<compile_context>
chip_gen: v7x
topology: tpu7x:2x2x1
jax: 0.10.0
libtpu: 0.0.40
codegen_flags: <defaults>
</compile_context>

<pallas_src>
import functools

import numpy as np
import jax
import jax.numpy as jnp
from jax.experimental import pallas as pl
from jax.experimental.pallas import tpu as pltpu

K = 5          # conv kernel size
STRIDE = 2     # conv stride
EPS = 1e-5     # BatchNorm eps
SUBLANE = 8    # f32 sublane width; batch rows are padded to a multiple of this


def conv2d_size_out(size, kernel_size=K, stride=STRIDE):
    return (size - (kernel_size - 1) - 1) // stride + 1


# ------------------------------- fused kernel ------------------------------ #

def _fused_dqn_kernel(xs1_ref,
                      bw1_ref, g1_ref, be1_ref, gs1_ref, bc1_ref,
                      bw2_hbm, g2_ref, be2_ref, gs2_ref, bc2_ref,
                      bw3_hbm, g3_ref, be3_ref, gs3_ref, bc3_ref,
                      whr_hbm, bh_ref,
                      out_ref,
                      xs2_ref, xs3_ref,
                      bw2_vmem, bw3_vmem, whr_vmem, dma_sem,
                      *, n, n_real, layer_dims):
    """Whole DQN forward in one kernel; all intermediates stay in VMEM.

    Activations of each layer are stored as a 2-D row matrix of shape
        (2 * ceil(H_in/2) * n,  W_in * C_in)
    rows ordered (h_parity, h//2, batch), columns ordered (w, c).  With this
    layout the input slab needed by kernel-row tap i of a stride-2 conv is a
    contiguous, sublane-aligned block of rows, so every conv is 5 accumulating
    bf16 MXU matmuls against banded weights (kernel-column taps + stride baked
    in on the host, once).
    """
    # Kick off the weight prefetch DMAs so they overlap conv1/conv2 compute.
    cp_bw2 = pltpu.make_async_copy(bw2_hbm, bw2_vmem, dma_sem.at[0])
    cp_bw3 = pltpu.make_async_copy(bw3_hbm, bw3_vmem, dma_sem.at[1])
    cp_whr = pltpu.make_async_copy(whr_hbm, whr_vmem, dma_sem.at[2])
    cp_bw2.start()
    cp_bw3.start()
    cp_whr.start()

    (hq0, h1, w1, c1), (hq1, h2, w2, c2), (hq2, h3, w3, c3) = layer_dims

    def batch_mask(rows):
        # 1.0 for real batch entries, 0.0 for the sublane-padding rows.
        ridx = jax.lax.broadcasted_iota(jnp.int32, (rows, 1), 0)
        return ((ridx % n) < n_real).astype(jnp.float32)

    def conv_bn_relu(x_ref, bw_ref, gamma_ref, beta_ref, gsum_ref, bcast_ref,
                     hq_in, ho, wo, cout):
        rows = ho * n
        plane = hq_in * n                          # rows per H-parity plane
        acc = None
        for i in range(K):                         # 5 kernel rows -> 5 matmuls
            start = (i % 2) * plane + (i // 2) * n           # multiple of 8
            slab = x_ref[pl.ds(start, rows), :].astype(jnp.bfloat16)
            part = jnp.dot(slab, bw_ref[i],                  # (rows, Wo*Cout)
                           preferred_element_type=jnp.float32)
            acc = part if acc is None else acc + part
        # Conv bias omitted: training-mode BN subtracts the mean right after,
        # which cancels a per-channel bias exactly.
        # BatchNorm (batch stats, biased variance), f32.  Padded batch rows of
        # the input are zero => their acc rows are zero => sums are exact for
        # the real batch; only the element count must use n_real.
        count = float(n_real * ho * wo)
        csum = jnp.sum(acc, axis=0, keepdims=True)             # (1, Wo*Cout)
        csq = jnp.sum(acc * acc, axis=0, keepdims=True)
        mean = jnp.dot(csum, gsum_ref[...],                    # (1, Cout) MXU
                       preferred_element_type=jnp.float32) / count
        ex2 = jnp.dot(csq, gsum_ref[...],
                      preferred_element_type=jnp.float32) / count
        var = jnp.maximum(ex2 - mean * mean, 0.0)              # clamp (review)
        scale = gamma_ref[...] * jax.lax.rsqrt(var + EPS)      # (1, Cout)
        shift = beta_ref[...] - mean * scale
        # Expand per-channel scale/shift to the (w, c) column layout on the
        # (idle) MXU via a 0/1 broadcast matrix instead of a lane-dim concat.
        scale_w = jnp.dot(scale, bcast_ref[...],               # (1, Wo*Cout)
                          preferred_element_type=jnp.float32)
        shift_w = jnp.dot(shift, bcast_ref[...],
                          preferred_element_type=jnp.float32)
        y = jnp.maximum(acc * scale_w + shift_w, 0.0)
        # Re-zero the batch-padding rows so the NEXT layer's BN statistics
        # stay exact (keeps the "padded rows are zero" invariant).
        return y * batch_mask(rows)

    def store_parity_rows(dst_ref, y, ho, hq_alloc):
        # Re-order output rows (ho, n) into the H-parity-split layout consumed
        # by the next stride-2 conv; every store is a contiguous, 8-aligned
        # block of n rows.
        for r in range(ho):
            dst = (r % 2) * hq_alloc * n + (r // 2) * n
            dst_ref[pl.ds(dst, n), :] = y[r * n:(r + 1) * n, :]

    # conv1 -> bn1 -> relu   (bw1 was auto-DMA'd; overlaps with bw2/bw3/whr)
    y1 = conv_bn_relu(xs1_ref, bw1_ref, g1_ref, be1_ref, gs1_ref, bc1_ref,
                      hq0, h1, w1, c1)
    store_parity_rows(xs2_ref, y1, h1, hq1)

    # conv2 -> bn2 -> relu
    cp_bw2.wait()
    y2 = conv_bn_relu(xs2_ref, bw2_vmem, g2_ref, be2_ref, gs2_ref, bc2_ref,
                      hq1, h2, w2, c2)
    store_parity_rows(xs3_ref, y2, h2, hq2)

    # conv3 -> bn3 -> relu   (rows ordered (h3, n), cols (w3, c3))
    cp_bw3.wait()
    y3 = conv_bn_relu(xs3_ref, bw3_vmem, g3_ref, be3_ref, gs3_ref, bc3_ref,
                      hq2, h3, w3, c3)

    # Linear head.  The PyTorch NCHW .view(N,-1) flatten is matched by the
    # host-side permutation of the head weight (whr), so no activation
    # transpose is needed: sum over the h3 row-blocks of small matmuls.
    cp_whr.wait()
    head = None
    for r in range(h3):
        slab = y3[r * n:(r + 1) * n, :].astype(jnp.bfloat16)
        part = jnp.dot(slab, whr_vmem[r], preferred_element_type=jnp.float32)
        head = part if head is None else head + part
    # NOTE: outputs=2 lane width is a masked store but negligible at this size;
    # pad to 128 lanes if the action space ever grows.
    out_ref[...] = head + bh_ref[...]


# --------------------------- one-time weight prep --------------------------- #

def _banded_conv_weight(w_oihw, w_in):
    """PyTorch conv weight (Cout, Cin, 5, 5) -> bf16 (5, w_in*Cin, w_out*Cout).

    bw[i][(w, cin), (wo, cout)] = W[cout, cin, i, j] if w == 2*wo + j else 0,
    so kernel-row tap i of the stride-2 conv becomes one dense matmul.
    """
    w = np.asarray(jax.device_get(w_oihw), np.float32)
    cout, cin, kh, kw = w.shape
    w_out = conv2d_size_out(w_in)
    bw = np.zeros((kh, w_in * cin, w_out * cout), np.float32)
    for i in range(kh):
        for j in range(kw):
            blk = w[:, :, i, j].T                              # (Cin, Cout)
            for wo in range(w_out):
                wi = STRIDE * wo + j
                bw[i, wi * cin:(wi + 1) * cin,
                   wo * cout:(wo + 1) * cout] = blk
    return jnp.asarray(bw, dtype=jnp.bfloat16)


def _group_sum_matrix(w_out, cout):
    """(w_out*cout, cout) 0/1 matrix: right-multiplying a (1, w_out*cout) row
    vector sums the w_out groups -> per-channel totals (done on the MXU)."""
    return jnp.asarray(np.tile(np.eye(cout, dtype=np.float32), (w_out, 1)))


def _broadcast_matrix(w_out, cout):
    """(cout, w_out*cout) 0/1 matrix: (1,cout) @ bc replicates per-channel
    values across the (w, c) column layout (MXU instead of lane-concat)."""
    return jnp.asarray(np.tile(np.eye(cout, dtype=np.float32), (1, w_out)))


def _head_weight_permuted(w_head, h3, w3, c3):
    """PyTorch head weight (O, C3*H3*W3)  [NCHW flatten]  ->  bf16
    (H3, W3*C3, O) matching the kernel's (h-row, (w, c)-column) layout."""
    wh = np.asarray(jax.device_get(w_head), np.float32)
    o = wh.shape[0]
    whr = np.zeros((h3, w3 * c3, o), np.float32)
    for hh in range(h3):
        for ww in range(w3):
            for cc in range(c3):
                whr[hh, ww * c3 + cc, :] = wh[:, cc * h3 * w3 + hh * w3 + ww]
    return jnp.asarray(whr, dtype=jnp.bfloat16)


def init_params(h, w, outputs, key):
    """Same parameterization as the PyTorch module (torch-default init)."""
    def uniform(key, shape, fan_in):
        bound = 1.0 / np.sqrt(fan_in)
        return jax.random.uniform(key, shape, jnp.float32, -bound, bound)

    keys = jax.random.split(key, 8)
    params = {}
    params["w1"] = uniform(keys[0], (16, 3, 5, 5), 3 * 5 * 5)
    params["b1"] = uniform(keys[1], (1, 16), 3 * 5 * 5)    # cancelled by BN
    params["g1"] = jnp.ones((1, 16), jnp.float32)
    params["be1"] = jnp.zeros((1, 16), jnp.float32)
    params["w2"] = uniform(keys[2], (32, 16, 5, 5), 16 * 5 * 5)
    params["b2"] = uniform(keys[3], (1, 32), 16 * 5 * 5)   # cancelled by BN
    params["g2"] = jnp.ones((1, 32), jnp.float32)
    params["be2"] = jnp.zeros((1, 32), jnp.float32)
    params["w3"] = uniform(keys[4], (32, 32, 5, 5), 32 * 5 * 5)
    params["b3"] = uniform(keys[5], (1, 32), 32 * 5 * 5)   # cancelled by BN
    params["g3"] = jnp.ones((1, 32), jnp.float32)
    params["be3"] = jnp.zeros((1, 32), jnp.float32)
    convw = conv2d_size_out(conv2d_size_out(conv2d_size_out(w)))
    convh = conv2d_size_out(conv2d_size_out(conv2d_size_out(h)))
    fin = convw * convh * 32
    params["wh"] = uniform(keys[6], (outputs, fin), fin)   # PyTorch (O, F)
    params["bh"] = uniform(keys[7], (1, outputs), fin)
    return params


def prepare_params(params, h, w):
    """One-time kernel-layout weight prep (hoisted out of the per-step forward).

    Conv biases b1/b2/b3 are intentionally unused: training-mode BatchNorm's
    mean subtraction cancels them exactly.
    """
    h1, w1 = conv2d_size_out(h), conv2d_size_out(w)
    h2, w2 = conv2d_size_out(h1), conv2d_size_out(w1)
    h3, w3 = conv2d_size_out(h2), conv2d_size_out(w2)
    return {
        "bw1": _banded_conv_weight(params["w1"], w),
        "bw2": _banded_conv_weight(params["w2"], w1),
        "bw3": _banded_conv_weight(params["w3"], w2),
        "g1": params["g1"], "be1": params["be1"],
        "gs1": _group_sum_matrix(w1, 16), "bc1": _broadcast_matrix(w1, 16),
        "g2": params["g2"], "be2": params["be2"],
        "gs2": _group_sum_matrix(w2, 32), "bc2": _broadcast_matrix(w2, 32),
        "g3": params["g3"], "be3": params["be3"],
        "gs3": _group_sum_matrix(w3, 32), "bc3": _broadcast_matrix(w3, 32),
        "whr": _head_weight_permuted(params["wh"], h3, w3, 32),
        "bh": params["bh"],
    }


# --------------------------------- forward ---------------------------------- #

def _split_input_rows(x_nchw, n_pad):
    """NCHW input -> H-parity-split row matrix (2 * H//2 * n_pad, W * C),
    rows ordered (h_parity, h//2, batch), columns ordered (w, c).  The batch
    dimension is zero-padded to n_pad (sublane alignment); zero rows keep the
    in-kernel BatchNorm statistics exact."""
    n, c, h, w = x_nchw.shape
    x = jnp.transpose(x_nchw, (0, 2, 3, 1)).astype(jnp.float32)  # (N, H, W, C)
    x = x.reshape(n, h // 2, 2, w * c)                           # (N, Hq, p, W*C)
    x = jnp.transpose(x, (2, 1, 0, 3))                           # (p, Hq, N, W*C)
    if n_pad > n:
        x = jnp.pad(x, ((0, 0), (0, 0), (0, n_pad - n), (0, 0)))
    return x.reshape(2 * (h // 2) * n_pad, w * c)


def dqn_forward(x_nchw, prep):
    n_real, cin, h, w = x_nchw.shape
    assert h % 2 == 0, "input height must be even for the H-parity layout"
    n_pad = ((n_real + SUBLANE - 1) // SUBLANE) * SUBLANE
    h1, w1 = conv2d_size_out(h), conv2d_size_out(w)
    h2, w2 = conv2d_size_out(h1), conv2d_size_out(w1)
    h3, w3 = conv2d_size_out(h2), conv2d_size_out(w2)
    c1, c2, c3 = 16, 32, 32
    hq1, hq2 = (h1 + 1) // 2, (h2 + 1) // 2
    outputs = prep["bh"].shape[1]

    xs1 = _split_input_rows(x_nchw, n_pad)

    layer_dims = ((h // 2, h1, w1, c1),
                  (hq1, h2, w2, c2),
                  (hq2, h3, w3, c3))
    kernel = functools.partial(_fused_dqn_kernel,
                               n=n_pad, n_real=n_real, layer_dims=layer_dims)

    vmem = pl.BlockSpec(memory_space=pltpu.MemorySpace.VMEM)
    anyspace = pl.BlockSpec(memory_space=pl.ANY)   # manual-DMA'd weights
    args = (xs1,
            prep["bw1"], prep["g1"], prep["be1"], prep["gs1"], prep["bc1"],
            prep["bw2"], prep["g2"], prep["be2"], prep["gs2"], prep["bc2"],
            prep["bw3"], prep["g3"], prep["be3"], prep["gs3"], prep["bc3"],
            prep["whr"], prep["bh"])
    in_specs = [vmem,
                vmem, vmem, vmem, vmem, vmem,
                anyspace, vmem, vmem, vmem, vmem,
                anyspace, vmem, vmem, vmem, vmem,
                anyspace, vmem]

    flops = (2 * n_pad * K * (h1 * (w * cin) * (w1 * c1)
                              + h2 * (w1 * c1) * (w2 * c2)
                              + h3 * (w2 * c2) * (w3 * c3))
             + 2 * n_pad * h3 * (w3 * c3) * outputs)
    bytes_accessed = sum(int(np.prod(a.shape)) * a.dtype.itemsize for a in args) \
        + n_pad * outputs * 4

    out = pl.pallas_call(
        kernel,
        out_shape=jax.ShapeDtypeStruct((n_pad, outputs), jnp.float32),
        in_specs=in_specs,
        out_specs=vmem,
        scratch_shapes=[
            # H-parity-split activations for conv2 / conv3 inputs (VMEM only).
            pltpu.VMEM((2 * hq1 * n_pad, w1 * c1), jnp.float32),
            pltpu.VMEM((2 * hq2 * n_pad, w2 * c2), jnp.float32),
            # VMEM landing buffers for the overlapped bf16 weight DMAs.
            pltpu.VMEM(prep["bw2"].shape, jnp.bfloat16),
            pltpu.VMEM(prep["bw3"].shape, jnp.bfloat16),
            pltpu.VMEM(prep["whr"].shape, jnp.bfloat16),
            pltpu.SemaphoreType.DMA((3,)),
        ],
        compiler_params=pltpu.CompilerParams(
            vmem_limit_bytes=32 * 1024 * 1024),
        cost_estimate=pl.CostEstimate(flops=int(flops),
                                      transcendentals=c1 + c2 + c3,
                                      bytes_accessed=int(bytes_accessed)),
    )(*args)
    return out[:n_real]


# ----------------------------------- main ------------------------------------ #

if __name__ == "__main__":
    H, W, OUTPUTS, BATCH = 40, 40, 2, 2   # CartPole-sized screen crop

    key = jax.random.PRNGKey(0)
    key_x, key_p = jax.random.split(key)
    x = jax.random.normal(key_x, (BATCH, 3, H, W), jnp.float32)  # NCHW like PyTorch
    params = init_params(H, W, OUTPUTS, key_p)
    prep = prepare_params(params, H, W)       # weight-layout prep hoisted (once)

    fwd = jax.jit(dqn_forward)
    out = jax.block_until_ready(fwd(x, prep))

    assert out.shape == (BATCH, OUTPUTS), out.shape
    assert bool(jnp.all(jnp.isfinite(out)))
    print("KERNEL_OK")
</pallas_src>

<mosaic_0001>
module attributes {stable_mosaic.version = 11 : i64} {
  func.func @_fused_dqn_kernel(%arg0: memref<320x120xf32, #tpu.memory_space<vmem>>, %arg1: memref<5x120x288xbf16, #tpu.memory_space<vmem>>, %arg2: memref<1x16xf32, #tpu.memory_space<vmem>>, %arg3: memref<1x16xf32, #tpu.memory_space<vmem>>, %arg4: memref<288x16xf32, #tpu.memory_space<vmem>>, %arg5: memref<16x288xf32, #tpu.memory_space<vmem>>, %arg6: memref<5x288x224xbf16, #tpu.memory_space<any>>, %arg7: memref<1x32xf32, #tpu.memory_space<vmem>>, %arg8: memref<1x32xf32, #tpu.memory_space<vmem>>, %arg9: memref<224x32xf32, #tpu.memory_space<vmem>>, %arg10: memref<32x224xf32, #tpu.memory_space<vmem>>, %arg11: memref<5x224x64xbf16, #tpu.memory_space<any>>, %arg12: memref<1x32xf32, #tpu.memory_space<vmem>>, %arg13: memref<1x32xf32, #tpu.memory_space<vmem>>, %arg14: memref<64x32xf32, #tpu.memory_space<vmem>>, %arg15: memref<32x64xf32, #tpu.memory_space<vmem>>, %arg16: memref<2x64x2xbf16, #tpu.memory_space<any>>, %arg17: memref<1x2xf32, #tpu.memory_space<vmem>>, %arg18: memref<8x2xf32, #tpu.memory_space<vmem>>, %arg19: memref<144x288xf32, #tpu.memory_space<vmem>>, %arg20: memref<64x224xf32, #tpu.memory_space<vmem>>, %arg21: memref<5x288x224xbf16, #tpu.memory_space<vmem>>, %arg22: memref<5x224x64xbf16, #tpu.memory_space<vmem>>, %arg23: memref<2x64x2xbf16, #tpu.memory_space<vmem>>, %arg24: memref<3x!tpu.dma_semaphore, #tpu.memory_space<semaphore_mem>>) attributes {dimension_semantics = [], scalar_prefetch = 0 : i64, scratch_operands = 6 : i64, tpu.core_type = #tpu.core_type<tc>} {
    %c0_i32 = arith.constant 0 : i32
    %0 = tpu.memref_slice %arg24[%c0_i32] : memref<3x!tpu.dma_semaphore, #tpu.memory_space<semaphore_mem>> -> memref<1x!tpu.dma_semaphore, #tpu.memory_space<semaphore_mem>>
    %1 = tpu.memref_squeeze %0 : memref<1x!tpu.dma_semaphore, #tpu.memory_space<semaphore_mem>> -> memref<!tpu.dma_semaphore, #tpu.memory_space<semaphore_mem>>
    tpu.enqueue_dma source(%arg6 : memref<5x288x224xbf16, #tpu.memory_space<any>>) target(%arg21 : memref<5x288x224xbf16, #tpu.memory_space<vmem>>) target_semaphore(%1 : memref<!tpu.dma_semaphore, #tpu.memory_space<semaphore_mem>>)
    %c1_i32 = arith.constant 1 : i32
    %2 = tpu.memref_slice %arg24[%c1_i32] : memref<3x!tpu.dma_semaphore, #tpu.memory_space<semaphore_mem>> -> memref<1x!tpu.dma_semaphore, #tpu.memory_space<semaphore_mem>>
    %3 = tpu.memref_squeeze %2 : memref<1x!tpu.dma_semaphore, #tpu.memory_space<semaphore_mem>> -> memref<!tpu.dma_semaphore, #tpu.memory_space<semaphore_mem>>
    tpu.enqueue_dma source(%arg11 : memref<5x224x64xbf16, #tpu.memory_space<any>>) target(%arg22 : memref<5x224x64xbf16, #tpu.memory_space<vmem>>) target_semaphore(%3 : memref<!tpu.dma_semaphore, #tpu.memory_space<semaphore_mem>>)
    %c2_i32 = arith.constant 2 : i32
    %4 = tpu.memref_slice %arg24[%c2_i32] : memref<3x!tpu.dma_semaphore, #tpu.memory_space<semaphore_mem>> -> memref<1x!tpu.dma_semaphore, #tpu.memory_space<semaphore_mem>>
    %5 = tpu.memref_squeeze %4 : memref<1x!tpu.dma_semaphore, #tpu.memory_space<semaphore_mem>> -> memref<!tpu.dma_semaphore, #tpu.memory_space<semaphore_mem>>
    tpu.enqueue_dma source(%arg16 : memref<2x64x2xbf16, #tpu.memory_space<any>>) target(%arg23 : memref<2x64x2xbf16, #tpu.memory_space<vmem>>) target_semaphore(%5 : memref<!tpu.dma_semaphore, #tpu.memory_space<semaphore_mem>>)
    %c0 = arith.constant 0 : index
    %c0_0 = arith.constant 0 : index
    %6 = vector.load %arg0[%c0, %c0_0] : memref<320x120xf32, #tpu.memory_space<vmem>>, vector<144x120xf32>
    %7 = arith.truncf %6 : vector<144x120xf32> to vector<144x120xbf16>
    %c0_1 = arith.constant 0 : index
    %c0_2 = arith.constant 0 : index
    %c0_3 = arith.constant 0 : index
    %8 = vector.load %arg1[%c0_1, %c0_2, %c0_3] : memref<5x120x288xbf16, #tpu.memory_space<vmem>>, vector<1x120x288xbf16>
    %9 = vector.shape_cast %8 : vector<1x120x288xbf16> to vector<120x288xbf16>
    %cst = arith.constant dense<0.000000e+00> : vector<144x288xf32>
    %10 = tpu.matmul %7, %9, %cst {dimension_numbers = #tpu.dot_dimension_numbers<[1], [0], [0], [1], [0, 0, 1, 1], [], []>} : vector<144x120xbf16>, vector<120x288xbf16>, vector<144x288xf32> -> vector<144x288xf32>
    %c160 = arith.constant 160 : index
    %c0_4 = arith.constant 0 : index
    %11 = vector.load %arg0[%c160, %c0_4] : memref<320x120xf32, #tpu.memory_space<vmem>>, vector<144x120xf32>
    %12 = arith.truncf %11 : vector<144x120xf32> to vector<144x120xbf16>
    %c1 = arith.constant 1 : index
    %c0_5 = arith.constant 0 : index
    %c0_6 = arith.constant 0 : index
    %13 = vector.load %arg1[%c1, %c0_5, %c0_6] : memref<5x120x288xbf16, #tpu.memory_space<vmem>>, vector<1x120x288xbf16>
    %14 = vector.shape_cast %13 : vector<1x120x288xbf16> to vector<120x288xbf16>
    %cst_7 = arith.constant dense<0.000000e+00> : vector<144x288xf32>
    %15 = tpu.matmul %12, %14, %cst_7 {dimension_numbers = #tpu.dot_dimension_numbers<[1], [0], [0], [1], [0, 0, 1, 1], [], []>} : vector<144x120xbf16>, vector<120x288xbf16>, vector<144x288xf32> -> vector<144x288xf32>
    %16 = arith.addf %10, %15 : vector<144x288xf32>
    %c8 = arith.constant 8 : index
    %c0_8 = arith.constant 0 : index
    %17 = vector.load %arg0[%c8, %c0_8] : memref<320x120xf32, #tpu.memory_space<vmem>>, vector<144x120xf32>
    %18 = arith.truncf %17 : vector<144x120xf32> to vector<144x120xbf16>
    %c2 = arith.constant 2 : index
    %c0_9 = arith.constant 0 : index
    %c0_10 = arith.constant 0 : index
    %19 = vector.load %arg1[%c2, %c0_9, %c0_10] : memref<5x120x288xbf16, #tpu.memory_space<vmem>>, vector<1x120x288xbf16>
    %20 = vector.shape_cast %19 : vector<1x120x288xbf16> to vector<120x288xbf16>
    %cst_11 = arith.constant dense<0.000000e+00> : vector<144x288xf32>
    %21 = tpu.matmul %18, %20, %cst_11 {dimension_numbers = #tpu.dot_dimension_numbers<[1], [0], [0], [1], [0, 0, 1, 1], [], []>} : vector<144x120xbf16>, vector<120x288xbf16>, vector<144x288xf32> -> vector<144x288xf32>
    %22 = arith.addf %16, %21 : vector<144x288xf32>
    %c168 = arith.constant 168 : index
    %c0_12 = arith.constant 0 : index
    %23 = vector.load %arg0[%c168, %c0_12] : memref<320x120xf32, #tpu.memory_space<vmem>>, vector<144x120xf32>
    %24 = arith.truncf %23 : vector<144x120xf32> to vector<144x120xbf16>
    %c3 = arith.constant 3 : index
    %c0_13 = arith.constant 0 : index
    %c0_14 = arith.constant 0 : index
    %25 = vector.load %arg1[%c3, %c0_13, %c0_14] : memref<5x120x288xbf16, #tpu.memory_space<vmem>>, vector<1x120x288xbf16>
    %26 = vector.shape_cast %25 : vector<1x120x288xbf16> to vector<120x288xbf16>
    %cst_15 = arith.constant dense<0.000000e+00> : vector<144x288xf32>
    %27 = tpu.matmul %24, %26, %cst_15 {dimension_numbers = #tpu.dot_dimension_numbers<[1], [0], [0], [1], [0, 0, 1, 1], [], []>} : vector<144x120xbf16>, vector<120x288xbf16>, vector<144x288xf32> -> vector<144x288xf32>
    %28 = arith.addf %22, %27 : vector<144x288xf32>
    %c16 = arith.constant 16 : index
    %c0_16 = arith.constant 0 : index
    %29 = vector.load %arg0[%c16, %c0_16] : memref<320x120xf32, #tpu.memory_space<vmem>>, vector<144x120xf32>
    %30 = arith.truncf %29 : vector<144x120xf32> to vector<144x120xbf16>
    %c4 = arith.constant 4 : index
    %c0_17 = arith.constant 0 : index
    %c0_18 = arith.constant 0 : index
    %31 = vector.load %arg1[%c4, %c0_17, %c0_18] : memref<5x120x288xbf16, #tpu.memory_space<vmem>>, vector<1x120x288xbf16>
    %32 = vector.shape_cast %31 : vector<1x120x288xbf16> to vector<120x288xbf16>
    %cst_19 = arith.constant dense<0.000000e+00> : vector<144x288xf32>
    %33 = tpu.matmul %30, %32, %cst_19 {dimension_numbers = #tpu.dot_dimension_numbers<[1], [0], [0], [1], [0, 0, 1, 1], [], []>} : vector<144x120xbf16>, vector<120x288xbf16>, vector<144x288xf32> -> vector<144x288xf32>
    %34 = arith.addf %28, %33 : vector<144x288xf32>
    %cst_20 = arith.constant dense<0.000000e+00> : vector<288xf32>
    %35 = vector.multi_reduction <add>, %34, %cst_20 [0] : vector<144x288xf32> to vector<288xf32>
    %36 = vector.shape_cast %35 : vector<288xf32> to vector<1x288xf32>
    %37 = arith.mulf %34, %34 : vector<144x288xf32>
    %cst_21 = arith.constant dense<0.000000e+00> : vector<288xf32>
    %38 = vector.multi_reduction <add>, %37, %cst_21 [0] : vector<144x288xf32> to vector<288xf32>
    %39 = vector.shape_cast %38 : vector<288xf32> to vector<1x288xf32>
    %c0_22 = arith.constant 0 : index
    %c0_23 = arith.constant 0 : index
    %40 = vector.load %arg4[%c0_22, %c0_23] : memref<288x16xf32, #tpu.memory_space<vmem>>, vector<288x16xf32>
    %cst_24 = arith.constant dense<0.000000e+00> : vector<1x16xf32>
    %41 = tpu.matmul %36, %40, %cst_24 {dimension_numbers = #tpu.dot_dimension_numbers<[1], [0], [0], [1], [0, 0, 1, 1], [], []>} : vector<1x288xf32>, vector<288x16xf32>, vector<1x16xf32> -> vector<1x16xf32>
    %cst_25 = arith.constant 6.480000e+02 : f32
    %42 = vector.broadcast %cst_25 : f32 to vector<1x16xf32>
    %43 = arith.divf %41, %42 : vector<1x16xf32>
    %c0_26 = arith.constant 0 : index
    %c0_27 = arith.constant 0 : index
    %44 = vector.load %arg4[%c0_26, %c0_27] : memref<288x16xf32, #tpu.memory_space<vmem>>, vector<288x16xf32>
    %cst_28 = arith.constant dense<0.000000e+00> : vector<1x16xf32>
    %45 = tpu.matmul %39, %44, %cst_28 {dimension_numbers = #tpu.dot_dimension_numbers<[1], [0], [0], [1], [0, 0, 1, 1], [], []>} : vector<1x288xf32>, vector<288x16xf32>, vector<1x16xf32> -> vector<1x16xf32>
    %cst_29 = arith.constant 6.480000e+02 : f32
    %46 = vector.broadcast %cst_29 : f32 to vector<1x16xf32>
    %47 = arith.divf %45, %46 : vector<1x16xf32>
    %48 = arith.mulf %43, %43 : vector<1x16xf32>
    %49 = arith.subf %47, %48 : vector<1x16xf32>
    %cst_30 = arith.constant 0.000000e+00 : f32
    %50 = vector.broadcast %cst_30 : f32 to vector<1x16xf32>
    %51 = arith.maximumf %49, %50 : vector<1x16xf32>
    %c0_31 = arith.constant 0 : index
    %c0_32 = arith.constant 0 : index
    %52 = vector.load %arg2[%c0_31, %c0_32] : memref<1x16xf32, #tpu.memory_space<vmem>>, vector<1x16xf32>
    %cst_33 = arith.constant 9.99999974E-6 : f32
    %53 = vector.broadcast %cst_33 : f32 to vector<1x16xf32>
    %54 = arith.addf %51, %53 : vector<1x16xf32>
    %55 = math.rsqrt %54 : vector<1x16xf32>
    %56 = arith.mulf %52, %55 : vector<1x16xf32>
    %c0_34 = arith.constant 0 : index
    %c0_35 = arith.constant 0 : index
    %57 = vector.load %arg3[%c0_34, %c0_35] : memref<1x16xf32, #tpu.memory_space<vmem>>, vector<1x16xf32>
    %58 = arith.mulf %43, %56 : vector<1x16xf32>
    %59 = arith.subf %57, %58 : vector<1x16xf32>
    %c0_36 = arith.constant 0 : index
    %c0_37 = arith.constant 0 : index
    %60 = vector.load %arg5[%c0_36, %c0_37] : memref<16x288xf32, #tpu.memory_space<vmem>>, vector<16x288xf32>
    %cst_38 = arith.constant dense<0.000000e+00> : vector<1x288xf32>
    %61 = tpu.matmul %56, %60, %cst_38 {dimension_numbers = #tpu.dot_dimension_numbers<[1], [0], [0], [1], [0, 0, 1, 1], [], []>} : vector<1x16xf32>, vector<16x288xf32>, vector<1x288xf32> -> vector<1x288xf32>
    %c0_39 = arith.constant 0 : index
    %c0_40 = arith.constant 0 : index
    %62 = vector.load %arg5[%c0_39, %c0_40] : memref<16x288xf32, #tpu.memory_space<vmem>>, vector<16x288xf32>
    %cst_41 = arith.constant dense<0.000000e+00> : vector<1x288xf32>
    %63 = tpu.matmul %59, %62, %cst_41 {dimension_numbers = #tpu.dot_dimension_numbers<[1], [0], [0], [1], [0, 0, 1, 1], [], []>} : vector<1x16xf32>, vector<16x288xf32>, vector<1x288xf32> -> vector<1x288xf32>
    %64 = vector.broadcast %61 : vector<1x288xf32> to vector<144x288xf32>
    %65 = arith.mulf %34, %64 : vector<144x288xf32>
    %66 = vector.broadcast %63 : vector<1x288xf32> to vector<144x288xf32>
    %67 = arith.addf %65, %66 : vector<144x288xf32>
    %cst_42 = arith.constant 0.000000e+00 : f32
    %68 = vector.broadcast %cst_42 : f32 to vector<144x288xf32>
    %69 = arith.maximumf %67, %68 : vector<144x288xf32>
    %70 = tpu.iota {dimensions = array<i32: 0>} : vector<144x1xi32>
    %c8_i32 = arith.constant 8 : i32
    %c0_i32_43 = arith.constant 0 : i32
    %71 = arith.cmpi eq, %c8_i32, %c0_i32_43 : i32
    %c1_i32_44 = arith.constant 1 : i32
    %72 = arith.select %71, %c1_i32_44, %c8_i32 : i32
    %73 = vector.broadcast %72 : i32 to vector<144x1xi32>
    %74 = arith.remsi %70, %73 : vector<144x1xi32>
    %c0_i32_45 = arith.constant 0 : i32
    %75 = vector.broadcast %c0_i32_45 : i32 to vector<144x1xi32>
    %76 = arith.cmpi ne, %74, %75 : vector<144x1xi32>
    %c0_i32_46 = arith.constant 0 : i32
    %77 = vector.broadcast %c0_i32_46 : i32 to vector<144x1xi32>
    %78 = arith.cmpi slt, %74, %77 : vector<144x1xi32>
    %c0_i32_47 = arith.constant 0 : i32
    %79 = arith.cmpi slt, %72, %c0_i32_47 : i32
    %80 = vector.broadcast %79 : i1 to vector<144x1xi1>
    %81 = vector.broadcast %80 : vector<144x1xi1> to vector<144x1xi1>
    %82 = arith.xori %78, %81 : vector<144x1xi1>
    %83 = arith.andi %82, %76 : vector<144x1xi1>
    %84 = vector.broadcast %72 : i32 to vector<144x1xi32>
    %85 = arith.addi %74, %84 : vector<144x1xi32>
    %86 = arith.select %83, %85, %74 : vector<144x1xi1>, vector<144x1xi32>
    %c2_i32_48 = arith.constant 2 : i32
    %87 = vector.broadcast %c2_i32_48 : i32 to vector<144x1xi32>
    %88 = arith.cmpi slt, %86, %87 : vector<144x1xi32>
    %89 = arith.extui %88 : vector<144x1xi1> to vector<144x1xi32>
    %90 = arith.sitofp %89 : vector<144x1xi32> to vector<144x1xf32>
    %91 = vector.broadcast %90 : vector<144x1xf32> to vector<144x288xf32>
    %92 = arith.mulf %69, %91 : vector<144x288xf32>
    %93 = vector.extract_strided_slice %92 {offsets = [0, 0], sizes = [8, 288], strides = [1, 1]} : vector<144x288xf32> to vector<8x288xf32>
    %c0_49 = arith.constant 0 : index
    %c0_50 = arith.constant 0 : index
    %94 = vector.load %arg19[%c0_49, %c0_50] : memref<144x288xf32, #tpu.memory_space<vmem>>, vector<8x288xf32>
    tpu.vector_store %arg19[%c0_49, %c0_50], %93 {strides = array<i32>} : memref<144x288xf32, #tpu.memory_space<vmem>>, vector<8x288xf32>,
    %95 = vector.extract_strided_slice %92 {offsets = [8, 0], sizes = [8, 288], strides = [1, 1]} : vector<144x288xf32> to vector<8x288xf32>
    %c72 = arith.constant 72 : index
    %c0_51 = arith.constant 0 : index
    %96 = vector.load %arg19[%c72, %c0_51] : memref<144x288xf32, #tpu.memory_space<vmem>>, vector<8x288xf32>
    tpu.vector_store %arg19[%c72, %c0_51], %95 {strides = array<i32>} : memref<144x288xf32, #tpu.memory_space<vmem>>, vector<8x288xf32>,
    %97 = vector.extract_strided_slice %92 {offsets = [16, 0], sizes = [8, 288], strides = [1, 1]} : vector<144x288xf32> to vector<8x288xf32>
    %c8_52 = arith.constant 8 : index
    %c0_53 = arith.constant 0 : index
    %98 = vector.load %arg19[%c8_52, %c0_53] : memref<144x288xf32, #tpu.memory_space<vmem>>, vector<8x288xf32>
    tpu.vector_store %arg19[%c8_52, %c0_53], %97 {strides = array<i32>} : memref<144x288xf32, #tpu.memory_space<vmem>>, vector<8x288xf32>,
    %99 = vector.extract_strided_slice %92 {offsets = [24, 0], sizes = [8, 288], strides = [1, 1]} : vector<144x288xf32> to vector<8x288xf32>
    %c80 = arith.constant 80 : index
    %c0_54 = arith.constant 0 : index
    %100 = vector.load %arg19[%c80, %c0_54] : memref<144x288xf32, #tpu.memory_space<vmem>>, vector<8x288xf32>
    tpu.vector_store %arg19[%c80, %c0_54], %99 {strides = array<i32>} : memref<144x288xf32, #tpu.memory_space<vmem>>, vector<8x288xf32>,
    %101 = vector.extract_strided_slice %92 {offsets = [32, 0], sizes = [8, 288], strides = [1, 1]} : vector<144x288xf32> to vector<8x288xf32>
    %c16_55 = arith.constant 16 : index
    %c0_56 = arith.constant 0 : index
    %102 = vector.load %arg19[%c16_55, %c0_56] : memref<144x288xf32, #tpu.memory_space<vmem>>, vector<8x288xf32>
    tpu.vector_store %arg19[%c16_55, %c0_56], %101 {strides = array<i32>} : memref<144x288xf32, #tpu.memory_space<vmem>>, vector<8x288xf32>,
    %103 = vector.extract_strided_slice %92 {offsets = [40, 0], sizes = [8, 288], strides = [1, 1]} : vector<144x288xf32> to vector<8x288xf32>
    %c88 = arith.constant 88 : index
    %c0_57 = arith.constant 0 : index
    %104 = vector.load %arg19[%c88, %c0_57] : memref<144x288xf32, #tpu.memory_space<vmem>>, vector<8x288xf32>
    tpu.vector_store %arg19[%c88, %c0_57], %103 {strides = array<i32>} : memref<144x288xf32, #tpu.memory_space<vmem>>, vector<8x288xf32>,
    %105 = vector.extract_strided_slice %92 {offsets = [48, 0], sizes = [8, 288], strides = [1, 1]} : vector<144x288xf32> to vector<8x288xf32>
    %c24 = arith.constant 24 : index
    %c0_58 = arith.constant 0 : index
    %106 = vector.load %arg19[%c24, %c0_58] : memref<144x288xf32, #tpu.memory_space<vmem>>, vector<8x288xf32>
    tpu.vector_store %arg19[%c24, %c0_58], %105 {strides = array<i32>} : memref<144x288xf32, #tpu.memory_space<vmem>>, vector<8x288xf32>,
    %107 = vector.extract_strided_slice %92 {offsets = [56, 0], sizes = [8, 288], strides = [1, 1]} : vector<144x288xf32> to vector<8x288xf32>
    %c96 = arith.constant 96 : index
    %c0_59 = arith.constant 0 : index
    %108 = vector.load %arg19[%c96, %c0_59] : memref<144x288xf32, #tpu.memory_space<vmem>>, vector<8x288xf32>
    tpu.vector_store %arg19[%c96, %c0_59], %107 {strides = array<i32>} : memref<144x288xf32, #tpu.memory_space<vmem>>, vector<8x288xf32>,
    %109 = vector.extract_strided_slice %92 {offsets = [64, 0], sizes = [8, 288], strides = [1, 1]} : vector<144x288xf32> to vector<8x288xf32>
    %c32 = arith.constant 32 : index
    %c0_60 = arith.constant 0 : index
    %110 = vector.load %arg19[%c32, %c0_60] : memref<144x288xf32, #tpu.memory_space<vmem>>, vector<8x288xf32>
    tpu.vector_store %arg19[%c32, %c0_60], %109 {strides = array<i32>} : memref<144x288xf32, #tpu.memory_space<vmem>>, vector<8x288xf32>,
    %111 = vector.extract_strided_slice %92 {offsets = [72, 0], sizes = [8, 288], strides = [1, 1]} : vector<144x288xf32> to vector<8x288xf32>
    %c104 = arith.constant 104 : index
    %c0_61 = arith.constant 0 : index
    %112 = vector.load %arg19[%c104, %c0_61] : memref<144x288xf32, #tpu.memory_space<vmem>>, vector<8x288xf32>
    tpu.vector_store %arg19[%c104, %c0_61], %111 {strides = array<i32>} : memref<144x288xf32, #tpu.memory_space<vmem>>, vector<8x288xf32>,
    %113 = vector.extract_strided_slice %92 {offsets = [80, 0], sizes = [8, 288], strides = [1, 1]} : vector<144x288xf32> to vector<8x288xf32>
    %c40 = arith.constant 40 : index
    %c0_62 = arith.constant 0 : index
    %114 = vector.load %arg19[%c40, %c0_62] : memref<144x288xf32, #tpu.memory_space<vmem>>, vector<8x288xf32>
    tpu.vector_store %arg19[%c40, %c0_62], %113 {strides = array<i32>} : memref<144x288xf32, #tpu.memory_space<vmem>>, vector<8x288xf32>,
    %115 = vector.extract_strided_slice %92 {offsets = [88, 0], sizes = [8, 288], strides = [1, 1]} : vector<144x288xf32> to vector<8x288xf32>
    %c112 = arith.constant 112 : index
    %c0_63 = arith.constant 0 : index
    %116 = vector.load %arg19[%c112, %c0_63] : memref<144x288xf32, #tpu.memory_space<vmem>>, vector<8x288xf32>
    tpu.vector_store %arg19[%c112, %c0_63], %115 {strides = array<i32>} : memref<144x288xf32, #tpu.memory_space<vmem>>, vector<8x288xf32>,
    %117 = vector.extract_strided_slice %92 {offsets = [96, 0], sizes = [8, 288], strides = [1, 1]} : vector<144x288xf32> to vector<8x288xf32>
    %c48 = arith.constant 48 : index
    %c0_64 = arith.constant 0 : index
    %118 = vector.load %arg19[%c48, %c0_64] : memref<144x288xf32, #tpu.memory_space<vmem>>, vector<8x288xf32>
    tpu.vector_store %arg19[%c48, %c0_64], %117 {strides = array<i32>} : memref<144x288xf32, #tpu.memory_space<vmem>>, vector<8x288xf32>,
    %119 = vector.extract_strided_slice %92 {offsets = [104, 0], sizes = [8, 288], strides = [1, 1]} : vector<144x288xf32> to vector<8x288xf32>
    %c120 = arith.constant 120 : index
    %c0_65 = arith.constant 0 : index
    %120 = vector.load %arg19[%c120, %c0_65] : memref<144x288xf32, #tpu.memory_space<vmem>>, vector<8x288xf32>
    tpu.vector_store %arg19[%c120, %c0_65], %119 {strides = array<i32>} : memref<144x288xf32, #tpu.memory_space<vmem>>, vector<8x288xf32>,
    %121 = vector.extract_strided_slice %92 {offsets = [112, 0], sizes = [8, 288], strides = [1, 1]} : vector<144x288xf32> to vector<8x288xf32>
    %c56 = arith.constant 56 : index
    %c0_66 = arith.constant 0 : index
    %122 = vector.load %arg19[%c56, %c0_66] : memref<144x288xf32, #tpu.memory_space<vmem>>, vector<8x288xf32>
    tpu.vector_store %arg19[%c56, %c0_66], %121 {strides = array<i32>} : memref<144x288xf32, #tpu.memory_space<vmem>>, vector<8x288xf32>,
    %123 = vector.extract_strided_slice %92 {offsets = [120, 0], sizes = [8, 288], strides = [1, 1]} : vector<144x288xf32> to vector<8x288xf32>
    %c128 = arith.constant 128 : index
    %c0_67 = arith.constant 0 : index
    %124 = vector.load %arg19[%c128, %c0_67] : memref<144x288xf32, #tpu.memory_space<vmem>>, vector<8x288xf32>
    tpu.vector_store %arg19[%c128, %c0_67], %123 {strides = array<i32>} : memref<144x288xf32, #tpu.memory_space<vmem>>, vector<8x288xf32>,
    %125 = vector.extract_strided_slice %92 {offsets = [128, 0], sizes = [8, 288], strides = [1, 1]} : vector<144x288xf32> to vector<8x288xf32>
    %c64 = arith.constant 64 : index
    %c0_68 = arith.constant 0 : index
    %126 = vector.load %arg19[%c64, %c0_68] : memref<144x288xf32, #tpu.memory_space<vmem>>, vector<8x288xf32>
    tpu.vector_store %arg19[%c64, %c0_68], %125 {strides = array<i32>} : memref<144x288xf32, #tpu.memory_space<vmem>>, vector<8x288xf32>,
    %127 = vector.extract_strided_slice %92 {offsets = [136, 0], sizes = [8, 288], strides = [1, 1]} : vector<144x288xf32> to vector<8x288xf32>
    %c136 = arith.constant 136 : index
    %c0_69 = arith.constant 0 : index
    %128 = vector.load %arg19[%c136, %c0_69] : memref<144x288xf32, #tpu.memory_space<vmem>>, vector<8x288xf32>
    tpu.vector_store %arg19[%c136, %c0_69], %127 {strides = array<i32>} : memref<144x288xf32, #tpu.memory_space<vmem>>, vector<8x288xf32>,
    %c0_i32_70 = arith.constant 0 : i32
    %129 = tpu.memref_slice %arg24[%c0_i32_70] : memref<3x!tpu.dma_semaphore, #tpu.memory_space<semaphore_mem>> -> memref<1x!tpu.dma_semaphore, #tpu.memory_space<semaphore_mem>>
    %130 = tpu.memref_squeeze %129 : memref<1x!tpu.dma_semaphore, #tpu.memory_space<semaphore_mem>> -> memref<!tpu.dma_semaphore, #tpu.memory_space<semaphore_mem>>
    tpu.wait_dma2 semaphore(%130 : memref<!tpu.dma_semaphore, #tpu.memory_space<semaphore_mem>>) src(%arg6 : memref<5x288x224xbf16, #tpu.memory_space<any>>) dst(%arg21 : memref<5x288x224xbf16, #tpu.memory_space<vmem>>)
    %c0_71 = arith.constant 0 : index
    %c0_72 = arith.constant 0 : index
    %131 = vector.load %arg19[%c0_71, %c0_72] : memref<144x288xf32, #tpu.memory_space<vmem>>, vector<56x288xf32>
    %132 = arith.truncf %131 : vector<56x288xf32> to vector<56x288xbf16>
    %c0_73 = arith.constant 0 : index
    %c0_74 = arith.constant 0 : index
    %c0_75 = arith.constant 0 : index
    %133 = vector.load %arg21[%c0_73, %c0_74, %c0_75] : memref<5x288x224xbf16, #tpu.memory_space<vmem>>, vector<1x288x224xbf16>
    %134 = vector.shape_cast %133 : vector<1x288x224xbf16> to vector<288x224xbf16>
    %cst_76 = arith.constant dense<0.000000e+00> : vector<56x224xf32>
    %135 = tpu.matmul %132, %134, %cst_76 {dimension_numbers = #tpu.dot_dimension_numbers<[1], [0], [0], [1], [0, 0, 1, 1], [], []>} : vector<56x288xbf16>, vector<288x224xbf16>, vector<56x224xf32> -> vector<56x224xf32>
    %c72_77 = arith.constant 72 : index
    %c0_78 = arith.constant 0 : index
    %136 = vector.load %arg19[%c72_77, %c0_78] : memref<144x288xf32, #tpu.memory_space<vmem>>, vector<56x288xf32>
    %137 = arith.truncf %136 : vector<56x288xf32> to vector<56x288xbf16>
    %c1_79 = arith.constant 1 : index
    %c0_80 = arith.constant 0 : index
    %c0_81 = arith.constant 0 : index
    %138 = vector.load %arg21[%c1_79, %c0_80, %c0_81] : memref<5x288x224xbf16, #tpu.memory_space<vmem>>, vector<1x288x224xbf16>
    %139 = vector.shape_cast %138 : vector<1x288x224xbf16> to vector<288x224xbf16>
    %cst_82 = arith.constant dense<0.000000e+00> : vector<56x224xf32>
    %140 = tpu.matmul %137, %139, %cst_82 {dimension_numbers = #tpu.dot_dimension_numbers<[1], [0], [0], [1], [0, 0, 1, 1], [], []>} : vector<56x288xbf16>, vector<288x224xbf16>, vector<56x224xf32> -> vector<56x224xf32>
    %141 = arith.addf %135, %140 : vector<56x224xf32>
    %c8_83 = arith.constant 8 : index
    %c0_84 = arith.constant 0 : index
    %142 = vector.load %arg19[%c8_83, %c0_84] : memref<144x288xf32, #tpu.memory_space<vmem>>, vector<56x288xf32>
    %143 = arith.truncf %142 : vector<56x288xf32> to vector<56x288xbf16>
    %c2_85 = arith.constant 2 : index
    %c0_86 = arith.constant 0 : index
    %c0_87 = arith.constant 0 : index
    %144 = vector.load %arg21[%c2_85, %c0_86, %c0_87] : memref<5x288x224xbf16, #tpu.memory_space<vmem>>, vector<1x288x224xbf16>
    %145 = vector.shape_cast %144 : vector<1x288x224xbf16> to vector<288x224xbf16>
    %cst_88 = arith.constant dense<0.000000e+00> : vector<56x224xf32>
    %146 = tpu.matmul %143, %145, %cst_88 {dimension_numbers = #tpu.dot_dimension_numbers<[1], [0], [0], [1], [0, 0, 1, 1], [], []>} : vector<56x288xbf16>, vector<288x224xbf16>, vector<56x224xf32> -> vector<56x224xf32>
    %147 = arith.addf %141, %146 : vector<56x224xf32>
    %c80_89 = arith.constant 80 : index
    %c0_90 = arith.constant 0 : index
    %148 = vector.load %arg19[%c80_89, %c0_90] : memref<144x288xf32, #tpu.memory_space<vmem>>, vector<56x288xf32>
    %149 = arith.truncf %148 : vector<56x288xf32> to vector<56x288xbf16>
    %c3_91 = arith.constant 3 : index
    %c0_92 = arith.constant 0 : index
    %c0_93 = arith.constant 0 : index
    %150 = vector.load %arg21[%c3_91, %c0_92, %c0_93] : memref<5x288x224xbf16, #tpu.memory_space<vmem>>, vector<1x288x224xbf16>
    %151 = vector.shape_cast %150 : vector<1x288x224xbf16> to vector<288x224xbf16>
    %cst_94 = arith.constant dense<0.000000e+00> : vector<56x224xf32>
    %152 = tpu.matmul %149, %151, %cst_94 {dimension_numbers = #tpu.dot_dimension_numbers<[1], [0], [0], [1], [0, 0, 1, 1], [], []>} : vector<56x288xbf16>, vector<288x224xbf16>, vector<56x224xf32> -> vector<56x224xf32>
    %153 = arith.addf %147, %152 : vector<56x224xf32>
    %c16_95 = arith.constant 16 : index
    %c0_96 = arith.constant 0 : index
    %154 = vector.load %arg19[%c16_95, %c0_96] : memref<144x288xf32, #tpu.memory_space<vmem>>, vector<56x288xf32>
    %155 = arith.truncf %154 : vector<56x288xf32> to vector<56x288xbf16>
    %c4_97 = arith.constant 4 : index
    %c0_98 = arith.constant 0 : index
    %c0_99 = arith.constant 0 : index
    %156 = vector.load %arg21[%c4_97, %c0_98, %c0_99] : memref<5x288x224xbf16, #tpu.memory_space<vmem>>, vector<1x288x224xbf16>
    %157 = vector.shape_cast %156 : vector<1x288x224xbf16> to vector<288x224xbf16>
    %cst_100 = arith.constant dense<0.000000e+00> : vector<56x224xf32>
    %158 = tpu.matmul %155, %157, %cst_100 {dimension_numbers = #tpu.dot_dimension_numbers<[1], [0], [0], [1], [0, 0, 1, 1], [], []>} : vector<56x288xbf16>, vector<288x224xbf16>, vector<56x224xf32> -> vector<56x224xf32>
    %159 = arith.addf %153, %158 : vector<56x224xf32>
    %cst_101 = arith.constant dense<0.000000e+00> : vector<224xf32>
    %160 = vector.multi_reduction <add>, %159, %cst_101 [0] : vector<56x224xf32> to vector<224xf32>
    %161 = vector.shape_cast %160 : vector<224xf32> to vector<1x224xf32>
    %162 = arith.mulf %159, %159 : vector<56x224xf32>
    %cst_102 = arith.constant dense<0.000000e+00> : vector<224xf32>
    %163 = vector.multi_reduction <add>, %162, %cst_102 [0] : vector<56x224xf32> to vector<224xf32>
    %164 = vector.shape_cast %163 : vector<224xf32> to vector<1x224xf32>
    %c0_103 = arith.constant 0 : index
    %c0_104 = arith.constant 0 : index
    %165 = vector.load %arg9[%c0_103, %c0_104] : memref<224x32xf32, #tpu.memory_space<vmem>>, vector<224x32xf32>
    %cst_105 = arith.constant dense<0.000000e+00> : vector<1x32xf32>
    %166 = tpu.matmul %161, %165, %cst_105 {dimension_numbers = #tpu.dot_dimension_numbers<[1], [0], [0], [1], [0, 0, 1, 1], [], []>} : vector<1x224xf32>, vector<224x32xf32>, vector<1x32xf32> -> vector<1x32xf32>
    %cst_106 = arith.constant 9.800000e+01 : f32
    %167 = vector.broadcast %cst_106 : f32 to vector<1x32xf32>
    %168 = arith.divf %166, %167 : vector<1x32xf32>
    %c0_107 = arith.constant 0 : index
    %c0_108 = arith.constant 0 : index
    %169 = vector.load %arg9[%c0_107, %c0_108] : memref<224x32xf32, #tpu.memory_space<vmem>>, vector<224x32xf32>
    %cst_109 = arith.constant dense<0.000000e+00> : vector<1x32xf32>
    %170 = tpu.matmul %164, %169, %cst_109 {dimension_numbers = #tpu.dot_dimension_numbers<[1], [0], [0], [1], [0, 0, 1, 1], [], []>} : vector<1x224xf32>, vector<224x32xf32>, vector<1x32xf32> -> vector<1x32xf32>
    %cst_110 = arith.constant 9.800000e+01 : f32
    %171 = vector.broadcast %cst_110 : f32 to vector<1x32xf32>
    %172 = arith.divf %170, %171 : vector<1x32xf32>
    %173 = arith.mulf %168, %168 : vector<1x32xf32>
    %174 = arith.subf %172, %173 : vector<1x32xf32>
    %cst_111 = arith.constant 0.000000e+00 : f32
    %175 = vector.broadcast %cst_111 : f32 to vector<1x32xf32>
    %176 = arith.maximumf %174, %175 : vector<1x32xf32>
    %c0_112 = arith.constant 0 : index
    %c0_113 = arith.constant 0 : index
    %177 = vector.load %arg7[%c0_112, %c0_113] : memref<1x32xf32, #tpu.memory_space<vmem>>, vector<1x32xf32>
    %cst_114 = arith.constant 9.99999974E-6 : f32
    %178 = vector.broadcast %cst_114 : f32 to vector<1x32xf32>
    %179 = arith.addf %176, %178 : vector<1x32xf32>
    %180 = math.rsqrt %179 : vector<1x32xf32>
    %181 = arith.mulf %177, %180 : vector<1x32xf32>
    %c0_115 = arith.constant 0 : index
    %c0_116 = arith.constant 0 : index
    %182 = vector.load %arg8[%c0_115, %c0_116] : memref<1x32xf32, #tpu.memory_space<vmem>>, vector<1x32xf32>
    %183 = arith.mulf %168, %181 : vector<1x32xf32>
    %184 = arith.subf %182, %183 : vector<1x32xf32>
    %c0_117 = arith.constant 0 : index
    %c0_118 = arith.constant 0 : index
    %185 = vector.load %arg10[%c0_117, %c0_118] : memref<32x224xf32, #tpu.memory_space<vmem>>, vector<32x224xf32>
    %cst_119 = arith.constant dense<0.000000e+00> : vector<1x224xf32>
    %186 = tpu.matmul %181, %185, %cst_119 {dimension_numbers = #tpu.dot_dimension_numbers<[1], [0], [0], [1], [0, 0, 1, 1], [], []>} : vector<1x32xf32>, vector<32x224xf32>, vector<1x224xf32> -> vector<1x224xf32>
    %c0_120 = arith.constant 0 : index
    %c0_121 = arith.constant 0 : index
    %187 = vector.load %arg10[%c0_120, %c0_121] : memref<32x224xf32, #tpu.memory_space<vmem>>, vector<32x224xf32>
    %cst_122 = arith.constant dense<0.000000e+00> : vector<1x224xf32>
    %188 = tpu.matmul %184, %187, %cst_122 {dimension_numbers = #tpu.dot_dimension_numbers<[1], [0], [0], [1], [0, 0, 1, 1], [], []>} : vector<1x32xf32>, vector<32x224xf32>, vector<1x224xf32> -> vector<1x224xf32>
    %189 = vector.broadcast %186 : vector<1x224xf32> to vector<56x224xf32>
    %190 = arith.mulf %159, %189 : vector<56x224xf32>
    %191 = vector.broadcast %188 : vector<1x224xf32> to vector<56x224xf32>
    %192 = arith.addf %190, %191 : vector<56x224xf32>
    %cst_123 = arith.constant 0.000000e+00 : f32
    %193 = vector.broadcast %cst_123 : f32 to vector<56x224xf32>
    %194 = arith.maximumf %192, %193 : vector<56x224xf32>
    %195 = tpu.iota {dimensions = array<i32: 0>} : vector<56x1xi32>
    %c8_i32_124 = arith.constant 8 : i32
    %c0_i32_125 = arith.constant 0 : i32
    %196 = arith.cmpi eq, %c8_i32_124, %c0_i32_125 : i32
    %c1_i32_126 = arith.constant 1 : i32
    %197 = arith.select %196, %c1_i32_126, %c8_i32_124 : i32
    %198 = vector.broadcast %197 : i32 to vector<56x1xi32>
    %199 = arith.remsi %195, %198 : vector<56x1xi32>
    %c0_i32_127 = arith.constant 0 : i32
    %200 = vector.broadcast %c0_i32_127 : i32 to vector<56x1xi32>
    %201 = arith.cmpi ne, %199, %200 : vector<56x1xi32>
    %c0_i32_128 = arith.constant 0 : i32
    %202 = vector.broadcast %c0_i32_128 : i32 to vector<56x1xi32>
    %203 = arith.cmpi slt, %199, %202 : vector<56x1xi32>
    %c0_i32_129 = arith.constant 0 : i32
    %204 = arith.cmpi slt, %197, %c0_i32_129 : i32
    %205 = vector.broadcast %204 : i1 to vector<56x1xi1>
    %206 = vector.broadcast %205 : vector<56x1xi1> to vector<56x1xi1>
    %207 = arith.xori %203, %206 : vector<56x1xi1>
    %208 = arith.andi %207, %201 : vector<56x1xi1>
    %209 = vector.broadcast %197 : i32 to vector<56x1xi32>
    %210 = arith.addi %199, %209 : vector<56x1xi32>
    %211 = arith.select %208, %210, %199 : vector<56x1xi1>, vector<56x1xi32>
    %c2_i32_130 = arith.constant 2 : i32
    %212 = vector.broadcast %c2_i32_130 : i32 to vector<56x1xi32>
    %213 = arith.cmpi slt, %211, %212 : vector<56x1xi32>
    %214 = arith.extui %213 : vector<56x1xi1> to vector<56x1xi32>
    %215 = arith.sitofp %214 : vector<56x1xi32> to vector<56x1xf32>
    %216 = vector.broadcast %215 : vector<56x1xf32> to vector<56x224xf32>
    %217 = arith.mulf %194, %216 : vector<56x224xf32>
    %218 = vector.extract_strided_slice %217 {offsets = [0, 0], sizes = [8, 224], strides = [1, 1]} : vector<56x224xf32> to vector<8x224xf32>
    %c0_131 = arith.constant 0 : index
    %c0_132 = arith.constant 0 : index
    %219 = vector.load %arg20[%c0_131, %c0_132] : memref<64x224xf32, #tpu.memory_space<vmem>>, vector<8x224xf32>
    tpu.vector_store %arg20[%c0_131, %c0_132], %218 {strides = array<i32>} : memref<64x224xf32, #tpu.memory_space<vmem>>, vector<8x224xf32>,
    %220 = vector.extract_strided_slice %217 {offsets = [8, 0], sizes = [8, 224], strides = [1, 1]} : vector<56x224xf32> to vector<8x224xf32>
    %c32_133 = arith.constant 32 : index
    %c0_134 = arith.constant 0 : index
    %221 = vector.load %arg20[%c32_133, %c0_134] : memref<64x224xf32, #tpu.memory_space<vmem>>, vector<8x224xf32>
    tpu.vector_store %arg20[%c32_133, %c0_134], %220 {strides = array<i32>} : memref<64x224xf32, #tpu.memory_space<vmem>>, vector<8x224xf32>,
    %222 = vector.extract_strided_slice %217 {offsets = [16, 0], sizes = [8, 224], strides = [1, 1]} : vector<56x224xf32> to vector<8x224xf32>
    %c8_135 = arith.constant 8 : index
    %c0_136 = arith.constant 0 : index
    %223 = vector.load %arg20[%c8_135, %c0_136] : memref<64x224xf32, #tpu.memory_space<vmem>>, vector<8x224xf32>
    tpu.vector_store %arg20[%c8_135, %c0_136], %222 {strides = array<i32>} : memref<64x224xf32, #tpu.memory_space<vmem>>, vector<8x224xf32>,
    %224 = vector.extract_strided_slice %217 {offsets = [24, 0], sizes = [8, 224], strides = [1, 1]} : vector<56x224xf32> to vector<8x224xf32>
    %c40_137 = arith.constant 40 : index
    %c0_138 = arith.constant 0 : index
    %225 = vector.load %arg20[%c40_137, %c0_138] : memref<64x224xf32, #tpu.memory_space<vmem>>, vector<8x224xf32>
    tpu.vector_store %arg20[%c40_137, %c0_138], %224 {strides = array<i32>} : memref<64x224xf32, #tpu.memory_space<vmem>>, vector<8x224xf32>,
    %226 = vector.extract_strided_slice %217 {offsets = [32, 0], sizes = [8, 224], strides = [1, 1]} : vector<56x224xf32> to vector<8x224xf32>
    %c16_139 = arith.constant 16 : index
    %c0_140 = arith.constant 0 : index
    %227 = vector.load %arg20[%c16_139, %c0_140] : memref<64x224xf32, #tpu.memory_space<vmem>>, vector<8x224xf32>
    tpu.vector_store %arg20[%c16_139, %c0_140], %226 {strides = array<i32>} : memref<64x224xf32, #tpu.memory_space<vmem>>, vector<8x224xf32>,
    %228 = vector.extract_strided_slice %217 {offsets = [40, 0], sizes = [8, 224], strides = [1, 1]} : vector<56x224xf32> to vector<8x224xf32>
    %c48_141 = arith.constant 48 : index
    %c0_142 = arith.constant 0 : index
    %229 = vector.load %arg20[%c48_141, %c0_142] : memref<64x224xf32, #tpu.memory_space<vmem>>, vector<8x224xf32>
    tpu.vector_store %arg20[%c48_141, %c0_142], %228 {strides = array<i32>} : memref<64x224xf32, #tpu.memory_space<vmem>>, vector<8x224xf32>,
    %230 = vector.extract_strided_slice %217 {offsets = [48, 0], sizes = [8, 224], strides = [1, 1]} : vector<56x224xf32> to vector<8x224xf32>
    %c24_143 = arith.constant 24 : index
    %c0_144 = arith.constant 0 : index
    %231 = vector.load %arg20[%c24_143, %c0_144] : memref<64x224xf32, #tpu.memory_space<vmem>>, vector<8x224xf32>
    tpu.vector_store %arg20[%c24_143, %c0_144], %230 {strides = array<i32>} : memref<64x224xf32, #tpu.memory_space<vmem>>, vector<8x224xf32>,
    %c1_i32_145 = arith.constant 1 : i32
    %232 = tpu.memref_slice %arg24[%c1_i32_145] : memref<3x!tpu.dma_semaphore, #tpu.memory_space<semaphore_mem>> -> memref<1x!tpu.dma_semaphore, #tpu.memory_space<semaphore_mem>>
    %233 = tpu.memref_squeeze %232 : memref<1x!tpu.dma_semaphore, #tpu.memory_space<semaphore_mem>> -> memref<!tpu.dma_semaphore, #tpu.memory_space<semaphore_mem>>
    tpu.wait_dma2 semaphore(%233 : memref<!tpu.dma_semaphore, #tpu.memory_space<semaphore_mem>>) src(%arg11 : memref<5x224x64xbf16, #tpu.memory_space<any>>) dst(%arg22 : memref<5x224x64xbf16, #tpu.memory_space<vmem>>)
    %c0_146 = arith.constant 0 : index
    %c0_147 = arith.constant 0 : index
    %234 = vector.load %arg20[%c0_146, %c0_147] : memref<64x224xf32, #tpu.memory_space<vmem>>, vector<16x224xf32>
    %235 = arith.truncf %234 : vector<16x224xf32> to vector<16x224xbf16>
    %c0_148 = arith.constant 0 : index
    %c0_149 = arith.constant 0 : index
    %c0_150 = arith.constant 0 : index
    %236 = vector.load %arg22[%c0_148, %c0_149, %c0_150] : memref<5x224x64xbf16, #tpu.memory_space<vmem>>, vector<1x224x64xbf16>
    %237 = vector.shape_cast %236 : vector<1x224x64xbf16> to vector<224x64xbf16>
    %cst_151 = arith.constant dense<0.000000e+00> : vector<16x64xf32>
    %238 = tpu.matmul %235, %237, %cst_151 {dimension_numbers = #tpu.dot_dimension_numbers<[1], [0], [0], [1], [0, 0, 1, 1], [], []>} : vector<16x224xbf16>, vector<224x64xbf16>, vector<16x64xf32> -> vector<16x64xf32>
    %c32_152 = arith.constant 32 : index
    %c0_153 = arith.constant 0 : index
    %239 = vector.load %arg20[%c32_152, %c0_153] : memref<64x224xf32, #tpu.memory_space<vmem>>, vector<16x224xf32>
    %240 = arith.truncf %239 : vector<16x224xf32> to vector<16x224xbf16>
    %c1_154 = arith.constant 1 : index
    %c0_155 = arith.constant 0 : index
    %c0_156 = arith.constant 0 : index
    %241 = vector.load %arg22[%c1_154, %c0_155, %c0_156] : memref<5x224x64xbf16, #tpu.memory_space<vmem>>, vector<1x224x64xbf16>
    %242 = vector.shape_cast %241 : vector<1x224x64xbf16> to vector<224x64xbf16>
    %cst_157 = arith.constant dense<0.000000e+00> : vector<16x64xf32>
    %243 = tpu.matmul %240, %242, %cst_157 {dimension_numbers = #tpu.dot_dimension_numbers<[1], [0], [0], [1], [0, 0, 1, 1], [], []>} : vector<16x224xbf16>, vector<224x64xbf16>, vector<16x64xf32> -> vector<16x64xf32>
    %244 = arith.addf %238, %243 : vector<16x64xf32>
    %c8_158 = arith.constant 8 : index
    %c0_159 = arith.constant 0 : index
    %245 = vector.load %arg20[%c8_158, %c0_159] : memref<64x224xf32, #tpu.memory_space<vmem>>, vector<16x224xf32>
    %246 = arith.truncf %245 : vector<16x224xf32> to vector<16x224xbf16>
    %c2_160 = arith.constant 2 : index
    %c0_161 = arith.constant 0 : index
    %c0_162 = arith.constant 0 : index
    %247 = vector.load %arg22[%c2_160, %c0_161, %c0_162] : memref<5x224x64xbf16, #tpu.memory_space<vmem>>, vector<1x224x64xbf16>
    %248 = vector.shape_cast %247 : vector<1x224x64xbf16> to vector<224x64xbf16>
    %cst_163 = arith.constant dense<0.000000e+00> : vector<16x64xf32>
    %249 = tpu.matmul %246, %248, %cst_163 {dimension_numbers = #tpu.dot_dimension_numbers<[1], [0], [0], [1], [0, 0, 1, 1], [], []>} : vector<16x224xbf16>, vector<224x64xbf16>, vector<16x64xf32> -> vector<16x64xf32>
    %250 = arith.addf %244, %249 : vector<16x64xf32>
    %c40_164 = arith.constant 40 : index
    %c0_165 = arith.constant 0 : index
    %251 = vector.load %arg20[%c40_164, %c0_165] : memref<64x224xf32, #tpu.memory_space<vmem>>, vector<16x224xf32>
    %252 = arith.truncf %251 : vector<16x224xf32> to vector<16x224xbf16>
    %c3_166 = arith.constant 3 : index
    %c0_167 = arith.constant 0 : index
    %c0_168 = arith.constant 0 : index
    %253 = vector.load %arg22[%c3_166, %c0_167, %c0_168] : memref<5x224x64xbf16, #tpu.memory_space<vmem>>, vector<1x224x64xbf16>
    %254 = vector.shape_cast %253 : vector<1x224x64xbf16> to vector<224x64xbf16>
    %cst_169 = arith.constant dense<0.000000e+00> : vector<16x64xf32>
    %255 = tpu.matmul %252, %254, %cst_169 {dimension_numbers = #tpu.dot_dimension_numbers<[1], [0], [0], [1], [0, 0, 1, 1], [], []>} : vector<16x224xbf16>, vector<224x64xbf16>, vector<16x64xf32> -> vector<16x64xf32>
    %256 = arith.addf %250, %255 : vector<16x64xf32>
    %c16_170 = arith.constant 16 : index
    %c0_171 = arith.constant 0 : index
    %257 = vector.load %arg20[%c16_170, %c0_171] : memref<64x224xf32, #tpu.memory_space<vmem>>, vector<16x224xf32>
    %258 = arith.truncf %257 : vector<16x224xf32> to vector<16x224xbf16>
    %c4_172 = arith.constant 4 : index
    %c0_173 = arith.constant 0 : index
    %c0_174 = arith.constant 0 : index
    %259 = vector.load %arg22[%c4_172, %c0_173, %c0_174] : memref<5x224x64xbf16, #tpu.memory_space<vmem>>, vector<1x224x64xbf16>
    %260 = vector.shape_cast %259 : vector<1x224x64xbf16> to vector<224x64xbf16>
    %cst_175 = arith.constant dense<0.000000e+00> : vector<16x64xf32>
    %261 = tpu.matmul %258, %260, %cst_175 {dimension_numbers = #tpu.dot_dimension_numbers<[1], [0], [0], [1], [0, 0, 1, 1], [], []>} : vector<16x224xbf16>, vector<224x64xbf16>, vector<16x64xf32> -> vector<16x64xf32>
    %262 = arith.addf %256, %261 : vector<16x64xf32>
    %cst_176 = arith.constant dense<0.000000e+00> : vector<64xf32>
    %263 = vector.multi_reduction <add>, %262, %cst_176 [0] : vector<16x64xf32> to vector<64xf32>
    %264 = vector.shape_cast %263 : vector<64xf32> to vector<1x64xf32>
    %265 = arith.mulf %262, %262 : vector<16x64xf32>
    %cst_177 = arith.constant dense<0.000000e+00> : vector<64xf32>
    %266 = vector.multi_reduction <add>, %265, %cst_177 [0] : vector<16x64xf32> to vector<64xf32>
    %267 = vector.shape_cast %266 : vector<64xf32> to vector<1x64xf32>
    %c0_178 = arith.constant 0 : index
    %c0_179 = arith.constant 0 : index
    %268 = vector.load %arg14[%c0_178, %c0_179] : memref<64x32xf32, #tpu.memory_space<vmem>>, vector<64x32xf32>
    %cst_180 = arith.constant dense<0.000000e+00> : vector<1x32xf32>
    %269 = tpu.matmul %264, %268, %cst_180 {dimension_numbers = #tpu.dot_dimension_numbers<[1], [0], [0], [1], [0, 0, 1, 1], [], []>} : vector<1x64xf32>, vector<64x32xf32>, vector<1x32xf32> -> vector<1x32xf32>
    %cst_181 = arith.constant 8.000000e+00 : f32
    %270 = vector.broadcast %cst_181 : f32 to vector<1x32xf32>
    %271 = arith.divf %269, %270 : vector<1x32xf32>
    %c0_182 = arith.constant 0 : index
    %c0_183 = arith.constant 0 : index
    %272 = vector.load %arg14[%c0_182, %c0_183] : memref<64x32xf32, #tpu.memory_space<vmem>>, vector<64x32xf32>
    %cst_184 = arith.constant dense<0.000000e+00> : vector<1x32xf32>
    %273 = tpu.matmul %267, %272, %cst_184 {dimension_numbers = #tpu.dot_dimension_numbers<[1], [0], [0], [1], [0, 0, 1, 1], [], []>} : vector<1x64xf32>, vector<64x32xf32>, vector<1x32xf32> -> vector<1x32xf32>
    %cst_185 = arith.constant 8.000000e+00 : f32
    %274 = vector.broadcast %cst_185 : f32 to vector<1x32xf32>
    %275 = arith.divf %273, %274 : vector<1x32xf32>
    %276 = arith.mulf %271, %271 : vector<1x32xf32>
    %277 = arith.subf %275, %276 : vector<1x32xf32>
    %cst_186 = arith.constant 0.000000e+00 : f32
    %278 = vector.broadcast %cst_186 : f32 to vector<1x32xf32>
    %279 = arith.maximumf %277, %278 : vector<1x32xf32>
    %c0_187 = arith.constant 0 : index
    %c0_188 = arith.constant 0 : index
    %280 = vector.load %arg12[%c0_187, %c0_188] : memref<1x32xf32, #tpu.memory_space<vmem>>, vector<1x32xf32>
    %cst_189 = arith.constant 9.99999974E-6 : f32
    %281 = vector.broadcast %cst_189 : f32 to vector<1x32xf32>
    %282 = arith.addf %279, %281 : vector<1x32xf32>
    %283 = math.rsqrt %282 : vector<1x32xf32>
    %284 = arith.mulf %280, %283 : vector<1x32xf32>
    %c0_190 = arith.constant 0 : index
    %c0_191 = arith.constant 0 : index
    %285 = vector.load %arg13[%c0_190, %c0_191] : memref<1x32xf32, #tpu.memory_space<vmem>>, vector<1x32xf32>
    %286 = arith.mulf %271, %284 : vector<1x32xf32>
    %287 = arith.subf %285, %286 : vector<1x32xf32>
    %c0_192 = arith.constant 0 : index
    %c0_193 = arith.constant 0 : index
    %288 = vector.load %arg15[%c0_192, %c0_193] : memref<32x64xf32, #tpu.memory_space<vmem>>, vector<32x64xf32>
    %cst_194 = arith.constant dense<0.000000e+00> : vector<1x64xf32>
    %289 = tpu.matmul %284, %288, %cst_194 {dimension_numbers = #tpu.dot_dimension_numbers<[1], [0], [0], [1], [0, 0, 1, 1], [], []>} : vector<1x32xf32>, vector<32x64xf32>, vector<1x64xf32> -> vector<1x64xf32>
    %c0_195 = arith.constant 0 : index
    %c0_196 = arith.constant 0 : index
    %290 = vector.load %arg15[%c0_195, %c0_196] : memref<32x64xf32, #tpu.memory_space<vmem>>, vector<32x64xf32>
    %cst_197 = arith.constant dense<0.000000e+00> : vector<1x64xf32>
    %291 = tpu.matmul %287, %290, %cst_197 {dimension_numbers = #tpu.dot_dimension_numbers<[1], [0], [0], [1], [0, 0, 1, 1], [], []>} : vector<1x32xf32>, vector<32x64xf32>, vector<1x64xf32> -> vector<1x64xf32>
    %292 = vector.broadcast %289 : vector<1x64xf32> to vector<16x64xf32>
    %293 = arith.mulf %262, %292 : vector<16x64xf32>
    %294 = vector.broadcast %291 : vector<1x64xf32> to vector<16x64xf32>
    %295 = arith.addf %293, %294 : vector<16x64xf32>
    %cst_198 = arith.constant 0.000000e+00 : f32
    %296 = vector.broadcast %cst_198 : f32 to vector<16x64xf32>
    %297 = arith.maximumf %295, %296 : vector<16x64xf32>
    %298 = tpu.iota {dimensions = array<i32: 0>} : vector<16x1xi32>
    %c8_i32_199 = arith.constant 8 : i32
    %c0_i32_200 = arith.constant 0 : i32
    %299 = arith.cmpi eq, %c8_i32_199, %c0_i32_200 : i32
    %c1_i32_201 = arith.constant 1 : i32
    %300 = arith.select %299, %c1_i32_201, %c8_i32_199 : i32
    %301 = vector.broadcast %300 : i32 to vector<16x1xi32>
    %302 = arith.remsi %298, %301 : vector<16x1xi32>
    %c0_i32_202 = arith.constant 0 : i32
    %303 = vector.broadcast %c0_i32_202 : i32 to vector<16x1xi32>
    %304 = arith.cmpi ne, %302, %303 : vector<16x1xi32>
    %c0_i32_203 = arith.constant 0 : i32
    %305 = vector.broadcast %c0_i32_203 : i32 to vector<16x1xi32>
    %306 = arith.cmpi slt, %302, %305 : vector<16x1xi32>
    %c0_i32_204 = arith.constant 0 : i32
    %307 = arith.cmpi slt, %300, %c0_i32_204 : i32
    %308 = vector.broadcast %307 : i1 to vector<16x1xi1>
    %309 = vector.broadcast %308 : vector<16x1xi1> to vector<16x1xi1>
    %310 = arith.xori %306, %309 : vector<16x1xi1>
    %311 = arith.andi %310, %304 : vector<16x1xi1>
    %312 = vector.broadcast %300 : i32 to vector<16x1xi32>
    %313 = arith.addi %302, %312 : vector<16x1xi32>
    %314 = arith.select %311, %313, %302 : vector<16x1xi1>, vector<16x1xi32>
    %c2_i32_205 = arith.constant 2 : i32
    %315 = vector.broadcast %c2_i32_205 : i32 to vector<16x1xi32>
    %316 = arith.cmpi slt, %314, %315 : vector<16x1xi32>
    %317 = arith.extui %316 : vector<16x1xi1> to vector<16x1xi32>
    %318 = arith.sitofp %317 : vector<16x1xi32> to vector<16x1xf32>
    %319 = vector.broadcast %318 : vector<16x1xf32> to vector<16x64xf32>
    %320 = arith.mulf %297, %319 : vector<16x64xf32>
    %c2_i32_206 = arith.constant 2 : i32
    %321 = tpu.memref_slice %arg24[%c2_i32_206] : memref<3x!tpu.dma_semaphore, #tpu.memory_space<semaphore_mem>> -> memref<1x!tpu.dma_semaphore, #tpu.memory_space<semaphore_mem>>
    %322 = tpu.memref_squeeze %321 : memref<1x!tpu.dma_semaphore, #tpu.memory_space<semaphore_mem>> -> memref<!tpu.dma_semaphore, #tpu.memory_space<semaphore_mem>>
    tpu.wait_dma2 semaphore(%322 : memref<!tpu.dma_semaphore, #tpu.memory_space<semaphore_mem>>) src(%arg16 : memref<2x64x2xbf16, #tpu.memory_space<any>>) dst(%arg23 : memref<2x64x2xbf16, #tpu.memory_space<vmem>>)
    %323 = vector.extract_strided_slice %320 {offsets = [0, 0], sizes = [8, 64], strides = [1, 1]} : vector<16x64xf32> to vector<8x64xf32>
    %324 = arith.truncf %323 : vector<8x64xf32> to vector<8x64xbf16>
    %c0_207 = arith.constant 0 : index
    %c0_208 = arith.constant 0 : index
    %c0_209 = arith.constant 0 : index
    %325 = vector.load %arg23[%c0_207, %c0_208, %c0_209] : memref<2x64x2xbf16, #tpu.memory_space<vmem>>, vector<1x64x2xbf16>
    %326 = vector.shape_cast %325 : vector<1x64x2xbf16> to vector<64x2xbf16>
    %cst_210 = arith.constant dense<0.000000e+00> : vector<8x2xf32>
    %327 = tpu.matmul %324, %326, %cst_210 {dimension_numbers = #tpu.dot_dimension_numbers<[1], [0], [0], [1], [0, 0, 1, 1], [], []>} : vector<8x64xbf16>, vector<64x2xbf16>, vector<8x2xf32> -> vector<8x2xf32>
    %328 = vector.extract_strided_slice %320 {offsets = [8, 0], sizes = [8, 64], strides = [1, 1]} : vector<16x64xf32> to vector<8x64xf32>
    %329 = arith.truncf %328 : vector<8x64xf32> to vector<8x64xbf16>
    %c1_211 = arith.constant 1 : index
    %c0_212 = arith.constant 0 : index
    %c0_213 = arith.constant 0 : index
    %330 = vector.load %arg23[%c1_211, %c0_212, %c0_213] : memref<2x64x2xbf16, #tpu.memory_space<vmem>>, vector<1x64x2xbf16>
    %331 = vector.shape_cast %330 : vector<1x64x2xbf16> to vector<64x2xbf16>
    %cst_214 = arith.constant dense<0.000000e+00> : vector<8x2xf32>
    %332 = tpu.matmul %329, %331, %cst_214 {dimension_numbers = #tpu.dot_dimension_numbers<[1], [0], [0], [1], [0, 0, 1, 1], [], []>} : vector<8x64xbf16>, vector<64x2xbf16>, vector<8x2xf32> -> vector<8x2xf32>
    %333 = arith.addf %327, %332 : vector<8x2xf32>
    %c0_215 = arith.constant 0 : index
    %c0_216 = arith.constant 0 : index
    %334 = vector.load %arg17[%c0_215, %c0_216] : memref<1x2xf32, #tpu.memory_space<vmem>>, vector<1x2xf32>
    %335 = vector.broadcast %334 : vector<1x2xf32> to vector<8x2xf32>
    %336 = arith.addf %333, %335 : vector<8x2xf32>
    %c0_217 = arith.constant 0 : index
    %c0_218 = arith.constant 0 : index
    %337 = vector.load %arg18[%c0_217, %c0_218] : memref<8x2xf32, #tpu.memory_space<vmem>>, vector<8x2xf32>
    tpu.vector_store %arg18[%c0_217, %c0_218], %336 {strides = array<i32>} : memref<8x2xf32, #tpu.memory_space<vmem>>, vector<8x2xf32>,
    return
  }
}

</mosaic_0001>

<llo_original>
// kernel: dqn_forward.1
$region0: #{dqn_forward.1}
  #allocation0 [shape = 'u32[]', space=smem, size = 0x4, offset = 0x4, fixed_abs, tag = 'smem constant byte address 0x4 - core index']
  #allocation1 [shape = 'u32[144,128]{1,0:T(1,128)}', space=vmem, size = 0x12000, scoped, tag = 'internal scratch']
  #allocation2 [shape = 'f32[144,288]{1,0:T(8,128)}', space=vmem, size = 0x36000, scoped, tag = 'scratch operand']
  #allocation3 [shape = 'f32[64,224]{1,0:T(8,128)}', space=vmem, size = 0x10000, scoped, tag = 'scratch operand']
  #allocation4 [shape = 'bf16[5,288,224]{2,1,0:T(16,128)(2,1)}', space=vmem, size = 0xb4000, scoped, tag = 'scratch operand']
  #allocation5 [shape = 'bf16[5,224,64]{2,1,0:T(16,128)(2,1)}', space=vmem, size = 0x46000, scoped, tag = 'scratch operand']
  #allocation6 [shape = 'bf16[2,64,2]{2,1,0:T(16,128)(2,1)}', space=vmem, size = 0x8000, scoped, tag = 'scratch operand']
  #allocation7 [shape = 's32[3]{0}', space=sflag, size = 0xc, scoped, tag = 'scratch operand']
  #allocation8 [shape = 's32[]', space=sflag, size = 0x4, offset = 0, fixed_abs, tag = 'sflag constant byte address 0x0 - dummy sync flag']
  #allocation9 [shape = 's32[]', space=sflag, size = 0x4, offset = 0, fixed_abs, tag = 'sflag constant byte address 0x0 - dummy sync flag']
  #allocation10 [shape = 's32[]', space=sflag, size = 0x4, offset = 0, fixed_abs, tag = 'sflag constant byte address 0x0 - dummy sync flag']
  %s0 = inlined_call_operand.vmem [shape: f32[320,120], index: 0, kind: input, shape index: {}]
  %s1 = inlined_call_operand.vmem [shape: bf16[5,120,288], index: 1, kind: input, shape index: {}]
  %s2 = inlined_call_operand.vmem [shape: f32[1,16], index: 2, kind: input, shape index: {}]
  %s3 = inlined_call_operand.vmem [shape: f32[1,16], index: 3, kind: input, shape index: {}]
  %s4 = inlined_call_operand.vmem [shape: f32[288,16], index: 4, kind: input, shape index: {}]
  %s5 = inlined_call_operand.vmem [shape: f32[16,288], index: 5, kind: input, shape index: {}]
  %s6 = inlined_call_operand.vmem [shape: bf16[5,288,224], index: 6, kind: input, shape index: {}]
  %s7 = inlined_call_operand.vmem [shape: f32[1,32], index: 7, kind: input, shape index: {}]
  %s8 = inlined_call_operand.vmem [shape: f32[1,32], index: 8, kind: input, shape index: {}]
  %s9 = inlined_call_operand.vmem [shape: f32[224,32], index: 9, kind: input, shape index: {}]
  %s10 = inlined_call_operand.vmem [shape: f32[32,224], index: 10, kind: input, shape index: {}]
  %s11 = inlined_call_operand.vmem [shape: bf16[5,224,64], index: 11, kind: input, shape index: {}]
  %s12 = inlined_call_operand.vmem [shape: f32[1,32], index: 12, kind: input, shape index: {}]
  %s13 = inlined_call_operand.vmem [shape: f32[1,32], index: 13, kind: input, shape index: {}]
  %s14 = inlined_call_operand.vmem [shape: f32[64,32], index: 14, kind: input, shape index: {}]
  %s15 = inlined_call_operand.vmem [shape: f32[32,64], index: 15, kind: input, shape index: {}]
  %s16 = inlined_call_operand.vmem [shape: bf16[2,64,2], index: 16, kind: input, shape index: {}]
  %s17 = inlined_call_operand.vmem [shape: f32[1,2], index: 17, kind: input, shape index: {}]
  %s18 = inlined_call_operand.vmem [shape: f32[8,2], index: 18, kind: output, shape index: {}]
  %s19 = sld [smem:[#allocation0]]
  $region175: #{dqn_forward.1} parent=0
    _
  %s21 = ssub.s32 1, %s19
  %s22 = scalar_select 0, %s21, %s19
  // Predicated region
  $region2: #{dqn_forward.1} parent=0 // pred_check
    _
  $region3: #{dqn_forward.1} parent=0 // pred_check_branch
    %24 = sbr.rel (0) target = $region5
  $region4: #{dqn_forward.1} parent=0 // pred_region
    _
  $region5: #{dqn_forward.1} parent=0 // pred_fallthru
    _
  // Predicated region
  $region6: #{dqn_forward.1} parent=0 // pred_check
    _
  $region7: #{dqn_forward.1} parent=0 // pred_check_branch
    %26 = sbr.rel (0) target = $region9
  $region8: #{dqn_forward.1} parent=0 // pred_region
    _
  $region9: #{dqn_forward.1} parent=0 // pred_fallthru
    _
  // Predicated region
  $region10: #{dqn_forward.1} parent=0 // pred_check
    _
  $region11: #{dqn_forward.1} parent=0 // pred_check_branch
    %28 = sbr.rel (0) target = $region13
  $region12: #{dqn_forward.1} parent=0 // pred_region
    _
  $region13: #{dqn_forward.1} parent=0 // pred_fallthru
    _
  // Predicated region
  $region14: #{dqn_forward.1} parent=0 // pred_check
    _
  $region15: #{dqn_forward.1} parent=0 // pred_check_branch
    %30 = sbr.rel (0) target = $region17
  $region16: #{dqn_forward.1} parent=0 // pred_region
    _
  $region17: #{dqn_forward.1} parent=0 // pred_fallthru
    _
  // Predicated region
  $region18: #{dqn_forward.1} parent=0 // pred_check
    _
  $region19: #{dqn_forward.1} parent=0 // pred_check_branch
    %32 = sbr.rel (0) target = $region21
  $region20: #{dqn_forward.1} parent=0 // pred_region
    _
  $region21: #{dqn_forward.1} parent=0 // pred_fallthru
    _
  // Predicated region
  $region22: #{dqn_forward.1} parent=0 // pred_check
    _
  $region23: #{dqn_forward.1} parent=0 // pred_check_branch
    %34 = sbr.rel (0) target = $region25
  $region24: #{dqn_forward.1} parent=0 // pred_region
    _
  $region25: #{dqn_forward.1} parent=0 // pred_fallthru
    _
  // Predicated region
  $region26: #{dqn_forward.1} parent=0 // pred_check
    _
  $region27: #{dqn_forward.1} parent=0 // pred_check_branch
    %36 = sbr.rel (0) target = $region29
  $region28: #{dqn_forward.1} parent=0 // pred_region
    _
  $region29: #{dqn_forward.1} parent=0 // pred_fallthru
    _
  // Predicated region
  $region30: #{dqn_forward.1} parent=0 // pred_check
    _
  $region31: #{dqn_forward.1} parent=0 // pred_check_branch
    %38 = sbr.rel (0) target = $region33
  $region32: #{dqn_forward.1} parent=0 // pred_region
    _
  $region33: #{dqn_forward.1} parent=0 // pred_fallthru
    _
  // Predicated region
  $region34: #{dqn_forward.1} parent=0 // pred_check
    _
  $region35: #{dqn_forward.1} parent=0 // pred_check_branch
    %40 = sbr.rel (0) target = $region37
  $region36: #{dqn_forward.1} parent=0 // pred_region
    _
  $region37: #{dqn_forward.1} parent=0 // pred_fallthru
    _
  // Predicated region
  $region38: #{dqn_forward.1} parent=0 // pred_check
    _
  $region39: #{dqn_forward.1} parent=0 // pred_check_branch
    %42 = sbr.rel (0) target = $region41
  $region40: #{dqn_forward.1} parent=0 // pred_region
    _
  $region41: #{dqn_forward.1} parent=0 // pred_fallthru
    _
  // Predicated region
  $region42: #{dqn_forward.1} parent=0 // pred_check
    _
  $region43: #{dqn_forward.1} parent=0 // pred_check_branch
    %44 = sbr.rel (0) target = $region45
  $region44: #{dqn_forward.1} parent=0 // pred_region
    _
  $region45: #{dqn_forward.1} parent=0 // pred_fallthru
    _
  // Predicated region
  $region46: #{dqn_forward.1} parent=0 // pred_check
    _
  $region47: #{dqn_forward.1} parent=0 // pred_check_branch
    %46 = sbr.rel (0) target = $region49
  $region48: #{dqn_forward.1} parent=0 // pred_region
    _
  $region49: #{dqn_forward.1} parent=0 // pred_fallthru
    _
  // Predicated region
  $region50: #{dqn_forward.1} parent=0 // pred_check
    _
  $region51: #{dqn_forward.1} parent=0 // pred_check_branch
    %48 = sbr.rel (0) target = $region53
  $region52: #{dqn_forward.1} parent=0 // pred_region
    _
  $region53: #{dqn_forward.1} parent=0 // pred_fallthru
    _
  // Predicated region
  $region54: #{dqn_forward.1} parent=0 // pred_check
    _
  $region55: #{dqn_forward.1} parent=0 // pred_check_branch
    %50 = sbr.rel (0) target = $region57
  $region56: #{dqn_forward.1} parent=0 // pred_region
    _
  $region57: #{dqn_forward.1} parent=0 // pred_fallthru
    _
  // Predicated region
  $region58: #{dqn_forward.1} parent=0 // pred_check
    _
  $region59: #{dqn_forward.1} parent=0 // pred_check_branch
    %52 = sbr.rel (0) target = $region61
  $region60: #{dqn_forward.1} parent=0 // pred_region
    _
  $region61: #{dqn_forward.1} parent=0 // pred_fallthru
    _
  %p55 = scmp.lt.u32.totalorder 4, 8
  %p56 = pneg %p55
  // Predicated region
  $region62: #{dqn_forward.1} parent=0 // pred_check
    _
  $region63: #{dqn_forward.1} parent=0 // pred_check_branch
    %58 = sbr.rel (%p55) target = $region65
  $region64: #{dqn_forward.1} parent=0 // pred_region
    %s791 = sand.u32 4, 7
    %p792 = scmp.eq.s32.totalorder %s791, 0
    %p793 = pneg %p792
    // Predicated region
    $region77: #{dqn_forward.1} parent=64 // pred_check
      _
    $region78: #{dqn_forward.1} parent=64 // pred_check_branch
      %795 = sbr.rel (%p792) target = $region80
    $region79: #{dqn_forward.1} parent=64 // pred_region
      %s796 = sand.u32 4, 7
      %s797 = ssub.s32 4, %s796
      %s798 = scalar_lea.vmem %s6, %s797
      %s799 = ssub.s32 4, %s796
      %s800 = scalar_lea.vmem [#allocation4], %s799
      loop: start=0, step=1, limit=1
      $region81: #{dqn_forward.1} parent=79 // loop_pre_header
        _
      $region82: #{dqn_forward.1} parent=79 // loop_header
        %s802 = sphi 0, %s806
        %p803 = scmp.ge.s32.totalorder %s802, 1
        %s807 = sphi %s6, %s6
        %s808 = sphi [#allocation4], [#allocation4]
      $region83: #{dqn_forward.1} parent=79 // loop_header_branch
        %805 = sbr.rel (%p803) target = $region87
      $region84: #{dqn_forward.1} parent=79 // loop_body
        _
      $region85: #{dqn_forward.1} parent=79 // loop_footer
        %s806 = sadd.s32 1, %s802
      $region86: #{dqn_forward.1} parent=79 // loop_footer_branch
        %801 = sbr.rel target = $region82
      $region87: #{dqn_forward.1} parent=79 // loop_exit
        _
      %s809 = sshllo.u32 0, %s796
      loop: start=0, step=1, limit=1
      $region88: #{dqn_forward.1} parent=79 // loop_pre_header
        _
      $region89: #{dqn_forward.1} parent=79 // loop_header
        %s811 = sphi 0, %s815
        %p812 = scmp.ge.s32.totalorder %s811, 1
        %s816 = sphi %s798, %s798
        %s817 = sphi %s800, %s800
      $region90: #{dqn_forward.1} parent=79 // loop_header_branch
        %814 = sbr.rel (%p812) target = $region94
      $region91: #{dqn_forward.1} parent=79 // loop_body
        %v818 = vld [vmem:[%s816] sm:%s809]
        %819 = vst [vmem:[%s817] sm:%s809] %v818
        %v820 = vld [vmem:[%s816 + $0x8] sm:%s809]
        %821 = vst [vmem:[%s817 + $0x4] sm:%s809] %v820
        %v822 = vld [vmem:[%s816 + $0x4] sm:%s809]
        %823 = vst [vmem:[%s817 + $0x8] sm:%s809] %v822
        %v824 = vld [vmem:[%s816 + $0xc] sm:%s809]
        %825 = vst [vmem:[%s817 + $0xc] sm:%s809] %v824
        %v826 = vld [vmem:[%s816 + $0x10] sm:%s809]
        %827 = vst [vmem:[%s817 + $0x10] sm:%s809] %v826
        %v828 = vld [vmem:[%s816 + $0x18] sm:%s809]
        %829 = vst [vmem:[%s817 + $0x14] sm:%s809] %v828
        %v830 = vld [vmem:[%s816 + $0x14] sm:%s809]
        %831 = vst [vmem:[%s817 + $0x18] sm:%s809] %v830
        %v832 = vld [vmem:[%s816 + $0x1c] sm:%s809]
        %833 = vst [vmem:[%s817 + $0x1c] sm:%s809] %v832
        %v834 = vld [vmem:[%s816 + $0x20] sm:%s809]
        %835 = vst [vmem:[%s817 + $0x20] sm:%s809] %v834
        %v836 = vld [vmem:[%s816 + $0x28] sm:%s809]
        %837 = vst [vmem:[%s817 + $0x24] sm:%s809] %v836
        %v838 = vld [vmem:[%s816 + $0x24] sm:%s809]
        %839 = vst [vmem:[%s817 + $0x28] sm:%s809] %v838
        %v840 = vld [vmem:[%s816 + $0x2c] sm:%s809]
        %841 = vst [vmem:[%s817 + $0x2c] sm:%s809] %v840
        %v842 = vld [vmem:[%s816 + $0x30] sm:%s809]
        %843 = vst [vmem:[%s817 + $0x30] sm:%s809] %v842
        %v844 = vld [vmem:[%s816 + $0x38] sm:%s809]
        %845 = vst [vmem:[%s817 + $0x34] sm:%s809] %v844
        %v846 = vld [vmem:[%s816 + $0x34] sm:%s809]
        %847 = vst [vmem:[%s817 + $0x38] sm:%s809] %v846
        %v848 = vld [vmem:[%s816 + $0x3c] sm:%s809]
        %849 = vst [vmem:[%s817 + $0x3c] sm:%s809] %v848
        %v850 = vld [vmem:[%s816 + $0x40] sm:%s809]
        %851 = vst [vmem:[%s817 + $0x40] sm:%s809] %v850
        %v852 = vld [vmem:[%s816 + $0x48] sm:%s809]
        %853 = vst [vmem:[%s817 + $0x44] sm:%s809] %v852
        %v854 = vld [vmem:[%s816 + $0x44] sm:%s809]
        %855 = vst [vmem:[%s817 + $0x48] sm:%s809] %v854
        %v856 = vld [vmem:[%s816 + $0x4c] sm:%s809]
        %857 = vst [vmem:[%s817 + $0x4c] sm:%s809] %v856
        %v858 = vld [vmem:[%s816 + $0x50] sm:%s809]
        %859 = vst [vmem:[%s817 + $0x50] sm:%s809] %v858
        %v860 = vld [vmem:[%s816 + $0x58] sm:%s809]
        %861 = vst [vmem:[%s817 + $0x54] sm:%s809] %v860
        %v862 = vld [vmem:[%s816 + $0x54] sm:%s809]
        %863 = vst [vmem:[%s817 + $0x58] sm:%s809] %v862
        %v864 = vld [vmem:[%s816 + $0x5c] sm:%s809]
        %865 = vst [vmem:[%s817 + $0x5c] sm:%s809] %v864
        %v866 = vld [vmem:[%s816 + $0x60] sm:%s809]
        %867 = vst [vmem:[%s817 + $0x60] sm:%s809] %v866
        %v868 = vld [vmem:[%s816 + $0x68] sm:%s809]
        %869 = vst [vmem:[%s817 + $0x64] sm:%s809] %v868
        %v870 = vld [vmem:[%s816 + $0x64] sm:%s809]
        %871 = vst [vmem:[%s817 + $0x68] sm:%s809] %v870
        %v872 = vld [vmem:[%s816 + $0x6c] sm:%s809]
        %873 = vst [vmem:[%s817 + $0x6c] sm:%s809] %v872
        %v874 = vld [vmem:[%s816 + $0x70] sm:%s809]
        %875 = vst [vmem:[%s817 + $0x70] sm:%s809] %v874
        %v876 = vld [vmem:[%s816 + $0x78] sm:%s809]
        %877 = vst [vmem:[%s817 + $0x74] sm:%s809] %v876
        %v878 = vld [vmem:[%s816 + $0x74] sm:%s809]
        %879 = vst [vmem:[%s817 + $0x78] sm:%s809] %v878
        %v880 = vld [vmem:[%s816 + $0x7c] sm:%s809]
        %881 = vst [vmem:[%s817 + $0x7c] sm:%s809] %v880
        %v882 = vld [vmem:[%s816 + $0x80] sm:%s809]
        %883 = vst [vmem:[%s817 + $0x80] sm:%s809] %v882
        %v884 = vld [vmem:[%s816 + $0x88] sm:%s809]
        %885 = vst [vmem:[%s817 + $0x84] sm:%s809] %v884
        %v886 = vld [vmem:[%s816 + $0x84] sm:%s809]
        %887 = vst [vmem:[%s817 + $0x88] sm:%s809] %v886
        %v888 = vld [vmem:[%s816 + $0x8c] sm:%s809]
        %889 = vst [vmem:[%s817 + $0x8c] sm:%s809] %v888
        %v890 = vld [vmem:[%s816 + $0x90] sm:%s809]
        %891 = vst [vmem:[%s817 + $0x90] sm:%s809] %v890
        %v892 = vld [vmem:[%s816 + $0x98] sm:%s809]
        %893 = vst [vmem:[%s817 + $0x94] sm:%s809] %v892
        %v894 = vld [vmem:[%s816 + $0x94] sm:%s809]
        %895 = vst [vmem:[%s817 + $0x98] sm:%s809] %v894
        %v896 = vld [vmem:[%s816 + $0x9c] sm:%s809]
        %897 = vst [vmem:[%s817 + $0x9c] sm:%s809] %v896
        %v898 = vld [vmem:[%s816 + $0xa0] sm:%s809]
        %899 = vst [vmem:[%s817 + $0xa0] sm:%s809] %v898
        %v900 = vld [vmem:[%s816 + $0xa8] sm:%s809]
        %901 = vst [vmem:[%s817 + $0xa4] sm:%s809] %v900
        %v902 = vld [vmem:[%s816 + $0xa4] sm:%s809]
        %903 = vst [vmem:[%s817 + $0xa8] sm:%s809] %v902
        %v904 = vld [vmem:[%s816 + $0xac] sm:%s809]
        %905 = vst [vmem:[%s817 + $0xac] sm:%s809] %v904
        %v906 = vld [vmem:[%s816 + $0xb0] sm:%s809]
        %907 = vst [vmem:[%s817 + $0xb0] sm:%s809] %v906
        %v908 = vld [vmem:[%s816 + $0xb8] sm:%s809]
        %909 = vst [vmem:[%s817 + $0xb4] sm:%s809] %v908
        %v910 = vld [vmem:[%s816 + $0xb4] sm:%s809]
        %911 = vst [vmem:[%s817 + $0xb8] sm:%s809] %v910
        %v912 = vld [vmem:[%s816 + $0xbc] sm:%s809]
        %913 = vst [vmem:[%s817 + $0xbc] sm:%s809] %v912
        %v914 = vld [vmem:[%s816 + $0xc0] sm:%s809]
        %915 = vst [vmem:[%s817 + $0xc0] sm:%s809] %v914
        %v916 = vld [vmem:[%s816 + $0xc8] sm:%s809]
        %917 = vst [vmem:[%s817 + $0xc4] sm:%s809] %v916
        %v918 = vld [vmem:[%s816 + $0xc4] sm:%s809]
        %919 = vst [vmem:[%s817 + $0xc8] sm:%s809] %v918
        %v920 = vld [vmem:[%s816 + $0xcc] sm:%s809]
        %921 = vst [vmem:[%s817 + $0xcc] sm:%s809] %v920
        %v922 = vld [vmem:[%s816 + $0xd0] sm:%s809]
        %923 = vst [vmem:[%s817 + $0xd0] sm:%s809] %v922
        %v924 = vld [vmem:[%s816 + $0xd8] sm:%s809]
        %925 = vst [vmem:[%s817 + $0xd4] sm:%s809] %v924
        %v926 = vld [vmem:[%s816 + $0xd4] sm:%s809]
        %927 = vst [vmem:[%s817 + $0xd8] sm:%s809] %v926
        %v928 = vld [vmem:[%s816 + $0xdc] sm:%s809]
        %929 = vst [vmem:[%s817 + $0xdc] sm:%s809] %v928
        %v930 = vld [vmem:[%s816 + $0xe0] sm:%s809]
        %931 = vst [vmem:[%s817 + $0xe0] sm:%s809] %v930
        %v932 = vld [vmem:[%s816 + $0xe8] sm:%s809]
        %933 = vst [vmem:[%s817 + $0xe4] sm:%s809] %v932
        %v934 = vld [vmem:[%s816 + $0xe4] sm:%s809]
        %935 = vst [vmem:[%s817 + $0xe8] sm:%s809] %v934
        %v936 = vld [vmem:[%s816 + $0xec] sm:%s809]
        %937 = vst [vmem:[%s817 + $0xec] sm:%s809] %v936
        %v938 = vld [vmem:[%s816 + $0xf0] sm:%s809]
        %939 = vst [vmem:[%s817 + $0xf0] sm:%s809] %v938
        %v940 = vld [vmem:[%s816 + $0xf8] sm:%s809]
        %941 = vst [vmem:[%s817 + $0xf4] sm:%s809] %v940
        %v942 = vld [vmem:[%s816 + $0xf4] sm:%s809]
        %943 = vst [vmem:[%s817 + $0xf8] sm:%s809] %v942
        %v944 = vld [vmem:[%s816 + $0xfc] sm:%s809]
        %945 = vst [vmem:[%s817 + $0xfc] sm:%s809] %v944
        %v946 = vld [vmem:[%s816 + $0x100] sm:%s809]
        %947 = vst [vmem:[%s817 + $0x100] sm:%s809] %v946
        %v948 = vld [vmem:[%s816 + $0x108] sm:%s809]
        %949 = vst [vmem:[%s817 + $0x104] sm:%s809] %v948
        %v950 = vld [vmem:[%s816 + $0x104] sm:%s809]
        %951 = vst [vmem:[%s817 + $0x108] sm:%s809] %v950
        %v952 = vld [vmem:[%s816 + $0x10c] sm:%s809]
        %953 = vst [vmem:[%s817 + $0x10c] sm:%s809] %v952
        %v954 = vld [vmem:[%s816 + $0x110] sm:%s809]
        %955 = vst [vmem:[%s817 + $0x110] sm:%s809] %v954
        %v956 = vld [vmem:[%s816 + $0x118] sm:%s809]
        %957 = vst [vmem:[%s817 + $0x114] sm:%s809] %v956
        %v958 = vld [vmem:[%s816 + $0x114] sm:%s809]
        %959 = vst [vmem:[%s817 + $0x118] sm:%s809] %v958
        %v960 = vld [vmem:[%s816 + $0x11c] sm:%s809]
        %961 = vst [vmem:[%s817 + $0x11c] sm:%s809] %v960
        %v962 = vld [vmem:[%s816 + $0x120] sm:%s809]
        %963 = vst [vmem:[%s817 + $0x120] sm:%s809] %v962
        %v964 = vld [vmem:[%s816 + $0x128] sm:%s809]
        %965 = vst [vmem:[%s817 + $0x124] sm:%s809] %v964
        %v966 = vld [vmem:[%s816 + $0x124] sm:%s809]
        %967 = vst [vmem:[%s817 + $0x128] sm:%s809] %v966
        %v968 = vld [vmem:[%s816 + $0x12c] sm:%s809]
        %969 = vst [vmem:[%s817 + $0x12c] sm:%s809] %v968
        %v970 = vld [vmem:[%s816 + $0x130] sm:%s809]
        %971 = vst [vmem:[%s817 + $0x130] sm:%s809] %v970
        %v972 = vld [vmem:[%s816 + $0x138] sm:%s809]
        %973 = vst [vmem:[%s817 + $0x134] sm:%s809] %v972
        %v974 = vld [vmem:[%s816 + $0x134] sm:%s809]
        %975 = vst [vmem:[%s817 + $0x138] sm:%s809] %v974
        %v976 = vld [vmem:[%s816 + $0x13c] sm:%s809]
        %977 = vst [vmem:[%s817 + $0x13c] sm:%s809] %v976
        %v978 = vld [vmem:[%s816 + $0x140] sm:%s809]
        %979 = vst [vmem:[%s817 + $0x140] sm:%s809] %v978
        %v980 = vld [vmem:[%s816 + $0x148] sm:%s809]
        %981 = vst [vmem:[%s817 + $0x144] sm:%s809] %v980
        %v982 = vld [vmem:[%s816 + $0x144] sm:%s809]
        %983 = vst [vmem:[%s817 + $0x148] sm:%s809] %v982
        %v984 = vld [vmem:[%s816 + $0x14c] sm:%s809]
        %985 = vst [vmem:[%s817 + $0x14c] sm:%s809] %v984
        %v986 = vld [vmem:[%s816 + $0x150] sm:%s809]
        %987 = vst [vmem:[%s817 + $0x150] sm:%s809] %v986
        %v988 = vld [vmem:[%s816 + $0x158] sm:%s809]
        %989 = vst [vmem:[%s817 + $0x154] sm:%s809] %v988
        %v990 = vld [vmem:[%s816 + $0x154] sm:%s809]
        %991 = vst [vmem:[%s817 + $0x158] sm:%s809] %v990
        %v992 = vld [vmem:[%s816 + $0x15c] sm:%s809]
        %993 = vst [vmem:[%s817 + $0x15c] sm:%s809] %v992
        %v994 = vld [vmem:[%s816 + $0x160] sm:%s809]
        %995 = vst [vmem:[%s817 + $0x160] sm:%s809] %v994
        %v996 = vld [vmem:[%s816 + $0x168] sm:%s809]
        %997 = vst [vmem:[%s817 + $0x164] sm:%s809] %v996
        %v998 = vld [vmem:[%s816 + $0x164] sm:%s809]
        %999 = vst [vmem:[%s817 + $0x168] sm:%s809] %v998
        %v1000 = vld [vmem:[%s816 + $0x16c] sm:%s809]
        %1001 = vst [vmem:[%s817 + $0x16c] sm:%s809] %v1000
        %v1002 = vld [vmem:[%s816 + $0x170] sm:%s809]
        %1003 = vst [vmem:[%s817 + $0x170] sm:%s809] %v1002
        %v1004 = vld [vmem:[%s816 + $0x178] sm:%s809]
        %1005 = vst [vmem:[%s817 + $0x174] sm:%s809] %v1004
        %v1006 = vld [vmem:[%s816 + $0x174] sm:%s809]
        %1007 = vst [vmem:[%s817 + $0x178] sm:%s809] %v1006
        %v1008 = vld [vmem:[%s816 + $0x17c] sm:%s809]
        %1009 = vst [vmem:[%s817 + $0x17c] sm:%s809] %v1008
        %v1010 = vld [vmem:[%s816 + $0x180] sm:%s809]
        %1011 = vst [vmem:[%s817 + $0x180] sm:%s809] %v1010
        %v1012 = vld [vmem:[%s816 + $0x188] sm:%s809]
        %1013 = vst [vmem:[%s817 + $0x184] sm:%s809] %v1012
        %v1014 = vld [vmem:[%s816 + $0x184] sm:%s809]
        %1015 = vst [vmem:[%s817 + $0x188] sm:%s809] %v1014
        %v1016 = vld [vmem:[%s816 + $0x18c] sm:%s809]
        %1017 = vst [vmem:[%s817 + $0x18c] sm:%s809] %v1016
        %v1018 = vld [vmem:[%s816 + $0x190] sm:%s809]
        %1019 = vst [vmem:[%s817 + $0x190] sm:%s809] %v1018
        %v1020 = vld [vmem:[%s816 + $0x198] sm:%s809]
        %1021 = vst [vmem:[%s817 + $0x194] sm:%s809] %v1020
        %v1022 = vld [vmem:[%s816 + $0x194] sm:%s809]
        %1023 = vst [vmem:[%s817 + $0x198] sm:%s809] %v1022
        %v1024 = vld [vmem:[%s816 + $0x19c] sm:%s809]
        %1025 = vst [vmem:[%s817 + $0x19c] sm:%s809] %v1024
        %v1026 = vld [vmem:[%s816 + $0x1a0] sm:%s809]
        %1027 = vst [vmem:[%s817 + $0x1a0] sm:%s809] %v1026
        %v1028 = vld [vmem:[%s816 + $0x1a8] sm:%s809]
        %1029 = vst [vmem:[%s817 + $0x1a4] sm:%s809] %v1028
        %v1030 = vld [vmem:[%s816 + $0x1a4] sm:%s809]
        %1031 = vst [vmem:[%s817 + $0x1a8] sm:%s809] %v1030
        %v1032 = vld [vmem:[%s816 + $0x1ac] sm:%s809]
        %1033 = vst [vmem:[%s817 + $0x1ac] sm:%s809] %v1032
        %v1034 = vld [vmem:[%s816 + $0x1b0] sm:%s809]
        %1035 = vst [vmem:[%s817 + $0x1b0] sm:%s809] %v1034
        %v1036 = vld [vmem:[%s816 + $0x1b8] sm:%s809]
        %1037 = vst [vmem:[%s817 + $0x1b4] sm:%s809] %v1036
        %v1038 = vld [vmem:[%s816 + $0x1b4] sm:%s809]
        %1039 = vst [vmem:[%s817 + $0x1b8] sm:%s809] %v1038
        %v1040 = vld [vmem:[%s816 + $0x1bc] sm:%s809]
        %1041 = vst [vmem:[%s817 + $0x1bc] sm:%s809] %v1040
        %v1042 = vld [vmem:[%s816 + $0x1c0] sm:%s809]
        %1043 = vst [vmem:[%s817 + $0x1c0] sm:%s809] %v1042
        %v1044 = vld [vmem:[%s816 + $0x1c8] sm:%s809]
        %1045 = vst [vmem:[%s817 + $0x1c4] sm:%s809] %v1044
        %v1046 = vld [vmem:[%s816 + $0x1c4] sm:%s809]
        %1047 = vst [vmem:[%s817 + $0x1c8] sm:%s809] %v1046
        %v1048 = vld [vmem:[%s816 + $0x1cc] sm:%s809]
        %1049 = vst [vmem:[%s817 + $0x1cc] sm:%s809] %v1048
        %v1050 = vld [vmem:[%s816 + $0x1d0] sm:%s809]
        %1051 = vst [vmem:[%s817 + $0x1d0] sm:%s809] %v1050
        %v1052 = vld [vmem:[%s816 + $0x1d8] sm:%s809]
        %1053 = vst [vmem:[%s817 + $0x1d4] sm:%s809] %v1052
        %v1054 = vld [vmem:[%s816 + $0x1d4] sm:%s809]
        %1055 = vst [vmem:[%s817 + $0x1d8] sm:%s809] %v1054
        %v1056 = vld [vmem:[%s816 + $0x1dc] sm:%s809]
        %1057 = vst [vmem:[%s817 + $0x1dc] sm:%s809] %v1056
        %v1058 = vld [vmem:[%s816 + $0x1e0] sm:%s809]
        %1059 = vst [vmem:[%s817 + $0x1e0] sm:%s809] %v1058
        %v1060 = vld [vmem:[%s816 + $0x1e8] sm:%s809]
        %1061 = vst [vmem:[%s817 + $0x1e4] sm:%s809] %v1060
        %v1062 = vld [vmem:[%s816 + $0x1e4] sm:%s809]
        %1063 = vst [vmem:[%s817 + $0x1e8] sm:%s809] %v1062
        %v1064 = vld [vmem:[%s816 + $0x1ec] sm:%s809]
        %1065 = vst [vmem:[%s817 + $0x1ec] sm:%s809] %v1064
        %v1066 = vld [vmem:[%s816 + $0x1f0] sm:%s809]
        %1067 = vst [vmem:[%s817 + $0x1f0] sm:%s809] %v1066
        %v1068 = vld [vmem:[%s816 + $0x1f8] sm:%s809]
        %1069 = vst [vmem:[%s817 + $0x1f4] sm:%s809] %v1068
        %v1070 = vld [vmem:[%s816 + $0x1f4] sm:%s809]
        %1071 = vst [vmem:[%s817 + $0x1f8] sm:%s809] %v1070
        %v1072 = vld [vmem:[%s816 + $0x1fc] sm:%s809]
        %1073 = vst [vmem:[%s817 + $0x1fc] sm:%s809] %v1072
        %v1074 = vld [vmem:[%s816 + $0x200] sm:%s809]
        %1075 = vst [vmem:[%s817 + $0x200] sm:%s809] %v1074
        %v1076 = vld [vmem:[%s816 + $0x208] sm:%s809]
        %1077 = vst [vmem:[%s817 + $0x204] sm:%s809] %v1076
        %v1078 = vld [vmem:[%s816 + $0x204] sm:%s809]
        %1079 = vst [vmem:[%s817 + $0x208] sm:%s809] %v1078
        %v1080 = vld [vmem:[%s816 + $0x20c] sm:%s809]
        %1081 = vst [vmem:[%s817 + $0x20c] sm:%s809] %v1080
        %v1082 = vld [vmem:[%s816 + $0x210] sm:%s809]
        %1083 = vst [vmem:[%s817 + $0x210] sm:%s809] %v1082
        %v1084 = vld [vmem:[%s816 + $0x218] sm:%s809]
        %1085 = vst [vmem:[%s817 + $0x214] sm:%s809] %v1084
        %v1086 = vld [vmem:[%s816 + $0x214] sm:%s809]
        %1087 = vst [vmem:[%s817 + $0x218] sm:%s809] %v1086
        %v1088 = vld [vmem:[%s816 + $0x21c] sm:%s809]
        %1089 = vst [vmem:[%s817 + $0x21c] sm:%s809] %v1088
        %v1090 = vld [vmem:[%s816 + $0x220] sm:%s809]
        %1091 = vst [vmem:[%s817 + $0x220] sm:%s809] %v1090
        %v1092 = vld [vmem:[%s816 + $0x228] sm:%s809]
        %1093 = vst [vmem:[%s817 + $0x224] sm:%s809] %v1092
        %v1094 = vld [vmem:[%s816 + $0x224] sm:%s809]
        %1095 = vst [vmem:[%s817 + $0x228] sm:%s809] %v1094
        %v1096 = vld [vmem:[%s816 + $0x22c] sm:%s809]
        %1097 = vst [vmem:[%s817 + $0x22c] sm:%s809] %v1096
        %v1098 = vld [vmem:[%s816 + $0x230] sm:%s809]
        %1099 = vst [vmem:[%s817 + $0x230] sm:%s809] %v1098
        %v1100 = vld [vmem:[%s816 + $0x238] sm:%s809]
        %1101 = vst [vmem:[%s817 + $0x234] sm:%s809] %v1100
        %v1102 = vld [vmem:[%s816 + $0x234] sm:%s809]
        %1103 = vst [vmem:[%s817 + $0x238] sm:%s809] %v1102
        %v1104 = vld [vmem:[%s816 + $0x23c] sm:%s809]
        %1105 = vst [vmem:[%s817 + $0x23c] sm:%s809] %v1104
        %v1106 = vld [vmem:[%s816 + $0x240] sm:%s809]
        %1107 = vst [vmem:[%s817 + $0x240] sm:%s809] %v1106
        %v1108 = vld [vmem:[%s816 + $0x248] sm:%s809]
        %1109 = vst [vmem:[%s817 + $0x244] sm:%s809] %v1108
        %v1110 = vld [vmem:[%s816 + $0x244] sm:%s809]
        %1111 = vst [vmem:[%s817 + $0x248] sm:%s809] %v1110
        %v1112 = vld [vmem:[%s816 + $0x24c] sm:%s809]
        %1113 = vst [vmem:[%s817 + $0x24c] sm:%s809] %v1112
        %v1114 = vld [vmem:[%s816 + $0x250] sm:%s809]
        %1115 = vst [vmem:[%s817 + $0x250] sm:%s809] %v1114
        %v1116 = vld [vmem:[%s816 + $0x258] sm:%s809]
        %1117 = vst [vmem:[%s817 + $0x254] sm:%s809] %v1116
        %v1118 = vld [vmem:[%s816 + $0x254] sm:%s809]
        %1119 = vst [vmem:[%s817 + $0x258] sm:%s809] %v1118
        %v1120 = vld [vmem:[%s816 + $0x25c] sm:%s809]
        %1121 = vst [vmem:[%s817 + $0x25c] sm:%s809] %v1120
        %v1122 = vld [vmem:[%s816 + $0x260] sm:%s809]
        %1123 = vst [vmem:[%s817 + $0x260] sm:%s809] %v1122
        %v1124 = vld [vmem:[%s816 + $0x268] sm:%s809]
        %1125 = vst [vmem:[%s817 + $0x264] sm:%s809] %v1124
        %v1126 = vld [vmem:[%s816 + $0x264] sm:%s809]
        %1127 = vst [vmem:[%s817 + $0x268] sm:%s809] %v1126
        %v1128 = vld [vmem:[%s816 + $0x26c] sm:%s809]
        %1129 = vst [vmem:[%s817 + $0x26c] sm:%s809] %v1128
        %v1130 = vld [vmem:[%s816 + $0x270] sm:%s809]
        %1131 = vst [vmem:[%s817 + $0x270] sm:%s809] %v1130
        %v1132 = vld [vmem:[%s816 + $0x278] sm:%s809]
        %1133 = vst [vmem:[%s817 + $0x274] sm:%s809] %v1132
        %v1134 = vld [vmem:[%s816 + $0x274] sm:%s809]
        %1135 = vst [vmem:[%s817 + $0x278] sm:%s809] %v1134
        %v1136 = vld [vmem:[%s816 + $0x27c] sm:%s809]
        %1137 = vst [vmem:[%s817 + $0x27c] sm:%s809] %v1136
        %v1138 = vld [vmem:[%s816 + $0x280] sm:%s809]
        %1139 = vst [vmem:[%s817 + $0x280] sm:%s809] %v1138
        %v1140 = vld [vmem:[%s816 + $0x288] sm:%s809]
        %1141 = vst [vmem:[%s817 + $0x284] sm:%s809] %v1140
        %v1142 = vld [vmem:[%s816 + $0x284] sm:%s809]
        %1143 = vst [vmem:[%s817 + $0x288] sm:%s809] %v1142
        %v1144 = vld [vmem:[%s816 + $0x28c] sm:%s809]
        %1145 = vst [vmem:[%s817 + $0x28c] sm:%s809] %v1144
        %v1146 = vld [vmem:[%s816 + $0x290] sm:%s809]
        %1147 = vst [vmem:[%s817 + $0x290] sm:%s809] %v1146
        %v1148 = vld [vmem:[%s816 + $0x298] sm:%s809]
        %1149 = vst [vmem:[%s817 + $0x294] sm:%s809] %v1148
        %v1150 = vld [vmem:[%s816 + $0x294] sm:%s809]
        %1151 = vst [vmem:[%s817 + $0x298] sm:%s809] %v1150
        %v1152 = vld [vmem:[%s816 + $0x29c] sm:%s809]
        %1153 = vst [vmem:[%s817 + $0x29c] sm:%s809] %v1152
        %v1154 = vld [vmem:[%s816 + $0x2a0] sm:%s809]
        %1155 = vst [vmem:[%s817 + $0x2a0] sm:%s809] %v1154
        %v1156 = vld [vmem:[%s816 + $0x2a8] sm:%s809]
        %1157 = vst [vmem:[%s817 + $0x2a4] sm:%s809] %v1156
        %v1158 = vld [vmem:[%s816 + $0x2a4] sm:%s809]
        %1159 = vst [vmem:[%s817 + $0x2a8] sm:%s809] %v1158
        %v1160 = vld [vmem:[%s816 + $0x2ac] sm:%s809]
        %1161 = vst [vmem:[%s817 + $0x2ac] sm:%s809] %v1160
        %v1162 = vld [vmem:[%s816 + $0x2b0] sm:%s809]
        %1163 = vst [vmem:[%s817 + $0x2b0] sm:%s809] %v1162
        %v1164 = vld [vmem:[%s816 + $0x2b8] sm:%s809]
        %1165 = vst [vmem:[%s817 + $0x2b4] sm:%s809] %v1164
        %v1166 = vld [vmem:[%s816 + $0x2b4] sm:%s809]
        %1167 = vst [vmem:[%s817 + $0x2b8] sm:%s809] %v1166
        %v1168 = vld [vmem:[%s816 + $0x2bc] sm:%s809]
        %1169 = vst [vmem:[%s817 + $0x2bc] sm:%s809] %v1168
        %v1170 = vld [vmem:[%s816 + $0x2c0] sm:%s809]
        %1171 = vst [vmem:[%s817 + $0x2c0] sm:%s809] %v1170
        %v1172 = vld [vmem:[%s816 + $0x2c8] sm:%s809]
        %1173 = vst [vmem:[%s817 + $0x2c4] sm:%s809] %v1172
        %v1174 = vld [vmem:[%s816 + $0x2c4] sm:%s809]
        %1175 = vst [vmem:[%s817 + $0x2c8] sm:%s809] %v1174
        %v1176 = vld [vmem:[%s816 + $0x2cc] sm:%s809]
        %1177 = vst [vmem:[%s817 + $0x2cc] sm:%s809] %v1176
        %v1178 = vld [vmem:[%s816 + $0x2d0] sm:%s809]
        %1179 = vst [vmem:[%s817 + $0x2d0] sm:%s809] %v1178
        %v1180 = vld [vmem:[%s816 + $0x2d8] sm:%s809]
        %1181 = vst [vmem:[%s817 + $0x2d4] sm:%s809] %v1180
        %v1182 = vld [vmem:[%s816 + $0x2d4] sm:%s809]
        %1183 = vst [vmem:[%s817 + $0x2d8] sm:%s809] %v1182
        %v1184 = vld [vmem:[%s816 + $0x2dc] sm:%s809]
        %1185 = vst [vmem:[%s817 + $0x2dc] sm:%s809] %v1184
        %v1186 = vld [vmem:[%s816 + $0x2e0] sm:%s809]
        %1187 = vst [vmem:[%s817 + $0x2e0] sm:%s809] %v1186
        %v1188 = vld [vmem:[%s816 + $0x2e8] sm:%s809]
        %1189 = vst [vmem:[%s817 + $0x2e4] sm:%s809] %v1188
        %v1190 = vld [vmem:[%s816 + $0x2e4] sm:%s809]
        %1191 = vst [vmem:[%s817 + $0x2e8] sm:%s809] %v1190
        %v1192 = vld [vmem:[%s816 + $0x2ec] sm:%s809]
        %1193 = vst [vmem:[%s817 + $0x2ec] sm:%s809] %v1192
        %v1194 = vld [vmem:[%s816 + $0x2f0] sm:%s809]
        %1195 = vst [vmem:[%s817 + $0x2f0] sm:%s809] %v1194
        %v1196 = vld [vmem:[%s816 + $0x2f8] sm:%s809]
        %1197 = vst [vmem:[%s817 + $0x2f4] sm:%s809] %v1196
        %v1198 = vld [vmem:[%s816 + $0x2f4] sm:%s809]
        %1199 = vst [vmem:[%s817 + $0x2f8] sm:%s809] %v1198
        %v1200 = vld [vmem:[%s816 + $0x2fc] sm:%s809]
        %1201 = vst [vmem:[%s817 + $0x2fc] sm:%s809] %v1200
        %v1202 = vld [vmem:[%s816 + $0x300] sm:%s809]
        %1203 = vst [vmem:[%s817 + $0x300] sm:%s809] %v1202
        %v1204 = vld [vmem:[%s816 + $0x308] sm:%s809]
        %1205 = vst [vmem:[%s817 + $0x304] sm:%s809] %v1204
        %v1206 = vld [vmem:[%s816 + $0x304] sm:%s809]
        %1207 = vst [vmem:[%s817 + $0x308] sm:%s809] %v1206
        %v1208 = vld [vmem:[%s816 + $0x30c] sm:%s809]
        %1209 = vst [vmem:[%s817 + $0x30c] sm:%s809] %v1208
        %v1210 = vld [vmem:[%s816 + $0x310] sm:%s809]
        %1211 = vst [vmem:[%s817 + $0x310] sm:%s809] %v1210
        %v1212 = vld [vmem:[%s816 + $0x318] sm:%s809]
        %1213 = vst [vmem:[%s817 + $0x314] sm:%s809] %v1212
        %v1214 = vld [vmem:[%s816 + $0x314] sm:%s809]
        %1215 = vst [vmem:[%s817 + $0x318] sm:%s809] %v1214
        %v1216 = vld [vmem:[%s816 + $0x31c] sm:%s809]
        %1217 = vst [vmem:[%s817 + $0x31c] sm:%s809] %v1216
        %v1218 = vld [vmem:[%s816 + $0x320] sm:%s809]
        %1219 = vst [vmem:[%s817 + $0x320] sm:%s809] %v1218
        %v1220 = vld [vmem:[%s816 + $0x328] sm:%s809]
        %1221 = vst [vmem:[%s817 + $0x324] sm:%s809] %v1220
        %v1222 = vld [vmem:[%s816 + $0x324] sm:%s809]
        %1223 = vst [vmem:[%s817 + $0x328] sm:%s809] %v1222
        %v1224 = vld [vmem:[%s816 + $0x32c] sm:%s809]
        %1225 = vst [vmem:[%s817 + $0x32c] sm:%s809] %v1224
        %v1226 = vld [vmem:[%s816 + $0x330] sm:%s809]
        %1227 = vst [vmem:[%s817 + $0x330] sm:%s809] %v1226
        %v1228 = vld [vmem:[%s816 + $0x338] sm:%s809]
        %1229 = vst [vmem:[%s817 + $0x334] sm:%s809] %v1228
        %v1230 = vld [vmem:[%s816 + $0x334] sm:%s809]
        %1231 = vst [vmem:[%s817 + $0x338] sm:%s809] %v1230
        %v1232 = vld [vmem:[%s816 + $0x33c] sm:%s809]
        %1233 = vst [vmem:[%s817 + $0x33c] sm:%s809] %v1232
        %v1234 = vld [vmem:[%s816 + $0x340] sm:%s809]
        %1235 = vst [vmem:[%s817 + $0x340] sm:%s809] %v1234
        %v1236 = vld [vmem:[%s816 + $0x348] sm:%s809]
        %1237 = vst [vmem:[%s817 + $0x344] sm:%s809] %v1236
        %v1238 = vld [vmem:[%s816 + $0x344] sm:%s809]
        %1239 = vst [vmem:[%s817 + $0x348] sm:%s809] %v1238
        %v1240 = vld [vmem:[%s816 + $0x34c] sm:%s809]
        %1241 = vst [vmem:[%s817 + $0x34c] sm:%s809] %v1240
        %v1242 = vld [vmem:[%s816 + $0x350] sm:%s809]
        %1243 = vst [vmem:[%s817 + $0x350] sm:%s809] %v1242
        %v1244 = vld [vmem:[%s816 + $0x358] sm:%s809]
        %1245 = vst [vmem:[%s817 + $0x354] sm:%s809] %v1244
        %v1246 = vld [vmem:[%s816 + $0x354] sm:%s809]
        %1247 = vst [vmem:[%s817 + $0x358] sm:%s809] %v1246
        %v1248 = vld [vmem:[%s816 + $0x35c] sm:%s809]
        %1249 = vst [vmem:[%s817 + $0x35c] sm:%s809] %v1248
        %v1250 = vld [vmem:[%s816 + $0x360] sm:%s809]
        %1251 = vst [vmem:[%s817 + $0x360] sm:%s809] %v1250
        %v1252 = vld [vmem:[%s816 + $0x368] sm:%s809]
        %1253 = vst [vmem:[%s817 + $0x364] sm:%s809] %v1252
        %v1254 = vld [vmem:[%s816 + $0x364] sm:%s809]
        %1255 = vst [vmem:[%s817 + $0x368] sm:%s809] %v1254
        %v1256 = vld [vmem:[%s816 + $0x36c] sm:%s809]
        %1257 = vst [vmem:[%s817 + $0x36c] sm:%s809] %v1256
        %v1258 = vld [vmem:[%s816 + $0x370] sm:%s809]
        %1259 = vst [vmem:[%s817 + $0x370] sm:%s809] %v1258
        %v1260 = vld [vmem:[%s816 + $0x378] sm:%s809]
        %1261 = vst [vmem:[%s817 + $0x374] sm:%s809] %v1260
        %v1262 = vld [vmem:[%s816 + $0x374] sm:%s809]
        %1263 = vst [vmem:[%s817 + $0x378] sm:%s809] %v1262
        %v1264 = vld [vmem:[%s816 + $0x37c] sm:%s809]
        %1265 = vst [vmem:[%s817 + $0x37c] sm:%s809] %v1264
        %v1266 = vld [vmem:[%s816 + $0x380] sm:%s809]
        %1267 = vst [vmem:[%s817 + $0x380] sm:%s809] %v1266
        %v1268 = vld [vmem:[%s816 + $0x388] sm:%s809]
        %1269 = vst [vmem:[%s817 + $0x384] sm:%s809] %v1268
        %v1270 = vld [vmem:[%s816 + $0x384] sm:%s809]
        %1271 = vst [vmem:[%s817 + $0x388] sm:%s809] %v1270
        %v1272 = vld [vmem:[%s816 + $0x38c] sm:%s809]
        %1273 = vst [vmem:[%s817 + $0x38c] sm:%s809] %v1272
        %v1274 = vld [vmem:[%s816 + $0x390] sm:%s809]
        %1275 = vst [vmem:[%s817 + $0x390] sm:%s809] %v1274
        %v1276 = vld [vmem:[%s816 + $0x398] sm:%s809]
        %1277 = vst [vmem:[%s817 + $0x394] sm:%s809] %v1276
        %v1278 = vld [vmem:[%s816 + $0x394] sm:%s809]
        %1279 = vst [vmem:[%s817 + $0x398] sm:%s809] %v1278
        %v1280 = vld [vmem:[%s816 + $0x39c] sm:%s809]
        %1281 = vst [vmem:[%s817 + $0x39c] sm:%s809] %v1280
        %v1282 = vld [vmem:[%s816 + $0x3a0] sm:%s809]
        %1283 = vst [vmem:[%s817 + $0x3a0] sm:%s809] %v1282
        %v1284 = vld [vmem:[%s816 + $0x3a8] sm:%s809]
        %1285 = vst [vmem:[%s817 + $0x3a4] sm:%s809] %v1284
        %v1286 = vld [vmem:[%s816 + $0x3a4] sm:%s809]
        %1287 = vst [vmem:[%s817 + $0x3a8] sm:%s809] %v1286
        %v1288 = vld [vmem:[%s816 + $0x3ac] sm:%s809]
        %1289 = vst [vmem:[%s817 + $0x3ac] sm:%s809] %v1288
        %v1290 = vld [vmem:[%s816 + $0x3b0] sm:%s809]
        %1291 = vst [vmem:[%s817 + $0x3b0] sm:%s809] %v1290
        %v1292 = vld [vmem:[%s816 + $0x3b8] sm:%s809]
        %1293 = vst [vmem:[%s817 + $0x3b4] sm:%s809] %v1292
        %v1294 = vld [vmem:[%s816 + $0x3b4] sm:%s809]
        %1295 = vst [vmem:[%s817 + $0x3b8] sm:%s809] %v1294
        %v1296 = vld [vmem:[%s816 + $0x3bc] sm:%s809]
        %1297 = vst [vmem:[%s817 + $0x3bc] sm:%s809] %v1296
        %v1298 = vld [vmem:[%s816 + $0x3c0] sm:%s809]
        %1299 = vst [vmem:[%s817 + $0x3c0] sm:%s809] %v1298
        %v1300 = vld [vmem:[%s816 + $0x3c8] sm:%s809]
        %1301 = vst [vmem:[%s817 + $0x3c4] sm:%s809] %v1300
        %v1302 = vld [vmem:[%s816 + $0x3c4] sm:%s809]
        %1303 = vst [vmem:[%s817 + $0x3c8] sm:%s809] %v1302
        %v1304 = vld [vmem:[%s816 + $0x3cc] sm:%s809]
        %1305 = vst [vmem:[%s817 + $0x3cc] sm:%s809] %v1304
        %v1306 = vld [vmem:[%s816 + $0x3d0] sm:%s809]
        %1307 = vst [vmem:[%s817 + $0x3d0] sm:%s809] %v1306
        %v1308 = vld [vmem:[%s816 + $0x3d8] sm:%s809]
        %1309 = vst [vmem:[%s817 + $0x3d4] sm:%s809] %v1308
        %v1310 = vld [vmem:[%s816 + $0x3d4] sm:%s809]
        %1311 = vst [vmem:[%s817 + $0x3d8] sm:%s809] %v1310
        %v1312 = vld [vmem:[%s816 + $0x3dc] sm:%s809]
        %1313 = vst [vmem:[%s817 + $0x3dc] sm:%s809] %v1312
        %v1314 = vld [vmem:[%s816 + $0x3e0] sm:%s809]
        %1315 = vst [vmem:[%s817 + $0x3e0] sm:%s809] %v1314
        %v1316 = vld [vmem:[%s816 + $0x3e8] sm:%s809]
        %1317 = vst [vmem:[%s817 + $0x3e4] sm:%s809] %v1316
        %v1318 = vld [vmem:[%s816 + $0x3e4] sm:%s809]
        %1319 = vst [vmem:[%s817 + $0x3e8] sm:%s809] %v1318
        %v1320 = vld [vmem:[%s816 + $0x3ec] sm:%s809]
        %1321 = vst [vmem:[%s817 + $0x3ec] sm:%s809] %v1320
        %v1322 = vld [vmem:[%s816 + $0x3f0] sm:%s809]
        %1323 = vst [vmem:[%s817 + $0x3f0] sm:%s809] %v1322
        %v1324 = vld [vmem:[%s816 + $0x3f8] sm:%s809]
        %1325 = vst [vmem:[%s817 + $0x3f4] sm:%s809] %v1324
        %v1326 = vld [vmem:[%s816 + $0x3f4] sm:%s809]
        %1327 = vst [vmem:[%s817 + $0x3f8] sm:%s809] %v1326
        %v1328 = vld [vmem:[%s816 + $0x3fc] sm:%s809]
        %1329 = vst [vmem:[%s817 + $0x3fc] sm:%s809] %v1328
        %v1330 = vld [vmem:[%s816 + $0x400] sm:%s809]
        %1331 = vst [vmem:[%s817 + $0x400] sm:%s809] %v1330
        %v1332 = vld [vmem:[%s816 + $0x408] sm:%s809]
        %1333 = vst [vmem:[%s817 + $0x404] sm:%s809] %v1332
        %v1334 = vld [vmem:[%s816 + $0x404] sm:%s809]
        %1335 = vst [vmem:[%s817 + $0x408] sm:%s809] %v1334
        %v1336 = vld [vmem:[%s816 + $0x40c] sm:%s809]
        %1337 = vst [vmem:[%s817 + $0x40c] sm:%s809] %v1336
        %v1338 = vld [vmem:[%s816 + $0x410] sm:%s809]
        %1339 = vst [vmem:[%s817 + $0x410] sm:%s809] %v1338
        %v1340 = vld [vmem:[%s816 + $0x418] sm:%s809]
        %1341 = vst [vmem:[%s817 + $0x414] sm:%s809] %v1340
        %v1342 = vld [vmem:[%s816 + $0x414] sm:%s809]
        %1343 = vst [vmem:[%s817 + $0x418] sm:%s809] %v1342
        %v1344 = vld [vmem:[%s816 + $0x41c] sm:%s809]
        %1345 = vst [vmem:[%s817 + $0x41c] sm:%s809] %v1344
        %v1346 = vld [vmem:[%s816 + $0x420] sm:%s809]
        %1347 = vst [vmem:[%s817 + $0x420] sm:%s809] %v1346
        %v1348 = vld [vmem:[%s816 + $0x428] sm:%s809]
        %1349 = vst [vmem:[%s817 + $0x424] sm:%s809] %v1348
        %v1350 = vld [vmem:[%s816 + $0x424] sm:%s809]
        %1351 = vst [vmem:[%s817 + $0x428] sm:%s809] %v1350
        %v1352 = vld [vmem:[%s816 + $0x42c] sm:%s809]
        %1353 = vst [vmem:[%s817 + $0x42c] sm:%s809] %v1352
        %v1354 = vld [vmem:[%s816 + $0x430] sm:%s809]
        %1355 = vst [vmem:[%s817 + $0x430] sm:%s809] %v1354
        %v1356 = vld [vmem:[%s816 + $0x438] sm:%s809]
        %1357 = vst [vmem:[%s817 + $0x434] sm:%s809] %v1356
        %v1358 = vld [vmem:[%s816 + $0x434] sm:%s809]
        %1359 = vst [vmem:[%s817 + $0x438] sm:%s809] %v1358
        %v1360 = vld [vmem:[%s816 + $0x43c] sm:%s809]
        %1361 = vst [vmem:[%s817 + $0x43c] sm:%s809] %v1360
        %v1362 = vld [vmem:[%s816 + $0x440] sm:%s809]
        %1363 = vst [vmem:[%s817 + $0x440] sm:%s809] %v1362
        %v1364 = vld [vmem:[%s816 + $0x448] sm:%s809]
        %1365 = vst [vmem:[%s817 + $0x444] sm:%s809] %v1364
        %v1366 = vld [vmem:[%s816 + $0x444] sm:%s809]
        %1367 = vst [vmem:[%s817 + $0x448] sm:%s809] %v1366
        %v1368 = vld [vmem:[%s816 + $0x44c] sm:%s809]
        %1369 = vst [vmem:[%s817 + $0x44c] sm:%s809] %v1368
        %v1370 = vld [vmem:[%s816 + $0x450] sm:%s809]
        %1371 = vst [vmem:[%s817 + $0x450] sm:%s809] %v1370
        %v1372 = vld [vmem:[%s816 + $0x458] sm:%s809]
        %1373 = vst [vmem:[%s817 + $0x454] sm:%s809] %v1372
        %v1374 = vld [vmem:[%s816 + $0x454] sm:%s809]
        %1375 = vst [vmem:[%s817 + $0x458] sm:%s809] %v1374
        %v1376 = vld [vmem:[%s816 + $0x45c] sm:%s809]
        %1377 = vst [vmem:[%s817 + $0x45c] sm:%s809] %v1376
        %v1378 = vld [vmem:[%s816 + $0x460] sm:%s809]
        %1379 = vst [vmem:[%s817 + $0x460] sm:%s809] %v1378
        %v1380 = vld [vmem:[%s816 + $0x468] sm:%s809]
        %1381 = vst [vmem:[%s817 + $0x464] sm:%s809] %v1380
        %v1382 = vld [vmem:[%s816 + $0x464] sm:%s809]
        %1383 = vst [vmem:[%s817 + $0x468] sm:%s809] %v1382
        %v1384 = vld [vmem:[%s816 + $0x46c] sm:%s809]
        %1385 = vst [vmem:[%s817 + $0x46c] sm:%s809] %v1384
        %v1386 = vld [vmem:[%s816 + $0x470] sm:%s809]
        %1387 = vst [vmem:[%s817 + $0x470] sm:%s809] %v1386
        %v1388 = vld [vmem:[%s816 + $0x478] sm:%s809]
        %1389 = vst [vmem:[%s817 + $0x474] sm:%s809] %v1388
        %v1390 = vld [vmem:[%s816 + $0x474] sm:%s809]
        %1391 = vst [vmem:[%s817 + $0x478] sm:%s809] %v1390
        %v1392 = vld [vmem:[%s816 + $0x47c] sm:%s809]
        %1393 = vst [vmem:[%s817 + $0x47c] sm:%s809] %v1392
        %v1394 = vld [vmem:[%s816 + $0x480] sm:%s809]
        %1395 = vst [vmem:[%s817 + $0x480] sm:%s809] %v1394
        %v1396 = vld [vmem:[%s816 + $0x488] sm:%s809]
        %1397 = vst [vmem:[%s817 + $0x484] sm:%s809] %v1396
        %v1398 = vld [vmem:[%s816 + $0x484] sm:%s809]
        %1399 = vst [vmem:[%s817 + $0x488] sm:%s809] %v1398
        %v1400 = vld [vmem:[%s816 + $0x48c] sm:%s809]
        %1401 = vst [vmem:[%s817 + $0x48c] sm:%s809] %v1400
        %v1402 = vld [vmem:[%s816 + $0x490] sm:%s809]
        %1403 = vst [vmem:[%s817 + $0x490] sm:%s809] %v1402
        %v1404 = vld [vmem:[%s816 + $0x498] sm:%s809]
        %1405 = vst [vmem:[%s817 + $0x494] sm:%s809] %v1404
        %v1406 = vld [vmem:[%s816 + $0x494] sm:%s809]
        %1407 = vst [vmem:[%s817 + $0x498] sm:%s809] %v1406
        %v1408 = vld [vmem:[%s816 + $0x49c] sm:%s809]
        %1409 = vst [vmem:[%s817 + $0x49c] sm:%s809] %v1408
        %v1410 = vld [vmem:[%s816 + $0x4a0] sm:%s809]
        %1411 = vst [vmem:[%s817 + $0x4a0] sm:%s809] %v1410
        %v1412 = vld [vmem:[%s816 + $0x4a8] sm:%s809]
        %1413 = vst [vmem:[%s817 + $0x4a4] sm:%s809] %v1412
        %v1414 = vld [vmem:[%s816 + $0x4a4] sm:%s809]
        %1415 = vst [vmem:[%s817 + $0x4a8] sm:%s809] %v1414
        %v1416 = vld [vmem:[%s816 + $0x4ac] sm:%s809]
        %1417 = vst [vmem:[%s817 + $0x4ac] sm:%s809] %v1416
        %v1418 = vld [vmem:[%s816 + $0x4b0] sm:%s809]
        %1419 = vst [vmem:[%s817 + $0x4b0] sm:%s809] %v1418
        %v1420 = vld [vmem:[%s816 + $0x4b8] sm:%s809]
        %1421 = vst [vmem:[%s817 + $0x4b4] sm:%s809] %v1420
        %v1422 = vld [vmem:[%s816 + $0x4b4] sm:%s809]
        %1423 = vst [vmem:[%s817 + $0x4b8] sm:%s809] %v1422
        %v1424 = vld [vmem:[%s816 + $0x4bc] sm:%s809]
        %1425 = vst [vmem:[%s817 + $0x4bc] sm:%s809] %v1424
        %v1426 = vld [vmem:[%s816 + $0x4c0] sm:%s809]
        %1427 = vst [vmem:[%s817 + $0x4c0] sm:%s809] %v1426
        %v1428 = vld [vmem:[%s816 + $0x4c8] sm:%s809]
        %1429 = vst [vmem:[%s817 + $0x4c4] sm:%s809] %v1428
        %v1430 = vld [vmem:[%s816 + $0x4c4] sm:%s809]
        %1431 = vst [vmem:[%s817 + $0x4c8] sm:%s809] %v1430
        %v1432 = vld [vmem:[%s816 + $0x4cc] sm:%s809]
        %1433 = vst [vmem:[%s817 + $0x4cc] sm:%s809] %v1432
        %v1434 = vld [vmem:[%s816 + $0x4d0] sm:%s809]
        %1435 = vst [vmem:[%s817 + $0x4d0] sm:%s809] %v1434
        %v1436 = vld [vmem:[%s816 + $0x4d8] sm:%s809]
        %1437 = vst [vmem:[%s817 + $0x4d4] sm:%s809] %v1436
        %v1438 = vld [vmem:[%s816 + $0x4d4] sm:%s809]
        %1439 = vst [vmem:[%s817 + $0x4d8] sm:%s809] %v1438
        %v1440 = vld [vmem:[%s816 + $0x4dc] sm:%s809]
        %1441 = vst [vmem:[%s817 + $0x4dc] sm:%s809] %v1440
        %v1442 = vld [vmem:[%s816 + $0x4e0] sm:%s809]
        %1443 = vst [vmem:[%s817 + $0x4e0] sm:%s809] %v1442
        %v1444 = vld [vmem:[%s816 + $0x4e8] sm:%s809]
        %1445 = vst [vmem:[%s817 + $0x4e4] sm:%s809] %v1444
        %v1446 = vld [vmem:[%s816 + $0x4e4] sm:%s809]
        %1447 = vst [vmem:[%s817 + $0x4e8] sm:%s809] %v1446
        %v1448 = vld [vmem:[%s816 + $0x4ec] sm:%s809]
        %1449 = vst [vmem:[%s817 + $0x4ec] sm:%s809] %v1448
        %v1450 = vld [vmem:[%s816 + $0x4f0] sm:%s809]
        %1451 = vst [vmem:[%s817 + $0x4f0] sm:%s809] %v1450
        %v1452 = vld [vmem:[%s816 + $0x4f8] sm:%s809]
        %1453 = vst [vmem:[%s817 + $0x4f4] sm:%s809] %v1452
        %v1454 = vld [vmem:[%s816 + $0x4f4] sm:%s809]
        %1455 = vst [vmem:[%s817 + $0x4f8] sm:%s809] %v1454
        %v1456 = vld [vmem:[%s816 + $0x4fc] sm:%s809]
        %1457 = vst [vmem:[%s817 + $0x4fc] sm:%s809] %v1456
        %v1458 = vld [vmem:[%s816 + $0x500] sm:%s809]
        %1459 = vst [vmem:[%s817 + $0x500] sm:%s809] %v1458
        %v1460 = vld [vmem:[%s816 + $0x508] sm:%s809]
        %1461 = vst [vmem:[%s817 + $0x504] sm:%s809] %v1460
        %v1462 = vld [vmem:[%s816 + $0x504] sm:%s809]
        %1463 = vst [vmem:[%s817 + $0x508] sm:%s809] %v1462
        %v1464 = vld [vmem:[%s816 + $0x50c] sm:%s809]
        %1465 = vst [vmem:[%s817 + $0x50c] sm:%s809] %v1464
        %v1466 = vld [vmem:[%s816 + $0x510] sm:%s809]
        %1467 = vst [vmem:[%s817 + $0x510] sm:%s809] %v1466
        %v1468 = vld [vmem:[%s816 + $0x518] sm:%s809]
        %1469 = vst [vmem:[%s817 + $0x514] sm:%s809] %v1468
        %v1470 = vld [vmem:[%s816 + $0x514] sm:%s809]
        %1471 = vst [vmem:[%s817 + $0x518] sm:%s809] %v1470
        %v1472 = vld [vmem:[%s816 + $0x51c] sm:%s809]
        %1473 = vst [vmem:[%s817 + $0x51c] sm:%s809] %v1472
        %v1474 = vld [vmem:[%s816 + $0x520] sm:%s809]
        %1475 = vst [vmem:[%s817 + $0x520] sm:%s809] %v1474
        %v1476 = vld [vmem:[%s816 + $0x528] sm:%s809]
        %1477 = vst [vmem:[%s817 + $0x524] sm:%s809] %v1476
        %v1478 = vld [vmem:[%s816 + $0x524] sm:%s809]
        %1479 = vst [vmem:[%s817 + $0x528] sm:%s809] %v1478
        %v1480 = vld [vmem:[%s816 + $0x52c] sm:%s809]
        %1481 = vst [vmem:[%s817 + $0x52c] sm:%s809] %v1480
        %v1482 = vld [vmem:[%s816 + $0x530] sm:%s809]
        %1483 = vst [vmem:[%s817 + $0x530] sm:%s809] %v1482
        %v1484 = vld [vmem:[%s816 + $0x538] sm:%s809]
        %1485 = vst [vmem:[%s817 + $0x534] sm:%s809] %v1484
        %v1486 = vld [vmem:[%s816 + $0x534] sm:%s809]
        %1487 = vst [vmem:[%s817 + $0x538] sm:%s809] %v1486
        %v1488 = vld [vmem:[%s816 + $0x53c] sm:%s809]
        %1489 = vst [vmem:[%s817 + $0x53c] sm:%s809] %v1488
        %v1490 = vld [vmem:[%s816 + $0x540] sm:%s809]
        %1491 = vst [vmem:[%s817 + $0x540] sm:%s809] %v1490
        %v1492 = vld [vmem:[%s816 + $0x548] sm:%s809]
        %1493 = vst [vmem:[%s817 + $0x544] sm:%s809] %v1492
        %v1494 = vld [vmem:[%s816 + $0x544] sm:%s809]
        %1495 = vst [vmem:[%s817 + $0x548] sm:%s809] %v1494
        %v1496 = vld [vmem:[%s816 + $0x54c] sm:%s809]
        %1497 = vst [vmem:[%s817 + $0x54c] sm:%s809] %v1496
        %v1498 = vld [vmem:[%s816 + $0x550] sm:%s809]
        %1499 = vst [vmem:[%s817 + $0x550] sm:%s809] %v1498
        %v1500 = vld [vmem:[%s816 + $0x558] sm:%s809]
        %1501 = vst [vmem:[%s817 + $0x554] sm:%s809] %v1500
        %v1502 = vld [vmem:[%s816 + $0x554] sm:%s809]
        %1503 = vst [vmem:[%s817 + $0x558] sm:%s809] %v1502
        %v1504 = vld [vmem:[%s816 + $0x55c] sm:%s809]
        %1505 = vst [vmem:[%s817 + $0x55c] sm:%s809] %v1504
        %v1506 = vld [vmem:[%s816 + $0x560] sm:%s809]
        %1507 = vst [vmem:[%s817 + $0x560] sm:%s809] %v1506
        %v1508 = vld [vmem:[%s816 + $0x568] sm:%s809]
        %1509 = vst [vmem:[%s817 + $0x564] sm:%s809] %v1508
        %v1510 = vld [vmem:[%s816 + $0x564] sm:%s809]
        %1511 = vst [vmem:[%s817 + $0x568] sm:%s809] %v1510
        %v1512 = vld [vmem:[%s816 + $0x56c] sm:%s809]
        %1513 = vst [vmem:[%s817 + $0x56c] sm:%s809] %v1512
        %v1514 = vld [vmem:[%s816 + $0x570] sm:%s809]
        %1515 = vst [vmem:[%s817 + $0x570] sm:%s809] %v1514
        %v1516 = vld [vmem:[%s816 + $0x578] sm:%s809]
        %1517 = vst [vmem:[%s817 + $0x574] sm:%s809] %v1516
        %v1518 = vld [vmem:[%s816 + $0x574] sm:%s809]
        %1519 = vst [vmem:[%s817 + $0x578] sm:%s809] %v1518
        %v1520 = vld [vmem:[%s816 + $0x57c] sm:%s809]
        %1521 = vst [vmem:[%s817 + $0x57c] sm:%s809] %v1520
        %v1522 = vld [vmem:[%s816 + $0x580] sm:%s809]
        %1523 = vst [vmem:[%s817 + $0x580] sm:%s809] %v1522
        %v1524 = vld [vmem:[%s816 + $0x588] sm:%s809]
        %1525 = vst [vmem:[%s817 + $0x584] sm:%s809] %v1524
        %v1526 = vld [vmem:[%s816 + $0x584] sm:%s809]
        %1527 = vst [vmem:[%s817 + $0x588] sm:%s809] %v1526
        %v1528 = vld [vmem:[%s816 + $0x58c] sm:%s809]
        %1529 = vst [vmem:[%s817 + $0x58c] sm:%s809] %v1528
        %v1530 = vld [vmem:[%s816 + $0x590] sm:%s809]
        %1531 = vst [vmem:[%s817 + $0x590] sm:%s809] %v1530
        %v1532 = vld [vmem:[%s816 + $0x598] sm:%s809]
        %1533 = vst [vmem:[%s817 + $0x594] sm:%s809] %v1532
        %v1534 = vld [vmem:[%s816 + $0x594] sm:%s809]
        %1535 = vst [vmem:[%s817 + $0x598] sm:%s809] %v1534
        %v1536 = vld [vmem:[%s816 + $0x59c] sm:%s809]
        %1537 = vst [vmem:[%s817 + $0x59c] sm:%s809] %v1536
      $region92: #{dqn_forward.1} parent=79 // loop_footer
        %s815 = sadd.s32 1, %s811
      $region93: #{dqn_forward.1} parent=79 // loop_footer_branch
        %810 = sbr.rel target = $region89
      $region94: #{dqn_forward.1} parent=79 // loop_exit
        _
    $region80: #{dqn_forward.1} parent=64 // pred_fallthru
      _
  $region65: #{dqn_forward.1} parent=0 // pred_fallthru
    _
  // Predicated region
  $region66: #{dqn_forward.1} parent=0 // pred_check
    %p59 = pneg %p55
  $region67: #{dqn_forward.1} parent=0 // pred_check_branch
    %61 = sbr.rel (%p59) target = $region69
  $region68: #{dqn_forward.1} parent=0 // pred_region
    %s62 = sshllo.u32 0, 4
    loop: start=0, step=1, limit=1
    $region70: #{dqn_forward.1} parent=68 // loop_pre_header
      _
    $region71: #{dqn_forward.1} parent=68 // loop_header
      %s64 = sphi 0, %s68
      %p65 = scmp.ge.s32.totalorder %s64, 1
      %s69 = sphi %s6, %s6
      %s70 = sphi [#allocation4], [#allocation4]
    $region72: #{dqn_forward.1} parent=68 // loop_header_branch
      %67 = sbr.rel (%p65) target = $region76
    $region73: #{dqn_forward.1} parent=68 // loop_body
      %v71 = vld [vmem:[%s69] sm:%s62]
      %72 = vst [vmem:[%s70] sm:%s62] %v71
      %v73 = vld [vmem:[%s69 + $0x8] sm:%s62]
      %74 = vst [vmem:[%s70 + $0x4] sm:%s62] %v73
      %v75 = vld [vmem:[%s69 + $0x4] sm:%s62]
      %76 = vst [vmem:[%s70 + $0x8] sm:%s62] %v75
      %v77 = vld [vmem:[%s69 + $0xc] sm:%s62]
      %78 = vst [vmem:[%s70 + $0xc] sm:%s62] %v77
      %v79 = vld [vmem:[%s69 + $0x10] sm:%s62]
      %80 = vst [vmem:[%s70 + $0x10] sm:%s62] %v79
      %v81 = vld [vmem:[%s69 + $0x18] sm:%s62]
      %82 = vst [vmem:[%s70 + $0x14] sm:%s62] %v81
      %v83 = vld [vmem:[%s69 + $0x14] sm:%s62]
      %84 = vst [vmem:[%s70 + $0x18] sm:%s62] %v83
      %v85 = vld [vmem:[%s69 + $0x1c] sm:%s62]
      %86 = vst [vmem:[%s70 + $0x1c] sm:%s62] %v85
      %v87 = vld [vmem:[%s69 + $0x20] sm:%s62]
      %88 = vst [vmem:[%s70 + $0x20] sm:%s62] %v87
      %v89 = vld [vmem:[%s69 + $0x28] sm:%s62]
      %90 = vst [vmem:[%s70 + $0x24] sm:%s62] %v89
      %v91 = vld [vmem:[%s69 + $0x24] sm:%s62]
      %92 = vst [vmem:[%s70 + $0x28] sm:%s62] %v91
      %v93 = vld [vmem:[%s69 + $0x2c] sm:%s62]
      %94 = vst [vmem:[%s70 + $0x2c] sm:%s62] %v93
      %v95 = vld [vmem:[%s69 + $0x30] sm:%s62]
      %96 = vst [vmem:[%s70 + $0x30] sm:%s62] %v95
      %v97 = vld [vmem:[%s69 + $0x38] sm:%s62]
      %98 = vst [vmem:[%s70 + $0x34] sm:%s62] %v97
      %v99 = vld [vmem:[%s69 + $0x34] sm:%s62]
      %100 = vst [vmem:[%s70 + $0x38] sm:%s62] %v99
      %v101 = vld [vmem:[%s69 + $0x3c] sm:%s62]
      %102 = vst [vmem:[%s70 + $0x3c] sm:%s62] %v101
      %v103 = vld [vmem:[%s69 + $0x40] sm:%s62]
      %104 = vst [vmem:[%s70 + $0x40] sm:%s62] %v103
      %v105 = vld [vmem:[%s69 + $0x48] sm:%s62]
      %106 = vst [vmem:[%s70 + $0x44] sm:%s62] %v105
      %v107 = vld [vmem:[%s69 + $0x44] sm:%s62]
      %108 = vst [vmem:[%s70 + $0x48] sm:%s62] %v107
      %v109 = vld [vmem:[%s69 + $0x4c] sm:%s62]
      %110 = vst [vmem:[%s70 + $0x4c] sm:%s62] %v109
      %v111 = vld [vmem:[%s69 + $0x50] sm:%s62]
      %112 = vst [vmem:[%s70 + $0x50] sm:%s62] %v111
      %v113 = vld [vmem:[%s69 + $0x58] sm:%s62]
      %114 = vst [vmem:[%s70 + $0x54] sm:%s62] %v113
      %v115 = vld [vmem:[%s69 + $0x54] sm:%s62]
      %116 = vst [vmem:[%s70 + $0x58] sm:%s62] %v115
      %v117 = vld [vmem:[%s69 + $0x5c] sm:%s62]
      %118 = vst [vmem:[%s70 + $0x5c] sm:%s62] %v117
      %v119 = vld [vmem:[%s69 + $0x60] sm:%s62]
      %120 = vst [vmem:[%s70 + $0x60] sm:%s62] %v119
      %v121 = vld [vmem:[%s69 + $0x68] sm:%s62]
      %122 = vst [vmem:[%s70 + $0x64] sm:%s62] %v121
      %v123 = vld [vmem:[%s69 + $0x64] sm:%s62]
      %124 = vst [vmem:[%s70 + $0x68] sm:%s62] %v123
      %v125 = vld [vmem:[%s69 + $0x6c] sm:%s62]
      %126 = vst [vmem:[%s70 + $0x6c] sm:%s62] %v125
      %v127 = vld [vmem:[%s69 + $0x70] sm:%s62]
      %128 = vst [vmem:[%s70 + $0x70] sm:%s62] %v127
      %v129 = vld [vmem:[%s69 + $0x78] sm:%s62]
      %130 = vst [vmem:[%s70 + $0x74] sm:%s62] %v129
      %v131 = vld [vmem:[%s69 + $0x74] sm:%s62]
      %132 = vst [vmem:[%s70 + $0x78] sm:%s62] %v131
      %v133 = vld [vmem:[%s69 + $0x7c] sm:%s62]
      %134 = vst [vmem:[%s70 + $0x7c] sm:%s62] %v133
      %v135 = vld [vmem:[%s69 + $0x80] sm:%s62]
      %136 = vst [vmem:[%s70 + $0x80] sm:%s62] %v135
      %v137 = vld [vmem:[%s69 + $0x88] sm:%s62]
      %138 = vst [vmem:[%s70 + $0x84] sm:%s62] %v137
      %v139 = vld [vmem:[%s69 + $0x84] sm:%s62]
      %140 = vst [vmem:[%s70 + $0x88] sm:%s62] %v139
      %v141 = vld [vmem:[%s69 + $0x8c] sm:%s62]
      %142 = vst [vmem:[%s70 + $0x8c] sm:%s62] %v141
      %v143 = vld [vmem:[%s69 + $0x90] sm:%s62]
      %144 = vst [vmem:[%s70 + $0x90] sm:%s62] %v143
      %v145 = vld [vmem:[%s69 + $0x98] sm:%s62]
      %146 = vst [vmem:[%s70 + $0x94] sm:%s62] %v145
      %v147 = vld [vmem:[%s69 + $0x94] sm:%s62]
      %148 = vst [vmem:[%s70 + $0x98] sm:%s62] %v147
      %v149 = vld [vmem:[%s69 + $0x9c] sm:%s62]
      %150 = vst [vmem:[%s70 + $0x9c] sm:%s62] %v149
      %v151 = vld [vmem:[%s69 + $0xa0] sm:%s62]
      %152 = vst [vmem:[%s70 + $0xa0] sm:%s62] %v151
      %v153 = vld [vmem:[%s69 + $0xa8] sm:%s62]
      %154 = vst [vmem:[%s70 + $0xa4] sm:%s62] %v153
      %v155 = vld [vmem:[%s69 + $0xa4] sm:%s62]
      %156 = vst [vmem:[%s70 + $0xa8] sm:%s62] %v155
      %v157 = vld [vmem:[%s69 + $0xac] sm:%s62]
      %158 = vst [vmem:[%s70 + $0xac] sm:%s62] %v157
      %v159 = vld [vmem:[%s69 + $0xb0] sm:%s62]
      %160 = vst [vmem:[%s70 + $0xb0] sm:%s62] %v159
      %v161 = vld [vmem:[%s69 + $0xb8] sm:%s62]
      %162 = vst [vmem:[%s70 + $0xb4] sm:%s62] %v161
      %v163 = vld [vmem:[%s69 + $0xb4] sm:%s62]
      %164 = vst [vmem:[%s70 + $0xb8] sm:%s62] %v163
      %v165 = vld [vmem:[%s69 + $0xbc] sm:%s62]
      %166 = vst [vmem:[%s70 + $0xbc] sm:%s62] %v165
      %v167 = vld [vmem:[%s69 + $0xc0] sm:%s62]
      %168 = vst [vmem:[%s70 + $0xc0] sm:%s62] %v167
      %v169 = vld [vmem:[%s69 + $0xc8] sm:%s62]
      %170 = vst [vmem:[%s70 + $0xc4] sm:%s62] %v169
      %v171 = vld [vmem:[%s69 + $0xc4] sm:%s62]
      %172 = vst [vmem:[%s70 + $0xc8] sm:%s62] %v171
      %v173 = vld [vmem:[%s69 + $0xcc] sm:%s62]
      %174 = vst [vmem:[%s70 + $0xcc] sm:%s62] %v173
      %v175 = vld [vmem:[%s69 + $0xd0] sm:%s62]
      %176 = vst [vmem:[%s70 + $0xd0] sm:%s62] %v175
      %v177 = vld [vmem:[%s69 + $0xd8] sm:%s62]
      %178 = vst [vmem:[%s70 + $0xd4] sm:%s62] %v177
      %v179 = vld [vmem:[%s69 + $0xd4] sm:%s62]
      %180 = vst [vmem:[%s70 + $0xd8] sm:%s62] %v179
      %v181 = vld [vmem:[%s69 + $0xdc] sm:%s62]
      %182 = vst [vmem:[%s70 + $0xdc] sm:%s62] %v181
      %v183 = vld [vmem:[%s69 + $0xe0] sm:%s62]
      %184 = vst [vmem:[%s70 + $0xe0] sm:%s62] %v183
      %v185 = vld [vmem:[%s69 + $0xe8] sm:%s62]
      %186 = vst [vmem:[%s70 + $0xe4] sm:%s62] %v185
      %v187 = vld [vmem:[%s69 + $0xe4] sm:%s62]
      %188 = vst [vmem:[%s70 + $0xe8] sm:%s62] %v187
      %v189 = vld [vmem:[%s69 + $0xec] sm:%s62]
      %190 = vst [vmem:[%s70 + $0xec] sm:%s62] %v189
      %v191 = vld [vmem:[%s69 + $0xf0] sm:%s62]
      %192 = vst [vmem:[%s70 + $0xf0] sm:%s62] %v191
      %v193 = vld [vmem:[%s69 + $0xf8] sm:%s62]
      %194 = vst [vmem:[%s70 + $0xf4] sm:%s62] %v193
      %v195 = vld [vmem:[%s69 + $0xf4] sm:%s62]
      %196 = vst [vmem:[%s70 + $0xf8] sm:%s62] %v195
      %v197 = vld [vmem:[%s69 + $0xfc] sm:%s62]
      %198 = vst [vmem:[%s70 + $0xfc] sm:%s62] %v197
      %v199 = vld [vmem:[%s69 + $0x100] sm:%s62]
      %200 = vst [vmem:[%s70 + $0x100] sm:%s62] %v199
      %v201 = vld [vmem:[%s69 + $0x108] sm:%s62]
      %202 = vst [vmem:[%s70 + $0x104] sm:%s62] %v201
      %v203 = vld [vmem:[%s69 + $0x104] sm:%s62]
      %204 = vst [vmem:[%s70 + $0x108] sm:%s62] %v203
      %v205 = vld [vmem:[%s69 + $0x10c] sm:%s62]
      %206 = vst [vmem:[%s70 + $0x10c] sm:%s62] %v205
      %v207 = vld [vmem:[%s69 + $0x110] sm:%s62]
      %208 = vst [vmem:[%s70 + $0x110] sm:%s62] %v207
      %v209 = vld [vmem:[%s69 + $0x118] sm:%s62]
      %210 = vst [vmem:[%s70 + $0x114] sm:%s62] %v209
      %v211 = vld [vmem:[%s69 + $0x114] sm:%s62]
      %212 = vst [vmem:[%s70 + $0x118] sm:%s62] %v211
      %v213 = vld [vmem:[%s69 + $0x11c] sm:%s62]
      %214 = vst [vmem:[%s70 + $0x11c] sm:%s62] %v213
      %v215 = vld [vmem:[%s69 + $0x120] sm:%s62]
      %216 = vst [vmem:[%s70 + $0x120] sm:%s62] %v215
      %v217 = vld [vmem:[%s69 + $0x128] sm:%s62]
      %218 = vst [vmem:[%s70 + $0x124] sm:%s62] %v217
      %v219 = vld [vmem:[%s69 + $0x124] sm:%s62]
      %220 = vst [vmem:[%s70 + $0x128] sm:%s62] %v219
      %v221 = vld [vmem:[%s69 + $0x12c] sm:%s62]
      %222 = vst [vmem:[%s70 + $0x12c] sm:%s62] %v221
      %v223 = vld [vmem:[%s69 + $0x130] sm:%s62]
      %224 = vst [vmem:[%s70 + $0x130] sm:%s62] %v223
      %v225 = vld [vmem:[%s69 + $0x138] sm:%s62]
      %226 = vst [vmem:[%s70 + $0x134] sm:%s62] %v225
      %v227 = vld [vmem:[%s69 + $0x134] sm:%s62]
      %228 = vst [vmem:[%s70 + $0x138] sm:%s62] %v227
      %v229 = vld [vmem:[%s69 + $0x13c] sm:%s62]
      %230 = vst [vmem:[%s70 + $0x13c] sm:%s62] %v229
      %v231 = vld [vmem:[%s69 + $0x140] sm:%s62]
      %232 = vst [vmem:[%s70 + $0x140] sm:%s62] %v231
      %v233 = vld [vmem:[%s69 + $0x148] sm:%s62]
      %234 = vst [vmem:[%s70 + $0x144] sm:%s62] %v233
      %v235 = vld [vmem:[%s69 + $0x144] sm:%s62]
      %236 = vst [vmem:[%s70 + $0x148] sm:%s62] %v235
      %v237 = vld [vmem:[%s69 + $0x14c] sm:%s62]
      %238 = vst [vmem:[%s70 + $0x14c] sm:%s62] %v237
      %v239 = vld [vmem:[%s69 + $0x150] sm:%s62]
      %240 = vst [vmem:[%s70 + $0x150] sm:%s62] %v239
      %v241 = vld [vmem:[%s69 + $0x158] sm:%s62]
      %242 = vst [vmem:[%s70 + $0x154] sm:%s62] %v241
      %v243 = vld [vmem:[%s69 + $0x154] sm:%s62]
      %244 = vst [vmem:[%s70 + $0x158] sm:%s62] %v243
      %v245 = vld [vmem:[%s69 + $0x15c] sm:%s62]
      %246 = vst [vmem:[%s70 + $0x15c] sm:%s62] %v245
      %v247 = vld [vmem:[%s69 + $0x160] sm:%s62]
      %248 = vst [vmem:[%s70 + $0x160] sm:%s62] %v247
      %v249 = vld [vmem:[%s69 + $0x168] sm:%s62]
      %250 = vst [vmem:[%s70 + $0x164] sm:%s62] %v249
      %v251 = vld [vmem:[%s69 + $0x164] sm:%s62]
      %252 = vst [vmem:[%s70 + $0x168] sm:%s62] %v251
      %v253 = vld [vmem:[%s69 + $0x16c] sm:%s62]
      %254 = vst [vmem:[%s70 + $0x16c] sm:%s62] %v253
      %v255 = vld [vmem:[%s69 + $0x170] sm:%s62]
      %256 = vst [vmem:[%s70 + $0x170] sm:%s62] %v255
      %v257 = vld [vmem:[%s69 + $0x178] sm:%s62]
      %258 = vst [vmem:[%s70 + $0x174] sm:%s62] %v257
      %v259 = vld [vmem:[%s69 + $0x174] sm:%s62]
      %260 = vst [vmem:[%s70 + $0x178] sm:%s62] %v259
      %v261 = vld [vmem:[%s69 + $0x17c] sm:%s62]
      %262 = vst [vmem:[%s70 + $0x17c] sm:%s62] %v261
      %v263 = vld [vmem:[%s69 + $0x180] sm:%s62]
      %264 = vst [vmem:[%s70 + $0x180] sm:%s62] %v263
      %v265 = vld [vmem:[%s69 + $0x188] sm:%s62]
      %266 = vst [vmem:[%s70 + $0x184] sm:%s62] %v265
      %v267 = vld [vmem:[%s69 + $0x184] sm:%s62]
      %268 = vst [vmem:[%s70 + $0x188] sm:%s62] %v267
      %v269 = vld [vmem:[%s69 + $0x18c] sm:%s62]
      %270 = vst [vmem:[%s70 + $0x18c] sm:%s62] %v269
      %v271 = vld [vmem:[%s69 + $0x190] sm:%s62]
      %272 = vst [vmem:[%s70 + $0x190] sm:%s62] %v271
      %v273 = vld [vmem:[%s69 + $0x198] sm:%s62]
      %274 = vst [vmem:[%s70 + $0x194] sm:%s62] %v273
      %v275 = vld [vmem:[%s69 + $0x194] sm:%s62]
      %276 = vst [vmem:[%s70 + $0x198] sm:%s62] %v275
      %v277 = vld [vmem:[%s69 + $0x19c] sm:%s62]
      %278 = vst [vmem:[%s70 + $0x19c] sm:%s62] %v277
      %v279 = vld [vmem:[%s69 + $0x1a0] sm:%s62]
      %280 = vst [vmem:[%s70 + $0x1a0] sm:%s62] %v279
      %v281 = vld [vmem:[%s69 + $0x1a8] sm:%s62]
      %282 = vst [vmem:[%s70 + $0x1a4] sm:%s62] %v281
      %v283 = vld [vmem:[%s69 + $0x1a4] sm:%s62]
      %284 = vst [vmem:[%s70 + $0x1a8] sm:%s62] %v283
      %v285 = vld [vmem:[%s69 + $0x1ac] sm:%s62]
      %286 = vst [vmem:[%s70 + $0x1ac] sm:%s62] %v285
      %v287 = vld [vmem:[%s69 + $0x1b0] sm:%s62]
      %288 = vst [vmem:[%s70 + $0x1b0] sm:%s62] %v287
      %v289 = vld [vmem:[%s69 + $0x1b8] sm:%s62]
      %290 = vst [vmem:[%s70 + $0x1b4] sm:%s62] %v289
      %v291 = vld [vmem:[%s69 + $0x1b4] sm:%s62]
      %292 = vst [vmem:[%s70 + $0x1b8] sm:%s62] %v291
      %v293 = vld [vmem:[%s69 + $0x1bc] sm:%s62]
      %294 = vst [vmem:[%s70 + $0x1bc] sm:%s62] %v293
      %v295 = vld [vmem:[%s69 + $0x1c0] sm:%s62]
      %296 = vst [vmem:[%s70 + $0x1c0] sm:%s62] %v295
      %v297 = vld [vmem:[%s69 + $0x1c8] sm:%s62]
      %298 = vst [vmem:[%s70 + $0x1c4] sm:%s62] %v297
      %v299 = vld [vmem:[%s69 + $0x1c4] sm:%s62]
      %300 = vst [vmem:[%s70 + $0x1c8] sm:%s62] %v299
      %v301 = vld [vmem:[%s69 + $0x1cc] sm:%s62]
      %302 = vst [vmem:[%s70 + $0x1cc] sm:%s62] %v301
      %v303 = vld [vmem:[%s69 + $0x1d0] sm:%s62]
      %304 = vst [vmem:[%s70 + $0x1d0] sm:%s62] %v303
      %v305 = vld [vmem:[%s69 + $0x1d8] sm:%s62]
      %306 = vst [vmem:[%s70 + $0x1d4] sm:%s62] %v305
      %v307 = vld [vmem:[%s69 + $0x1d4] sm:%s62]
      %308 = vst [vmem:[%s70 + $0x1d8] sm:%s62] %v307
      %v309 = vld [vmem:[%s69 + $0x1dc] sm:%s62]
      %310 = vst [vmem:[%s70 + $0x1dc] sm:%s62] %v309
      %v311 = vld [vmem:[%s69 + $0x1e0] sm:%s62]
      %312 = vst [vmem:[%s70 + $0x1e0] sm:%s62] %v311
      %v313 = vld [vmem:[%s69 + $0x1e8] sm:%s62]
      %314 = vst [vmem:[%s70 + $0x1e4] sm:%s62] %v313
      %v315 = vld [vmem:[%s69 + $0x1e4] sm:%s62]
      %316 = vst [vmem:[%s70 + $0x1e8] sm:%s62] %v315
      %v317 = vld [vmem:[%s69 + $0x1ec] sm:%s62]
      %318 = vst [vmem:[%s70 + $0x1ec] sm:%s62] %v317
      %v319 = vld [vmem:[%s69 + $0x1f0] sm:%s62]
      %320 = vst [vmem:[%s70 + $0x1f0] sm:%s62] %v319
      %v321 = vld [vmem:[%s69 + $0x1f8] sm:%s62]
      %322 = vst [vmem:[%s70 + $0x1f4] sm:%s62] %v321
      %v323 = vld [vmem:[%s69 + $0x1f4] sm:%s62]
      %324 = vst [vmem:[%s70 + $0x1f8] sm:%s62] %v323
      %v325 = vld [vmem:[%s69 + $0x1fc] sm:%s62]
      %326 = vst [vmem:[%s70 + $0x1fc] sm:%s62] %v325
      %v327 = vld [vmem:[%s69 + $0x200] sm:%s62]
      %328 = vst [vmem:[%s70 + $0x200] sm:%s62] %v327
      %v329 = vld [vmem:[%s69 + $0x208] sm:%s62]
      %330 = vst [vmem:[%s70 + $0x204] sm:%s62] %v329
      %v331 = vld [vmem:[%s69 + $0x204] sm:%s62]
      %332 = vst [vmem:[%s70 + $0x208] sm:%s62] %v331
      %v333 = vld [vmem:[%s69 + $0x20c] sm:%s62]
      %334 = vst [vmem:[%s70 + $0x20c] sm:%s62] %v333
      %v335 = vld [vmem:[%s69 + $0x210] sm:%s62]
      %336 = vst [vmem:[%s70 + $0x210] sm:%s62] %v335
      %v337 = vld [vmem:[%s69 + $0x218] sm:%s62]
      %338 = vst [vmem:[%s70 + $0x214] sm:%s62] %v337
      %v339 = vld [vmem:[%s69 + $0x214] sm:%s62]
      %340 = vst [vmem:[%s70 + $0x218] sm:%s62] %v339
      %v341 = vld [vmem:[%s69 + $0x21c] sm:%s62]
      %342 = vst [vmem:[%s70 + $0x21c] sm:%s62] %v341
      %v343 = vld [vmem:[%s69 + $0x220] sm:%s62]
      %344 = vst [vmem:[%s70 + $0x220] sm:%s62] %v343
      %v345 = vld [vmem:[%s69 + $0x228] sm:%s62]
      %346 = vst [vmem:[%s70 + $0x224] sm:%s62] %v345
      %v347 = vld [vmem:[%s69 + $0x224] sm:%s62]
      %348 = vst [vmem:[%s70 + $0x228] sm:%s62] %v347
      %v349 = vld [vmem:[%s69 + $0x22c] sm:%s62]
      %350 = vst [vmem:[%s70 + $0x22c] sm:%s62] %v349
      %v351 = vld [vmem:[%s69 + $0x230] sm:%s62]
      %352 = vst [vmem:[%s70 + $0x230] sm:%s62] %v351
      %v353 = vld [vmem:[%s69 + $0x238] sm:%s62]
      %354 = vst [vmem:[%s70 + $0x234] sm:%s62] %v353
      %v355 = vld [vmem:[%s69 + $0x234] sm:%s62]
      %356 = vst [vmem:[%s70 + $0x238] sm:%s62] %v355
      %v357 = vld [vmem:[%s69 + $0x23c] sm:%s62]
      %358 = vst [vmem:[%s70 + $0x23c] sm:%s62] %v357
      %v359 = vld [vmem:[%s69 + $0x240] sm:%s62]
      %360 = vst [vmem:[%s70 + $0x240] sm:%s62] %v359
      %v361 = vld [vmem:[%s69 + $0x248] sm:%s62]
      %362 = vst [vmem:[%s70 + $0x244] sm:%s62] %v361
      %v363 = vld [vmem:[%s69 + $0x244] sm:%s62]
      %364 = vst [vmem:[%s70 + $0x248] sm:%s62] %v363
      %v365 = vld [vmem:[%s69 + $0x24c] sm:%s62]
      %366 = vst [vmem:[%s70 + $0x24c] sm:%s62] %v365
      %v367 = vld [vmem:[%s69 + $0x250] sm:%s62]
      %368 = vst [vmem:[%s70 + $0x250] sm:%s62] %v367
      %v369 = vld [vmem:[%s69 + $0x258] sm:%s62]
      %370 = vst [vmem:[%s70 + $0x254] sm:%s62] %v369
      %v371 = vld [vmem:[%s69 + $0x254] sm:%s62]
      %372 = vst [vmem:[%s70 + $0x258] sm:%s62] %v371
      %v373 = vld [vmem:[%s69 + $0x25c] sm:%s62]
      %374 = vst [vmem:[%s70 + $0x25c] sm:%s62] %v373
      %v375 = vld [vmem:[%s69 + $0x260] sm:%s62]
      %376 = vst [vmem:[%s70 + $0x260] sm:%s62] %v375
      %v377 = vld [vmem:[%s69 + $0x268] sm:%s62]
      %378 = vst [vmem:[%s70 + $0x264] sm:%s62] %v377
      %v379 = vld [vmem:[%s69 + $0x264] sm:%s62]
      %380 = vst [vmem:[%s70 + $0x268] sm:%s62] %v379
      %v381 = vld [vmem:[%s69 + $0x26c] sm:%s62]
      %382 = vst [vmem:[%s70 + $0x26c] sm:%s62] %v381
      %v383 = vld [vmem:[%s69 + $0x270] sm:%s62]
      %384 = vst [vmem:[%s70 + $0x270] sm:%s62] %v383
      %v385 = vld [vmem:[%s69 + $0x278] sm:%s62]
      %386 = vst [vmem:[%s70 + $0x274] sm:%s62] %v385
      %v387 = vld [vmem:[%s69 + $0x274] sm:%s62]
      %388 = vst [vmem:[%s70 + $0x278] sm:%s62] %v387
      %v389 = vld [vmem:[%s69 + $0x27c] sm:%s62]
      %390 = vst [vmem:[%s70 + $0x27c] sm:%s62] %v389
      %v391 = vld [vmem:[%s69 + $0x280] sm:%s62]
      %392 = vst [vmem:[%s70 + $0x280] sm:%s62] %v391
      %v393 = vld [vmem:[%s69 + $0x288] sm:%s62]
      %394 = vst [vmem:[%s70 + $0x284] sm:%s62] %v393
      %v395 = vld [vmem:[%s69 + $0x284] sm:%s62]
      %396 = vst [vmem:[%s70 + $0x288] sm:%s62] %v395
      %v397 = vld [vmem:[%s69 + $0x28c] sm:%s62]
      %398 = vst [vmem:[%s70 + $0x28c] sm:%s62] %v397
      %v399 = vld [vmem:[%s69 + $0x290] sm:%s62]
      %400 = vst [vmem:[%s70 + $0x290] sm:%s62] %v399
      %v401 = vld [vmem:[%s69 + $0x298] sm:%s62]
      %402 = vst [vmem:[%s70 + $0x294] sm:%s62] %v401
      %v403 = vld [vmem:[%s69 + $0x294] sm:%s62]
      %404 = vst [vmem:[%s70 + $0x298] sm:%s62] %v403
      %v405 = vld [vmem:[%s69 + $0x29c] sm:%s62]
      %406 = vst [vmem:[%s70 + $0x29c] sm:%s62] %v405
      %v407 = vld [vmem:[%s69 + $0x2a0] sm:%s62]
      %408 = vst [vmem:[%s70 + $0x2a0] sm:%s62] %v407
      %v409 = vld [vmem:[%s69 + $0x2a8] sm:%s62]
      %410 = vst [vmem:[%s70 + $0x2a4] sm:%s62] %v409
      %v411 = vld [vmem:[%s69 + $0x2a4] sm:%s62]
      %412 = vst [vmem:[%s70 + $0x2a8] sm:%s62] %v411
      %v413 = vld [vmem:[%s69 + $0x2ac] sm:%s62]
      %414 = vst [vmem:[%s70 + $0x2ac] sm:%s62] %v413
      %v415 = vld [vmem:[%s69 + $0x2b0] sm:%s62]
      %416 = vst [vmem:[%s70 + $0x2b0] sm:%s62] %v415
      %v417 = vld [vmem:[%s69 + $0x2b8] sm:%s62]
      %418 = vst [vmem:[%s70 + $0x2b4] sm:%s62] %v417
      %v419 = vld [vmem:[%s69 + $0x2b4] sm:%s62]
      %420 = vst [vmem:[%s70 + $0x2b8] sm:%s62] %v419
      %v421 = vld [vmem:[%s69 + $0x2bc] sm:%s62]
      %422 = vst [vmem:[%s70 + $0x2bc] sm:%s62] %v421
      %v423 = vld [vmem:[%s69 + $0x2c0] sm:%s62]
      %424 = vst [vmem:[%s70 + $0x2c0] sm:%s62] %v423
      %v425 = vld [vmem:[%s69 + $0x2c8] sm:%s62]
      %426 = vst [vmem:[%s70 + $0x2c4] sm:%s62] %v425
      %v427 = vld [vmem:[%s69 + $0x2c4] sm:%s62]
      %428 = vst [vmem:[%s70 + $0x2c8] sm:%s62] %v427
      %v429 = vld [vmem:[%s69 + $0x2cc] sm:%s62]
      %430 = vst [vmem:[%s70 + $0x2cc] sm:%s62] %v429
      %v431 = vld [vmem:[%s69 + $0x2d0] sm:%s62]
      %432 = vst [vmem:[%s70 + $0x2d0] sm:%s62] %v431
      %v433 = vld [vmem:[%s69 + $0x2d8] sm:%s62]
      %434 = vst [vmem:[%s70 + $0x2d4] sm:%s62] %v433
      %v435 = vld [vmem:[%s69 + $0x2d4] sm:%s62]
      %436 = vst [vmem:[%s70 + $0x2d8] sm:%s62] %v435
      %v437 = vld [vmem:[%s69 + $0x2dc] sm:%s62]
      %438 = vst [vmem:[%s70 + $0x2dc] sm:%s62] %v437
      %v439 = vld [vmem:[%s69 + $0x2e0] sm:%s62]
      %440 = vst [vmem:[%s70 + $0x2e0] sm:%s62] %v439
      %v441 = vld [vmem:[%s69 + $0x2e8] sm:%s62]
      %442 = vst [vmem:[%s70 + $0x2e4] sm:%s62] %v441
      %v443 = vld [vmem:[%s69 + $0x2e4] sm:%s62]
      %444 = vst [vmem:[%s70 + $0x2e8] sm:%s62] %v443
      %v445 = vld [vmem:[%s69 + $0x2ec] sm:%s62]
      %446 = vst [vmem:[%s70 + $0x2ec] sm:%s62] %v445
      %v447 = vld [vmem:[%s69 + $0x2f0] sm:%s62]
      %448 = vst [vmem:[%s70 + $0x2f0] sm:%s62] %v447
      %v449 = vld [vmem:[%s69 + $0x2f8] sm:%s62]
      %450 = vst [vmem:[%s70 + $0x2f4] sm:%s62] %v449
      %v451 = vld [vmem:[%s69 + $0x2f4] sm:%s62]
      %452 = vst [vmem:[%s70 + $0x2f8] sm:%s62] %v451
      %v453 = vld [vmem:[%s69 + $0x2fc] sm:%s62]
      %454 = vst [vmem:[%s70 + $0x2fc] sm:%s62] %v453
      %v455 = vld [vmem:[%s69 + $0x300] sm:%s62]
      %456 = vst [vmem:[%s70 + $0x300] sm:%s62] %v455
      %v457 = vld [vmem:[%s69 + $0x308] sm:%s62]
      %458 = vst [vmem:[%s70 + $0x304] sm:%s62] %v457
      %v459 = vld [vmem:[%s69 + $0x304] sm:%s62]
      %460 = vst [vmem:[%s70 + $0x308] sm:%s62] %v459
      %v461 = vld [vmem:[%s69 + $0x30c] sm:%s62]
      %462 = vst [vmem:[%s70 + $0x30c] sm:%s62] %v461
      %v463 = vld [vmem:[%s69 + $0x310] sm:%s62]
      %464 = vst [vmem:[%s70 + $0x310] sm:%s62] %v463
      %v465 = vld [vmem:[%s69 + $0x318] sm:%s62]
      %466 = vst [vmem:[%s70 + $0x314] sm:%s62] %v465
      %v467 = vld [vmem:[%s69 + $0x314] sm:%s62]
      %468 = vst [vmem:[%s70 + $0x318] sm:%s62] %v467
      %v469 = vld [vmem:[%s69 + $0x31c] sm:%s62]
      %470 = vst [vmem:[%s70 + $0x31c] sm:%s62] %v469
      %v471 = vld [vmem:[%s69 + $0x320] sm:%s62]
      %472 = vst [vmem:[%s70 + $0x320] sm:%s62] %v471
      %v473 = vld [vmem:[%s69 + $0x328] sm:%s62]
      %474 = vst [vmem:[%s70 + $0x324] sm:%s62] %v473
      %v475 = vld [vmem:[%s69 + $0x324] sm:%s62]
      %476 = vst [vmem:[%s70 + $0x328] sm:%s62] %v475
      %v477 = vld [vmem:[%s69 + $0x32c] sm:%s62]
      %478 = vst [vmem:[%s70 + $0x32c] sm:%s62] %v477
      %v479 = vld [vmem:[%s69 + $0x330] sm:%s62]
      %480 = vst [vmem:[%s70 + $0x330] sm:%s62] %v479
      %v481 = vld [vmem:[%s69 + $0x338] sm:%s62]
      %482 = vst [vmem:[%s70 + $0x334] sm:%s62] %v481
      %v483 = vld [vmem:[%s69 + $0x334] sm:%s62]
      %484 = vst [vmem:[%s70 + $0x338] sm:%s62] %v483
      %v485 = vld [vmem:[%s69 + $0x33c] sm:%s62]
      %486 = vst [vmem:[%s70 + $0x33c] sm:%s62] %v485
      %v487 = vld [vmem:[%s69 + $0x340] sm:%s62]
      %488 = vst [vmem:[%s70 + $0x340] sm:%s62] %v487
      %v489 = vld [vmem:[%s69 + $0x348] sm:%s62]
      %490 = vst [vmem:[%s70 + $0x344] sm:%s62] %v489
      %v491 = vld [vmem:[%s69 + $0x344] sm:%s62]
      %492 = vst [vmem:[%s70 + $0x348] sm:%s62] %v491
      %v493 = vld [vmem:[%s69 + $0x34c] sm:%s62]
      %494 = vst [vmem:[%s70 + $0x34c] sm:%s62] %v493
      %v495 = vld [vmem:[%s69 + $0x350] sm:%s62]
      %496 = vst [vmem:[%s70 + $0x350] sm:%s62] %v495
      %v497 = vld [vmem:[%s69 + $0x358] sm:%s62]
      %498 = vst [vmem:[%s70 + $0x354] sm:%s62] %v497
      %v499 = vld [vmem:[%s69 + $0x354] sm:%s62]
      %500 = vst [vmem:[%s70 + $0x358] sm:%s62] %v499
      %v501 = vld [vmem:[%s69 + $0x35c] sm:%s62]
      %502 = vst [vmem:[%s70 + $0x35c] sm:%s62] %v501
      %v503 = vld [vmem:[%s69 + $0x360] sm:%s62]
      %504 = vst [vmem:[%s70 + $0x360] sm:%s62] %v503
      %v505 = vld [vmem:[%s69 + $0x368] sm:%s62]
      %506 = vst [vmem:[%s70 + $0x364] sm:%s62] %v505
      %v507 = vld [vmem:[%s69 + $0x364] sm:%s62]
      %508 = vst [vmem:[%s70 + $0x368] sm:%s62] %v507
      %v509 = vld [vmem:[%s69 + $0x36c] sm:%s62]
      %510 = vst [vmem:[%s70 + $0x36c] sm:%s62] %v509
      %v511 = vld [vmem:[%s69 + $0x370] sm:%s62]
      %512 = vst [vmem:[%s70 + $0x370] sm:%s62] %v511
      %v513 = vld [vmem:[%s69 + $0x378] sm:%s62]
      %514 = vst [vmem:[%s70 + $0x374] sm:%s62] %v513
      %v515 = vld [vmem:[%s69 + $0x374] sm:%s62]
      %516 = vst [vmem:[%s70 + $0x378] sm:%s62] %v515
      %v517 = vld [vmem:[%s69 + $0x37c] sm:%s62]
      %518 = vst [vmem:[%s70 + $0x37c] sm:%s62] %v517
      %v519 = vld [vmem:[%s69 + $0x380] sm:%s62]
      %520 = vst [vmem:[%s70 + $0x380] sm:%s62] %v519
      %v521 = vld [vmem:[%s69 + $0x388] sm:%s62]
      %522 = vst [vmem:[%s70 + $0x384] sm:%s62] %v521
      %v523 = vld [vmem:[%s69 + $0x384] sm:%s62]
      %524 = vst [vmem:[%s70 + $0x388] sm:%s62] %v523
      %v525 = vld [vmem:[%s69 + $0x38c] sm:%s62]
      %526 = vst [vmem:[%s70 + $0x38c] sm:%s62] %v525
      %v527 = vld [vmem:[%s69 + $0x390] sm:%s62]
      %528 = vst [vmem:[%s70 + $0x390] sm:%s62] %v527
      %v529 = vld [vmem:[%s69 + $0x398] sm:%s62]
      %530 = vst [vmem:[%s70 + $0x394] sm:%s62] %v529
      %v531 = vld [vmem:[%s69 + $0x394] sm:%s62]
      %532 = vst [vmem:[%s70 + $0x398] sm:%s62] %v531
      %v533 = vld [vmem:[%s69 + $0x39c] sm:%s62]
      %534 = vst [vmem:[%s70 + $0x39c] sm:%s62] %v533
      %v535 = vld [vmem:[%s69 + $0x3a0] sm:%s62]
      %536 = vst [vmem:[%s70 + $0x3a0] sm:%s62] %v535
      %v537 = vld [vmem:[%s69 + $0x3a8] sm:%s62]
      %538 = vst [vmem:[%s70 + $0x3a4] sm:%s62] %v537
      %v539 = vld [vmem:[%s69 + $0x3a4] sm:%s62]
      %540 = vst [vmem:[%s70 + $0x3a8] sm:%s62] %v539
      %v541 = vld [vmem:[%s69 + $0x3ac] sm:%s62]
      %542 = vst [vmem:[%s70 + $0x3ac] sm:%s62] %v541
      %v543 = vld [vmem:[%s69 + $0x3b0] sm:%s62]
      %544 = vst [vmem:[%s70 + $0x3b0] sm:%s62] %v543
      %v545 = vld [vmem:[%s69 + $0x3b8] sm:%s62]
      %546 = vst [vmem:[%s70 + $0x3b4] sm:%s62] %v545
      %v547 = vld [vmem:[%s69 + $0x3b4] sm:%s62]
      %548 = vst [vmem:[%s70 + $0x3b8] sm:%s62] %v547
      %v549 = vld [vmem:[%s69 + $0x3bc] sm:%s62]
      %550 = vst [vmem:[%s70 + $0x3bc] sm:%s62] %v549
      %v551 = vld [vmem:[%s69 + $0x3c0] sm:%s62]
      %552 = vst [vmem:[%s70 + $0x3c0] sm:%s62] %v551
      %v553 = vld [vmem:[%s69 + $0x3c8] sm:%s62]
      %554 = vst [vmem:[%s70 + $0x3c4] sm:%s62] %v553
      %v555 = vld [vmem:[%s69 + $0x3c4] sm:%s62]
      %556 = vst [vmem:[%s70 + $0x3c8] sm:%s62] %v555
      %v557 = vld [vmem:[%s69 + $0x3cc] sm:%s62]
      %558 = vst [vmem:[%s70 + $0x3cc] sm:%s62] %v557
      %v559 = vld [vmem:[%s69 + $0x3d0] sm:%s62]
      %560 = vst [vmem:[%s70 + $0x3d0] sm:%s62] %v559
      %v561 = vld [vmem:[%s69 + $0x3d8] sm:%s62]
      %562 = vst [vmem:[%s70 + $0x3d4] sm:%s62] %v561
      %v563 = vld [vmem:[%s69 + $0x3d4] sm:%s62]
      %564 = vst [vmem:[%s70 + $0x3d8] sm:%s62] %v563
      %v565 = vld [vmem:[%s69 + $0x3dc] sm:%s62]
      %566 = vst [vmem:[%s70 + $0x3dc] sm:%s62] %v565
      %v567 = vld [vmem:[%s69 + $0x3e0] sm:%s62]
      %568 = vst [vmem:[%s70 + $0x3e0] sm:%s62] %v567
      %v569 = vld [vmem:[%s69 + $0x3e8] sm:%s62]
      %570 = vst [vmem:[%s70 + $0x3e4] sm:%s62] %v569
      %v571 = vld [vmem:[%s69 + $0x3e4] sm:%s62]
      %572 = vst [vmem:[%s70 + $0x3e8] sm:%s62] %v571
      %v573 = vld [vmem:[%s69 + $0x3ec] sm:%s62]
      %574 = vst [vmem:[%s70 + $0x3ec] sm:%s62] %v573
      %v575 = vld [vmem:[%s69 + $0x3f0] sm:%s62]
      %576 = vst [vmem:[%s70 + $0x3f0] sm:%s62] %v575
      %v577 = vld [vmem:[%s69 + $0x3f8] sm:%s62]
      %578 = vst [vmem:[%s70 + $0x3f4] sm:%s62] %v577
      %v579 = vld [vmem:[%s69 + $0x3f4] sm:%s62]
      %580 = vst [vmem:[%s70 + $0x3f8] sm:%s62] %v579
      %v581 = vld [vmem:[%s69 + $0x3fc] sm:%s62]
      %582 = vst [vmem:[%s70 + $0x3fc] sm:%s62] %v581
      %v583 = vld [vmem:[%s69 + $0x400] sm:%s62]
      %584 = vst [vmem:[%s70 + $0x400] sm:%s62] %v583
      %v585 = vld [vmem:[%s69 + $0x408] sm:%s62]
      %586 = vst [vmem:[%s70 + $0x404] sm:%s62] %v585
      %v587 = vld [vmem:[%s69 + $0x404] sm:%s62]
      %588 = vst [vmem:[%s70 + $0x408] sm:%s62] %v587
      %v589 = vld [vmem:[%s69 + $0x40c] sm:%s62]
      %590 = vst [vmem:[%s70 + $0x40c] sm:%s62] %v589
      %v591 = vld [vmem:[%s69 + $0x410] sm:%s62]
      %592 = vst [vmem:[%s70 + $0x410] sm:%s62] %v591
      %v593 = vld [vmem:[%s69 + $0x418] sm:%s62]
      %594 = vst [vmem:[%s70 + $0x414] sm:%s62] %v593
      %v595 = vld [vmem:[%s69 + $0x414] sm:%s62]
      %596 = vst [vmem:[%s70 + $0x418] sm:%s62] %v595
      %v597 = vld [vmem:[%s69 + $0x41c] sm:%s62]
      %598 = vst [vmem:[%s70 + $0x41c] sm:%s62] %v597
      %v599 = vld [vmem:[%s69 + $0x420] sm:%s62]
      %600 = vst [vmem:[%s70 + $0x420] sm:%s62] %v599
      %v601 = vld [vmem:[%s69 + $0x428] sm:%s62]
      %602 = vst [vmem:[%s70 + $0x424] sm:%s62] %v601
      %v603 = vld [vmem:[%s69 + $0x424] sm:%s62]
      %604 = vst [vmem:[%s70 + $0x428] sm:%s62] %v603
      %v605 = vld [vmem:[%s69 + $0x42c] sm:%s62]
      %606 = vst [vmem:[%s70 + $0x42c] sm:%s62] %v605
      %v607 = vld [vmem:[%s69 + $0x430] sm:%s62]
      %608 = vst [vmem:[%s70 + $0x430] sm:%s62] %v607
      %v609 = vld [vmem:[%s69 + $0x438] sm:%s62]
      %610 = vst [vmem:[%s70 + $0x434] sm:%s62] %v609
      %v611 = vld [vmem:[%s69 + $0x434] sm:%s62]
      %612 = vst [vmem:[%s70 + $0x438] sm:%s62] %v611
      %v613 = vld [vmem:[%s69 + $0x43c] sm:%s62]
      %614 = vst [vmem:[%s70 + $0x43c] sm:%s62] %v613
      %v615 = vld [vmem:[%s69 + $0x440] sm:%s62]
      %616 = vst [vmem:[%s70 + $0x440] sm:%s62] %v615
      %v617 = vld [vmem:[%s69 + $0x448] sm:%s62]
      %618 = vst [vmem:[%s70 + $0x444] sm:%s62] %v617
      %v619 = vld [vmem:[%s69 + $0x444] sm:%s62]
      %620 = vst [vmem:[%s70 + $0x448] sm:%s62] %v619
      %v621 = vld [vmem:[%s69 + $0x44c] sm:%s62]
      %622 = vst [vmem:[%s70 + $0x44c] sm:%s62] %v621
      %v623 = vld [vmem:[%s69 + $0x450] sm:%s62]
      %624 = vst [vmem:[%s70 + $0x450] sm:%s62] %v623
      %v625 = vld [vmem:[%s69 + $0x458] sm:%s62]
      %626 = vst [vmem:[%s70 + $0x454] sm:%s62] %v625
      %v627 = vld [vmem:[%s69 + $0x454] sm:%s62]
      %628 = vst [vmem:[%s70 + $0x458] sm:%s62] %v627
      %v629 = vld [vmem:[%s69 + $0x45c] sm:%s62]
      %630 = vst [vmem:[%s70 + $0x45c] sm:%s62] %v629
      %v631 = vld [vmem:[%s69 + $0x460] sm:%s62]
      %632 = vst [vmem:[%s70 + $0x460] sm:%s62] %v631
      %v633 = vld [vmem:[%s69 + $0x468] sm:%s62]
      %634 = vst [vmem:[%s70 + $0x464] sm:%s62] %v633
      %v635 = vld [vmem:[%s69 + $0x464] sm:%s62]
      %636 = vst [vmem:[%s70 + $0x468] sm:%s62] %v635
      %v637 = vld [vmem:[%s69 + $0x46c] sm:%s62]
      %638 = vst [vmem:[%s70 + $0x46c] sm:%s62] %v637
      %v639 = vld [vmem:[%s69 + $0x470] sm:%s62]
      %640 = vst [vmem:[%s70 + $0x470] sm:%s62] %v639
      %v641 = vld [vmem:[%s69 + $0x478] sm:%s62]
      %642 = vst [vmem:[%s70 + $0x474] sm:%s62] %v641
      %v643 = vld [vmem:[%s69 + $0x474] sm:%s62]
      %644 = vst [vmem:[%s70 + $0x478] sm:%s62] %v643
      %v645 = vld [vmem:[%s69 + $0x47c] sm:%s62]
      %646 = vst [vmem:[%s70 + $0x47c] sm:%s62] %v645
      %v647 = vld [vmem:[%s69 + $0x480] sm:%s62]
      %648 = vst [vmem:[%s70 + $0x480] sm:%s62] %v647
      %v649 = vld [vmem:[%s69 + $0x488] sm:%s62]
      %650 = vst [vmem:[%s70 + $0x484] sm:%s62] %v649
      %v651 = vld [vmem:[%s69 + $0x484] sm:%s62]
      %652 = vst [vmem:[%s70 + $0x488] sm:%s62] %v651
      %v653 = vld [vmem:[%s69 + $0x48c] sm:%s62]
      %654 = vst [vmem:[%s70 + $0x48c] sm:%s62] %v653
      %v655 = vld [vmem:[%s69 + $0x490] sm:%s62]
      %656 = vst [vmem:[%s70 + $0x490] sm:%s62] %v655
      %v657 = vld [vmem:[%s69 + $0x498] sm:%s62]
      %658 = vst [vmem:[%s70 + $0x494] sm:%s62] %v657
      %v659 = vld [vmem:[%s69 + $0x494] sm:%s62]
      %660 = vst [vmem:[%s70 + $0x498] sm:%s62] %v659
      %v661 = vld [vmem:[%s69 + $0x49c] sm:%s62]
      %662 = vst [vmem:[%s70 + $0x49c] sm:%s62] %v661
      %v663 = vld [vmem:[%s69 + $0x4a0] sm:%s62]
      %664 = vst [vmem:[%s70 + $0x4a0] sm:%s62] %v663
      %v665 = vld [vmem:[%s69 + $0x4a8] sm:%s62]
      %666 = vst [vmem:[%s70 + $0x4a4] sm:%s62] %v665
      %v667 = vld [vmem:[%s69 + $0x4a4] sm:%s62]
      %668 = vst [vmem:[%s70 + $0x4a8] sm:%s62] %v667
      %v669 = vld [vmem:[%s69 + $0x4ac] sm:%s62]
      %670 = vst [vmem:[%s70 + $0x4ac] sm:%s62] %v669
      %v671 = vld [vmem:[%s69 + $0x4b0] sm:%s62]
      %672 = vst [vmem:[%s70 + $0x4b0] sm:%s62] %v671
      %v673 = vld [vmem:[%s69 + $0x4b8] sm:%s62]
      %674 = vst [vmem:[%s70 + $0x4b4] sm:%s62] %v673
      %v675 = vld [vmem:[%s69 + $0x4b4] sm:%s62]
      %676 = vst [vmem:[%s70 + $0x4b8] sm:%s62] %v675
      %v677 = vld [vmem:[%s69 + $0x4bc] sm:%s62]
      %678 = vst [vmem:[%s70 + $0x4bc] sm:%s62] %v677
      %v679 = vld [vmem:[%s69 + $0x4c0] sm:%s62]
      %680 = vst [vmem:[%s70 + $0x4c0] sm:%s62] %v679
      %v681 = vld [vmem:[%s69 + $0x4c8] sm:%s62]
      %682 = vst [vmem:[%s70 + $0x4c4] sm:%s62] %v681
      %v683 = vld [vmem:[%s69 + $0x4c4] sm:%s62]
      %684 = vst [vmem:[%s70 + $0x4c8] sm:%s62] %v683
      %v685 = vld [vmem:[%s69 + $0x4cc] sm:%s62]
      %686 = vst [vmem:[%s70 + $0x4cc] sm:%s62] %v685
      %v687 = vld [vmem:[%s69 + $0x4d0] sm:%s62]
      %688 = vst [vmem:[%s70 + $0x4d0] sm:%s62] %v687
      %v689 = vld [vmem:[%s69 + $0x4d8] sm:%s62]
      %690 = vst [vmem:[%s70 + $0x4d4] sm:%s62] %v689
      %v691 = vld [vmem:[%s69 + $0x4d4] sm:%s62]
      %692 = vst [vmem:[%s70 + $0x4d8] sm:%s62] %v691
      %v693 = vld [vmem:[%s69 + $0x4dc] sm:%s62]
      %694 = vst [vmem:[%s70 + $0x4dc] sm:%s62] %v693
      %v695 = vld [vmem:[%s69 + $0x4e0] sm:%s62]
      %696 = vst [vmem:[%s70 + $0x4e0] sm:%s62] %v695
      %v697 = vld [vmem:[%s69 + $0x4e8] sm:%s62]
      %698 = vst [vmem:[%s70 + $0x4e4] sm:%s62] %v697
      %v699 = vld [vmem:[%s69 + $0x4e4] sm:%s62]
      %700 = vst [vmem:[%s70 + $0x4e8] sm:%s62] %v699
      %v701 = vld [vmem:[%s69 + $0x4ec] sm:%s62]
      %702 = vst [vmem:[%s70 + $0x4ec] sm:%s62] %v701
      %v703 = vld [vmem:[%s69 + $0x4f0] sm:%s62]
      %704 = vst [vmem:[%s70 + $0x4f0] sm:%s62] %v703
      %v705 = vld [vmem:[%s69 + $0x4f8] sm:%s62]
      %706 = vst [vmem:[%s70 + $0x4f4] sm:%s62] %v705
      %v707 = vld [vmem:[%s69 + $0x4f4] sm:%s62]
      %708 = vst [vmem:[%s70 + $0x4f8] sm:%s62] %v707
      %v709 = vld [vmem:[%s69 + $0x4fc] sm:%s62]
      %710 = vst [vmem:[%s70 + $0x4fc] sm:%s62] %v709
      %v711 = vld [vmem:[%s69 + $0x500] sm:%s62]
      %712 = vst [vmem:[%s70 + $0x500] sm:%s62] %v711
      %v713 = vld [vmem:[%s69 + $0x508] sm:%s62]
      %714 = vst [vmem:[%s70 + $0x504] sm:%s62] %v713
      %v715 = vld [vmem:[%s69 + $0x504] sm:%s62]
      %716 = vst [vmem:[%s70 + $0x508] sm:%s62] %v715
      %v717 = vld [vmem:[%s69 + $0x50c] sm:%s62]
      %718 = vst [vmem:[%s70 + $0x50c] sm:%s62] %v717
      %v719 = vld [vmem:[%s69 + $0x510] sm:%s62]
      %720 = vst [vmem:[%s70 + $0x510] sm:%s62] %v719
      %v721 = vld [vmem:[%s69 + $0x518] sm:%s62]
      %722 = vst [vmem:[%s70 + $0x514] sm:%s62] %v721
      %v723 = vld [vmem:[%s69 + $0x514] sm:%s62]
      %724 = vst [vmem:[%s70 + $0x518] sm:%s62] %v723
      %v725 = vld [vmem:[%s69 + $0x51c] sm:%s62]
      %726 = vst [vmem:[%s70 + $0x51c] sm:%s62] %v725
      %v727 = vld [vmem:[%s69 + $0x520] sm:%s62]
      %728 = vst [vmem:[%s70 + $0x520] sm:%s62] %v727
      %v729 = vld [vmem:[%s69 + $0x528] sm:%s62]
      %730 = vst [vmem:[%s70 + $0x524] sm:%s62] %v729
      %v731 = vld [vmem:[%s69 + $0x524] sm:%s62]
      %732 = vst [vmem:[%s70 + $0x528] sm:%s62] %v731
      %v733 = vld [vmem:[%s69 + $0x52c] sm:%s62]
      %734 = vst [vmem:[%s70 + $0x52c] sm:%s62] %v733
      %v735 = vld [vmem:[%s69 + $0x530] sm:%s62]
      %736 = vst [vmem:[%s70 + $0x530] sm:%s62] %v735
      %v737 = vld [vmem:[%s69 + $0x538] sm:%s62]
      %738 = vst [vmem:[%s70 + $0x534] sm:%s62] %v737
      %v739 = vld [vmem:[%s69 + $0x534] sm:%s62]
      %740 = vst [vmem:[%s70 + $0x538] sm:%s62] %v739
      %v741 = vld [vmem:[%s69 + $0x53c] sm:%s62]
      %742 = vst [vmem:[%s70 + $0x53c] sm:%s62] %v741
      %v743 = vld [vmem:[%s69 + $0x540] sm:%s62]
      %744 = vst [vmem:[%s70 + $0x540] sm:%s62] %v743
      %v745 = vld [vmem:[%s69 + $0x548] sm:%s62]
      %746 = vst [vmem:[%s70 + $0x544] sm:%s62] %v745
      %v747 = vld [vmem:[%s69 + $0x544] sm:%s62]
      %748 = vst [vmem:[%s70 + $0x548] sm:%s62] %v747
      %v749 = vld [vmem:[%s69 + $0x54c] sm:%s62]
      %750 = vst [vmem:[%s70 + $0x54c] sm:%s62] %v749
      %v751 = vld [vmem:[%s69 + $0x550] sm:%s62]
      %752 = vst [vmem:[%s70 + $0x550] sm:%s62] %v751
      %v753 = vld [vmem:[%s69 + $0x558] sm:%s62]
      %754 = vst [vmem:[%s70 + $0x554] sm:%s62] %v753
      %v755 = vld [vmem:[%s69 + $0x554] sm:%s62]
      %756 = vst [vmem:[%s70 + $0x558] sm:%s62] %v755
      %v757 = vld [vmem:[%s69 + $0x55c] sm:%s62]
      %758 = vst [vmem:[%s70 + $0x55c] sm:%s62] %v757
      %v759 = vld [vmem:[%s69 + $0x560] sm:%s62]
      %760 = vst [vmem:[%s70 + $0x560] sm:%s62] %v759
      %v761 = vld [vmem:[%s69 + $0x568] sm:%s62]
      %762 = vst [vmem:[%s70 + $0x564] sm:%s62] %v761
      %v763 = vld [vmem:[%s69 + $0x564] sm:%s62]
      %764 = vst [vmem:[%s70 + $0x568] sm:%s62] %v763
      %v765 = vld [vmem:[%s69 + $0x56c] sm:%s62]
      %766 = vst [vmem:[%s70 + $0x56c] sm:%s62] %v765
      %v767 = vld [vmem:[%s69 + $0x570] sm:%s62]
      %768 = vst [vmem:[%s70 + $0x570] sm:%s62] %v767
      %v769 = vld [vmem:[%s69 + $0x578] sm:%s62]
      %770 = vst [vmem:[%s70 + $0x574] sm:%s62] %v769
      %v771 = vld [vmem:[%s69 + $0x574] sm:%s62]
      %772 = vst [vmem:[%s70 + $0x578] sm:%s62] %v771
      %v773 = vld [vmem:[%s69 + $0x57c] sm:%s62]
      %774 = vst [vmem:[%s70 + $0x57c] sm:%s62] %v773
      %v775 = vld [vmem:[%s69 + $0x580] sm:%s62]
      %776 = vst [vmem:[%s70 + $0x580] sm:%s62] %v775
      %v777 = vld [vmem:[%s69 + $0x588] sm:%s62]
      %778 = vst [vmem:[%s70 + $0x584] sm:%s62] %v777
      %v779 = vld [vmem:[%s69 + $0x584] sm:%s62]
      %780 = vst [vmem:[%s70 + $0x588] sm:%s62] %v779
      %v781 = vld [vmem:[%s69 + $0x58c] sm:%s62]
      %782 = vst [vmem:[%s70 + $0x58c] sm:%s62] %v781
      %v783 = vld [vmem:[%s69 + $0x590] sm:%s62]
      %784 = vst [vmem:[%s70 + $0x590] sm:%s62] %v783
      %v785 = vld [vmem:[%s69 + $0x598] sm:%s62]
      %786 = vst [vmem:[%s70 + $0x594] sm:%s62] %v785
      %v787 = vld [vmem:[%s69 + $0x594] sm:%s62]
      %788 = vst [vmem:[%s70 + $0x598] sm:%s62] %v787
      %v789 = vld [vmem:[%s69 + $0x59c] sm:%s62]
      %790 = vst [vmem:[%s70 + $0x59c] sm:%s62] %v789
    $region74: #{dqn_forward.1} parent=68 // loop_footer
      %s68 = sadd.s32 1, %s64
    $region75: #{dqn_forward.1} parent=68 // loop_footer_branch
      %63 = sbr.rel target = $region71
    $region76: #{dqn_forward.1} parent=68 // loop_exit
      _
  $region69: #{dqn_forward.1} parent=0 // pred_fallthru
    _
  // Predicated region
  $region95: #{dqn_forward.1} parent=0 // pred_check
    _
  $region96: #{dqn_forward.1} parent=0 // pred_check_branch
    %1540 = sbr.rel (0) target = $region98
  $region97: #{dqn_forward.1} parent=0 // pred_region
    %1541 = vsyncadd [#allocation7], 23040
  $region98: #{dqn_forward.1} parent=0 // pred_fallthru
    _
  %s1542 = scalar_lea.sflag [#allocation7], 1
  %p1544 = scmp.lt.u32.totalorder 560, 8
  %p1545 = pneg %p1544
  // Predicated region
  $region99: #{dqn_forward.1} parent=0 // pred_check
    _
  $region100: #{dqn_forward.1} parent=0 // pred_check_branch
    %1547 = sbr.rel (%p1544) target = $region102
  $region101: #{dqn_forward.1} parent=0 // pred_region
    %s1562 = sand.u32 560, 7
    %p1563 = scmp.eq.s32.totalorder %s1562, 0
    // Predicated region
    $region114: #{dqn_forward.1} parent=101 // pred_check
      %p1564 = pneg %p1563
    $region115: #{dqn_forward.1} parent=101 // pred_check_branch
      %1566 = sbr.rel (%p1564) target = $region117
    $region116: #{dqn_forward.1} parent=101 // pred_region
      loop: start=0, step=1, limit=1
      $region118: #{dqn_forward.1} parent=116 // loop_pre_header
        _
      $region119: #{dqn_forward.1} parent=116 // loop_header
        %s1568 = sphi 0, %s1572
        %p1569 = scmp.ge.s32.totalorder %s1568, 1
        %s1573 = sphi %s11, %s11
        %s1574 = sphi [#allocation5], [#allocation5]
      $region120: #{dqn_forward.1} parent=116 // loop_header_branch
        %1571 = sbr.rel (%p1569) target = $region124
      $region121: #{dqn_forward.1} parent=116 // loop_body
        %v1575 = vld [vmem:[%s1573] sm:$0xff]
        %1576 = vst [vmem:[%s1574] sm:$0xff] %v1575
        %v1577 = vld [vmem:[%s1573 + $0x8] sm:$0xff]
        %1578 = vst [vmem:[%s1574 + $0x8] sm:$0xff] %v1577
        %v1579 = vld [vmem:[%s1573 + $0x10] sm:$0xff]
        %1580 = vst [vmem:[%s1574 + $0x10] sm:$0xff] %v1579
        %v1581 = vld [vmem:[%s1573 + $0x18] sm:$0xff]
        %1582 = vst [vmem:[%s1574 + $0x18] sm:$0xff] %v1581
        %v1583 = vld [vmem:[%s1573 + $0x20] sm:$0xff]
        %1584 = vst [vmem:[%s1574 + $0x20] sm:$0xff] %v1583
        %v1585 = vld [vmem:[%s1573 + $0x28] sm:$0xff]
        %1586 = vst [vmem:[%s1574 + $0x28] sm:$0xff] %v1585
        %v1587 = vld [vmem:[%s1573 + $0x30] sm:$0xff]
        %1588 = vst [vmem:[%s1574 + $0x30] sm:$0xff] %v1587
        %v1589 = vld [vmem:[%s1573 + $0x38] sm:$0xff]
        %1590 = vst [vmem:[%s1574 + $0x38] sm:$0xff] %v1589
        %v1591 = vld [vmem:[%s1573 + $0x40] sm:$0xff]
        %1592 = vst [vmem:[%s1574 + $0x40] sm:$0xff] %v1591
        %v1593 = vld [vmem:[%s1573 + $0x48] sm:$0xff]
        %1594 = vst [vmem:[%s1574 + $0x48] sm:$0xff] %v1593
        %v1595 = vld [vmem:[%s1573 + $0x50] sm:$0xff]
        %1596 = vst [vmem:[%s1574 + $0x50] sm:$0xff] %v1595
        %v1597 = vld [vmem:[%s1573 + $0x58] sm:$0xff]
        %1598 = vst [vmem:[%s1574 + $0x58] sm:$0xff] %v1597
        %v1599 = vld [vmem:[%s1573 + $0x60] sm:$0xff]
        %1600 = vst [vmem:[%s1574 + $0x60] sm:$0xff] %v1599
        %v1601 = vld [vmem:[%s1573 + $0x68] sm:$0xff]
        %1602 = vst [vmem:[%s1574 + $0x68] sm:$0xff] %v1601
        %v1603 = vld [vmem:[%s1573 + $0x70] sm:$0xff]
        %1604 = vst [vmem:[%s1574 + $0x70] sm:$0xff] %v1603
        %v1605 = vld [vmem:[%s1573 + $0x78] sm:$0xff]
        %1606 = vst [vmem:[%s1574 + $0x78] sm:$0xff] %v1605
        %v1607 = vld [vmem:[%s1573 + $0x80] sm:$0xff]
        %1608 = vst [vmem:[%s1574 + $0x80] sm:$0xff] %v1607
        %v1609 = vld [vmem:[%s1573 + $0x88] sm:$0xff]
        %1610 = vst [vmem:[%s1574 + $0x88] sm:$0xff] %v1609
        %v1611 = vld [vmem:[%s1573 + $0x90] sm:$0xff]
        %1612 = vst [vmem:[%s1574 + $0x90] sm:$0xff] %v1611
        %v1613 = vld [vmem:[%s1573 + $0x98] sm:$0xff]
        %1614 = vst [vmem:[%s1574 + $0x98] sm:$0xff] %v1613
        %v1615 = vld [vmem:[%s1573 + $0xa0] sm:$0xff]
        %1616 = vst [vmem:[%s1574 + $0xa0] sm:$0xff] %v1615
        %v1617 = vld [vmem:[%s1573 + $0xa8] sm:$0xff]
        %1618 = vst [vmem:[%s1574 + $0xa8] sm:$0xff] %v1617
        %v1619 = vld [vmem:[%s1573 + $0xb0] sm:$0xff]
        %1620 = vst [vmem:[%s1574 + $0xb0] sm:$0xff] %v1619
        %v1621 = vld [vmem:[%s1573 + $0xb8] sm:$0xff]
        %1622 = vst [vmem:[%s1574 + $0xb8] sm:$0xff] %v1621
        %v1623 = vld [vmem:[%s1573 + $0xc0] sm:$0xff]
        %1624 = vst [vmem:[%s1574 + $0xc0] sm:$0xff] %v1623
        %v1625 = vld [vmem:[%s1573 + $0xc8] sm:$0xff]
        %1626 = vst [vmem:[%s1574 + $0xc8] sm:$0xff] %v1625
        %v1627 = vld [vmem:[%s1573 + $0xd0] sm:$0xff]
        %1628 = vst [vmem:[%s1574 + $0xd0] sm:$0xff] %v1627
        %v1629 = vld [vmem:[%s1573 + $0xd8] sm:$0xff]
        %1630 = vst [vmem:[%s1574 + $0xd8] sm:$0xff] %v1629
        %v1631 = vld [vmem:[%s1573 + $0xe0] sm:$0xff]
        %1632 = vst [vmem:[%s1574 + $0xe0] sm:$0xff] %v1631
        %v1633 = vld [vmem:[%s1573 + $0xe8] sm:$0xff]
        %1634 = vst [vmem:[%s1574 + $0xe8] sm:$0xff] %v1633
        %v1635 = vld [vmem:[%s1573 + $0xf0] sm:$0xff]
        %1636 = vst [vmem:[%s1574 + $0xf0] sm:$0xff] %v1635
        %v1637 = vld [vmem:[%s1573 + $0xf8] sm:$0xff]
        %1638 = vst [vmem:[%s1574 + $0xf8] sm:$0xff] %v1637
        %v1639 = vld [vmem:[%s1573 + $0x100] sm:$0xff]
        %1640 = vst [vmem:[%s1574 + $0x100] sm:$0xff] %v1639
        %v1641 = vld [vmem:[%s1573 + $0x108] sm:$0xff]
        %1642 = vst [vmem:[%s1574 + $0x108] sm:$0xff] %v1641
        %v1643 = vld [vmem:[%s1573 + $0x110] sm:$0xff]
        %1644 = vst [vmem:[%s1574 + $0x110] sm:$0xff] %v1643
        %v1645 = vld [vmem:[%s1573 + $0x118] sm:$0xff]
        %1646 = vst [vmem:[%s1574 + $0x118] sm:$0xff] %v1645
        %v1647 = vld [vmem:[%s1573 + $0x120] sm:$0xff]
        %1648 = vst [vmem:[%s1574 + $0x120] sm:$0xff] %v1647
        %v1649 = vld [vmem:[%s1573 + $0x128] sm:$0xff]
        %1650 = vst [vmem:[%s1574 + $0x128] sm:$0xff] %v1649
        %v1651 = vld [vmem:[%s1573 + $0x130] sm:$0xff]
        %1652 = vst [vmem:[%s1574 + $0x130] sm:$0xff] %v1651
        %v1653 = vld [vmem:[%s1573 + $0x138] sm:$0xff]
        %1654 = vst [vmem:[%s1574 + $0x138] sm:$0xff] %v1653
        %v1655 = vld [vmem:[%s1573 + $0x140] sm:$0xff]
        %1656 = vst [vmem:[%s1574 + $0x140] sm:$0xff] %v1655
        %v1657 = vld [vmem:[%s1573 + $0x148] sm:$0xff]
        %1658 = vst [vmem:[%s1574 + $0x148] sm:$0xff] %v1657
        %v1659 = vld [vmem:[%s1573 + $0x150] sm:$0xff]
        %1660 = vst [vmem:[%s1574 + $0x150] sm:$0xff] %v1659
        %v1661 = vld [vmem:[%s1573 + $0x158] sm:$0xff]
        %1662 = vst [vmem:[%s1574 + $0x158] sm:$0xff] %v1661
        %v1663 = vld [vmem:[%s1573 + $0x160] sm:$0xff]
        %1664 = vst [vmem:[%s1574 + $0x160] sm:$0xff] %v1663
        %v1665 = vld [vmem:[%s1573 + $0x168] sm:$0xff]
        %1666 = vst [vmem:[%s1574 + $0x168] sm:$0xff] %v1665
        %v1667 = vld [vmem:[%s1573 + $0x170] sm:$0xff]
        %1668 = vst [vmem:[%s1574 + $0x170] sm:$0xff] %v1667
        %v1669 = vld [vmem:[%s1573 + $0x178] sm:$0xff]
        %1670 = vst [vmem:[%s1574 + $0x178] sm:$0xff] %v1669
        %v1671 = vld [vmem:[%s1573 + $0x180] sm:$0xff]
        %1672 = vst [vmem:[%s1574 + $0x180] sm:$0xff] %v1671
        %v1673 = vld [vmem:[%s1573 + $0x188] sm:$0xff]
        %1674 = vst [vmem:[%s1574 + $0x188] sm:$0xff] %v1673
        %v1675 = vld [vmem:[%s1573 + $0x190] sm:$0xff]
        %1676 = vst [vmem:[%s1574 + $0x190] sm:$0xff] %v1675
        %v1677 = vld [vmem:[%s1573 + $0x198] sm:$0xff]
        %1678 = vst [vmem:[%s1574 + $0x198] sm:$0xff] %v1677
        %v1679 = vld [vmem:[%s1573 + $0x1a0] sm:$0xff]
        %1680 = vst [vmem:[%s1574 + $0x1a0] sm:$0xff] %v1679
        %v1681 = vld [vmem:[%s1573 + $0x1a8] sm:$0xff]
        %1682 = vst [vmem:[%s1574 + $0x1a8] sm:$0xff] %v1681
        %v1683 = vld [vmem:[%s1573 + $0x1b0] sm:$0xff]
        %1684 = vst [vmem:[%s1574 + $0x1b0] sm:$0xff] %v1683
        %v1685 = vld [vmem:[%s1573 + $0x1b8] sm:$0xff]
        %1686 = vst [vmem:[%s1574 + $0x1b8] sm:$0xff] %v1685
        %v1687 = vld [vmem:[%s1573 + $0x1c0] sm:$0xff]
        %1688 = vst [vmem:[%s1574 + $0x1c0] sm:$0xff] %v1687
        %v1689 = vld [vmem:[%s1573 + $0x1c8] sm:$0xff]
        %1690 = vst [vmem:[%s1574 + $0x1c8] sm:$0xff] %v1689
        %v1691 = vld [vmem:[%s1573 + $0x1d0] sm:$0xff]
        %1692 = vst [vmem:[%s1574 + $0x1d0] sm:$0xff] %v1691
        %v1693 = vld [vmem:[%s1573 + $0x1d8] sm:$0xff]
        %1694 = vst [vmem:[%s1574 + $0x1d8] sm:$0xff] %v1693
        %v1695 = vld [vmem:[%s1573 + $0x1e0] sm:$0xff]
        %1696 = vst [vmem:[%s1574 + $0x1e0] sm:$0xff] %v1695
        %v1697 = vld [vmem:[%s1573 + $0x1e8] sm:$0xff]
        %1698 = vst [vmem:[%s1574 + $0x1e8] sm:$0xff] %v1697
        %v1699 = vld [vmem:[%s1573 + $0x1f0] sm:$0xff]
        %1700 = vst [vmem:[%s1574 + $0x1f0] sm:$0xff] %v1699
        %v1701 = vld [vmem:[%s1573 + $0x1f8] sm:$0xff]
        %1702 = vst [vmem:[%s1574 + $0x1f8] sm:$0xff] %v1701
        %v1703 = vld [vmem:[%s1573 + $0x200] sm:$0xff]
        %1704 = vst [vmem:[%s1574 + $0x200] sm:$0xff] %v1703
        %v1705 = vld [vmem:[%s1573 + $0x208] sm:$0xff]
        %1706 = vst [vmem:[%s1574 + $0x208] sm:$0xff] %v1705
        %v1707 = vld [vmem:[%s1573 + $0x210] sm:$0xff]
        %1708 = vst [vmem:[%s1574 + $0x210] sm:$0xff] %v1707
        %v1709 = vld [vmem:[%s1573 + $0x218] sm:$0xff]
        %1710 = vst [vmem:[%s1574 + $0x218] sm:$0xff] %v1709
        %v1711 = vld [vmem:[%s1573 + $0x220] sm:$0xff]
        %1712 = vst [vmem:[%s1574 + $0x220] sm:$0xff] %v1711
        %v1713 = vld [vmem:[%s1573 + $0x228] sm:$0xff]
        %1714 = vst [vmem:[%s1574 + $0x228] sm:$0xff] %v1713
      $region122: #{dqn_forward.1} parent=116 // loop_footer
        %s1572 = sadd.s32 1, %s1568
      $region123: #{dqn_forward.1} parent=116 // loop_footer_branch
        %1567 = sbr.rel target = $region119
      $region124: #{dqn_forward.1} parent=116 // loop_exit
        _
    $region117: #{dqn_forward.1} parent=101 // pred_fallthru
      _
    %p1715 = pneg %p1563
    // Predicated region
    $region125: #{dqn_forward.1} parent=101 // pred_check
      _
    $region126: #{dqn_forward.1} parent=101 // pred_check_branch
      %1717 = sbr.rel (%p1563) target = $region128
    $region127: #{dqn_forward.1} parent=101 // pred_region
      %s1718 = sand.u32 560, 7
    $region128: #{dqn_forward.1} parent=101 // pred_fallthru
      _
  $region102: #{dqn_forward.1} parent=0 // pred_fallthru
    _
  // Predicated region
  $region103: #{dqn_forward.1} parent=0 // pred_check
    %p1548 = pneg %p1544
  $region104: #{dqn_forward.1} parent=0 // pred_check_branch
    %1550 = sbr.rel (%p1548) target = $region106
  $region105: #{dqn_forward.1} parent=0 // pred_region
    %s1551 = sshllo.u32 0, 560
    loop: start=0, step=1, limit=1
    $region107: #{dqn_forward.1} parent=105 // loop_pre_header
      _
    $region108: #{dqn_forward.1} parent=105 // loop_header
      %s1553 = sphi 0, %s1557
      %p1554 = scmp.ge.s32.totalorder %s1553, 1
      %s1558 = sphi %s11, %s11
      %s1559 = sphi [#allocation5], [#allocation5]
    $region109: #{dqn_forward.1} parent=105 // loop_header_branch
      %1556 = sbr.rel (%p1554) target = $region113
    $region110: #{dqn_forward.1} parent=105 // loop_body
      %v1560 = vld [vmem:[%s1558] sm:%s1551]
      %1561 = vst [vmem:[%s1559] sm:%s1551] %v1560
    $region111: #{dqn_forward.1} parent=105 // loop_footer
      %s1557 = sadd.s32 1, %s1553
    $region112: #{dqn_forward.1} parent=105 // loop_footer_branch
      %1552 = sbr.rel target = $region108
    $region113: #{dqn_forward.1} parent=105 // loop_exit
      _
  $region106: #{dqn_forward.1} parent=0 // pred_fallthru
    _
  // Predicated region
  $region129: #{dqn_forward.1} parent=0 // pred_check
    _
  $region130: #{dqn_forward.1} parent=0 // pred_check_branch
    %1721 = sbr.rel (0) target = $region132
  $region131: #{dqn_forward.1} parent=0 // pred_region
    %1722 = vsyncadd %s1542, 8960
  $region132: #{dqn_forward.1} parent=0 // pred_fallthru
    _
  %s1723 = scalar_lea.sflag [#allocation7], 2
  %p1725 = scmp.lt.u32.totalorder 64, 8
  %p1726 = pneg %p1725
  // Predicated region
  $region133: #{dqn_forward.1} parent=0 // pred_check
    _
  $region134: #{dqn_forward.1} parent=0 // pred_check_branch
    %1728 = sbr.rel (%p1725) target = $region136
  $region135: #{dqn_forward.1} parent=0 // pred_region
    %s1743 = sand.u32 64, 7
    %p1744 = scmp.eq.s32.totalorder %s1743, 0
    // Predicated region
    $region148: #{dqn_forward.1} parent=135 // pred_check
      %p1745 = pneg %p1744
    $region149: #{dqn_forward.1} parent=135 // pred_check_branch
      %1747 = sbr.rel (%p1745) target = $region151
    $region150: #{dqn_forward.1} parent=135 // pred_region
      loop: start=0, step=1, limit=1
      $region152: #{dqn_forward.1} parent=150 // loop_pre_header
        _
      $region153: #{dqn_forward.1} parent=150 // loop_header
        %s1749 = sphi 0, %s1753
        %p1750 = scmp.ge.s32.totalorder %s1749, 1
        %s1754 = sphi %s16, %s16
        %s1755 = sphi [#allocation6], [#allocation6]
      $region154: #{dqn_forward.1} parent=150 // loop_header_branch
        %1752 = sbr.rel (%p1750) target = $region158
      $region155: #{dqn_forward.1} parent=150 // loop_body
        %v1756 = vld [vmem:[%s1754] sm:$0xff]
        %1757 = vst [vmem:[%s1755] sm:$0xff] %v1756
        %v1758 = vld [vmem:[%s1754 + $0x8] sm:$0xff]
        %1759 = vst [vmem:[%s1755 + $0x8] sm:$0xff] %v1758
        %v1760 = vld [vmem:[%s1754 + $0x10] sm:$0xff]
        %1761 = vst [vmem:[%s1755 + $0x10] sm:$0xff] %v1760
        %v1762 = vld [vmem:[%s1754 + $0x18] sm:$0xff]
        %1763 = vst [vmem:[%s1755 + $0x18] sm:$0xff] %v1762
        %v1764 = vld [vmem:[%s1754 + $0x20] sm:$0xff]
        %1765 = vst [vmem:[%s1755 + $0x20] sm:$0xff] %v1764
        %v1766 = vld [vmem:[%s1754 + $0x28] sm:$0xff]
        %1767 = vst [vmem:[%s1755 + $0x28] sm:$0xff] %v1766
        %v1768 = vld [vmem:[%s1754 + $0x30] sm:$0xff]
        %1769 = vst [vmem:[%s1755 + $0x30] sm:$0xff] %v1768
        %v1770 = vld [vmem:[%s1754 + $0x38] sm:$0xff]
        %1771 = vst [vmem:[%s1755 + $0x38] sm:$0xff] %v1770
      $region156: #{dqn_forward.1} parent=150 // loop_footer
        %s1753 = sadd.s32 1, %s1749
      $region157: #{dqn_forward.1} parent=150 // loop_footer_branch
        %1748 = sbr.rel target = $region153
      $region158: #{dqn_forward.1} parent=150 // loop_exit
        _
    $region151: #{dqn_forward.1} parent=135 // pred_fallthru
      _
    %p1772 = pneg %p1744
    // Predicated region
    $region159: #{dqn_forward.1} parent=135 // pred_check
      _
    $region160: #{dqn_forward.1} parent=135 // pred_check_branch
      %1774 = sbr.rel (%p1744) target = $region162
    $region161: #{dqn_forward.1} parent=135 // pred_region
      %s1775 = sand.u32 64, 7
    $region162: #{dqn_forward.1} parent=135 // pred_fallthru
      _
  $region136: #{dqn_forward.1} parent=0 // pred_fallthru
    _
  // Predicated region
  $region137: #{dqn_forward.1} parent=0 // pred_check
    %p1729 = pneg %p1725
  $region138: #{dqn_forward.1} parent=0 // pred_check_branch
    %1731 = sbr.rel (%p1729) target = $region140
  $region139: #{dqn_forward.1} parent=0 // pred_region
    %s1732 = sshllo.u32 0, 64
    loop: start=0, step=1, limit=1
    $region141: #{dqn_forward.1} parent=139 // loop_pre_header
      _
    $region142: #{dqn_forward.1} parent=139 // loop_header
      %s1734 = sphi 0, %s1738
      %p1735 = scmp.ge.s32.totalorder %s1734, 1
      %s1739 = sphi %s16, %s16
      %s1740 = sphi [#allocation6], [#allocation6]
    $region143: #{dqn_forward.1} parent=139 // loop_header_branch
      %1737 = sbr.rel (%p1735) target = $region147
    $region144: #{dqn_forward.1} parent=139 // loop_body
      %v1741 = vld [vmem:[%s1739] sm:%s1732]
      %1742 = vst [vmem:[%s1740] sm:%s1732] %v1741
    $region145: #{dqn_forward.1} parent=139 // loop_footer
      %s1738 = sadd.s32 1, %s1734
    $region146: #{dqn_forward.1} parent=139 // loop_footer_branch
      %1733 = sbr.rel target = $region142
    $region147: #{dqn_forward.1} parent=139 // loop_exit
      _
  $region140: #{dqn_forward.1} parent=0 // pred_fallthru
    _
  // Predicated region
  $region163: #{dqn_forward.1} parent=0 // pred_check
    _
  $region164: #{dqn_forward.1} parent=0 // pred_check_branch
    %1778 = sbr.rel (0) target = $region166
  $region165: #{dqn_forward.1} parent=0 // pred_region
    %1779 = vsyncadd %s1723, 1024
  $region166: #{dqn_forward.1} parent=0 // pred_fallthru
    _
  %v1780 = vld [vmem:[%s0] sm:$0xff]
  %v1781 = vld [vmem:[%s0 + $0x8] sm:$0xff]
  %v1782 = vld [vmem:[%s0 + $0x10] sm:$0xff]
  %v1783 = vld [vmem:[%s0 + $0x18] sm:$0xff]
  %v1784 = vld [vmem:[%s0 + $0x20] sm:$0xff]
  %v1785 = vld [vmem:[%s0 + $0x28] sm:$0xff]
  %v1786 = vld [vmem:[%s0 + $0x30] sm:$0xff]
  %v1787 = vld [vmem:[%s0 + $0x38] sm:$0xff]
  %v1788 = vld [vmem:[%s0 + $0x40] sm:$0xff]
  %v1789 = vld [vmem:[%s0 + $0x48] sm:$0xff]
  %v1790 = vld [vmem:[%s0 + $0x50] sm:$0xff]
  %v1791 = vld [vmem:[%s0 + $0x58] sm:$0xff]
  %v1792 = vld [vmem:[%s0 + $0x60] sm:$0xff]
  %v1793 = vld [vmem:[%s0 + $0x68] sm:$0xff]
  %v1794 = vld [vmem:[%s0 + $0x70] sm:$0xff]
  %v1795 = vld [vmem:[%s0 + $0x78] sm:$0xff]
  %v1796 = vld [vmem:[%s0 + $0x80] sm:$0xff]
  %v1797 = vld [vmem:[%s0 + $0x88] sm:$0xff]
  %v1798 = vpack.c.bf16 %v1781, %v1780
  %v1799 = vpack.c.bf16 %v1783, %v1782
  %v1800 = vpack.c.bf16 %v1785, %v1784
  %v1801 = vpack.c.bf16 %v1787, %v1786
  %v1802 = vpack.c.bf16 %v1789, %v1788
  %v1803 = vpack.c.bf16 %v1791, %v1790
  %v1804 = vpack.c.bf16 %v1793, %v1792
  %v1805 = vpack.c.bf16 %v1795, %v1794
  %v1806 = vpack.c.bf16 %v1797, %v1796
  %v1807 = vld [vmem:[%s1] sm:$0xff]
  %v1808 = vld [vmem:[%s1 + $0x8] sm:$0xf]
  %v1809 = vld [vmem:[%s1 + $0xc] sm:$0xff]
  %v1810 = vld [vmem:[%s1 + $0x14] sm:$0xf]
  %v1811 = vld [vmem:[%s1 + $0x18] sm:$0xff]
  %v1812 = vld [vmem:[%s1 + $0x20] sm:$0xf]
  %v1813 = vld [vmem:[%s1 + $0x24] sm:$0xff]
  %v1814 = vld [vmem:[%s1 + $0x2c] sm:$0xf]
  %v1815 = vld [vmem:[%s1 + $0x30] sm:$0xff]
  %v1816 = vld [vmem:[%s1 + $0x38] sm:$0xf]
  %v1817 = vld [vmem:[%s1 + $0x3c] sm:$0xff]
  %v1818 = vld [vmem:[%s1 + $0x44] sm:$0xf]
  %v1819 = vld [vmem:[%s1 + $0x48] sm:$0xff]
  %v1820 = vld [vmem:[%s1 + $0x50] sm:$0xf]
  %v1821 = vld [vmem:[%s1 + $0x54] sm:$0xff]
  %v1822 = vld [vmem:[%s1 + $0x5c] sm:$0xf]
  %v1823 = vld [vmem:[%s1 + $0x60] sm:$0xff]
  %v1824 = vld [vmem:[%s1 + $0x68] sm:$0xf]
  %v1825 = vld [vmem:[%s1 + $0x6c] sm:$0xff]
  %v1826 = vld [vmem:[%s1 + $0x74] sm:$0xf]
  %v1827 = vld [vmem:[%s1 + $0x78] sm:$0xff]
  %v1828 = vld [vmem:[%s1 + $0x80] sm:$0xf]
  %v1829 = vld [vmem:[%s1 + $0x84] sm:$0xff]
  %v1830 = vld [vmem:[%s1 + $0x8c] sm:$0xf]
  %v1831 = vld [vmem:[%s1 + $0x90] sm:$0xff]
  %v1832 = vld [vmem:[%s1 + $0x98] sm:$0xf]
  %v1833 = vld [vmem:[%s1 + $0x9c] sm:$0xff]
  %v1834 = vld [vmem:[%s1 + $0xa4] sm:$0xf]
  %v1835 = vld [vmem:[%s1 + $0xa8] sm:$0xff]
  %v1836 = vld [vmem:[%s1 + $0xb0] sm:$0xf]
  %v1837 = vld [vmem:[%s0 + $0xa0] sm:$0xff]
  %v1838 = vld [vmem:[%s0 + $0xa8] sm:$0xff]
  %v1839 = vld [vmem:[%s0 + $0xb0] sm:$0xff]
  %v1840 = vld [vmem:[%s0 + $0xb8] sm:$0xff]
  %v1841 = vld [vmem:[%s0 + $0xc0] sm:$0xff]
  %v1842 = vld [vmem:[%s0 + $0xc8] sm:$0xff]
  %v1843 = vld [vmem:[%s0 + $0xd0] sm:$0xff]
  %v1844 = vld [vmem:[%s0 + $0xd8] sm:$0xff]
  %v1845 = vld [vmem:[%s0 + $0xe0] sm:$0xff]
  %v1846 = vld [vmem:[%s0 + $0xe8] sm:$0xff]
  %v1847 = vld [vmem:[%s0 + $0xf0] sm:$0xff]
  %v1848 = vld [vmem:[%s0 + $0xf8] sm:$0xff]
  %v1849 = vld [vmem:[%s0 + $0x100] sm:$0xff]
  %v1850 = vld [vmem:[%s0 + $0x108] sm:$0xff]
  %v1851 = vld [vmem:[%s0 + $0x110] sm:$0xff]
  %v1852 = vld [vmem:[%s0 + $0x118] sm:$0xff]
  %v1853 = vld [vmem:[%s0 + $0x120] sm:$0xff]
  %v1854 = vld [vmem:[%s0 + $0x128] sm:$0xff]
  %v1855 = vpack.c.bf16 %v1838, %v1837
  %v1856 = vpack.c.bf16 %v1840, %v1839
  %v1857 = vpack.c.bf16 %v1842, %v1841
  %v1858 = vpack.c.bf16 %v1844, %v1843
  %v1859 = vpack.c.bf16 %v1846, %v1845
  %v1860 = vpack.c.bf16 %v1848, %v1847
  %v1861 = vpack.c.bf16 %v1850, %v1849
  %v1862 = vpack.c.bf16 %v1852, %v1851
  %v1863 = vpack.c.bf16 %v1854, %v1853
  %s1864 = scalar_lea.vmem %s1, 180
  %v1865 = vld [vmem:[%s1864] sm:$0xff]
  %v1866 = vld [vmem:[%s1864 + $0x8] sm:$0xf]
  %v1867 = vld [vmem:[%s1864 + $0xc] sm:$0xff]
  %v1868 = vld [vmem:[%s1864 + $0x14] sm:$0xf]
  %v1869 = vld [vmem:[%s1864 + $0x18] sm:$0xff]
  %v1870 = vld [vmem:[%s1864 + $0x20] sm:$0xf]
  %v1871 = vld [vmem:[%s1864 + $0x24] sm:$0xff]
  %v1872 = vld [vmem:[%s1864 + $0x2c] sm:$0xf]
  %v1873 = vld [vmem:[%s1864 + $0x30] sm:$0xff]
  %v1874 = vld [vmem:[%s1864 + $0x38] sm:$0xf]
  %v1875 = vld [vmem:[%s1864 + $0x3c] sm:$0xff]
  %v1876 = vld [vmem:[%s1864 + $0x44] sm:$0xf]
  %v1877 = vld [vmem:[%s1864 + $0x48] sm:$0xff]
  %v1878 = vld [vmem:[%s1864 + $0x50] sm:$0xf]
  %v1879 = vld [vmem:[%s1864 + $0x54] sm:$0xff]
  %v1880 = vld [vmem:[%s1864 + $0x5c] sm:$0xf]
  %v1881 = vld [vmem:[%s1864 + $0x60] sm:$0xff]
  %v1882 = vld [vmem:[%s1864 + $0x68] sm:$0xf]
  %v1883 = vld [vmem:[%s1864 + $0x6c] sm:$0xff]
  %v1884 = vld [vmem:[%s1864 + $0x74] sm:$0xf]
  %v1885 = vld [vmem:[%s1864 + $0x78] sm:$0xff]
  %v1886 = vld [vmem:[%s1864 + $0x80] sm:$0xf]
  %v1887 = vld [vmem:[%s1864 + $0x84] sm:$0xff]
  %v1888 = vld [vmem:[%s1864 + $0x8c] sm:$0xf]
  %v1889 = vld [vmem:[%s1864 + $0x90] sm:$0xff]
  %v1890 = vld [vmem:[%s1864 + $0x98] sm:$0xf]
  %v1891 = vld [vmem:[%s1864 + $0x9c] sm:$0xff]
  %v1892 = vld [vmem:[%s1864 + $0xa4] sm:$0xf]
  %v1893 = vld [vmem:[%s1864 + $0xa8] sm:$0xff]
  %v1894 = vld [vmem:[%s1864 + $0xb0] sm:$0xf]
  %v1925 = vunpack.c.l.b16 %v1865
  %v1926 = vunpack.c.h.b16 %v1865
  %v1927 = vunpack.c.l.b16 %v1866
  %v1928 = vunpack.c.l.b16 %v1867
  %v1929 = vunpack.c.h.b16 %v1867
  %v1930 = vunpack.c.l.b16 %v1868
  %v1931 = vunpack.c.l.b16 %v1869
  %v1932 = vunpack.c.h.b16 %v1869
  %v1933 = vunpack.c.l.b16 %v1870
  %v1934 = vunpack.c.l.b16 %v1871
  %v1935 = vunpack.c.h.b16 %v1871
  %v1936 = vunpack.c.l.b16 %v1872
  %v1937 = vunpack.c.l.b16 %v1873
  %v1938 = vunpack.c.h.b16 %v1873
  %v1939 = vunpack.c.l.b16 %v1874
  %v1940 = vunpack.c.l.b16 %v1875
  %v1941 = vunpack.c.h.b16 %v1875
  %v1942 = vunpack.c.l.b16 %v1876
  %v1943 = vunpack.c.l.b16 %v1877
  %v1944 = vunpack.c.h.b16 %v1877
  %v1945 = vunpack.c.l.b16 %v1878
  %v1946 = vunpack.c.l.b16 %v1879
  %v1947 = vunpack.c.h.b16 %v1879
  %v1948 = vunpack.c.l.b16 %v1880
  %v1949 = vunpack.c.l.b16 %v1881
  %v1950 = vunpack.c.h.b16 %v1881
  %v1951 = vunpack.c.l.b16 %v1882
  %v1952 = vunpack.c.l.b16 %v1883
  %v1953 = vunpack.c.h.b16 %v1883
  %v1954 = vunpack.c.l.b16 %v1884
  %v1955 = vunpack.c.l.b16 %v1885
  %v1956 = vunpack.c.h.b16 %v1885
  %v1957 = vunpack.c.l.b16 %v1886
  %v1958 = vunpack.c.l.b16 %v1887
  %v1959 = vunpack.c.h.b16 %v1887
  %v1960 = vunpack.c.l.b16 %v1888
  %v1961 = vunpack.c.l.b16 %v1889
  %v1962 = vunpack.c.h.b16 %v1889
  %v1963 = vunpack.c.l.b16 %v1890
  %v1964 = vunpack.c.l.b16 %v1891
  %v1965 = vunpack.c.h.b16 %v1891
  %v1966 = vunpack.c.l.b16 %v1892
  %v1967 = vunpack.c.l.b16 %v1893
  %v1968 = vunpack.c.h.b16 %v1893
  %v1969 = vunpack.c.l.b16 %v1894
  %v1970 = vpack.c.b16 %v1928, %v1925
  %v1971 = vpack.c.b16 %v1929, %v1926
  %v1972 = vpack.c.b16 %v1930, %v1927
  %v1973 = vpack.c.b16 %v1934, %v1931
  %v1974 = vpack.c.b16 %v1935, %v1932
  %v1975 = vpack.c.b16 %v1936, %v1933
  %v1976 = vpack.c.b16 %v1940, %v1937
  %v1977 = vpack.c.b16 %v1941, %v1938
  %v1978 = vpack.c.b16 %v1942, %v1939
  %v1979 = vpack.c.b16 %v1946, %v1943
  %v1980 = vpack.c.b16 %v1947, %v1944
  %v1981 = vpack.c.b16 %v1948, %v1945
  %v1982 = vpack.c.b16 %v1952, %v1949
  %v1983 = vpack.c.b16 %v1953, %v1950
  %v1984 = vpack.c.b16 %v1954, %v1951
  %v1985 = vpack.c.b16 %v1958, %v1955
  %v1986 = vpack.c.b16 %v1959, %v1956
  %v1987 = vpack.c.b16 %v1960, %v1957
  %v1988 = vpack.c.b16 %v1964, %v1961
  %v1989 = vpack.c.b16 %v1965, %v1962
  %v1990 = vpack.c.b16 %v1966, %v1963
  %v1991 = vpack.c.b16 %v1967, %v1967
  %v1992 = vpack.c.b16 %v1968, %v1968
  %v1993 = vpack.c.b16 %v1969, %v1969
  %vm2015 = vcmask 982016
  %v2017 = vsel %vm2015, %v1855, 0
  %v2020 = vsel %vm2015, %v1856, 0
  %v2023 = vsel %vm2015, %v1857, 0
  %v2026 = vsel %vm2015, %v1858, 0
  %v2029 = vsel %vm2015, %v1859, 0
  %v2032 = vsel %vm2015, %v1860, 0
  %v2035 = vsel %vm2015, %v1861, 0
  %v2038 = vsel %vm2015, %v1862, 0
  %v2041 = vsel %vm2015, %v1863, 0
  %vm2043 = vcmask 1043456
  %v2045 = vsel %vm2043, %v1991, 0
  %v2048 = vsel %vm2043, %v1992, 0
  %v2051 = vsel %vm2043, %v1993, 0
  %2053 = vmatprep.subr.bf16.mxu0 %v1971
  %2054 = vmatpush1.bf16.msra.mxu0 %v1970
  %2055 = vmatprep.subr.bf16.mxu0 %v1974
  %2056 = vmatpush1.bf16.msra.mxu0 %v1973
  %2057 = vmatprep.subr.bf16.mxu0 %v1977
  %2058 = vmatpush1.bf16.msra.mxu0 %v1976
  %2059 = vmatprep.subr.bf16.mxu0 %v1980
  %2060 = vmatpush1.bf16.msra.mxu0 %v1979
  %2061 = vmatprep.subr.bf16.mxu0 %v1983
  %2062 = vmatpush1.bf16.msra.mxu0 %v1982
  %2063 = vmatprep.subr.bf16.mxu0 %v1986
  %2064 = vmatpush1.bf16.msra.mxu0 %v1985
  %2065 = vmatprep.subr.bf16.mxu0 %v1989
  %2066 = vmatpush1.bf16.msra.mxu0 %v1988
  %2067 = vmatprep.subr.bf16.mxu0 %v2048
  %2068 = vmatpush1.bf16.msra.mxu0 %v2045
  %2069 = vmatprep.subr.bf16.mxu0 0
  %2070 = vmatpush1.bf16.msra.mxu0 0
  %2071 = vmatprep.subr.bf16.mxu0 0
  %2072 = vmatpush1.bf16.msra.mxu0 0
  %2073 = vmatprep.subr.bf16.mxu0 0
  %2074 = vmatpush1.bf16.msra.mxu0 0
  %2075 = vmatprep.subr.bf16.mxu0 0
  %2076 = vmatpush1.bf16.msra.mxu0 0
  %2077 = vmatprep.subr.bf16.mxu0 0
  %2078 = vmatpush1.bf16.msra.mxu0 0
  %2079 = vmatprep.subr.bf16.mxu0 0
  %2080 = vmatpush1.bf16.msra.mxu0 0
  %2081 = vmatprep.subr.bf16.mxu0 0
  %2082 = vmatpush1.bf16.msra.mxu0 0
  %2083 = vmatprep.subr.bf16.mxu0 0
  %2084 = vmatpush1.bf16.msra.mxu0 0
  %2085 = vmatprep.mubr.bf16.mxu0 0
  %2086 = vmatmul.mubr.bf16.gmra.mrb[0].mxu0 %v2017
  %v2087 = vpop.f32.mrb[0].mxu0
  %v2088 = vadd.f32 0.0, %v2087
  %v2089 = vpop.f32.mrb[0].mxu0
  %v2090 = vadd.f32 0.0, %v2089
  %v2091 = vpop.f32.mrb[0].mxu0
  %v2092 = vadd.f32 0.0, %v2091
  %v2093 = vpop.f32.mrb[0].mxu0
  %v2094 = vadd.f32 0.0, %v2093
  %2095 = vmatprep.mubr.bf16.mxu0 0
  %2096 = vmatmul.mubr.bf16.gmra.mrb[0].mxu0 %v2020
  %v2097 = vpop.f32.mrb[0].mxu0
  %v2098 = vadd.f32 0.0, %v2097
  %v2099 = vpop.f32.mrb[0].mxu0
  %v2100 = vadd.f32 0.0, %v2099
  %v2101 = vpop.f32.mrb[0].mxu0
  %v2102 = vadd.f32 0.0, %v2101
  %v2103 = vpop.f32.mrb[0].mxu0
  %v2104 = vadd.f32 0.0, %v2103
  %2105 = vmatprep.mubr.bf16.mxu0 0
  %2106 = vmatmul.mubr.bf16.gmra.mrb[0].mxu0 %v2023
  %v2107 = vpop.f32.mrb[0].mxu0
  %v2108 = vadd.f32 0.0, %v2107
  %v2109 = vpop.f32.mrb[0].mxu0
  %v2110 = vadd.f32 0.0, %v2109
  %v2111 = vpop.f32.mrb[0].mxu0
  %v2112 = vadd.f32 0.0, %v2111
  %v2113 = vpop.f32.mrb[0].mxu0
  %v2114 = vadd.f32 0.0, %v2113
  %2115 = vmatprep.mubr.bf16.mxu0 0
  %2116 = vmatmul.mubr.bf16.gmra.mrb[0].mxu0 %v2026
  %v2117 = vpop.f32.mrb[0].mxu0
  %v2118 = vadd.f32 0.0, %v2117
  %v2119 = vpop.f32.mrb[0].mxu0
  %v2120 = vadd.f32 0.0, %v2119
  %v2121 = vpop.f32.mrb[0].mxu0
  %v2122 = vadd.f32 0.0, %v2121
  %v2123 = vpop.f32.mrb[0].mxu0
  %v2124 = vadd.f32 0.0, %v2123
  %2125 = vmatprep.mubr.bf16.mxu0 0
  %2126 = vmatmul.mubr.bf16.gmra.mrb[0].mxu0 %v2029
  %v2127 = vpop.f32.mrb[0].mxu0
  %v2128 = vadd.f32 0.0, %v2127
  %v2129 = vpop.f32.mrb[0].mxu0
  %v2130 = vadd.f32 0.0, %v2129
  %v2131 = vpop.f32.mrb[0].mxu0
  %v2132 = vadd.f32 0.0, %v2131
  %v2133 = vpop.f32.mrb[0].mxu0
  %v2134 = vadd.f32 0.0, %v2133
  %2135 = vmatprep.mubr.bf16.mxu0 0
  %2136 = vmatmul.mubr.bf16.gmra.mrb[0].mxu0 %v2032
  %v2137 = vpop.f32.mrb[0].mxu0
  %v2138 = vadd.f32 0.0, %v2137
  %v2139 = vpop.f32.mrb[0].mxu0
  %v2140 = vadd.f32 0.0, %v2139
  %v2141 = vpop.f32.mrb[0].mxu0
  %v2142 = vadd.f32 0.0, %v2141
  %v2143 = vpop.f32.mrb[0].mxu0
  %v2144 = vadd.f32 0.0, %v2143
  %2145 = vmatprep.mubr.bf16.mxu0 0
  %2146 = vmatmul.mubr.bf16.gmra.mrb[0].mxu0 %v2035
  %v2147 = vpop.f32.mrb[0].mxu0
  %v2148 = vadd.f32 0.0, %v2147
  %v2149 = vpop.f32.mrb[0].mxu0
  %v2150 = vadd.f32 0.0, %v2149
  %v2151 = vpop.f32.mrb[0].mxu0
  %v2152 = vadd.f32 0.0, %v2151
  %v2153 = vpop.f32.mrb[0].mxu0
  %v2154 = vadd.f32 0.0, %v2153
  %2155 = vmatprep.mubr.bf16.mxu0 0
  %2156 = vmatmul.mubr.bf16.gmra.mrb[0].mxu0 %v2038
  %v2157 = vpop.f32.mrb[0].mxu0
  %v2158 = vadd.f32 0.0, %v2157
  %v2159 = vpop.f32.mrb[0].mxu0
  %v2160 = vadd.f32 0.0, %v2159
  %v2161 = vpop.f32.mrb[0].mxu0
  %v2162 = vadd.f32 0.0, %v2161
  %v2163 = vpop.f32.mrb[0].mxu0
  %v2164 = vadd.f32 0.0, %v2163
  %2165 = vmatprep.mubr.bf16.mxu0 0
  %2166 = vmatmul.mubr.bf16.gmra.mrb[0].mxu0 %v2041
  %v2167 = vpop.f32.mrb[0].mxu0
  %v2168 = vadd.f32 0.0, %v2167
  %v2169 = vpop.f32.mrb[0].mxu0
  %v2170 = vadd.f32 0.0, %v2169
  %v2171 = vpop.f32.mrb[0].mxu0
  %v2172 = vadd.f32 0.0, %v2171
  %v2173 = vpop.f32.mrb[0].mxu0
  %v2174 = vadd.f32 0.0, %v2173
  %2175 = vdwg.mxu0
  %2176 = vmatprep.subr.bf16.mxu0 0
  %2177 = vmatpush1.bf16.msra.mxu0 %v1972
  %2178 = vmatprep.subr.bf16.mxu0 0
  %2179 = vmatpush1.bf16.msra.mxu0 %v1975
  %2180 = vmatprep.subr.bf16.mxu0 0
  %2181 = vmatpush1.bf16.msra.mxu0 %v1978
  %2182 = vmatprep.subr.bf16.mxu0 0
  %2183 = vmatpush1.bf16.msra.mxu0 %v1981
  %2184 = vmatprep.subr.bf16.mxu0 0
  %2185 = vmatpush1.bf16.msra.mxu0 %v1984
  %2186 = vmatprep.subr.bf16.mxu0 0
  %2187 = vmatpush1.bf16.msra.mxu0 %v1987
  %2188 = vmatprep.subr.bf16.mxu0 0
  %2189 = vmatpush1.bf16.msra.mxu0 %v1990
  %2190 = vmatprep.subr.bf16.mxu0 0
  %2191 = vmatpush1.bf16.msra.mxu0 %v2051
  %2192 = vmatprep.subr.bf16.mxu0 0
  %2193 = vmatpush1.bf16.msra.mxu0 0
  %2194 = vmatprep.subr.bf16.mxu0 0
  %2195 = vmatpush1.bf16.msra.mxu0 0
  %2196 = vmatprep.subr.bf16.mxu0 0
  %2197 = vmatpush1.bf16.msra.mxu0 0
  %2198 = vmatprep.subr.bf16.mxu0 0
  %2199 = vmatpush1.bf16.msra.mxu0 0
  %2200 = vmatprep.subr.bf16.mxu0 0
  %2201 = vmatpush1.bf16.msra.mxu0 0
  %2202 = vmatprep.subr.bf16.mxu0 0
  %2203 = vmatpush1.bf16.msra.mxu0 0
  %2204 = vmatprep.subr.bf16.mxu0 0
  %2205 = vmatpush1.bf16.msra.mxu0 0
  %2206 = vmatprep.subr.bf16.mxu0 0
  %2207 = vmatpush1.bf16.msra.mxu0 0
  %2208 = vmatprep.mubr.bf16.mxu0 0
  %2209 = vmatmul.mubr.bf16.gmra.mrb[0].mxu0 %v2017
  %v2210 = vpop.f32.mrb[0].mxu0
  %v2211 = vadd.f32 0.0, %v2210
  %v2212 = vpop.f32.mrb[0].mxu0
  %v2213 = vpop.f32.mrb[0].mxu0
  %v2214 = vadd.f32 0.0, %v2213
  %v2215 = vpop.f32.mrb[0].mxu0
  %2216 = vmatprep.mubr.bf16.mxu0 0
  %2217 = vmatmul.mubr.bf16.gmra.mrb[0].mxu0 %v2020
  %v2218 = vpop.f32.mrb[0].mxu0
  %v2219 = vadd.f32 0.0, %v2218
  %v2220 = vpop.f32.mrb[0].mxu0
  %v2221 = vpop.f32.mrb[0].mxu0
  %v2222 = vadd.f32 0.0, %v2221
  %v2223 = vpop.f32.mrb[0].mxu0
  %2224 = vmatprep.mubr.bf16.mxu0 0
  %2225 = vmatmul.mubr.bf16.gmra.mrb[0].mxu0 %v2023
  %v2226 = vpop.f32.mrb[0].mxu0
  %v2227 = vadd.f32 0.0, %v2226
  %v2228 = vpop.f32.mrb[0].mxu0
  %v2229 = vpop.f32.mrb[0].mxu0
  %v2230 = vadd.f32 0.0, %v2229
  %v2231 = vpop.f32.mrb[0].mxu0
  %2232 = vmatprep.mubr.bf16.mxu0 0
  %2233 = vmatmul.mubr.bf16.gmra.mrb[0].mxu0 %v2026
  %v2234 = vpop.f32.mrb[0].mxu0
  %v2235 = vadd.f32 0.0, %v2234
  %v2236 = vpop.f32.mrb[0].mxu0
  %v2237 = vpop.f32.mrb[0].mxu0
  %v2238 = vadd.f32 0.0, %v2237
  %v2239 = vpop.f32.mrb[0].mxu0
  %2240 = vmatprep.mubr.bf16.mxu0 0
  %2241 = vmatmul.mubr.bf16.gmra.mrb[0].mxu0 %v2029
  %v2242 = vpop.f32.mrb[0].mxu0
  %v2243 = vadd.f32 0.0, %v2242
  %v2244 = vpop.f32.mrb[0].mxu0
  %v2245 = vpop.f32.mrb[0].mxu0
  %v2246 = vadd.f32 0.0, %v2245
  %v2247 = vpop.f32.mrb[0].mxu0
  %2248 = vmatprep.mubr.bf16.mxu0 0
  %2249 = vmatmul.mubr.bf16.gmra.mrb[0].mxu0 %v2032
  %v2250 = vpop.f32.mrb[0].mxu0
  %v2251 = vadd.f32 0.0, %v2250
  %v2252 = vpop.f32.mrb[0].mxu0
  %v2253 = vpop.f32.mrb[0].mxu0
  %v2254 = vadd.f32 0.0, %v2253
  %v2255 = vpop.f32.mrb[0].mxu0
  %2256 = vmatprep.mubr.bf16.mxu0 0
  %2257 = vmatmul.mubr.bf16.gmra.mrb[0].mxu0 %v2035
  %v2258 = vpop.f32.mrb[0].mxu0
  %v2259 = vadd.f32 0.0, %v2258
  %v2260 = vpop.f32.mrb[0].mxu0
  %v2261 = vpop.f32.mrb[0].mxu0
  %v2262 = vadd.f32 0.0, %v2261
  %v2263 = vpop.f32.mrb[0].mxu0
  %2264 = vmatprep.mubr.bf16.mxu0 0
  %2265 = vmatmul.mubr.bf16.gmra.mrb[0].mxu0 %v2038
  %v2266 = vpop.f32.mrb[0].mxu0
  %v2267 = vadd.f32 0.0, %v2266
  %v2268 = vpop.f32.mrb[0].mxu0
  %v2269 = vpop.f32.mrb[0].mxu0
  %v2270 = vadd.f32 0.0, %v2269
  %v2271 = vpop.f32.mrb[0].mxu0
  %2272 = vmatprep.mubr.bf16.mxu0 0
  %2273 = vmatmul.mubr.bf16.gmra.mrb[0].mxu0 %v2041
  %v2274 = vpop.f32.mrb[0].mxu0
  %v2275 = vadd.f32 0.0, %v2274
  %v2276 = vpop.f32.mrb[0].mxu0
  %v2277 = vpop.f32.mrb[0].mxu0
  %v2278 = vadd.f32 0.0, %v2277
  %v2279 = vpop.f32.mrb[0].mxu0
  %2280 = vdwg.mxu0
  %v2311 = vunpack.c.l.b16 %v1807
  %v2312 = vunpack.c.h.b16 %v1807
  %v2313 = vunpack.c.l.b16 %v1808
  %v2314 = vunpack.c.l.b16 %v1809
  %v2315 = vunpack.c.h.b16 %v1809
  %v2316 = vunpack.c.l.b16 %v1810
  %v2317 = vunpack.c.l.b16 %v1811
  %v2318 = vunpack.c.h.b16 %v1811
  %v2319 = vunpack.c.l.b16 %v1812
  %v2320 = vunpack.c.l.b16 %v1813
  %v2321 = vunpack.c.h.b16 %v1813
  %v2322 = vunpack.c.l.b16 %v1814
  %v2323 = vunpack.c.l.b16 %v1815
  %v2324 = vunpack.c.h.b16 %v1815
  %v2325 = vunpack.c.l.b16 %v1816
  %v2326 = vunpack.c.l.b16 %v1817
  %v2327 = vunpack.c.h.b16 %v1817
  %v2328 = vunpack.c.l.b16 %v1818
  %v2329 = vunpack.c.l.b16 %v1819
  %v2330 = vunpack.c.h.b16 %v1819
  %v2331 = vunpack.c.l.b16 %v1820
  %v2332 = vunpack.c.l.b16 %v1821
  %v2333 = vunpack.c.h.b16 %v1821
  %v2334 = vunpack.c.l.b16 %v1822
  %v2335 = vunpack.c.l.b16 %v1823
  %v2336 = vunpack.c.h.b16 %v1823
  %v2337 = vunpack.c.l.b16 %v1824
  %v2338 = vunpack.c.l.b16 %v1825
  %v2339 = vunpack.c.h.b16 %v1825
  %v2340 = vunpack.c.l.b16 %v1826
  %v2341 = vunpack.c.l.b16 %v1827
  %v2342 = vunpack.c.h.b16 %v1827
  %v2343 = vunpack.c.l.b16 %v1828
  %v2344 = vunpack.c.l.b16 %v1829
  %v2345 = vunpack.c.h.b16 %v1829
  %v2346 = vunpack.c.l.b16 %v1830
  %v2347 = vunpack.c.l.b16 %v1831
  %v2348 = vunpack.c.h.b16 %v1831
  %v2349 = vunpack.c.l.b16 %v1832
  %v2350 = vunpack.c.l.b16 %v1833
  %v2351 = vunpack.c.h.b16 %v1833
  %v2352 = vunpack.c.l.b16 %v1834
  %v2353 = vunpack.c.l.b16 %v1835
  %v2354 = vunpack.c.h.b16 %v1835
  %v2355 = vunpack.c.l.b16 %v1836
  %v2356 = vpack.c.b16 %v2314, %v2311
  %v2357 = vpack.c.b16 %v2315, %v2312
  %v2358 = vpack.c.b16 %v2316, %v2313
  %v2359 = vpack.c.b16 %v2320, %v2317
  %v2360 = vpack.c.b16 %v2321, %v2318
  %v2361 = vpack.c.b16 %v2322, %v2319
  %v2362 = vpack.c.b16 %v2326, %v2323
  %v2363 = vpack.c.b16 %v2327, %v2324
  %v2364 = vpack.c.b16 %v2328, %v2325
  %v2365 = vpack.c.b16 %v2332, %v2329
  %v2366 = vpack.c.b16 %v2333, %v2330
  %v2367 = vpack.c.b16 %v2334, %v2331
  %v2368 = vpack.c.b16 %v2338, %v2335
  %v2369 = vpack.c.b16 %v2339, %v2336
  %v2370 = vpack.c.b16 %v2340, %v2337
  %v2371 = vpack.c.b16 %v2344, %v2341
  %v2372 = vpack.c.b16 %v2345, %v2342
  %v2373 = vpack.c.b16 %v2346, %v2343
  %v2374 = vpack.c.b16 %v2350, %v2347
  %v2375 = vpack.c.b16 %v2351, %v2348
  %v2376 = vpack.c.b16 %v2352, %v2349
  %v2377 = vpack.c.b16 %v2353, %v2353
  %v2378 = vpack.c.b16 %v2354, %v2354
  %v2379 = vpack.c.b16 %v2355, %v2355
  %v2402 = vsel %vm2015, %v1798, 0
  %v2405 = vsel %vm2015, %v1799, 0
  %v2408 = vsel %vm2015, %v1800, 0
  %v2411 = vsel %vm2015, %v1801, 0
  %v2414 = vsel %vm2015, %v1802, 0
  %v2417 = vsel %vm2015, %v1803, 0
  %v2420 = vsel %vm2015, %v1804, 0
  %v2423 = vsel %vm2015, %v1805, 0
  %v2426 = vsel %vm2015, %v1806, 0
  %v2429 = vsel %vm2043, %v2377, 0
  %v2432 = vsel %vm2043, %v2378, 0
  %v2435 = vsel %vm2043, %v2379, 0
  %2437 = vmatprep.subr.bf16.mxu0 %v2357
  %2438 = vmatpush1.bf16.msra.mxu0 %v2356
  %2439 = vmatprep.subr.bf16.mxu0 %v2360
  %2440 = vmatpush1.bf16.msra.mxu0 %v2359
  %2441 = vmatprep.subr.bf16.mxu0 %v2363
  %2442 = vmatpush1.bf16.msra.mxu0 %v2362
  %2443 = vmatprep.subr.bf16.mxu0 %v2366
  %2444 = vmatpush1.bf16.msra.mxu0 %v2365
  %2445 = vmatprep.subr.bf16.mxu0 %v2369
  %2446 = vmatpush1.bf16.msra.mxu0 %v2368
  %2447 = vmatprep.subr.bf16.mxu0 %v2372
  %2448 = vmatpush1.bf16.msra.mxu0 %v2371
  %2449 = vmatprep.subr.bf16.mxu0 %v2375
  %2450 = vmatpush1.bf16.msra.mxu0 %v2374
  %2451 = vmatprep.subr.bf16.mxu0 %v2432
  %2452 = vmatpush1.bf16.msra.mxu0 %v2429
  %2453 = vmatprep.subr.bf16.mxu0 0
  %2454 = vmatpush1.bf16.msra.mxu0 0
  %2455 = vmatprep.subr.bf16.mxu0 0
  %2456 = vmatpush1.bf16.msra.mxu0 0
  %2457 = vmatprep.subr.bf16.mxu0 0
  %2458 = vmatpush1.bf16.msra.mxu0 0
  %2459 = vmatprep.subr.bf16.mxu0 0
  %2460 = vmatpush1.bf16.msra.mxu0 0
  %2461 = vmatprep.subr.bf16.mxu0 0
  %2462 = vmatpush1.bf16.msra.mxu0 0
  %2463 = vmatprep.subr.bf16.mxu0 0
  %2464 = vmatpush1.bf16.msra.mxu0 0
  %2465 = vmatprep.subr.bf16.mxu0 0
  %2466 = vmatpush1.bf16.msra.mxu0 0
  %2467 = vmatprep.subr.bf16.mxu0 0
  %2468 = vmatpush1.bf16.msra.mxu0 0
  %2469 = vmatprep.mubr.bf16.mxu0 0
  %2470 = vmatmul.mubr.bf16.gmra.mrb[0].mxu0 %v2402
  %v2471 = vpop.f32.mrb[0].mxu0
  %v2472 = vadd.f32 %v2088, %v2471
  %v2473 = vpop.f32.mrb[0].mxu0
  %v2474 = vadd.f32 %v2090, %v2473
  %v2475 = vpop.f32.mrb[0].mxu0
  %v2476 = vadd.f32 %v2092, %v2475
  %v2477 = vpop.f32.mrb[0].mxu0
  %v2478 = vadd.f32 %v2094, %v2477
  %2479 = vmatprep.mubr.bf16.mxu0 0
  %2480 = vmatmul.mubr.bf16.gmra.mrb[0].mxu0 %v2405
  %v2481 = vpop.f32.mrb[0].mxu0
  %v2482 = vadd.f32 %v2098, %v2481
  %v2483 = vpop.f32.mrb[0].mxu0
  %v2484 = vadd.f32 %v2100, %v2483
  %v2485 = vpop.f32.mrb[0].mxu0
  %v2486 = vadd.f32 %v2102, %v2485
  %v2487 = vpop.f32.mrb[0].mxu0
  %v2488 = vadd.f32 %v2104, %v2487
  %2489 = vmatprep.mubr.bf16.mxu0 0
  %2490 = vmatmul.mubr.bf16.gmra.mrb[0].mxu0 %v2408
  %v2491 = vpop.f32.mrb[0].mxu0
  %v2492 = vadd.f32 %v2108, %v2491
  %v2493 = vpop.f32.mrb[0].mxu0
  %v2494 = vadd.f32 %v2110, %v2493
  %v2495 = vpop.f32.mrb[0].mxu0
  %v2496 = vadd.f32 %v2112, %v2495
  %v2497 = vpop.f32.mrb[0].mxu0
  %v2498 = vadd.f32 %v2114, %v2497
  %2499 = vmatprep.mubr.bf16.mxu0 0
  %2500 = vmatmul.mubr.bf16.gmra.mrb[0].mxu0 %v2411
  %v2501 = vpop.f32.mrb[0].mxu0
  %v2502 = vadd.f32 %v2118, %v2501
  %v2503 = vpop.f32.mrb[0].mxu0
  %v2504 = vadd.f32 %v2120, %v2503
  %v2505 = vpop.f32.mrb[0].mxu0
  %v2506 = vadd.f32 %v2122, %v2505
  %v2507 = vpop.f32.mrb[0].mxu0
  %v2508 = vadd.f32 %v2124, %v2507
  %2509 = vmatprep.mubr.bf16.mxu0 0
  %2510 = vmatmul.mubr.bf16.gmra.mrb[0].mxu0 %v2414
  %v2511 = vpop.f32.mrb[0].mxu0
  %v2512 = vadd.f32 %v2128, %v2511
  %v2513 = vpop.f32.mrb[0].mxu0
  %v2514 = vadd.f32 %v2130, %v2513
  %v2515 = vpop.f32.mrb[0].mxu0
  %v2516 = vadd.f32 %v2132, %v2515
  %v2517 = vpop.f32.mrb[0].mxu0
  %v2518 = vadd.f32 %v2134, %v2517
  %2519 = vmatprep.mubr.bf16.mxu0 0
  %2520 = vmatmul.mubr.bf16.gmra.mrb[0].mxu0 %v2417
  %v2521 = vpop.f32.mrb[0].mxu0
  %v2522 = vadd.f32 %v2138, %v2521
  %v2523 = vpop.f32.mrb[0].mxu0
  %v2524 = vadd.f32 %v2140, %v2523
  %v2525 = vpop.f32.mrb[0].mxu0
  %v2526 = vadd.f32 %v2142, %v2525
  %v2527 = vpop.f32.mrb[0].mxu0
  %v2528 = vadd.f32 %v2144, %v2527
  %2529 = vmatprep.mubr.bf16.mxu0 0
  %2530 = vmatmul.mubr.bf16.gmra.mrb[0].mxu0 %v2420
  %v2531 = vpop.f32.mrb[0].mxu0
  %v2532 = vadd.f32 %v2148, %v2531
  %v2533 = vpop.f32.mrb[0].mxu0
  %v2534 = vadd.f32 %v2150, %v2533
  %v2535 = vpop.f32.mrb[0].mxu0
  %v2536 = vadd.f32 %v2152, %v2535
  %v2537 = vpop.f32.mrb[0].mxu0
  %v2538 = vadd.f32 %v2154, %v2537
  %2539 = vmatprep.mubr.bf16.mxu0 0
  %2540 = vmatmul.mubr.bf16.gmra.mrb[0].mxu0 %v2423
  %v2541 = vpop.f32.mrb[0].mxu0
  %v2542 = vadd.f32 %v2158, %v2541
  %v2543 = vpop.f32.mrb[0].mxu0
  %v2544 = vadd.f32 %v2160, %v2543
  %v2545 = vpop.f32.mrb[0].mxu0
  %v2546 = vadd.f32 %v2162, %v2545
  %v2547 = vpop.f32.mrb[0].mxu0
  %v2548 = vadd.f32 %v2164, %v2547
  %2549 = vmatprep.mubr.bf16.mxu0 0
  %2550 = vmatmul.mubr.bf16.gmra.mrb[0].mxu0 %v2426
  %v2551 = vpop.f32.mrb[0].mxu0
  %v2552 = vadd.f32 %v2168, %v2551
  %v2553 = vpop.f32.mrb[0].mxu0
  %v2554 = vadd.f32 %v2170, %v2553
  %v2555 = vpop.f32.mrb[0].mxu0
  %v2556 = vadd.f32 %v2172, %v2555
  %v2557 = vpop.f32.mrb[0].mxu0
  %v2558 = vadd.f32 %v2174, %v2557
  %2559 = vdwg.mxu0
  %2560 = vmatprep.subr.bf16.mxu0 0
  %2561 = vmatpush1.bf16.msra.mxu0 %v2358
  %2562 = vmatprep.subr.bf16.mxu0 0
  %2563 = vmatpush1.bf16.msra.mxu0 %v2361
  %2564 = vmatprep.subr.bf16.mxu0 0
  %2565 = vmatpush1.bf16.msra.mxu0 %v2364
  %2566 = vmatprep.subr.bf16.mxu0 0
  %2567 = vmatpush1.bf16.msra.mxu0 %v2367
  %2568 = vmatprep.subr.bf16.mxu0 0
  %2569 = vmatpush1.bf16.msra.mxu0 %v2370
  %2570 = vmatprep.subr.bf16.mxu0 0
  %2571 = vmatpush1.bf16.msra.mxu0 %v2373
  %2572 = vmatprep.subr.bf16.mxu0 0
  %2573 = vmatpush1.bf16.msra.mxu0 %v2376
  %2574 = vmatprep.subr.bf16.mxu0 0
  %2575 = vmatpush1.bf16.msra.mxu0 %v2435
  %2576 = vmatprep.subr.bf16.mxu0 0
  %2577 = vmatpush1.bf16.msra.mxu0 0
  %2578 = vmatprep.subr.bf16.mxu0 0
  %2579 = vmatpush1.bf16.msra.mxu0 0
  %2580 = vmatprep.subr.bf16.mxu0 0
  %2581 = vmatpush1.bf16.msra.mxu0 0
  %2582 = vmatprep.subr.bf16.mxu0 0
  %2583 = vmatpush1.bf16.msra.mxu0 0
  %2584 = vmatprep.subr.bf16.mxu0 0
  %2585 = vmatpush1.bf16.msra.mxu0 0
  %2586 = vmatprep.subr.bf16.mxu0 0
  %2587 = vmatpush1.bf16.msra.mxu0 0
  %2588 = vmatprep.subr.bf16.mxu0 0
  %2589 = vmatpush1.bf16.msra.mxu0 0
  %2590 = vmatprep.subr.bf16.mxu0 0
  %2591 = vmatpush1.bf16.msra.mxu0 0
  %2592 = vmatprep.mubr.bf16.mxu0 0
  %2593 = vmatmul.mubr.bf16.gmra.mrb[0].mxu0 %v2402
  %v2594 = vpop.f32.mrb[0].mxu0
  %v2595 = vadd.f32 %v2211, %v2594
  %v2596 = vpop.f32.mrb[0].mxu0
  %v2597 = vpop.f32.mrb[0].mxu0
  %v2598 = vadd.f32 %v2214, %v2597
  %v2599 = vpop.f32.mrb[0].mxu0
  %2600 = vmatprep.mubr.bf16.mxu0 0
  %2601 = vmatmul.mubr.bf16.gmra.mrb[0].mxu0 %v2405
  %v2602 = vpop.f32.mrb[0].mxu0
  %v2603 = vadd.f32 %v2219, %v2602
  %v2604 = vpop.f32.mrb[0].mxu0
  %v2605 = vpop.f32.mrb[0].mxu0
  %v2606 = vadd.f32 %v2222, %v2605
  %v2607 = vpop.f32.mrb[0].mxu0
  %2608 = vmatprep.mubr.bf16.mxu0 0
  %2609 = vmatmul.mubr.bf16.gmra.mrb[0].mxu0 %v2408
  %v2610 = vpop.f32.mrb[0].mxu0
  %v2611 = vadd.f32 %v2227, %v2610
  %v2612 = vpop.f32.mrb[0].mxu0
  %v2613 = vpop.f32.mrb[0].mxu0
  %v2614 = vadd.f32 %v2230, %v2613
  %v2615 = vpop.f32.mrb[0].mxu0
  %2616 = vmatprep.mubr.bf16.mxu0 0
  %2617 = vmatmul.mubr.bf16.gmra.mrb[0].mxu0 %v2411
  %v2618 = vpop.f32.mrb[0].mxu0
  %v2619 = vadd.f32 %v2235, %v2618
  %v2620 = vpop.f32.mrb[0].mxu0
  %v2621 = vpop.f32.mrb[0].mxu0
  %v2622 = vadd.f32 %v2238, %v2621
  %v2623 = vpop.f32.mrb[0].mxu0
  %2624 = vmatprep.mubr.bf16.mxu0 0
  %2625 = vmatmul.mubr.bf16.gmra.mrb[0].mxu0 %v2414
  %v2626 = vpop.f32.mrb[0].mxu0
  %v2627 = vadd.f32 %v2243, %v2626
  %v2628 = vpop.f32.mrb[0].mxu0
  %v2629 = vpop.f32.mrb[0].mxu0
  %v2630 = vadd.f32 %v2246, %v2629
  %v2631 = vpop.f32.mrb[0].mxu0
  %2632 = vmatprep.mubr.bf16.mxu0 0
  %2633 = vmatmul.mubr.bf16.gmra.mrb[0].mxu0 %v2417
  %v2634 = vpop.f32.mrb[0].mxu0
  %v2635 = vadd.f32 %v2251, %v2634
  %v2636 = vpop.f32.mrb[0].mxu0
  %v2637 = vpop.f32.mrb[0].mxu0
  %v2638 = vadd.f32 %v2254, %v2637
  %v2639 = vpop.f32.mrb[0].mxu0
  %2640 = vmatprep.mubr.bf16.mxu0 0
  %2641 = vmatmul.mubr.bf16.gmra.mrb[0].mxu0 %v2420
  %v2642 = vpop.f32.mrb[0].mxu0
  %v2643 = vadd.f32 %v2259, %v2642
  %v2644 = vpop.f32.mrb[0].mxu0
  %v2645 = vpop.f32.mrb[0].mxu0
  %v2646 = vadd.f32 %v2262, %v2645
  %v2647 = vpop.f32.mrb[0].mxu0
  %2648 = vmatprep.mubr.bf16.mxu0 0
  %2649 = vmatmul.mubr.bf16.gmra.mrb[0].mxu0 %v2423
  %v2650 = vpop.f32.mrb[0].mxu0
  %v2651 = vadd.f32 %v2267, %v2650
  %v2652 = vpop.f32.mrb[0].mxu0
  %v2653 = vpop.f32.mrb[0].mxu0
  %v2654 = vadd.f32 %v2270, %v2653
  %v2655 = vpop.f32.mrb[0].mxu0
  %2656 = vmatprep.mubr.bf16.mxu0 0
  %2657 = vmatmul.mubr.bf16.gmra.mrb[0].mxu0 %v2426
  %v2658 = vpop.f32.mrb[0].mxu0
  %v2659 = vadd.f32 %v2275, %v2658
  %v2660 = vpop.f32.mrb[0].mxu0
  %v2661 = vpop.f32.mrb[0].mxu0
  %v2662 = vadd.f32 %v2278, %v2661
  %v2663 = vpop.f32.mrb[0].mxu0
  %2664 = vdwg.mxu0
  %v2665 = vld [vmem:[%s0 + $0x8] sm:$0xff]
  %v2666 = vld [vmem:[%s0 + $0x10] sm:$0xff]
  %v2667 = vld [vmem:[%s0 + $0x18] sm:$0xff]
  %v2668 = vld [vmem:[%s0 + $0x20] sm:$0xff]
  %v2669 = vld [vmem:[%s0 + $0x28] sm:$0xff]
  %v2670 = vld [vmem:[%s0 + $0x30] sm:$0xff]
  %v2671 = vld [vmem:[%s0 + $0x38] sm:$0xff]
  %v2672 = vld [vmem:[%s0 + $0x40] sm:$0xff]
  %v2673 = vld [vmem:[%s0 + $0x48] sm:$0xff]
  %v2674 = vld [vmem:[%s0 + $0x50] sm:$0xff]
  %v2675 = vld [vmem:[%s0 + $0x58] sm:$0xff]
  %v2676 = vld [vmem:[%s0 + $0x60] sm:$0xff]
  %v2677 = vld [vmem:[%s0 + $0x68] sm:$0xff]
  %v2678 = vld [vmem:[%s0 + $0x70] sm:$0xff]
  %v2679 = vld [vmem:[%s0 + $0x78] sm:$0xff]
  %v2680 = vld [vmem:[%s0 + $0x80] sm:$0xff]
  %v2681 = vld [vmem:[%s0 + $0x88] sm:$0xff]
  %v2682 = vld [vmem:[%s0 + $0x90] sm:$0xff]
  %v2683 = vpack.c.bf16 %v2666, %v2665
  %v2684 = vpack.c.bf16 %v2668, %v2667
  %v2685 = vpack.c.bf16 %v2670, %v2669
  %v2686 = vpack.c.bf16 %v2672, %v2671
  %v2687 = vpack.c.bf16 %v2674, %v2673
  %v2688 = vpack.c.bf16 %v2676, %v2675
  %v2689 = vpack.c.bf16 %v2678, %v2677
  %v2690 = vpack.c.bf16 %v2680, %v2679
  %v2691 = vpack.c.bf16 %v2682, %v2681
  %s2692 = scalar_lea.vmem %s1, 360
  %v2693 = vld [vmem:[%s2692] sm:$0xff]
  %v2694 = vld [vmem:[%s2692 + $0x8] sm:$0xf]
  %v2695 = vld [vmem:[%s2692 + $0xc] sm:$0xff]
  %v2696 = vld [vmem:[%s2692 + $0x14] sm:$0xf]
  %v2697 = vld [vmem:[%s2692 + $0x18] sm:$0xff]
  %v2698 = vld [vmem:[%s2692 + $0x20] sm:$0xf]
  %v2699 = vld [vmem:[%s2692 + $0x24] sm:$0xff]
  %v2700 = vld [vmem:[%s2692 + $0x2c] sm:$0xf]
  %v2701 = vld [vmem:[%s2692 + $0x30] sm:$0xff]
  %v2702 = vld [vmem:[%s2692 + $0x38] sm:$0xf]
  %v2703 = vld [vmem:[%s2692 + $0x3c] sm:$0xff]
  %v2704 = vld [vmem:[%s2692 + $0x44] sm:$0xf]
  %v2705 = vld [vmem:[%s2692 + $0x48] sm:$0xff]
  %v2706 = vld [vmem:[%s2692 + $0x50] sm:$0xf]
  %v2707 = vld [vmem:[%s2692 + $0x54] sm:$0xff]
  %v2708 = vld [vmem:[%s2692 + $0x5c] sm:$0xf]
  %v2709 = vld [vmem:[%s2692 + $0x60] sm:$0xff]
  %v2710 = vld [vmem:[%s2692 + $0x68] sm:$0xf]
  %v2711 = vld [vmem:[%s2692 + $0x6c] sm:$0xff]
  %v2712 = vld [vmem:[%s2692 + $0x74] sm:$0xf]
  %v2713 = vld [vmem:[%s2692 + $0x78] sm:$0xff]
  %v2714 = vld [vmem:[%s2692 + $0x80] sm:$0xf]
  %v2715 = vld [vmem:[%s2692 + $0x84] sm:$0xff]
  %v2716 = vld [vmem:[%s2692 + $0x8c] sm:$0xf]
  %v2717 = vld [vmem:[%s2692 + $0x90] sm:$0xff]
  %v2718 = vld [vmem:[%s2692 + $0x98] sm:$0xf]
  %v2719 = vld [vmem:[%s2692 + $0x9c] sm:$0xff]
  %v2720 = vld [vmem:[%s2692 + $0xa4] sm:$0xf]
  %v2721 = vld [vmem:[%s2692 + $0xa8] sm:$0xff]
  %v2722 = vld [vmem:[%s2692 + $0xb0] sm:$0xf]
  %v2753 = vunpack.c.l.b16 %v2693
  %v2754 = vunpack.c.h.b16 %v2693
  %v2755 = vunpack.c.l.b16 %v2694
  %v2756 = vunpack.c.l.b16 %v2695
  %v2757 = vunpack.c.h.b16 %v2695
  %v2758 = vunpack.c.l.b16 %v2696
  %v2759 = vunpack.c.l.b16 %v2697
  %v2760 = vunpack.c.h.b16 %v2697
  %v2761 = vunpack.c.l.b16 %v2698
  %v2762 = vunpack.c.l.b16 %v2699
  %v2763 = vunpack.c.h.b16 %v2699
  %v2764 = vunpack.c.l.b16 %v2700
  %v2765 = vunpack.c.l.b16 %v2701
  %v2766 = vunpack.c.h.b16 %v2701
  %v2767 = vunpack.c.l.b16 %v2702
  %v2768 = vunpack.c.l.b16 %v2703
  %v2769 = vunpack.c.h.b16 %v2703
  %v2770 = vunpack.c.l.b16 %v2704
  %v2771 = vunpack.c.l.b16 %v2705
  %v2772 = vunpack.c.h.b16 %v2705
  %v2773 = vunpack.c.l.b16 %v2706
  %v2774 = vunpack.c.l.b16 %v2707
  %v2775 = vunpack.c.h.b16 %v2707
  %v2776 = vunpack.c.l.b16 %v2708
  %v2777 = vunpack.c.l.b16 %v2709
  %v2778 = vunpack.c.h.b16 %v2709
  %v2779 = vunpack.c.l.b16 %v2710
  %v2780 = vunpack.c.l.b16 %v2711
  %v2781 = vunpack.c.h.b16 %v2711
  %v2782 = vunpack.c.l.b16 %v2712
  %v2783 = vunpack.c.l.b16 %v2713
  %v2784 = vunpack.c.h.b16 %v2713
  %v2785 = vunpack.c.l.b16 %v2714
  %v2786 = vunpack.c.l.b16 %v2715
  %v2787 = vunpack.c.h.b16 %v2715
  %v2788 = vunpack.c.l.b16 %v2716
  %v2789 = vunpack.c.l.b16 %v2717
  %v2790 = vunpack.c.h.b16 %v2717
  %v2791 = vunpack.c.l.b16 %v2718
  %v2792 = vunpack.c.l.b16 %v2719
  %v2793 = vunpack.c.h.b16 %v2719
  %v2794 = vunpack.c.l.b16 %v2720
  %v2795 = vunpack.c.l.b16 %v2721
  %v2796 = vunpack.c.h.b16 %v2721
  %v2797 = vunpack.c.l.b16 %v2722
  %v2798 = vpack.c.b16 %v2756, %v2753
  %v2799 = vpack.c.b16 %v2757, %v2754
  %v2800 = vpack.c.b16 %v2758, %v2755
  %v2801 = vpack.c.b16 %v2762, %v2759
  %v2802 = vpack.c.b16 %v2763, %v2760
  %v2803 = vpack.c.b16 %v2764, %v2761
  %v2804 = vpack.c.b16 %v2768, %v2765
  %v2805 = vpack.c.b16 %v2769, %v2766
  %v2806 = vpack.c.b16 %v2770, %v2767
  %v2807 = vpack.c.b16 %v2774, %v2771
  %v2808 = vpack.c.b16 %v2775, %v2772
  %v2809 = vpack.c.b16 %v2776, %v2773
  %v2810 = vpack.c.b16 %v2780, %v2777
  %v2811 = vpack.c.b16 %v2781, %v2778
  %v2812 = vpack.c.b16 %v2782, %v2779
  %v2813 = vpack.c.b16 %v2786, %v2783
  %v2814 = vpack.c.b16 %v2787, %v2784
  %v2815 = vpack.c.b16 %v2788, %v2785
  %v2816 = vpack.c.b16 %v2792, %v2789
  %v2817 = vpack.c.b16 %v2793, %v2790
  %v2818 = vpack.c.b16 %v2794, %v2791
  %v2819 = vpack.c.b16 %v2795, %v2795
  %v2820 = vpack.c.b16 %v2796, %v2796
  %v2821 = vpack.c.b16 %v2797, %v2797
  %v2844 = vsel %vm2015, %v2683, 0
  %v2847 = vsel %vm2015, %v2684, 0
  %v2850 = vsel %vm2015, %v2685, 0
  %v2853 = vsel %vm2015, %v2686, 0
  %v2856 = vsel %vm2015, %v2687, 0
  %v2859 = vsel %vm2015, %v2688, 0
  %v2862 = vsel %vm2015, %v2689, 0
  %v2865 = vsel %vm2015, %v2690, 0
  %v2868 = vsel %vm2015, %v2691, 0
  %v2871 = vsel %vm2043, %v2819, 0
  %v2874 = vsel %vm2043, %v2820, 0
  %v2877 = vsel %vm2043, %v2821, 0
  %2879 = vmatprep.subr.bf16.mxu0 %v2799
  %2880 = vmatpush1.bf16.msra.mxu0 %v2798
  %2881 = vmatprep.subr.bf16.mxu0 %v2802
  %2882 = vmatpush1.bf16.msra.mxu0 %v2801
  %2883 = vmatprep.subr.bf16.mxu0 %v2805
  %2884 = vmatpush1.bf16.msra.mxu0 %v2804
  %2885 = vmatprep.subr.bf16.mxu0 %v2808
  %2886 = vmatpush1.bf16.msra.mxu0 %v2807
  %2887 = vmatprep.subr.bf16.mxu0 %v2811
  %2888 = vmatpush1.bf16.msra.mxu0 %v2810
  %2889 = vmatprep.subr.bf16.mxu0 %v2814
  %2890 = vmatpush1.bf16.msra.mxu0 %v2813
  %2891 = vmatprep.subr.bf16.mxu0 %v2817
  %2892 = vmatpush1.bf16.msra.mxu0 %v2816
  %2893 = vmatprep.subr.bf16.mxu0 %v2874
  %2894 = vmatpush1.bf16.msra.mxu0 %v2871
  %2895 = vmatprep.subr.bf16.mxu0 0
  %2896 = vmatpush1.bf16.msra.mxu0 0
  %2897 = vmatprep.subr.bf16.mxu0 0
  %2898 = vmatpush1.bf16.msra.mxu0 0
  %2899 = vmatprep.subr.bf16.mxu0 0
  %2900 = vmatpush1.bf16.msra.mxu0 0
  %2901 = vmatprep.subr.bf16.mxu0 0
  %2902 = vmatpush1.bf16.msra.mxu0 0
  %2903 = vmatprep.subr.bf16.mxu0 0
  %2904 = vmatpush1.bf16.msra.mxu0 0
  %2905 = vmatprep.subr.bf16.mxu0 0
  %2906 = vmatpush1.bf16.msra.mxu0 0
  %2907 = vmatprep.subr.bf16.mxu0 0
  %2908 = vmatpush1.bf16.msra.mxu0 0
  %2909 = vmatprep.subr.bf16.mxu0 0
  %2910 = vmatpush1.bf16.msra.mxu0 0
  %2911 = vmatprep.mubr.bf16.mxu0 0
  %2912 = vmatmul.mubr.bf16.gmra.mrb[0].mxu0 %v2844
  %v2913 = vpop.f32.mrb[0].mxu0
  %v2914 = vadd.f32 0.0, %v2913
  %v2915 = vpop.f32.mrb[0].mxu0
  %v2916 = vadd.f32 0.0, %v2915
  %v2917 = vpop.f32.mrb[0].mxu0
  %v2918 = vadd.f32 0.0, %v2917
  %v2919 = vpop.f32.mrb[0].mxu0
  %v2920 = vadd.f32 0.0, %v2919
  %2921 = vmatprep.mubr.bf16.mxu0 0
  %2922 = vmatmul.mubr.bf16.gmra.mrb[0].mxu0 %v2847
  %v2923 = vpop.f32.mrb[0].mxu0
  %v2924 = vadd.f32 0.0, %v2923
  %v2925 = vpop.f32.mrb[0].mxu0
  %v2926 = vadd.f32 0.0, %v2925
  %v2927 = vpop.f32.mrb[0].mxu0
  %v2928 = vadd.f32 0.0, %v2927
  %v2929 = vpop.f32.mrb[0].mxu0
  %v2930 = vadd.f32 0.0, %v2929
  %2931 = vmatprep.mubr.bf16.mxu0 0
  %2932 = vmatmul.mubr.bf16.gmra.mrb[0].mxu0 %v2850
  %v2933 = vpop.f32.mrb[0].mxu0
  %v2934 = vadd.f32 0.0, %v2933
  %v2935 = vpop.f32.mrb[0].mxu0
  %v2936 = vadd.f32 0.0, %v2935
  %v2937 = vpop.f32.mrb[0].mxu0
  %v2938 = vadd.f32 0.0, %v2937
  %v2939 = vpop.f32.mrb[0].mxu0
  %v2940 = vadd.f32 0.0, %v2939
  %2941 = vmatprep.mubr.bf16.mxu0 0
  %2942 = vmatmul.mubr.bf16.gmra.mrb[0].mxu0 %v2853
  %v2943 = vpop.f32.mrb[0].mxu0
  %v2944 = vadd.f32 0.0, %v2943
  %v2945 = vpop.f32.mrb[0].mxu0
  %v2946 = vadd.f32 0.0, %v2945
  %v2947 = vpop.f32.mrb[0].mxu0
  %v2948 = vadd.f32 0.0, %v2947
  %v2949 = vpop.f32.mrb[0].mxu0
  %v2950 = vadd.f32 0.0, %v2949
  %2951 = vmatprep.mubr.bf16.mxu0 0
  %2952 = vmatmul.mubr.bf16.gmra.mrb[0].mxu0 %v2856
  %v2953 = vpop.f32.mrb[0].mxu0
  %v2954 = vadd.f32 0.0, %v2953
  %v2955 = vpop.f32.mrb[0].mxu0
  %v2956 = vadd.f32 0.0, %v2955
  %v2957 = vpop.f32.mrb[0].mxu0
  %v2958 = vadd.f32 0.0, %v2957
  %v2959 = vpop.f32.mrb[0].mxu0
  %v2960 = vadd.f32 0.0, %v2959
  %2961 = vmatprep.mubr.bf16.mxu0 0
  %2962 = vmatmul.mubr.bf16.gmra.mrb[0].mxu0 %v2859
  %v2963 = vpop.f32.mrb[0].mxu0
  %v2964 = vadd.f32 0.0, %v2963
  %v2965 = vpop.f32.mrb[0].mxu0
  %v2966 = vadd.f32 0.0, %v2965
  %v2967 = vpop.f32.mrb[0].mxu0
  %v2968 = vadd.f32 0.0, %v2967
  %v2969 = vpop.f32.mrb[0].mxu0
  %v2970 = vadd.f32 0.0, %v2969
  %2971 = vmatprep.mubr.bf16.mxu0 0
  %2972 = vmatmul.mubr.bf16.gmra.mrb[0].mxu0 %v2862
  %v2973 = vpop.f32.mrb[0].mxu0
  %v2974 = vadd.f32 0.0, %v2973
  %v2975 = vpop.f32.mrb[0].mxu0
  %v2976 = vadd.f32 0.0, %v2975
  %v2977 = vpop.f32.mrb[0].mxu0
  %v2978 = vadd.f32 0.0, %v2977
  %v2979 = vpop.f32.mrb[0].mxu0
  %v2980 = vadd.f32 0.0, %v2979
  %2981 = vmatprep.mubr.bf16.mxu0 0
  %2982 = vmatmul.mubr.bf16.gmra.mrb[0].mxu0 %v2865
  %v2983 = vpop.f32.mrb[0].mxu0
  %v2984 = vadd.f32 0.0, %v2983
  %v2985 = vpop.f32.mrb[0].mxu0
  %v2986 = vadd.f32 0.0, %v2985
  %v2987 = vpop.f32.mrb[0].mxu0
  %v2988 = vadd.f32 0.0, %v2987
  %v2989 = vpop.f32.mrb[0].mxu0
  %v2990 = vadd.f32 0.0, %v2989
  %2991 = vmatprep.mubr.bf16.mxu0 0
  %2992 = vmatmul.mubr.bf16.gmra.mrb[0].mxu0 %v2868
  %v2993 = vpop.f32.mrb[0].mxu0
  %v2994 = vadd.f32 0.0, %v2993
  %v2995 = vpop.f32.mrb[0].mxu0
  %v2996 = vadd.f32 0.0, %v2995
  %v2997 = vpop.f32.mrb[0].mxu0
  %v2998 = vadd.f32 0.0, %v2997
  %v2999 = vpop.f32.mrb[0].mxu0
  %v3000 = vadd.f32 0.0, %v2999
  %3001 = vdwg.mxu0
  %3002 = vmatprep.subr.bf16.mxu0 0
  %3003 = vmatpush1.bf16.msra.mxu0 %v2800
  %3004 = vmatprep.subr.bf16.mxu0 0
  %3005 = vmatpush1.bf16.msra.mxu0 %v2803
  %3006 = vmatprep.subr.bf16.mxu0 0
  %3007 = vmatpush1.bf16.msra.mxu0 %v2806
  %3008 = vmatprep.subr.bf16.mxu0 0
  %3009 = vmatpush1.bf16.msra.mxu0 %v2809
  %3010 = vmatprep.subr.bf16.mxu0 0
  %3011 = vmatpush1.bf16.msra.mxu0 %v2812
  %3012 = vmatprep.subr.bf16.mxu0 0
  %3013 = vmatpush1.bf16.msra.mxu0 %v2815
  %3014 = vmatprep.subr.bf16.mxu0 0
  %3015 = vmatpush1.bf16.msra.mxu0 %v2818
  %3016 = vmatprep.subr.bf16.mxu0 0
  %3017 = vmatpush1.bf16.msra.mxu0 %v2877
  %3018 = vmatprep.subr.bf16.mxu0 0
  %3019 = vmatpush1.bf16.msra.mxu0 0
  %3020 = vmatprep.subr.bf16.mxu0 0
  %3021 = vmatpush1.bf16.msra.mxu0 0
  %3022 = vmatprep.subr.bf16.mxu0 0
  %3023 = vmatpush1.bf16.msra.mxu0 0
  %3024 = vmatprep.subr.bf16.mxu0 0
  %3025 = vmatpush1.bf16.msra.mxu0 0
  %3026 = vmatprep.subr.bf16.mxu0 0
  %3027 = vmatpush1.bf16.msra.mxu0 0
  %3028 = vmatprep.subr.bf16.mxu0 0
  %3029 = vmatpush1.bf16.msra.mxu0 0
  %3030 = vmatprep.subr.bf16.mxu0 0
  %3031 = vmatpush1.bf16.msra.mxu0 0
  %3032 = vmatprep.subr.bf16.mxu0 0
  %3033 = vmatpush1.bf16.msra.mxu0 0
  %3034 = vmatprep.mubr.bf16.mxu0 0
  %3035 = vmatmul.mubr.bf16.gmra.mrb[0].mxu0 %v2844
  %v3036 = vpop.f32.mrb[0].mxu0
  %v3037 = vadd.f32 0.0, %v3036
  %v3038 = vpop.f32.mrb[0].mxu0
  %v3039 = vpop.f32.mrb[0].mxu0
  %v3040 = vadd.f32 0.0, %v3039
  %v3041 = vpop.f32.mrb[0].mxu0
  %3042 = vmatprep.mubr.bf16.mxu0 0
  %3043 = vmatmul.mubr.bf16.gmra.mrb[0].mxu0 %v2847
  %v3044 = vpop.f32.mrb[0].mxu0
  %v3045 = vadd.f32 0.0, %v3044
  %v3046 = vpop.f32.mrb[0].mxu0
  %v3047 = vpop.f32.mrb[0].mxu0
  %v3048 = vadd.f32 0.0, %v3047
  %v3049 = vpop.f32.mrb[0].mxu0
  %3050 = vmatprep.mubr.bf16.mxu0 0
  %3051 = vmatmul.mubr.bf16.gmra.mrb[0].mxu0 %v2850
  %v3052 = vpop.f32.mrb[0].mxu0
  %v3053 = vadd.f32 0.0, %v3052
  %v3054 = vpop.f32.mrb[0].mxu0
  %v3055 = vpop.f32.mrb[0].mxu0
  %v3056 = vadd.f32 0.0, %v3055
  %v3057 = vpop.f32.mrb[0].mxu0
  %3058 = vmatprep.mubr.bf16.mxu0 0
  %3059 = vmatmul.mubr.bf16.gmra.mrb[0].mxu0 %v2853
  %v3060 = vpop.f32.mrb[0].mxu0
  %v3061 = vadd.f32 0.0, %v3060
  %v3062 = vpop.f32.mrb[0].mxu0
  %v3063 = vpop.f32.mrb[0].mxu0
  %v3064 = vadd.f32 0.0, %v3063
  %v3065 = vpop.f32.mrb[0].mxu0
  %3066 = vmatprep.mubr.bf16.mxu0 0
  %3067 = vmatmul.mubr.bf16.gmra.mrb[0].mxu0 %v2856
  %v3068 = vpop.f32.mrb[0].mxu0
  %v3069 = vadd.f32 0.0, %v3068
  %v3070 = vpop.f32.mrb[0].mxu0
  %v3071 = vpop.f32.mrb[0].mxu0
  %v3072 = vadd.f32 0.0, %v3071
  %v3073 = vpop.f32.mrb[0].mxu0
  %3074 = vmatprep.mubr.bf16.mxu0 0
  %3075 = vmatmul.mubr.bf16.gmra.mrb[0].mxu0 %v2859
  %v3076 = vpop.f32.mrb[0].mxu0
  %v3077 = vadd.f32 0.0, %v3076
  %v3078 = vpop.f32.mrb[0].mxu0
  %v3079 = vpop.f32.mrb[0].mxu0
  %v3080 = vadd.f32 0.0, %v3079
  %v3081 = vpop.f32.mrb[0].mxu0
  %3082 = vmatprep.mubr.bf16.mxu0 0
  %3083 = vmatmul.mubr.bf16.gmra.mrb[0].mxu0 %v2862
  %v3084 = vpop.f32.mrb[0].mxu0
  %v3085 = vadd.f32 0.0, %v3084
  %v3086 = vpop.f32.mrb[0].mxu0
  %v3087 = vpop.f32.mrb[0].mxu0
  %v3088 = vadd.f32 0.0, %v3087
  %v3089 = vpop.f32.mrb[0].mxu0
  %3090 = vmatprep.mubr.bf16.mxu0 0
  %3091 = vmatmul.mubr.bf16.gmra.mrb[0].mxu0 %v2865
  %v3092 = vpop.f32.mrb[0].mxu0
  %v3093 = vadd.f32 0.0, %v3092
  %v3094 = vpop.f32.mrb[0].mxu0
  %v3095 = vpop.f32.mrb[0].mxu0
  %v3096 = vadd.f32 0.0, %v3095
  %v3097 = vpop.f32.mrb[0].mxu0
  %3098 = vmatprep.mubr.bf16.mxu0 0
  %3099 = vmatmul.mubr.bf16.gmra.mrb[0].mxu0 %v2868
  %v3100 = vpop.f32.mrb[0].mxu0
  %v3101 = vadd.f32 0.0, %v3100
  %v3102 = vpop.f32.mrb[0].mxu0
  %v3103 = vpop.f32.mrb[0].mxu0
  %v3104 = vadd.f32 0.0, %v3103
  %v3105 = vpop.f32.mrb[0].mxu0
  %3106 = vdwg.mxu0
  %v3107 = vadd.f32 %v2472, %v2914
  %v3108 = vadd.f32 %v2474, %v2916
  %v3109 = vadd.f32 %v2595, %v3037
  %v3110 = vadd.f32 %v2476, %v2918
  %v3111 = vadd.f32 %v2478, %v2920
  %v3112 = vadd.f32 %v2598, %v3040
  %v3113 = vadd.f32 %v2482, %v2924
  %v3114 = vadd.f32 %v2484, %v2926
  %v3115 = vadd.f32 %v2603, %v3045
  %v3116 = vadd.f32 %v2486, %v2928
  %v3117 = vadd.f32 %v2488, %v2930
  %v3118 = vadd.f32 %v2606, %v3048
  %v3119 = vadd.f32 %v2492, %v2934
  %v3120 = vadd.f32 %v2494, %v2936
  %v3121 = vadd.f32 %v2611, %v3053
  %v3122 = vadd.f32 %v2496, %v2938
  %v3123 = vadd.f32 %v2498, %v2940
  %v3124 = vadd.f32 %v2614, %v3056
  %v3125 = vadd.f32 %v2502, %v2944
  %v3126 = vadd.f32 %v2504, %v2946
  %v3127 = vadd.f32 %v2619, %v3061
  %v3128 = vadd.f32 %v2506, %v2948
  %v3129 = vadd.f32 %v2508, %v2950
  %v3130 = vadd.f32 %v2622, %v3064
  %v3131 = vadd.f32 %v2512, %v2954
  %v3132 = vadd.f32 %v2514, %v2956
  %v3133 = vadd.f32 %v2627, %v3069
  %v3134 = vadd.f32 %v2516, %v2958
  %v3135 = vadd.f32 %v2518, %v2960
  %v3136 = vadd.f32 %v2630, %v3072
  %v3137 = vadd.f32 %v2522, %v2964
  %v3138 = vadd.f32 %v2524, %v2966
  %v3139 = vadd.f32 %v2635, %v3077
  %v3140 = vadd.f32 %v2526, %v2968
  %v3141 = vadd.f32 %v2528, %v2970
  %v3142 = vadd.f32 %v2638, %v3080
  %v3143 = vadd.f32 %v2532, %v2974
  %v3144 = vadd.f32 %v2534, %v2976
  %v3145 = vadd.f32 %v2643, %v3085
  %v3146 = vadd.f32 %v2536, %v2978
  %v3147 = vadd.f32 %v2538, %v2980
  %v3148 = vadd.f32 %v2646, %v3088
  %v3149 = vadd.f32 %v2542, %v2984
  %v3150 = vadd.f32 %v2544, %v2986
  %v3151 = vadd.f32 %v2651, %v3093
  %v3152 = vadd.f32 %v2546, %v2988
  %v3153 = vadd.f32 %v2548, %v2990
  %v3154 = vadd.f32 %v2654, %v3096
  %v3155 = vadd.f32 %v2552, %v2994
  %v3156 = vadd.f32 %v2554, %v2996
  %v3157 = vadd.f32 %v2659, %v3101
  %v3158 = vadd.f32 %v2556, %v2998
  %v3159 = vadd.f32 %v2558, %v3000
  %v3160 = vadd.f32 %v2662, %v3104
  %v3161 = vld [vmem:[%s0 + $0xa8] sm:$0xff]
  %v3162 = vld [vmem:[%s0 + $0xb0] sm:$0xff]
  %v3163 = vld [vmem:[%s0 + $0xb8] sm:$0xff]
  %v3164 = vld [vmem:[%s0 + $0xc0] sm:$0xff]
  %v3165 = vld [vmem:[%s0 + $0xc8] sm:$0xff]
  %v3166 = vld [vmem:[%s0 + $0xd0] sm:$0xff]
  %v3167 = vld [vmem:[%s0 + $0xd8] sm:$0xff]
  %v3168 = vld [vmem:[%s0 + $0xe0] sm:$0xff]
  %v3169 = vld [vmem:[%s0 + $0xe8] sm:$0xff]
  %v3170 = vld [vmem:[%s0 + $0xf0] sm:$0xff]
  %v3171 = vld [vmem:[%s0 + $0xf8] sm:$0xff]
  %v3172 = vld [vmem:[%s0 + $0x100] sm:$0xff]
  %v3173 = vld [vmem:[%s0 + $0x108] sm:$0xff]
  %v3174 = vld [vmem:[%s0 + $0x110] sm:$0xff]
  %v3175 = vld [vmem:[%s0 + $0x118] sm:$0xff]
  %v3176 = vld [vmem:[%s0 + $0x120] sm:$0xff]
  %v3177 = vld [vmem:[%s0 + $0x128] sm:$0xff]
  %v3178 = vld [vmem:[%s0 + $0x130] sm:$0xff]
  %v3179 = vpack.c.bf16 %v3162, %v3161
  %v3180 = vpack.c.bf16 %v3164, %v3163
  %v3181 = vpack.c.bf16 %v3166, %v3165
  %v3182 = vpack.c.bf16 %v3168, %v3167
  %v3183 = vpack.c.bf16 %v3170, %v3169
  %v3184 = vpack.c.bf16 %v3172, %v3171
  %v3185 = vpack.c.bf16 %v3174, %v3173
  %v3186 = vpack.c.bf16 %v3176, %v3175
  %v3187 = vpack.c.bf16 %v3178, %v3177
  %s3188 = scalar_lea.vmem %s1, 540
  %v3189 = vld [vmem:[%s3188] sm:$0xff]
  %v3190 = vld [vmem:[%s3188 + $0x8] sm:$0xf]
  %v3191 = vld [vmem:[%s3188 + $0xc] sm:$0xff]
  %v3192 = vld [vmem:[%s3188 + $0x14] sm:$0xf]
  %v3193 = vld [vmem:[%s3188 + $0x18] sm:$0xff]
  %v3194 = vld [vmem:[%s3188 + $0x20] sm:$0xf]
  %v3195 = vld [vmem:[%s3188 + $0x24] sm:$0xff]
  %v3196 = vld [vmem:[%s3188 + $0x2c] sm:$0xf]
  %v3197 = vld [vmem:[%s3188 + $0x30] sm:$0xff]
  %v3198 = vld [vmem:[%s3188 + $0x38] sm:$0xf]
  %v3199 = vld [vmem:[%s3188 + $0x3c] sm:$0xff]
  %v3200 = vld [vmem:[%s3188 + $0x44] sm:$0xf]
  %v3201 = vld [vmem:[%s3188 + $0x48] sm:$0xff]
  %v3202 = vld [vmem:[%s3188 + $0x50] sm:$0xf]
  %v3203 = vld [vmem:[%s3188 + $0x54] sm:$0xff]
  %v3204 = vld [vmem:[%s3188 + $0x5c] sm:$0xf]
  %v3205 = vld [vmem:[%s3188 + $0x60] sm:$0xff]
  %v3206 = vld [vmem:[%s3188 + $0x68] sm:$0xf]
  %v3207 = vld [vmem:[%s3188 + $0x6c] sm:$0xff]
  %v3208 = vld [vmem:[%s3188 + $0x74] sm:$0xf]
  %v3209 = vld [vmem:[%s3188 + $0x78] sm:$0xff]
  %v3210 = vld [vmem:[%s3188 + $0x80] sm:$0xf]
  %v3211 = vld [vmem:[%s3188 + $0x84] sm:$0xff]
  %v3212 = vld [vmem:[%s3188 + $0x8c] sm:$0xf]
  %v3213 = vld [vmem:[%s3188 + $0x90] sm:$0xff]
  %v3214 = vld [vmem:[%s3188 + $0x98] sm:$0xf]
  %v3215 = vld [vmem:[%s3188 + $0x9c] sm:$0xff]
  %v3216 = vld [vmem:[%s3188 + $0xa4] sm:$0xf]
  %v3217 = vld [vmem:[%s3188 + $0xa8] sm:$0xff]
  %v3218 = vld [vmem:[%s3188 + $0xb0] sm:$0xf]
  %v3249 = vunpack.c.l.b16 %v3189
  %v3250 = vunpack.c.h.b16 %v3189
  %v3251 = vunpack.c.l.b16 %v3190
  %v3252 = vunpack.c.l.b16 %v3191
  %v3253 = vunpack.c.h.b16 %v3191
  %v3254 = vunpack.c.l.b16 %v3192
  %v3255 = vunpack.c.l.b16 %v3193
  %v3256 = vunpack.c.h.b16 %v3193
  %v3257 = vunpack.c.l.b16 %v3194
  %v3258 = vunpack.c.l.b16 %v3195
  %v3259 = vunpack.c.h.b16 %v3195
  %v3260 = vunpack.c.l.b16 %v3196
  %v3261 = vunpack.c.l.b16 %v3197
  %v3262 = vunpack.c.h.b16 %v3197
  %v3263 = vunpack.c.l.b16 %v3198
  %v3264 = vunpack.c.l.b16 %v3199
  %v3265 = vunpack.c.h.b16 %v3199
  %v3266 = vunpack.c.l.b16 %v3200
  %v3267 = vunpack.c.l.b16 %v3201
  %v3268 = vunpack.c.h.b16 %v3201
  %v3269 = vunpack.c.l.b16 %v3202
  %v3270 = vunpack.c.l.b16 %v3203
  %v3271 = vunpack.c.h.b16 %v3203
  %v3272 = vunpack.c.l.b16 %v3204
  %v3273 = vunpack.c.l.b16 %v3205
  %v3274 = vunpack.c.h.b16 %v3205
  %v3275 = vunpack.c.l.b16 %v3206
  %v3276 = vunpack.c.l.b16 %v3207
  %v3277 = vunpack.c.h.b16 %v3207
  %v3278 = vunpack.c.l.b16 %v3208
  %v3279 = vunpack.c.l.b16 %v3209
  %v3280 = vunpack.c.h.b16 %v3209
  %v3281 = vunpack.c.l.b16 %v3210
  %v3282 = vunpack.c.l.b16 %v3211
  %v3283 = vunpack.c.h.b16 %v3211
  %v3284 = vunpack.c.l.b16 %v3212
  %v3285 = vunpack.c.l.b16 %v3213
  %v3286 = vunpack.c.h.b16 %v3213
  %v3287 = vunpack.c.l.b16 %v3214
  %v3288 = vunpack.c.l.b16 %v3215
  %v3289 = vunpack.c.h.b16 %v3215
  %v3290 = vunpack.c.l.b16 %v3216
  %v3291 = vunpack.c.l.b16 %v3217
  %v3292 = vunpack.c.h.b16 %v3217
  %v3293 = vunpack.c.l.b16 %v3218
  %v3294 = vpack.c.b16 %v3252, %v3249
  %v3295 = vpack.c.b16 %v3253, %v3250
  %v3296 = vpack.c.b16 %v3254, %v3251
  %v3297 = vpack.c.b16 %v3258, %v3255
  %v3298 = vpack.c.b16 %v3259, %v3256
  %v3299 = vpack.c.b16 %v3260, %v3257
  %v3300 = vpack.c.b16 %v3264, %v3261
  %v3301 = vpack.c.b16 %v3265, %v3262
  %v3302 = vpack.c.b16 %v3266, %v3263
  %v3303 = vpack.c.b16 %v3270, %v3267
  %v3304 = vpack.c.b16 %v3271, %v3268
  %v3305 = vpack.c.b16 %v3272, %v3269
  %v3306 = vpack.c.b16 %v3276, %v3273
  %v3307 = vpack.c.b16 %v3277, %v3274
  %v3308 = vpack.c.b16 %v3278, %v3275
  %v3309 = vpack.c.b16 %v3282, %v3279
  %v3310 = vpack.c.b16 %v3283, %v3280
  %v3311 = vpack.c.b16 %v3284, %v3281
  %v3312 = vpack.c.b16 %v3288, %v3285
  %v3313 = vpack.c.b16 %v3289, %v3286
  %v3314 = vpack.c.b16 %v3290, %v3287
  %v3315 = vpack.c.b16 %v3291, %v3291
  %v3316 = vpack.c.b16 %v3292, %v3292
  %v3317 = vpack.c.b16 %v3293, %v3293
  %v3340 = vsel %vm2015, %v3179, 0
  %v3343 = vsel %vm2015, %v3180, 0
  %v3346 = vsel %vm2015, %v3181, 0
  %v3349 = vsel %vm2015, %v3182, 0
  %v3352 = vsel %vm2015, %v3183, 0
  %v3355 = vsel %vm2015, %v3184, 0
  %v3358 = vsel %vm2015, %v3185, 0
  %v3361 = vsel %vm2015, %v3186, 0
  %v3364 = vsel %vm2015, %v3187, 0
  %v3367 = vsel %vm2043, %v3315, 0
  %v3370 = vsel %vm2043, %v3316, 0
  %v3373 = vsel %vm2043, %v3317, 0
  %3375 = vmatprep.subr.bf16.mxu0 %v3295
  %3376 = vmatpush1.bf16.msra.mxu0 %v3294
  %3377 = vmatprep.subr.bf16.mxu0 %v3298
  %3378 = vmatpush1.bf16.msra.mxu0 %v3297
  %3379 = vmatprep.subr.bf16.mxu0 %v3301
  %3380 = vmatpush1.bf16.msra.mxu0 %v3300
  %3381 = vmatprep.subr.bf16.mxu0 %v3304
  %3382 = vmatpush1.bf16.msra.mxu0 %v3303
  %3383 = vmatprep.subr.bf16.mxu0 %v3307
  %3384 = vmatpush1.bf16.msra.mxu0 %v3306
  %3385 = vmatprep.subr.bf16.mxu0 %v3310
  %3386 = vmatpush1.bf16.msra.mxu0 %v3309
  %3387 = vmatprep.subr.bf16.mxu0 %v3313
  %3388 = vmatpush1.bf16.msra.mxu0 %v3312
  %3389 = vmatprep.subr.bf16.mxu0 %v3370
  %3390 = vmatpush1.bf16.msra.mxu0 %v3367
  %3391 = vmatprep.subr.bf16.mxu0 0
  %3392 = vmatpush1.bf16.msra.mxu0 0
  %3393 = vmatprep.subr.bf16.mxu0 0
  %3394 = vmatpush1.bf16.msra.mxu0 0
  %3395 = vmatprep.subr.bf16.mxu0 0
  %3396 = vmatpush1.bf16.msra.mxu0 0
  %3397 = vmatprep.subr.bf16.mxu0 0
  %3398 = vmatpush1.bf16.msra.mxu0 0
  %3399 = vmatprep.subr.bf16.mxu0 0
  %3400 = vmatpush1.bf16.msra.mxu0 0
  %3401 = vmatprep.subr.bf16.mxu0 0
  %3402 = vmatpush1.bf16.msra.mxu0 0
  %3403 = vmatprep.subr.bf16.mxu0 0
  %3404 = vmatpush1.bf16.msra.mxu0 0
  %3405 = vmatprep.subr.bf16.mxu0 0
  %3406 = vmatpush1.bf16.msra.mxu0 0
  %3407 = vmatprep.mubr.bf16.mxu0 0
  %3408 = vmatmul.mubr.bf16.gmra.mrb[0].mxu0 %v3340
  %v3409 = vpop.f32.mrb[0].mxu0
  %v3410 = vadd.f32 0.0, %v3409
  %v3411 = vpop.f32.mrb[0].mxu0
  %v3412 = vadd.f32 0.0, %v3411
  %v3413 = vpop.f32.mrb[0].mxu0
  %v3414 = vadd.f32 0.0, %v3413
  %v3415 = vpop.f32.mrb[0].mxu0
  %v3416 = vadd.f32 0.0, %v3415
  %3417 = vmatprep.mubr.bf16.mxu0 0
  %3418 = vmatmul.mubr.bf16.gmra.mrb[0].mxu0 %v3343
  %v3419 = vpop.f32.mrb[0].mxu0
  %v3420 = vadd.f32 0.0, %v3419
  %v3421 = vpop.f32.mrb[0].mxu0
  %v3422 = vadd.f32 0.0, %v3421
  %v3423 = vpop.f32.mrb[0].mxu0
  %v3424 = vadd.f32 0.0, %v3423
  %v3425 = vpop.f32.mrb[0].mxu0
  %v3426 = vadd.f32 0.0, %v3425
  %3427 = vmatprep.mubr.bf16.mxu0 0
  %3428 = vmatmul.mubr.bf16.gmra.mrb[0].mxu0 %v3346
  %v3429 = vpop.f32.mrb[0].mxu0
  %v3430 = vadd.f32 0.0, %v3429
  %v3431 = vpop.f32.mrb[0].mxu0
  %v3432 = vadd.f32 0.0, %v3431
  %v3433 = vpop.f32.mrb[0].mxu0
  %v3434 = vadd.f32 0.0, %v3433
  %v3435 = vpop.f32.mrb[0].mxu0
  %v3436 = vadd.f32 0.0, %v3435
  %3437 = vmatprep.mubr.bf16.mxu0 0
  %3438 = vmatmul.mubr.bf16.gmra.mrb[0].mxu0 %v3349
  %v3439 = vpop.f32.mrb[0].mxu0
  %v3440 = vadd.f32 0.0, %v3439
  %v3441 = vpop.f32.mrb[0].mxu0
  %v3442 = vadd.f32 0.0, %v3441
  %v3443 = vpop.f32.mrb[0].mxu0
  %v3444 = vadd.f32 0.0, %v3443
  %v3445 = vpop.f32.mrb[0].mxu0
  %v3446 = vadd.f32 0.0, %v3445
  %3447 = vmatprep.mubr.bf16.mxu0 0
  %3448 = vmatmul.mubr.bf16.gmra.mrb[0].mxu0 %v3352
  %v3449 = vpop.f32.mrb[0].mxu0
  %v3450 = vadd.f32 0.0, %v3449
  %v3451 = vpop.f32.mrb[0].mxu0
  %v3452 = vadd.f32 0.0, %v3451
  %v3453 = vpop.f32.mrb[0].mxu0
  %v3454 = vadd.f32 0.0, %v3453
  %v3455 = vpop.f32.mrb[0].mxu0
  %v3456 = vadd.f32 0.0, %v3455
  %3457 = vmatprep.mubr.bf16.mxu0 0
  %3458 = vmatmul.mubr.bf16.gmra.mrb[0].mxu0 %v3355
  %v3459 = vpop.f32.mrb[0].mxu0
  %v3460 = vadd.f32 0.0, %v3459
  %v3461 = vpop.f32.mrb[0].mxu0
  %v3462 = vadd.f32 0.0, %v3461
  %v3463 = vpop.f32.mrb[0].mxu0
  %v3464 = vadd.f32 0.0, %v3463
  %v3465 = vpop.f32.mrb[0].mxu0
  %v3466 = vadd.f32 0.0, %v3465
  %3467 = vmatprep.mubr.bf16.mxu0 0
  %3468 = vmatmul.mubr.bf16.gmra.mrb[0].mxu0 %v3358
  %v3469 = vpop.f32.mrb[0].mxu0
  %v3470 = vadd.f32 0.0, %v3469
  %v3471 = vpop.f32.mrb[0].mxu0
  %v3472 = vadd.f32 0.0, %v3471
  %v3473 = vpop.f32.mrb[0].mxu0
  %v3474 = vadd.f32 0.0, %v3473
  %v3475 = vpop.f32.mrb[0].mxu0
  %v3476 = vadd.f32 0.0, %v3475
  %3477 = vmatprep.mubr.bf16.mxu0 0
  %3478 = vmatmul.mubr.bf16.gmra.mrb[0].mxu0 %v3361
  %v3479 = vpop.f32.mrb[0].mxu0
  %v3480 = vadd.f32 0.0, %v3479
  %v3481 = vpop.f32.mrb[0].mxu0
  %v3482 = vadd.f32 0.0, %v3481
  %v3483 = vpop.f32.mrb[0].mxu0
  %v3484 = vadd.f32 0.0, %v3483
  %v3485 = vpop.f32.mrb[0].mxu0
  %v3486 = vadd.f32 0.0, %v3485
  %3487 = vmatprep.mubr.bf16.mxu0 0
  %3488 = vmatmul.mubr.bf16.gmra.mrb[0].mxu0 %v3364
  %v3489 = vpop.f32.mrb[0].mxu0
  %v3490 = vadd.f32 0.0, %v3489
  %v3491 = vpop.f32.mrb[0].mxu0
  %v3492 = vadd.f32 0.0, %v3491
  %v3493 = vpop.f32.mrb[0].mxu0
  %v3494 = vadd.f32 0.0, %v3493
  %v3495 = vpop.f32.mrb[0].mxu0
  %v3496 = vadd.f32 0.0, %v3495
  %3497 = vdwg.mxu0
  %3498 = vmatprep.subr.bf16.mxu0 0
  %3499 = vmatpush1.bf16.msra.mxu0 %v3296
  %3500 = vmatprep.subr.bf16.mxu0 0
  %3501 = vmatpush1.bf16.msra.mxu0 %v3299
  %3502 = vmatprep.subr.bf16.mxu0 0
  %3503 = vmatpush1.bf16.msra.mxu0 %v3302
  %3504 = vmatprep.subr.bf16.mxu0 0
  %3505 = vmatpush1.bf16.msra.mxu0 %v3305
  %3506 = vmatprep.subr.bf16.mxu0 0
  %3507 = vmatpush1.bf16.msra.mxu0 %v3308
  %3508 = vmatprep.subr.bf16.mxu0 0
  %3509 = vmatpush1.bf16.msra.mxu0 %v3311
  %3510 = vmatprep.subr.bf16.mxu0 0
  %3511 = vmatpush1.bf16.msra.mxu0 %v3314
  %3512 = vmatprep.subr.bf16.mxu0 0
  %3513 = vmatpush1.bf16.msra.mxu0 %v3373
  %3514 = vmatprep.subr.bf16.mxu0 0
  %3515 = vmatpush1.bf16.msra.mxu0 0
  %3516 = vmatprep.subr.bf16.mxu0 0
  %3517 = vmatpush1.bf16.msra.mxu0 0
  %3518 = vmatprep.subr.bf16.mxu0 0
  %3519 = vmatpush1.bf16.msra.mxu0 0
  %3520 = vmatprep.subr.bf16.mxu0 0
  %3521 = vmatpush1.bf16.msra.mxu0 0
  %3522 = vmatprep.subr.bf16.mxu0 0
  %3523 = vmatpush1.bf16.msra.mxu0 0
  %3524 = vmatprep.subr.bf16.mxu0 0
  %3525 = vmatpush1.bf16.msra.mxu0 0
  %3526 = vmatprep.subr.bf16.mxu0 0
  %3527 = vmatpush1.bf16.msra.mxu0 0
  %3528 = vmatprep.subr.bf16.mxu0 0
  %3529 = vmatpush1.bf16.msra.mxu0 0
  %3530 = vmatprep.mubr.bf16.mxu0 0
  %3531 = vmatmul.mubr.bf16.gmra.mrb[0].mxu0 %v3340
  %v3532 = vpop.f32.mrb[0].mxu0
  %v3533 = vadd.f32 0.0, %v3532
  %v3534 = vpop.f32.mrb[0].mxu0
  %v3535 = vpop.f32.mrb[0].mxu0
  %v3536 = vadd.f32 0.0, %v3535
  %v3537 = vpop.f32.mrb[0].mxu0
  %3538 = vmatprep.mubr.bf16.mxu0 0
  %3539 = vmatmul.mubr.bf16.gmra.mrb[0].mxu0 %v3343
  %v3540 = vpop.f32.mrb[0].mxu0
  %v3541 = vadd.f32 0.0, %v3540
  %v3542 = vpop.f32.mrb[0].mxu0
  %v3543 = vpop.f32.mrb[0].mxu0
  %v3544 = vadd.f32 0.0, %v3543
  %v3545 = vpop.f32.mrb[0].mxu0
  %3546 = vmatprep.mubr.bf16.mxu0 0
  %3547 = vmatmul.mubr.bf16.gmra.mrb[0].mxu0 %v3346
  %v3548 = vpop.f32.mrb[0].mxu0
  %v3549 = vadd.f32 0.0, %v3548
  %v3550 = vpop.f32.mrb[0].mxu0
  %v3551 = vpop.f32.mrb[0].mxu0
  %v3552 = vadd.f32 0.0, %v3551
  %v3553 = vpop.f32.mrb[0].mxu0
  %3554 = vmatprep.mubr.bf16.mxu0 0
  %3555 = vmatmul.mubr.bf16.gmra.mrb[0].mxu0 %v3349
  %v3556 = vpop.f32.mrb[0].mxu0
  %v3557 = vadd.f32 0.0, %v3556
  %v3558 = vpop.f32.mrb[0].mxu0
  %v3559 = vpop.f32.mrb[0].mxu0
  %v3560 = vadd.f32 0.0, %v3559
  %v3561 = vpop.f32.mrb[0].mxu0
  %3562 = vmatprep.mubr.bf16.mxu0 0
  %3563 = vmatmul.mubr.bf16.gmra.mrb[0].mxu0 %v3352
  %v3564 = vpop.f32.mrb[0].mxu0
  %v3565 = vadd.f32 0.0, %v3564
  %v3566 = vpop.f32.mrb[0].mxu0
  %v3567 = vpop.f32.mrb[0].mxu0
  %v3568 = vadd.f32 0.0, %v3567
  %v3569 = vpop.f32.mrb[0].mxu0
  %3570 = vmatprep.mubr.bf16.mxu0 0
  %3571 = vmatmul.mubr.bf16.gmra.mrb[0].mxu0 %v3355
  %v3572 = vpop.f32.mrb[0].mxu0
  %v3573 = vadd.f32 0.0, %v3572
  %v3574 = vpop.f32.mrb[0].mxu0
  %v3575 = vpop.f32.mrb[0].mxu0
  %v3576 = vadd.f32 0.0, %v3575
  %v3577 = vpop.f32.mrb[0].mxu0
  %3578 = vmatprep.mubr.bf16.mxu0 0
  %3579 = vmatmul.mubr.bf16.gmra.mrb[0].mxu0 %v3358
  %v3580 = vpop.f32.mrb[0].mxu0
  %v3581 = vadd.f32 0.0, %v3580
  %v3582 = vpop.f32.mrb[0].mxu0
  %v3583 = vpop.f32.mrb[0].mxu0
  %v3584 = vadd.f32 0.0, %v3583
  %v3585 = vpop.f32.mrb[0].mxu0
  %3586 = vmatprep.mubr.bf16.mxu0 0
  %3587 = vmatmul.mubr.bf16.gmra.mrb[0].mxu0 %v3361
  %v3588 = vpop.f32.mrb[0].mxu0
  %v3589 = vadd.f32 0.0, %v3588
  %v3590 = vpop.f32.mrb[0].mxu0
  %v3591 = vpop.f32.mrb[0].mxu0
  %v3592 = vadd.f32 0.0, %v3591
  %v3593 = vpop.f32.mrb[0].mxu0
  %3594 = vmatprep.mubr.bf16.mxu0 0
  %3595 = vmatmul.mubr.bf16.gmra.mrb[0].mxu0 %v3364
  %v3596 = vpop.f32.mrb[0].mxu0
  %v3597 = vadd.f32 0.0, %v3596
  %v3598 = vpop.f32.mrb[0].mxu0
  %v3599 = vpop.f32.mrb[0].mxu0
  %v3600 = vadd.f32 0.0, %v3599
  %v3601 = vpop.f32.mrb[0].mxu0
  %3602 = vdwg.mxu0
  %v3603 = vadd.f32 %v3107, %v3410
  %v3604 = vadd.f32 %v3108, %v3412
  %v3605 = vadd.f32 %v3109, %v3533
  %v3606 = vadd.f32 %v3110, %v3414
  %v3607 = vadd.f32 %v3111, %v3416
  %v3608 = vadd.f32 %v3112, %v3536
  %v3609 = vadd.f32 %v3113, %v3420
  %v3610 = vadd.f32 %v3114, %v3422
  %v3611 = vadd.f32 %v3115, %v3541
  %v3612 = vadd.f32 %v3116, %v3424
  %v3613 = vadd.f32 %v3117, %v3426
  %v3614 = vadd.f32 %v3118, %v3544
  %v3615 = vadd.f32 %v3119, %v3430
  %v3616 = vadd.f32 %v3120, %v3432
  %v3617 = vadd.f32 %v3121, %v3549
  %v3618 = vadd.f32 %v3122, %v3434
  %v3619 = vadd.f32 %v3123, %v3436
  %v3620 = vadd.f32 %v3124, %v3552
  %v3621 = vadd.f32 %v3125, %v3440
  %v3622 = vadd.f32 %v3126, %v3442
  %v3623 = vadd.f32 %v3127, %v3557
  %v3624 = vadd.f32 %v3128, %v3444
  %v3625 = vadd.f32 %v3129, %v3446
  %v3626 = vadd.f32 %v3130, %v3560
  %v3627 = vadd.f32 %v3131, %v3450
  %v3628 = vadd.f32 %v3132, %v3452
  %v3629 = vadd.f32 %v3133, %v3565
  %v3630 = vadd.f32 %v3134, %v3454
  %v3631 = vadd.f32 %v3135, %v3456
  %v3632 = vadd.f32 %v3136, %v3568
  %v3633 = vadd.f32 %v3137, %v3460
  %v3634 = vadd.f32 %v3138, %v3462
  %v3635 = vadd.f32 %v3139, %v3573
  %v3636 = vadd.f32 %v3140, %v3464
  %v3637 = vadd.f32 %v3141, %v3466
  %v3638 = vadd.f32 %v3142, %v3576
  %v3639 = vadd.f32 %v3143, %v3470
  %v3640 = vadd.f32 %v3144, %v3472
  %v3641 = vadd.f32 %v3145, %v3581
  %v3642 = vadd.f32 %v3146, %v3474
  %v3643 = vadd.f32 %v3147, %v3476
  %v3644 = vadd.f32 %v3148, %v3584
  %v3645 = vadd.f32 %v3149, %v3480
  %v3646 = vadd.f32 %v3150, %v3482
  %v3647 = vadd.f32 %v3151, %v3589
  %v3648 = vadd.f32 %v3152, %v3484
  %v3649 = vadd.f32 %v3153, %v3486
  %v3650 = vadd.f32 %v3154, %v3592
  %v3651 = vadd.f32 %v3155, %v3490
  %v3652 = vadd.f32 %v3156, %v3492
  %v3653 = vadd.f32 %v3157, %v3597
  %v3654 = vadd.f32 %v3158, %v3494
  %v3655 = vadd.f32 %v3159, %v3496
  %v3656 = vadd.f32 %v3160, %v3600
  %v3657 = vld [vmem:[%s0 + $0x10] sm:$0xff]
  %v3658 = vld [vmem:[%s0 + $0x18] sm:$0xff]
  %v3659 = vld [vmem:[%s0 + $0x20] sm:$0xff]
  %v3660 = vld [vmem:[%s0 + $0x28] sm:$0xff]
  %v3661 = vld [vmem:[%s0 + $0x30] sm:$0xff]
  %v3662 = vld [vmem:[%s0 + $0x38] sm:$0xff]
  %v3663 = vld [vmem:[%s0 + $0x40] sm:$0xff]
  %v3664 = vld [vmem:[%s0 + $0x48] sm:$0xff]
  %v3665 = vld [vmem:[%s0 + $0x50] sm:$0xff]
  %v3666 = vld [vmem:[%s0 + $0x58] sm:$0xff]
  %v3667 = vld [vmem:[%s0 + $0x60] sm:$0xff]
  %v3668 = vld [vmem:[%s0 + $0x68] sm:$0xff]
  %v3669 = vld [vmem:[%s0 + $0x70] sm:$0xff]
  %v3670 = vld [vmem:[%s0 + $0x78] sm:$0xff]
  %v3671 = vld [vmem:[%s0 + $0x80] sm:$0xff]
  %v3672 = vld [vmem:[%s0 + $0x88] sm:$0xff]
  %v3673 = vld [vmem:[%s0 + $0x90] sm:$0xff]
  %v3674 = vld [vmem:[%s0 + $0x98] sm:$0xff]
  %v3675 = vpack.c.bf16 %v3658, %v3657
  %v3676 = vpack.c.bf16 %v3660, %v3659
  %v3677 = vpack.c.bf16 %v3662, %v3661
  %v3678 = vpack.c.bf16 %v3664, %v3663
  %v3679 = vpack.c.bf16 %v3666, %v3665
  %v3680 = vpack.c.bf16 %v3668, %v3667
  %v3681 = vpack.c.bf16 %v3670, %v3669
  %v3682 = vpack.c.bf16 %v3672, %v3671
  %v3683 = vpack.c.bf16 %v3674, %v3673
  %s3684 = scalar_lea.vmem %s1, 720
  %v3685 = vld [vmem:[%s3684] sm:$0xff]
  %v3686 = vld [vmem:[%s3684 + $0x8] sm:$0xf]
  %v3687 = vld [vmem:[%s3684 + $0xc] sm:$0xff]
  %v3688 = vld [vmem:[%s3684 + $0x14] sm:$0xf]
  %v3689 = vld [vmem:[%s3684 + $0x18] sm:$0xff]
  %v3690 = vld [vmem:[%s3684 + $0x20] sm:$0xf]
  %v3691 = vld [vmem:[%s3684 + $0x24] sm:$0xff]
  %v3692 = vld [vmem:[%s3684 + $0x2c] sm:$0xf]
  %v3693 = vld [vmem:[%s3684 + $0x30] sm:$0xff]
  %v3694 = vld [vmem:[%s3684 + $0x38] sm:$0xf]
  %v3695 = vld [vmem:[%s3684 + $0x3c] sm:$0xff]
  %v3696 = vld [vmem:[%s3684 + $0x44] sm:$0xf]
  %v3697 = vld [vmem:[%s3684 + $0x48] sm:$0xff]
  %v3698 = vld [vmem:[%s3684 + $0x50] sm:$0xf]
  %v3699 = vld [vmem:[%s3684 + $0x54] sm:$0xff]
  %v3700 = vld [vmem:[%s3684 + $0x5c] sm:$0xf]
  %v3701 = vld [vmem:[%s3684 + $0x60] sm:$0xff]
  %v3702 = vld [vmem:[%s3684 + $0x68] sm:$0xf]
  %v3703 = vld [vmem:[%s3684 + $0x6c] sm:$0xff]
  %v3704 = vld [vmem:[%s3684 + $0x74] sm:$0xf]
  %v3705 = vld [vmem:[%s3684 + $0x78] sm:$0xff]
  %v3706 = vld [vmem:[%s3684 + $0x80] sm:$0xf]
  %v3707 = vld [vmem:[%s3684 + $0x84] sm:$0xff]
  %v3708 = vld [vmem:[%s3684 + $0x8c] sm:$0xf]
  %v3709 = vld [vmem:[%s3684 + $0x90] sm:$0xff]
  %v3710 = vld [vmem:[%s3684 + $0x98] sm:$0xf]
  %v3711 = vld [vmem:[%s3684 + $0x9c] sm:$0xff]
  %v3712 = vld [vmem:[%s3684 + $0xa4] sm:$0xf]
  %v3713 = vld [vmem:[%s3684 + $0xa8] sm:$0xff]
  %v3714 = vld [vmem:[%s3684 + $0xb0] sm:$0xf]
  %v3745 = vunpack.c.l.b16 %v3685
  %v3746 = vunpack.c.h.b16 %v3685
  %v3747 = vunpack.c.l.b16 %v3686
  %v3748 = vunpack.c.l.b16 %v3687
  %v3749 = vunpack.c.h.b16 %v3687
  %v3750 = vunpack.c.l.b16 %v3688
  %v3751 = vunpack.c.l.b16 %v3689
  %v3752 = vunpack.c.h.b16 %v3689
  %v3753 = vunpack.c.l.b16 %v3690
  %v3754 = vunpack.c.l.b16 %v3691
  %v3755 = vunpack.c.h.b16 %v3691
  %v3756 = vunpack.c.l.b16 %v3692
  %v3757 = vunpack.c.l.b16 %v3693
  %v3758 = vunpack.c.h.b16 %v3693
  %v3759 = vunpack.c.l.b16 %v3694
  %v3760 = vunpack.c.l.b16 %v3695
  %v3761 = vunpack.c.h.b16 %v3695
  %v3762 = vunpack.c.l.b16 %v3696
  %v3763 = vunpack.c.l.b16 %v3697
  %v3764 = vunpack.c.h.b16 %v3697
  %v3765 = vunpack.c.l.b16 %v3698
  %v3766 = vunpack.c.l.b16 %v3699
  %v3767 = vunpack.c.h.b16 %v3699
  %v3768 = vunpack.c.l.b16 %v3700
  %v3769 = vunpack.c.l.b16 %v3701
  %v3770 = vunpack.c.h.b16 %v3701
  %v3771 = vunpack.c.l.b16 %v3702
  %v3772 = vunpack.c.l.b16 %v3703
  %v3773 = vunpack.c.h.b16 %v3703
  %v3774 = vunpack.c.l.b16 %v3704
  %v3775 = vunpack.c.l.b16 %v3705
  %v3776 = vunpack.c.h.b16 %v3705
  %v3777 = vunpack.c.l.b16 %v3706
  %v3778 = vunpack.c.l.b16 %v3707
  %v3779 = vunpack.c.h.b16 %v3707
  %v3780 = vunpack.c.l.b16 %v3708
  %v3781 = vunpack.c.l.b16 %v3709
  %v3782 = vunpack.c.h.b16 %v3709
  %v3783 = vunpack.c.l.b16 %v3710
  %v3784 = vunpack.c.l.b16 %v3711
  %v3785 = vunpack.c.h.b16 %v3711
  %v3786 = vunpack.c.l.b16 %v3712
  %v3787 = vunpack.c.l.b16 %v3713
  %v3788 = vunpack.c.h.b16 %v3713
  %v3789 = vunpack.c.l.b16 %v3714
  %v3790 = vpack.c.b16 %v3748, %v3745
  %v3791 = vpack.c.b16 %v3749, %v3746
  %v3792 = vpack.c.b16 %v3750, %v3747
  %v3793 = vpack.c.b16 %v3754, %v3751
  %v3794 = vpack.c.b16 %v3755, %v3752
  %v3795 = vpack.c.b16 %v3756, %v3753
  %v3796 = vpack.c.b16 %v3760, %v3757
  %v3797 = vpack.c.b16 %v3761, %v3758
  %v3798 = vpack.c.b16 %v3762, %v3759
  %v3799 = vpack.c.b16 %v3766, %v3763
  %v3800 = vpack.c.b16 %v3767, %v3764
  %v3801 = vpack.c.b16 %v3768, %v3765
  %v3802 = vpack.c.b16 %v3772, %v3769
  %v3803 = vpack.c.b16 %v3773, %v3770
  %v3804 = vpack.c.b16 %v3774, %v3771
  %v3805 = vpack.c.b16 %v3778, %v3775
  %v3806 = vpack.c.b16 %v3779, %v3776
  %v3807 = vpack.c.b16 %v3780, %v3777
  %v3808 = vpack.c.b16 %v3784, %v3781
  %v3809 = vpack.c.b16 %v3785, %v3782
  %v3810 = vpack.c.b16 %v3786, %v3783
  %v3811 = vpack.c.b16 %v3787, %v3787
  %v3812 = vpack.c.b16 %v3788, %v3788
  %v3813 = vpack.c.b16 %v3789, %v3789
  %v3836 = vsel %vm2015, %v3675, 0
  %v3839 = vsel %vm2015, %v3676, 0
  %v3842 = vsel %vm2015, %v3677, 0
  %v3845 = vsel %vm2015, %v3678, 0
  %v3848 = vsel %vm2015, %v3679, 0
  %v3851 = vsel %vm2015, %v3680, 0
  %v3854 = vsel %vm2015, %v3681, 0
  %v3857 = vsel %vm2015, %v3682, 0
  %v3860 = vsel %vm2015, %v3683, 0
  %v3863 = vsel %vm2043, %v3811, 0
  %v3866 = vsel %vm2043, %v3812, 0
  %v3869 = vsel %vm2043, %v3813, 0
  %3871 = vmatprep.subr.bf16.mxu0 %v3791
  %3872 = vmatpush1.bf16.msra.mxu0 %v3790
  %3873 = vmatprep.subr.bf16.mxu0 %v3794
  %3874 = vmatpush1.bf16.msra.mxu0 %v3793
  %3875 = vmatprep.subr.bf16.mxu0 %v3797
  %3876 = vmatpush1.bf16.msra.mxu0 %v3796
  %3877 = vmatprep.subr.bf16.mxu0 %v3800
  %3878 = vmatpush1.bf16.msra.mxu0 %v3799
  %3879 = vmatprep.subr.bf16.mxu0 %v3803
  %3880 = vmatpush1.bf16.msra.mxu0 %v3802
  %3881 = vmatprep.subr.bf16.mxu0 %v3806
  %3882 = vmatpush1.bf16.msra.mxu0 %v3805
  %3883 = vmatprep.subr.bf16.mxu0 %v3809
  %3884 = vmatpush1.bf16.msra.mxu0 %v3808
  %3885 = vmatprep.subr.bf16.mxu0 %v3866
  %3886 = vmatpush1.bf16.msra.mxu0 %v3863
  %3887 = vmatprep.subr.bf16.mxu0 0
  %3888 = vmatpush1.bf16.msra.mxu0 0
  %3889 = vmatprep.subr.bf16.mxu0 0
  %3890 = vmatpush1.bf16.msra.mxu0 0
  %3891 = vmatprep.subr.bf16.mxu0 0
  %3892 = vmatpush1.bf16.msra.mxu0 0
  %3893 = vmatprep.subr.bf16.mxu0 0
  %3894 = vmatpush1.bf16.msra.mxu0 0
  %3895 = vmatprep.subr.bf16.mxu0 0
  %3896 = vmatpush1.bf16.msra.mxu0 0
  %3897 = vmatprep.subr.bf16.mxu0 0
  %3898 = vmatpush1.bf16.msra.mxu0 0
  %3899 = vmatprep.subr.bf16.mxu0 0
  %3900 = vmatpush1.bf16.msra.mxu0 0
  %3901 = vmatprep.subr.bf16.mxu0 0
  %3902 = vmatpush1.bf16.msra.mxu0 0
  %3903 = vmatprep.mubr.bf16.mxu0 0
  %3904 = vmatmul.mubr.bf16.gmra.mrb[0].mxu0 %v3836
  %v3905 = vpop.f32.mrb[0].mxu0
  %v3906 = vadd.f32 0.0, %v3905
  %v3907 = vpop.f32.mrb[0].mxu0
  %v3908 = vadd.f32 0.0, %v3907
  %v3909 = vpop.f32.mrb[0].mxu0
  %v3910 = vadd.f32 0.0, %v3909
  %v3911 = vpop.f32.mrb[0].mxu0
  %v3912 = vadd.f32 0.0, %v3911
  %3913 = vmatprep.mubr.bf16.mxu0 0
  %3914 = vmatmul.mubr.bf16.gmra.mrb[0].mxu0 %v3839
  %v3915 = vpop.f32.mrb[0].mxu0
  %v3916 = vadd.f32 0.0, %v3915
  %v3917 = vpop.f32.mrb[0].mxu0
  %v3918 = vadd.f32 0.0, %v3917
  %v3919 = vpop.f32.mrb[0].mxu0
  %v3920 = vadd.f32 0.0, %v3919
  %v3921 = vpop.f32.mrb[0].mxu0
  %v3922 = vadd.f32 0.0, %v3921
  %3923 = vmatprep.mubr.bf16.mxu0 0
  %3924 = vmatmul.mubr.bf16.gmra.mrb[0].mxu0 %v3842
  %v3925 = vpop.f32.mrb[0].mxu0
  %v3926 = vadd.f32 0.0, %v3925
  %v3927 = vpop.f32.mrb[0].mxu0
  %v3928 = vadd.f32 0.0, %v3927
  %v3929 = vpop.f32.mrb[0].mxu0
  %v3930 = vadd.f32 0.0, %v3929
  %v3931 = vpop.f32.mrb[0].mxu0
  %v3932 = vadd.f32 0.0, %v3931
  %3933 = vmatprep.mubr.bf16.mxu0 0
  %3934 = vmatmul.mubr.bf16.gmra.mrb[0].mxu0 %v3845
  %v3935 = vpop.f32.mrb[0].mxu0
  %v3936 = vadd.f32 0.0, %v3935
  %v3937 = vpop.f32.mrb[0].mxu0
  %v3938 = vadd.f32 0.0, %v3937
  %v3939 = vpop.f32.mrb[0].mxu0
  %v3940 = vadd.f32 0.0, %v3939
  %v3941 = vpop.f32.mrb[0].mxu0
  %v3942 = vadd.f32 0.0, %v3941
  %3943 = vmatprep.mubr.bf16.mxu0 0
  %3944 = vmatmul.mubr.bf16.gmra.mrb[0].mxu0 %v3848
  %v3945 = vpop.f32.mrb[0].mxu0
  %v3946 = vadd.f32 0.0, %v3945
  %v3947 = vpop.f32.mrb[0].mxu0
  %v3948 = vadd.f32 0.0, %v3947
  %v3949 = vpop.f32.mrb[0].mxu0
  %v3950 = vadd.f32 0.0, %v3949
  %v3951 = vpop.f32.mrb[0].mxu0
  %v3952 = vadd.f32 0.0, %v3951
  %3953 = vmatprep.mubr.bf16.mxu0 0
  %3954 = vmatmul.mubr.bf16.gmra.mrb[0].mxu0 %v3851
  %v3955 = vpop.f32.mrb[0].mxu0
  %v3956 = vadd.f32 0.0, %v3955
  %v3957 = vpop.f32.mrb[0].mxu0
  %v3958 = vadd.f32 0.0, %v3957
  %v3959 = vpop.f32.mrb[0].mxu0
  %v3960 = vadd.f32 0.0, %v3959
  %v3961 = vpop.f32.mrb[0].mxu0
  %v3962 = vadd.f32 0.0, %v3961
  %3963 = vmatprep.mubr.bf16.mxu0 0
  %3964 = vmatmul.mubr.bf16.gmra.mrb[0].mxu0 %v3854
  %v3965 = vpop.f32.mrb[0].mxu0
  %v3966 = vadd.f32 0.0, %v3965
  %v3967 = vpop.f32.mrb[0].mxu0
  %v3968 = vadd.f32 0.0, %v3967
  %v3969 = vpop.f32.mrb[0].mxu0
  %v3970 = vadd.f32 0.0, %v3969
  %v3971 = vpop.f32.mrb[0].mxu0
  %v3972 = vadd.f32 0.0, %v3971
  %3973 = vmatprep.mubr.bf16.mxu0 0
  %3974 = vmatmul.mubr.bf16.gmra.mrb[0].mxu0 %v3857
  %v3975 = vpop.f32.mrb[0].mxu0
  %v3976 = vadd.f32 0.0, %v3975
  %v3977 = vpop.f32.mrb[0].mxu0
  %v3978 = vadd.f32 0.0, %v3977
  %v3979 = vpop.f32.mrb[0].mxu0
  %v3980 = vadd.f32 0.0, %v3979
  %v3981 = vpop.f32.mrb[0].mxu0
  %v3982 = vadd.f32 0.0, %v3981
  %3983 = vmatprep.mubr.bf16.mxu0 0
  %3984 = vmatmul.mubr.bf16.gmra.mrb[0].mxu0 %v3860
  %v3985 = vpop.f32.mrb[0].mxu0
  %v3986 = vadd.f32 0.0, %v3985
  %v3987 = vpop.f32.mrb[0].mxu0
  %v3988 = vadd.f32 0.0, %v3987
  %v3989 = vpop.f32.mrb[0].mxu0
  %v3990 = vadd.f32 0.0, %v3989
  %v3991 = vpop.f32.mrb[0].mxu0
  %v3992 = vadd.f32 0.0, %v3991
  %3993 = vdwg.mxu0
  %3994 = vmatprep.subr.bf16.mxu0 0
  %3995 = vmatpush1.bf16.msra.mxu0 %v3792
  %3996 = vmatprep.subr.bf16.mxu0 0
  %3997 = vmatpush1.bf16.msra.mxu0 %v3795
  %3998 = vmatprep.subr.bf16.mxu0 0
  %3999 = vmatpush1.bf16.msra.mxu0 %v3798
  %4000 = vmatprep.subr.bf16.mxu0 0
  %4001 = vmatpush1.bf16.msra.mxu0 %v3801
  %4002 = vmatprep.subr.bf16.mxu0 0
  %4003 = vmatpush1.bf16.msra.mxu0 %v3804
  %4004 = vmatprep.subr.bf16.mxu0 0
  %4005 = vmatpush1.bf16.msra.mxu0 %v3807
  %4006 = vmatprep.subr.bf16.mxu0 0
  %4007 = vmatpush1.bf16.msra.mxu0 %v3810
  %4008 = vmatprep.subr.bf16.mxu0 0
  %4009 = vmatpush1.bf16.msra.mxu0 %v3869
  %4010 = vmatprep.subr.bf16.mxu0 0
  %4011 = vmatpush1.bf16.msra.mxu0 0
  %4012 = vmatprep.subr.bf16.mxu0 0
  %4013 = vmatpush1.bf16.msra.mxu0 0
  %4014 = vmatprep.subr.bf16.mxu0 0
  %4015 = vmatpush1.bf16.msra.mxu0 0
  %4016 = vmatprep.subr.bf16.mxu0 0
  %4017 = vmatpush1.bf16.msra.mxu0 0
  %4018 = vmatprep.subr.bf16.mxu0 0
  %4019 = vmatpush1.bf16.msra.mxu0 0
  %4020 = vmatprep.subr.bf16.mxu0 0
  %4021 = vmatpush1.bf16.msra.mxu0 0
  %4022 = vmatprep.subr.bf16.mxu0 0
  %4023 = vmatpush1.bf16.msra.mxu0 0
  %4024 = vmatprep.subr.bf16.mxu0 0
  %4025 = vmatpush1.bf16.msra.mxu0 0
  %4026 = vmatprep.mubr.bf16.mxu0 0
  %4027 = vmatmul.mubr.bf16.gmra.mrb[0].mxu0 %v3836
  %v4028 = vpop.f32.mrb[0].mxu0
  %v4029 = vadd.f32 0.0, %v4028
  %v4030 = vpop.f32.mrb[0].mxu0
  %v4031 = vpop.f32.mrb[0].mxu0
  %v4032 = vadd.f32 0.0, %v4031
  %v4033 = vpop.f32.mrb[0].mxu0
  %4034 = vmatprep.mubr.bf16.mxu0 0
  %4035 = vmatmul.mubr.bf16.gmra.mrb[0].mxu0 %v3839
  %v4036 = vpop.f32.mrb[0].mxu0
  %v4037 = vadd.f32 0.0, %v4036
  %v4038 = vpop.f32.mrb[0].mxu0
  %v4039 = vpop.f32.mrb[0].mxu0
  %v4040 = vadd.f32 0.0, %v4039
  %v4041 = vpop.f32.mrb[0].mxu0
  %4042 = vmatprep.mubr.bf16.mxu0 0
  %4043 = vmatmul.mubr.bf16.gmra.mrb[0].mxu0 %v3842
  %v4044 = vpop.f32.mrb[0].mxu0
  %v4045 = vadd.f32 0.0, %v4044
  %v4046 = vpop.f32.mrb[0].mxu0
  %v4047 = vpop.f32.mrb[0].mxu0
  %v4048 = vadd.f32 0.0, %v4047
  %v4049 = vpop.f32.mrb[0].mxu0
  %4050 = vmatprep.mubr.bf16.mxu0 0
  %4051 = vmatmul.mubr.bf16.gmra.mrb[0].mxu0 %v3845
  %v4052 = vpop.f32.mrb[0].mxu0
  %v4053 = vadd.f32 0.0, %v4052
  %v4054 = vpop.f32.mrb[0].mxu0
  %v4055 = vpop.f32.mrb[0].mxu0
  %v4056 = vadd.f32 0.0, %v4055
  %v4057 = vpop.f32.mrb[0].mxu0
  %4058 = vmatprep.mubr.bf16.mxu0 0
  %4059 = vmatmul.mubr.bf16.gmra.mrb[0].mxu0 %v3848
  %v4060 = vpop.f32.mrb[0].mxu0
  %v4061 = vadd.f32 0.0, %v4060
  %v4062 = vpop.f32.mrb[0].mxu0
  %v4063 = vpop.f32.mrb[0].mxu0
  %v4064 = vadd.f32 0.0, %v4063
  %v4065 = vpop.f32.mrb[0].mxu0
  %4066 = vmatprep.mubr.bf16.mxu0 0
  %4067 = vmatmul.mubr.bf16.gmra.mrb[0].mxu0 %v3851
  %v4068 = vpop.f32.mrb[0].mxu0
  %v4069 = vadd.f32 0.0, %v4068
  %v4070 = vpop.f32.mrb[0].mxu0
  %v4071 = vpop.f32.mrb[0].mxu0
  %v4072 = vadd.f32 0.0, %v4071
  %v4073 = vpop.f32.mrb[0].mxu0
  %4074 = vmatprep.mubr.bf16.mxu0 0
  %4075 = vmatmul.mubr.bf16.gmra.mrb[0].mxu0 %v3854
  %v4076 = vpop.f32.mrb[0].mxu0
  %v4077 = vadd.f32 0.0, %v4076
  %v4078 = vpop.f32.mrb[0].mxu0
  %v4079 = vpop.f32.mrb[0].mxu0
  %v4080 = vadd.f32 0.0, %v4079
  %v4081 = vpop.f32.mrb[0].mxu0
  %4082 = vmatprep.mubr.bf16.mxu0 0
  %4083 = vmatmul.mubr.bf16.gmra.mrb[0].mxu0 %v3857
  %v4084 = vpop.f32.mrb[0].mxu0
  %v4085 = vadd.f32 0.0, %v4084
  %v4086 = vpop.f32.mrb[0].mxu0
  %v4087 = vpop.f32.mrb[0].mxu0
  %v4088 = vadd.f32 0.0, %v4087
  %v4089 = vpop.f32.mrb[0].mxu0
  %4090 = vmatprep.mubr.bf16.mxu0 0
  %4091 = vmatmul.mubr.bf16.gmra.mrb[0].mxu0 %v3860
  %v4092 = vpop.f32.mrb[0].mxu0
  %v4093 = vadd.f32 0.0, %v4092
  %v4094 = vpop.f32.mrb[0].mxu0
  %v4095 = vpop.f32.mrb[0].mxu0
  %v4096 = vadd.f32 0.0, %v4095
  %v4097 = vpop.f32.mrb[0].mxu0
  %4098 = vdwg.mxu0
  %v4099 = vadd.f32 %v3603, %v3906
  %v4100 = vadd.f32 %v3604, %v3908
  %v4101 = vadd.f32 %v3605, %v4029
  %v4102 = vadd.f32 %v3606, %v3910
  %v4103 = vadd.f32 %v3607, %v3912
  %v4104 = vadd.f32 %v3608, %v4032
  %v4105 = vadd.f32 %v3609, %v3916
  %v4106 = vadd.f32 %v3610, %v3918
  %v4107 = vadd.f32 %v3611, %v4037
  %v4108 = vadd.f32 %v3612, %v3920
  %v4109 = vadd.f32 %v3613, %v3922
  %v4110 = vadd.f32 %v3614, %v4040
  %v4111 = vadd.f32 %v3615, %v3926
  %v4112 = vadd.f32 %v3616, %v3928
  %v4113 = vadd.f32 %v3617, %v4045
  %v4114 = vadd.f32 %v3618, %v3930
  %v4115 = vadd.f32 %v3619, %v3932
  %v4116 = vadd.f32 %v3620, %v4048
  %v4117 = vadd.f32 %v3621, %v3936
  %v4118 = vadd.f32 %v3622, %v3938
  %v4119 = vadd.f32 %v3623, %v4053
  %v4120 = vadd.f32 %v3624, %v3940
  %v4121 = vadd.f32 %v3625, %v3942
  %v4122 = vadd.f32 %v3626, %v4056
  %v4123 = vadd.f32 %v3627, %v3946
  %v4124 = vadd.f32 %v3628, %v3948
  %v4125 = vadd.f32 %v3629, %v4061
  %v4126 = vadd.f32 %v3630, %v3950
  %v4127 = vadd.f32 %v3631, %v3952
  %v4128 = vadd.f32 %v3632, %v4064
  %v4129 = vadd.f32 %v3633, %v3956
  %v4130 = vadd.f32 %v3634, %v3958
  %v4131 = vadd.f32 %v3635, %v4069
  %v4132 = vadd.f32 %v3636, %v3960
  %v4133 = vadd.f32 %v3637, %v3962
  %v4134 = vadd.f32 %v3638, %v4072
  %v4135 = vadd.f32 %v3639, %v3966
  %v4136 = vadd.f32 %v3640, %v3968
  %v4137 = vadd.f32 %v3641, %v4077
  %v4138 = vadd.f32 %v3642, %v3970
  %v4139 = vadd.f32 %v3643, %v3972
  %v4140 = vadd.f32 %v3644, %v4080
  %v4141 = vadd.f32 %v3645, %v3976
  %v4142 = vadd.f32 %v3646, %v3978
  %v4143 = vadd.f32 %v3647, %v4085
  %v4144 = vadd.f32 %v3648, %v3980
  %v4145 = vadd.f32 %v3649, %v3982
  %v4146 = vadd.f32 %v3650, %v4088
  %v4147 = vadd.f32 %v3651, %v3986
  %v4148 = vadd.f32 %v3652, %v3988
  %v4149 = vadd.f32 %v3653, %v4093
  %v4150 = vadd.f32 %v3654, %v3990
  %v4151 = vadd.f32 %v3655, %v3992
  %v4152 = vadd.f32 %v3656, %v4096
  %v4153 = vadd.f32 %v4099, %v4102
  %v4154 = vadd.f32 %v4153, %v4105
  %v4155 = vadd.f32 %v4154, %v4108
  %v4156 = vadd.f32 %v4155, %v4111
  %v4157 = vadd.f32 %v4156, %v4114
  %v4158 = vadd.f32 %v4157, %v4117
  %v4159 = vadd.f32 %v4158, %v4120
  %v4160 = vadd.f32 %v4159, %v4123
  %v4161 = vadd.f32 %v4160, %v4126
  %v4162 = vadd.f32 %v4161, %v4129
  %v4163 = vadd.f32 %v4162, %v4132
  %v4164 = vadd.f32 %v4163, %v4135
  %v4165 = vadd.f32 %v4164, %v4138
  %v4166 = vadd.f32 %v4165, %v4141
  %v4167 = vadd.f32 %v4166, %v4144
  %v4168 = vadd.f32 %v4167, %v4147
  %v4169 = vadd.f32 %v4168, %v4150
  %v4170 = vrot.slane %v4169, 4
  %v4171 = vadd.f32 %v4169, %v4170
  %v4172 = vrot.slane %v4171, 2
  %v4173 = vadd.f32 %v4171, %v4172
  %v4174 = vrot.slane %v4173, 1
  %v4175 = vadd.f32 %v4173, %v4174
  %v4176 = vadd.f32 %v4100, %v4103
  %v4177 = vadd.f32 %v4176, %v4106
  %v4178 = vadd.f32 %v4177, %v4109
  %v4179 = vadd.f32 %v4178, %v4112
  %v4180 = vadd.f32 %v4179, %v4115
  %v4181 = vadd.f32 %v4180, %v4118
  %v4182 = vadd.f32 %v4181, %v4121
  %v4183 = vadd.f32 %v4182, %v4124
  %v4184 = vadd.f32 %v4183, %v4127
  %v4185 = vadd.f32 %v4184, %v4130
  %v4186 = vadd.f32 %v4185, %v4133
  %v4187 = vadd.f32 %v4186, %v4136
  %v4188 = vadd.f32 %v4187, %v4139
  %v4189 = vadd.f32 %v4188, %v4142
  %v4190 = vadd.f32 %v4189, %v4145
  %v4191 = vadd.f32 %v4190, %v4148
  %v4192 = vadd.f32 %v4191, %v4151
  %v4193 = vrot.slane %v4192, 4
  %v4194 = vadd.f32 %v4192, %v4193
  %v4195 = vrot.slane %v4194, 2
  %v4196 = vadd.f32 %v4194, %v4195
  %v4197 = vrot.slane %v4196, 1
  %v4198 = vadd.f32 %v4196, %v4197
  %vm4199 = vcmask 261120
  %v4200 = vsel %vm4199, %v4101, 0.0
  %v4201 = vsel %vm4199, %v4104, 0.0
  %v4202 = vadd.f32 %v4200, %v4201
  %v4203 = vsel %vm4199, %v4107, 0.0
  %v4204 = vadd.f32 %v4202, %v4203
  %v4205 = vsel %vm4199, %v4110, 0.0
  %v4206 = vadd.f32 %v4204, %v4205
  %v4207 = vsel %vm4199, %v4113, 0.0
  %v4208 = vadd.f32 %v4206, %v4207
  %v4209 = vsel %vm4199, %v4116, 0.0
  %v4210 = vadd.f32 %v4208, %v4209
  %v4211 = vsel %vm4199, %v4119, 0.0
  %v4212 = vadd.f32 %v4210, %v4211
  %v4213 = vsel %vm4199, %v4122, 0.0
  %v4214 = vadd.f32 %v4212, %v4213
  %v4215 = vsel %vm4199, %v4125, 0.0
  %v4216 = vadd.f32 %v4214, %v4215
  %v4217 = vsel %vm4199, %v4128, 0.0
  %v4218 = vadd.f32 %v4216, %v4217
  %v4219 = vsel %vm4199, %v4131, 0.0
  %v4220 = vadd.f32 %v4218, %v4219
  %v4221 = vsel %vm4199, %v4134, 0.0
  %v4222 = vadd.f32 %v4220, %v4221
  %v4223 = vsel %vm4199, %v4137, 0.0
  %v4224 = vadd.f32 %v4222, %v4223
  %v4225 = vsel %vm4199, %v4140, 0.0
  %v4226 = vadd.f32 %v4224, %v4225
  %v4227 = vsel %vm4199, %v4143, 0.0
  %v4228 = vadd.f32 %v4226, %v4227
  %v4229 = vsel %vm4199, %v4146, 0.0
  %v4230 = vadd.f32 %v4228, %v4229
  %v4231 = vsel %vm4199, %v4149, 0.0
  %v4232 = vadd.f32 %v4230, %v4231
  %v4233 = vsel %vm4199, %v4152, 0.0
  %v4234 = vadd.f32 %v4232, %v4233
  %v4235 = vrot.slane %v4234, 4
  %v4236 = vadd.f32 %v4234, %v4235
  %v4237 = vrot.slane %v4236, 2
  %v4238 = vadd.f32 %v4236, %v4237
  %v4239 = vrot.slane %v4238, 1
  %v4240 = vadd.f32 %v4238, %v4239
  %v4241 = vmul.f32 %v4099, %v4099
  %v4242 = vmul.f32 %v4100, %v4100
  %v4243 = vmul.f32 %v4101, %v4101
  %v4244 = vmul.f32 %v4102, %v4102
  %v4245 = vmul.f32 %v4103, %v4103
  %v4246 = vmul.f32 %v4104, %v4104
  %v4247 = vmul.f32 %v4105, %v4105
  %v4248 = vmul.f32 %v4106, %v4106
  %v4249 = vmul.f32 %v4107, %v4107
  %v4250 = vmul.f32 %v4108, %v4108
  %v4251 = vmul.f32 %v4109, %v4109
  %v4252 = vmul.f32 %v4110, %v4110
  %v4253 = vmul.f32 %v4111, %v4111
  %v4254 = vmul.f32 %v4112, %v4112
  %v4255 = vmul.f32 %v4113, %v4113
  %v4256 = vmul.f32 %v4114, %v4114
  %v4257 = vmul.f32 %v4115, %v4115
  %v4258 = vmul.f32 %v4116, %v4116
  %v4259 = vmul.f32 %v4117, %v4117
  %v4260 = vmul.f32 %v4118, %v4118
  %v4261 = vmul.f32 %v4119, %v4119
  %v4262 = vmul.f32 %v4120, %v4120
  %v4263 = vmul.f32 %v4121, %v4121
  %v4264 = vmul.f32 %v4122, %v4122
  %v4265 = vmul.f32 %v4123, %v4123
  %v4266 = vmul.f32 %v4124, %v4124
  %v4267 = vmul.f32 %v4125, %v4125
  %v4268 = vmul.f32 %v4126, %v4126
  %v4269 = vmul.f32 %v4127, %v4127
  %v4270 = vmul.f32 %v4128, %v4128
  %v4271 = vmul.f32 %v4129, %v4129
  %v4272 = vmul.f32 %v4130, %v4130
  %v4273 = vmul.f32 %v4131, %v4131
  %v4274 = vmul.f32 %v4132, %v4132
  %v4275 = vmul.f32 %v4133, %v4133
  %v4276 = vmul.f32 %v4134, %v4134
  %v4277 = vmul.f32 %v4135, %v4135
  %v4278 = vmul.f32 %v4136, %v4136
  %v4279 = vmul.f32 %v4137, %v4137
  %v4280 = vmul.f32 %v4138, %v4138
  %v4281 = vmul.f32 %v4139, %v4139
  %v4282 = vmul.f32 %v4140, %v4140
  %v4283 = vmul.f32 %v4141, %v4141
  %v4284 = vmul.f32 %v4142, %v4142
  %v4285 = vmul.f32 %v4143, %v4143
  %v4286 = vmul.f32 %v4144, %v4144
  %v4287 = vmul.f32 %v4145, %v4145
  %v4288 = vmul.f32 %v4146, %v4146
  %v4289 = vmul.f32 %v4147, %v4147
  %v4290 = vmul.f32 %v4148, %v4148
  %v4291 = vmul.f32 %v4149, %v4149
  %v4292 = vmul.f32 %v4150, %v4150
  %v4293 = vmul.f32 %v4151, %v4151
  %v4294 = vmul.f32 %v4152, %v4152
  %v4295 = vadd.f32 %v4241, %v4244
  %v4296 = vadd.f32 %v4295, %v4247
  %v4297 = vadd.f32 %v4296, %v4250
  %v4298 = vadd.f32 %v4297, %v4253
  %v4299 = vadd.f32 %v4298, %v4256
  %v4300 = vadd.f32 %v4299, %v4259
  %v4301 = vadd.f32 %v4300, %v4262
  %v4302 = vadd.f32 %v4301, %v4265
  %v4303 = vadd.f32 %v4302, %v4268
  %v4304 = vadd.f32 %v4303, %v4271
  %v4305 = vadd.f32 %v4304, %v4274
  %v4306 = vadd.f32 %v4305, %v4277
  %v4307 = vadd.f32 %v4306, %v4280
  %v4308 = vadd.f32 %v4307, %v4283
  %v4309 = vadd.f32 %v4308, %v4286
  %v4310 = vadd.f32 %v4309, %v4289
  %v4311 = vadd.f32 %v4310, %v4292
  %v4312 = vrot.slane %v4311, 4
  %v4313 = vadd.f32 %v4311, %v4312
  %v4314 = vrot.slane %v4313, 2
  %v4315 = vadd.f32 %v4313, %v4314
  %v4316 = vrot.slane %v4315, 1
  %v4317 = vadd.f32 %v4315, %v4316
  %v4318 = vadd.f32 %v4242, %v4245
  %v4319 = vadd.f32 %v4318, %v4248
  %v4320 = vadd.f32 %v4319, %v4251
  %v4321 = vadd.f32 %v4320, %v4254
  %v4322 = vadd.f32 %v4321, %v4257
  %v4323 = vadd.f32 %v4322, %v4260
  %v4324 = vadd.f32 %v4323, %v4263
  %v4325 = vadd.f32 %v4324, %v4266
  %v4326 = vadd.f32 %v4325, %v4269
  %v4327 = vadd.f32 %v4326, %v4272
  %v4328 = vadd.f32 %v4327, %v4275
  %v4329 = vadd.f32 %v4328, %v4278
  %v4330 = vadd.f32 %v4329, %v4281
  %v4331 = vadd.f32 %v4330, %v4284
  %v4332 = vadd.f32 %v4331, %v4287
  %v4333 = vadd.f32 %v4332, %v4290
  %v4334 = vadd.f32 %v4333, %v4293
  %v4335 = vrot.slane %v4334, 4
  %v4336 = vadd.f32 %v4334, %v4335
  %v4337 = vrot.slane %v4336, 2
  %v4338 = vadd.f32 %v4336, %v4337
  %v4339 = vrot.slane %v4338, 1
  %v4340 = vadd.f32 %v4338, %v4339
  %v4341 = vsel %vm4199, %v4243, 0.0
  %v4342 = vsel %vm4199, %v4246, 0.0
  %v4343 = vadd.f32 %v4341, %v4342
  %v4344 = vsel %vm4199, %v4249, 0.0
  %v4345 = vadd.f32 %v4343, %v4344
  %v4346 = vsel %vm4199, %v4252, 0.0
  %v4347 = vadd.f32 %v4345, %v4346
  %v4348 = vsel %vm4199, %v4255, 0.0
  %v4349 = vadd.f32 %v4347, %v4348
  %v4350 = vsel %vm4199, %v4258, 0.0
  %v4351 = vadd.f32 %v4349, %v4350
  %v4352 = vsel %vm4199, %v4261, 0.0
  %v4353 = vadd.f32 %v4351, %v4352
  %v4354 = vsel %vm4199, %v4264, 0.0
  %v4355 = vadd.f32 %v4353, %v4354
  %v4356 = vsel %vm4199, %v4267, 0.0
  %v4357 = vadd.f32 %v4355, %v4356
  %v4358 = vsel %vm4199, %v4270, 0.0
  %v4359 = vadd.f32 %v4357, %v4358
  %v4360 = vsel %vm4199, %v4273, 0.0
  %v4361 = vadd.f32 %v4359, %v4360
  %v4362 = vsel %vm4199, %v4276, 0.0
  %v4363 = vadd.f32 %v4361, %v4362
  %v4364 = vsel %vm4199, %v4279, 0.0
  %v4365 = vadd.f32 %v4363, %v4364
  %v4366 = vsel %vm4199, %v4282, 0.0
  %v4367 = vadd.f32 %v4365, %v4366
  %v4368 = vsel %vm4199, %v4285, 0.0
  %v4369 = vadd.f32 %v4367, %v4368
  %v4370 = vsel %vm4199, %v4288, 0.0
  %v4371 = vadd.f32 %v4369, %v4370
  %v4372 = vsel %vm4199, %v4291, 0.0
  %v4373 = vadd.f32 %v4371, %v4372
  %v4374 = vsel %vm4199, %v4294, 0.0
  %v4375 = vadd.f32 %v4373, %v4374
  %v4376 = vrot.slane %v4375, 4
  %v4377 = vadd.f32 %v4375, %v4376
  %v4378 = vrot.slane %v4377, 2
  %v4379 = vadd.f32 %v4377, %v4378
  %v4380 = vrot.slane %v4379, 1
  %v4381 = vadd.f32 %v4379, %v4380
  %v4382 = vld [vmem:[%s4] sm:$0xff]
  %v4383 = vld [vmem:[%s4 + $0x8] sm:$0xff]
  %v4384 = vld [vmem:[%s4 + $0x10] sm:$0xff]
  %v4385 = vld [vmem:[%s4 + $0x18] sm:$0xff]
  %v4386 = vld [vmem:[%s4 + $0x20] sm:$0xff]
  %v4387 = vld [vmem:[%s4 + $0x28] sm:$0xff]
  %v4388 = vld [vmem:[%s4 + $0x30] sm:$0xff]
  %v4389 = vld [vmem:[%s4 + $0x38] sm:$0xff]
  %v4390 = vld [vmem:[%s4 + $0x40] sm:$0xff]
  %v4391 = vld [vmem:[%s4 + $0x48] sm:$0xff]
  %v4392 = vld [vmem:[%s4 + $0x50] sm:$0xff]
  %v4393 = vld [vmem:[%s4 + $0x58] sm:$0xff]
  %v4394 = vld [vmem:[%s4 + $0x60] sm:$0xff]
  %v4395 = vld [vmem:[%s4 + $0x68] sm:$0xff]
  %v4396 = vld [vmem:[%s4 + $0x70] sm:$0xff]
  %v4397 = vld [vmem:[%s4 + $0x78] sm:$0xff]
  %v4398 = vld [vmem:[%s4 + $0x80] sm:$0xff]
  %v4399 = vld [vmem:[%s4 + $0x88] sm:$0xff]
  %v4400 = vld [vmem:[%s4 + $0x90] sm:$0xff]
  %v4401 = vld [vmem:[%s4 + $0x98] sm:$0xff]
  %v4402 = vld [vmem:[%s4 + $0xa0] sm:$0xff]
  %v4403 = vld [vmem:[%s4 + $0xa8] sm:$0xff]
  %v4404 = vld [vmem:[%s4 + $0xb0] sm:$0xff]
  %v4405 = vld [vmem:[%s4 + $0xb8] sm:$0xff]
  %v4406 = vld [vmem:[%s4 + $0xc0] sm:$0xff]
  %v4407 = vld [vmem:[%s4 + $0xc8] sm:$0xff]
  %v4408 = vld [vmem:[%s4 + $0xd0] sm:$0xff]
  %v4409 = vld [vmem:[%s4 + $0xd8] sm:$0xff]
  %v4410 = vld [vmem:[%s4 + $0xe0] sm:$0xff]
  %v4411 = vld [vmem:[%s4 + $0xe8] sm:$0xff]
  %v4412 = vld [vmem:[%s4 + $0xf0] sm:$0xff]
  %v4413 = vld [vmem:[%s4 + $0xf8] sm:$0xff]
  %v4414 = vld [vmem:[%s4 + $0x100] sm:$0xff]
  %v4415 = vld [vmem:[%s4 + $0x108] sm:$0xff]
  %v4416 = vld [vmem:[%s4 + $0x110] sm:$0xff]
  %v4417 = vld [vmem:[%s4 + $0x118] sm:$0xff]
  %v4419 = vsel %vm4199, %v4240, 0
  %4421 = vmatprep.subr.mxu0 0.0
  %4422 = vmatpush1.msra.mxu0 %v4382
  %4423 = vmatprep.subr.mxu0 0.0
  %4424 = vmatpush1.msra.mxu0 %v4383
  %4425 = vmatprep.subr.mxu0 0.0
  %4426 = vmatpush1.msra.mxu0 %v4384
  %4427 = vmatprep.subr.mxu0 0.0
  %4428 = vmatpush1.msra.mxu0 %v4385
  %4429 = vmatprep.subr.mxu0 0.0
  %4430 = vmatpush1.msra.mxu0 %v4386
  %4431 = vmatprep.subr.mxu0 0.0
  %4432 = vmatpush1.msra.mxu0 %v4387
  %4433 = vmatprep.subr.mxu0 0.0
  %4434 = vmatpush1.msra.mxu0 %v4388
  %4435 = vmatprep.subr.mxu0 0.0
  %4436 = vmatpush1.msra.mxu0 %v4389
  %4437 = vmatprep.subr.mxu0 0.0
  %4438 = vmatpush1.msra.mxu0 %v4390
  %4439 = vmatprep.subr.mxu0 0.0
  %4440 = vmatpush1.msra.mxu0 %v4391
  %4441 = vmatprep.subr.mxu0 0.0
  %4442 = vmatpush1.msra.mxu0 %v4392
  %4443 = vmatprep.subr.mxu0 0.0
  %4444 = vmatpush1.msra.mxu0 %v4393
  %4445 = vmatprep.subr.mxu0 0.0
  %4446 = vmatpush1.msra.mxu0 %v4394
  %4447 = vmatprep.subr.mxu0 0.0
  %4448 = vmatpush1.msra.mxu0 %v4395
  %4449 = vmatprep.subr.mxu0 0.0
  %4450 = vmatpush1.msra.mxu0 %v4396
  %4451 = vmatprep.subr.mxu0 0.0
  %4452 = vmatpush1.msra.mxu0 %v4397
  %4453 = vmatprep.subr.mxu0 0.0
  %4454 = vmatpush1.msra.mxu0 %v4398
  %4455 = vmatprep.subr.mxu0 0.0
  %4456 = vmatpush1.msra.mxu0 %v4399
  %4457 = vmatprep.subr.mxu0 0.0
  %4458 = vmatpush1.msra.mxu0 %v4400
  %4459 = vmatprep.subr.mxu0 0.0
  %4460 = vmatpush1.msra.mxu0 %v4401
  %4461 = vmatprep.subr.mxu0 0.0
  %4462 = vmatpush1.msra.mxu0 %v4402
  %4463 = vmatprep.subr.mxu0 0.0
  %4464 = vmatpush1.msra.mxu0 %v4403
  %4465 = vmatprep.subr.mxu0 0.0
  %4466 = vmatpush1.msra.mxu0 %v4404
  %4467 = vmatprep.subr.mxu0 0.0
  %4468 = vmatpush1.msra.mxu0 %v4405
  %4469 = vmatprep.subr.mxu0 0.0
  %4470 = vmatpush1.msra.mxu0 %v4406
  %4471 = vmatprep.subr.mxu0 0.0
  %4472 = vmatpush1.msra.mxu0 %v4407
  %4473 = vmatprep.subr.mxu0 0.0
  %4474 = vmatpush1.msra.mxu0 %v4408
  %4475 = vmatprep.subr.mxu0 0.0
  %4476 = vmatpush1.msra.mxu0 %v4409
  %4477 = vmatprep.subr.mxu0 0.0
  %4478 = vmatpush1.msra.mxu0 %v4410
  %4479 = vmatprep.subr.mxu0 0.0
  %4480 = vmatpush1.msra.mxu0 %v4411
  %4481 = vmatprep.subr.mxu0 0.0
  %4482 = vmatpush1.msra.mxu0 %v4412
  %4483 = vmatprep.subr.mxu0 0.0
  %4484 = vmatpush1.msra.mxu0 %v4413
  %4485 = vmatprep.mubr.f32.mxu0 %v4198
  %4486 = vmatmul.mubr.f32.gmra.mrb[0].mxu0 %v4175
  %v4487 = vpop.f32.mrb[0].mxu0
  %v4488 = vadd.f32 0.0, %v4487
  %v4489 = vpop.f32.mrb[0].mxu0
  %4490 = vdwg.mxu0
  %4491 = vmatprep.subr.mxu0 0.0
  %4492 = vmatpush1.msra.mxu0 %v4414
  %4493 = vmatprep.subr.mxu0 0.0
  %4494 = vmatpush1.msra.mxu0 %v4415
  %4495 = vmatprep.subr.mxu0 0.0
  %4496 = vmatpush1.msra.mxu0 %v4416
  %4497 = vmatprep.subr.mxu0 0.0
  %4498 = vmatpush1.msra.mxu0 %v4417
  %4499 = vmatprep.subr.mxu0 0.0
  %4500 = vmatpush1.msra.mxu0 0.0
  %4501 = vmatprep.subr.mxu0 0.0
  %4502 = vmatpush1.msra.mxu0 0.0
  %4503 = vmatprep.subr.mxu0 0.0
  %4504 = vmatpush1.msra.mxu0 0.0
  %4505 = vmatprep.subr.mxu0 0.0
  %4506 = vmatpush1.msra.mxu0 0.0
  %4507 = vmatprep.subr.mxu0 0.0
  %4508 = vmatpush1.msra.mxu0 0.0
  %4509 = vmatprep.subr.mxu0 0.0
  %4510 = vmatpush1.msra.mxu0 0.0
  %4511 = vmatprep.subr.mxu0 0.0
  %4512 = vmatpush1.msra.mxu0 0.0
  %4513 = vmatprep.subr.mxu0 0.0
  %4514 = vmatpush1.msra.mxu0 0.0
  %4515 = vmatprep.subr.mxu0 0.0
  %4516 = vmatpush1.msra.mxu0 0.0
  %4517 = vmatprep.subr.mxu0 0.0
  %4518 = vmatpush1.msra.mxu0 0.0
  %4519 = vmatprep.subr.mxu0 0.0
  %4520 = vmatpush1.msra.mxu0 0.0
  %4521 = vmatprep.subr.mxu0 0.0
  %4522 = vmatpush1.msra.mxu0 0.0
  %4523 = vmatprep.subr.mxu0 0.0
  %4524 = vmatpush1.msra.mxu0 0.0
  %4525 = vmatprep.subr.mxu0 0.0
  %4526 = vmatpush1.msra.mxu0 0.0
  %4527 = vmatprep.subr.mxu0 0.0
  %4528 = vmatpush1.msra.mxu0 0.0
  %4529 = vmatprep.subr.mxu0 0.0
  %4530 = vmatpush1.msra.mxu0 0.0
  %4531 = vmatprep.subr.mxu0 0.0
  %4532 = vmatpush1.msra.mxu0 0.0
  %4533 = vmatprep.subr.mxu0 0.0
  %4534 = vmatpush1.msra.mxu0 0.0
  %4535 = vmatprep.subr.mxu0 0.0
  %4536 = vmatpush1.msra.mxu0 0.0
  %4537 = vmatprep.subr.mxu0 0.0
  %4538 = vmatpush1.msra.mxu0 0.0
  %4539 = vmatprep.subr.mxu0 0.0
  %4540 = vmatpush1.msra.mxu0 0.0
  %4541 = vmatprep.subr.mxu0 0.0
  %4542 = vmatpush1.msra.mxu0 0.0
  %4543 = vmatprep.subr.mxu0 0.0
  %4544 = vmatpush1.msra.mxu0 0.0
  %4545 = vmatprep.subr.mxu0 0.0
  %4546 = vmatpush1.msra.mxu0 0.0
  %4547 = vmatprep.subr.mxu0 0.0
  %4548 = vmatpush1.msra.mxu0 0.0
  %4549 = vmatprep.subr.mxu0 0.0
  %4550 = vmatpush1.msra.mxu0 0.0
  %4551 = vmatprep.subr.mxu0 0.0
  %4552 = vmatpush1.msra.mxu0 0.0
  %4553 = vmatprep.subr.mxu0 0.0
  %4554 = vmatpush1.msra.mxu0 0.0
  %4555 = vmatprep.mubr.f32.mxu0 0.0
  %4556 = vmatmul.mubr.f32.gmra.mrb[0].mxu0 %v4419
  %v4557 = vpop.f32.mrb[0].mxu0
  %v4558 = vadd.f32 %v4488, %v4557
  %v4559 = vpop.f32.mrb[0].mxu0
  %4560 = vdwg.mxu0
  %v4561 = vrcp.pop 648.0
  %v4562 = vmul.f32 %v4558, %v4561
  %v4564 = vsel %vm4199, %v4381, 0
  %4566 = vmatprep.subr.mxu0 0.0
  %4567 = vmatpush1.msra.mxu0 %v4382
  %4568 = vmatprep.subr.mxu0 0.0
  %4569 = vmatpush1.msra.mxu0 %v4383
  %4570 = vmatprep.subr.mxu0 0.0
  %4571 = vmatpush1.msra.mxu0 %v4384
  %4572 = vmatprep.subr.mxu0 0.0
  %4573 = vmatpush1.msra.mxu0 %v4385
  %4574 = vmatprep.subr.mxu0 0.0
  %4575 = vmatpush1.msra.mxu0 %v4386
  %4576 = vmatprep.subr.mxu0 0.0
  %4577 = vmatpush1.msra.mxu0 %v4387
  %4578 = vmatprep.subr.mxu0 0.0
  %4579 = vmatpush1.msra.mxu0 %v4388
  %4580 = vmatprep.subr.mxu0 0.0
  %4581 = vmatpush1.msra.mxu0 %v4389
  %4582 = vmatprep.subr.mxu0 0.0
  %4583 = vmatpush1.msra.mxu0 %v4390
  %4584 = vmatprep.subr.mxu0 0.0
  %4585 = vmatpush1.msra.mxu0 %v4391
  %4586 = vmatprep.subr.mxu0 0.0
  %4587 = vmatpush1.msra.mxu0 %v4392
  %4588 = vmatprep.subr.mxu0 0.0
  %4589 = vmatpush1.msra.mxu0 %v4393
  %4590 = vmatprep.subr.mxu0 0.0
  %4591 = vmatpush1.msra.mxu0 %v4394
  %4592 = vmatprep.subr.mxu0 0.0
  %4593 = vmatpush1.msra.mxu0 %v4395
  %4594 = vmatprep.subr.mxu0 0.0
  %4595 = vmatpush1.msra.mxu0 %v4396
  %4596 = vmatprep.subr.mxu0 0.0
  %4597 = vmatpush1.msra.mxu0 %v4397
  %4598 = vmatprep.subr.mxu0 0.0
  %4599 = vmatpush1.msra.mxu0 %v4398
  %4600 = vmatprep.subr.mxu0 0.0
  %4601 = vmatpush1.msra.mxu0 %v4399
  %4602 = vmatprep.subr.mxu0 0.0
  %4603 = vmatpush1.msra.mxu0 %v4400
  %4604 = vmatprep.subr.mxu0 0.0
  %4605 = vmatpush1.msra.mxu0 %v4401
  %4606 = vmatprep.subr.mxu0 0.0
  %4607 = vmatpush1.msra.mxu0 %v4402
  %4608 = vmatprep.subr.mxu0 0.0
  %4609 = vmatpush1.msra.mxu0 %v4403
  %4610 = vmatprep.subr.mxu0 0.0
  %4611 = vmatpush1.msra.mxu0 %v4404
  %4612 = vmatprep.subr.mxu0 0.0
  %4613 = vmatpush1.msra.mxu0 %v4405
  %4614 = vmatprep.subr.mxu0 0.0
  %4615 = vmatpush1.msra.mxu0 %v4406
  %4616 = vmatprep.subr.mxu0 0.0
  %4617 = vmatpush1.msra.mxu0 %v4407
  %4618 = vmatprep.subr.mxu0 0.0
  %4619 = vmatpush1.msra.mxu0 %v4408
  %4620 = vmatprep.subr.mxu0 0.0
  %4621 = vmatpush1.msra.mxu0 %v4409
  %4622 = vmatprep.subr.mxu0 0.0
  %4623 = vmatpush1.msra.mxu0 %v4410
  %4624 = vmatprep.subr.mxu0 0.0
  %4625 = vmatpush1.msra.mxu0 %v4411
  %4626 = vmatprep.subr.mxu0 0.0
  %4627 = vmatpush1.msra.mxu0 %v4412
  %4628 = vmatprep.subr.mxu0 0.0
  %4629 = vmatpush1.msra.mxu0 %v4413
  %4630 = vmatprep.mubr.f32.mxu0 %v4340
  %4631 = vmatmul.mubr.f32.gmra.mrb[0].mxu0 %v4317
  %v4632 = vpop.f32.mrb[0].mxu0
  %v4633 = vadd.f32 0.0, %v4632
  %v4634 = vpop.f32.mrb[0].mxu0
  %4635 = vdwg.mxu0
  %4636 = vmatprep.subr.mxu0 0.0
  %4637 = vmatpush1.msra.mxu0 %v4414
  %4638 = vmatprep.subr.mxu0 0.0
  %4639 = vmatpush1.msra.mxu0 %v4415
  %4640 = vmatprep.subr.mxu0 0.0
  %4641 = vmatpush1.msra.mxu0 %v4416
  %4642 = vmatprep.subr.mxu0 0.0
  %4643 = vmatpush1.msra.mxu0 %v4417
  %4644 = vmatprep.subr.mxu0 0.0
  %4645 = vmatpush1.msra.mxu0 0.0
  %4646 = vmatprep.subr.mxu0 0.0
  %4647 = vmatpush1.msra.mxu0 0.0
  %4648 = vmatprep.subr.mxu0 0.0
  %4649 = vmatpush1.msra.mxu0 0.0
  %4650 = vmatprep.subr.mxu0 0.0
  %4651 = vmatpush1.msra.mxu0 0.0
  %4652 = vmatprep.subr.mxu0 0.0
  %4653 = vmatpush1.msra.mxu0 0.0
  %4654 = vmatprep.subr.mxu0 0.0
  %4655 = vmatpush1.msra.mxu0 0.0
  %4656 = vmatprep.subr.mxu0 0.0
  %4657 = vmatpush1.msra.mxu0 0.0
  %4658 = vmatprep.subr.mxu0 0.0
  %4659 = vmatpush1.msra.mxu0 0.0
  %4660 = vmatprep.subr.mxu0 0.0
  %4661 = vmatpush1.msra.mxu0 0.0
  %4662 = vmatprep.subr.mxu0 0.0
  %4663 = vmatpush1.msra.mxu0 0.0
  %4664 = vmatprep.subr.mxu0 0.0
  %4665 = vmatpush1.msra.mxu0 0.0
  %4666 = vmatprep.subr.mxu0 0.0
  %4667 = vmatpush1.msra.mxu0 0.0
  %4668 = vmatprep.subr.mxu0 0.0
  %4669 = vmatpush1.msra.mxu0 0.0
  %4670 = vmatprep.subr.mxu0 0.0
  %4671 = vmatpush1.msra.mxu0 0.0
  %4672 = vmatprep.subr.mxu0 0.0
  %4673 = vmatpush1.msra.mxu0 0.0
  %4674 = vmatprep.subr.mxu0 0.0
  %4675 = vmatpush1.msra.mxu0 0.0
  %4676 = vmatprep.subr.mxu0 0.0
  %4677 = vmatpush1.msra.mxu0 0.0
  %4678 = vmatprep.subr.mxu0 0.0
  %4679 = vmatpush1.msra.mxu0 0.0
  %4680 = vmatprep.subr.mxu0 0.0
  %4681 = vmatpush1.msra.mxu0 0.0
  %4682 = vmatprep.subr.mxu0 0.0
  %4683 = vmatpush1.msra.mxu0 0.0
  %4684 = vmatprep.subr.mxu0 0.0
  %4685 = vmatpush1.msra.mxu0 0.0
  %4686 = vmatprep.subr.mxu0 0.0
  %4687 = vmatpush1.msra.mxu0 0.0
  %4688 = vmatprep.subr.mxu0 0.0
  %4689 = vmatpush1.msra.mxu0 0.0
  %4690 = vmatprep.subr.mxu0 0.0
  %4691 = vmatpush1.msra.mxu0 0.0
  %4692 = vmatprep.subr.mxu0 0.0
  %4693 = vmatpush1.msra.mxu0 0.0
  %4694 = vmatprep.subr.mxu0 0.0
  %4695 = vmatpush1.msra.mxu0 0.0
  %4696 = vmatprep.subr.mxu0 0.0
  %4697 = vmatpush1.msra.mxu0 0.0
  %4698 = vmatprep.subr.mxu0 0.0
  %4699 = vmatpush1.msra.mxu0 0.0
  %4700 = vmatprep.mubr.f32.mxu0 0.0
  %4701 = vmatmul.mubr.f32.gmra.mrb[0].mxu0 %v4564
  %v4702 = vpop.f32.mrb[0].mxu0
  %v4703 = vadd.f32 %v4633, %v4702
  %v4704 = vpop.f32.mrb[0].mxu0
  %4705 = vdwg.mxu0
  %v4706 = vmul.f32 %v4703, %v4561
  %v4707 = vmul.f32 %v4562, %v4562
  %v4708 = vsub.f32 %v4706, %v4707
  %v4709 = vmax.f32 %v4708, 0.0
  %v4710 = vld [vmem:[%s2] sm:$0x1]
  %v4711 = vadd.f32 %v4709, 1e-05
  %v4712 = vrsqrt.pop %v4711
  %v4713 = vmul.f32 %v4710, %v4712
  %v4714 = vld [vmem:[%s3] sm:$0x1]
  %v4715 = vmul.f32 %v4562, %v4713
  %v4716 = vsub.f32 %v4714, %v4715
  %v4717 = vld [vmem:[%s5] sm:$0xff]
  %v4718 = vld [vmem:[%s5 + $0x8] sm:$0xff]
  %v4719 = vld [vmem:[%s5 + $0x10] sm:$0xff]
  %v4720 = vld [vmem:[%s5 + $0x18] sm:$0xff]
  %v4721 = vld [vmem:[%s5 + $0x20] sm:$0xff]
  %v4722 = vld [vmem:[%s5 + $0x28] sm:$0xff]
  %vm4723 = vcmask 130048
  %v4725 = vsel %vm4723, %v4713, 0
  %4727 = vmatprep.subr.mxu0 %v4718
  %4728 = vmatpush1.msra.mxu0 %v4717
  %4729 = vmatprep.subr.mxu0 %v4721
  %4730 = vmatpush1.msra.mxu0 %v4720
  %4731 = vmatprep.subr.mxu0 0.0
  %4732 = vmatpush1.msra.mxu0 0.0
  %4733 = vmatprep.subr.mxu0 0.0
  %4734 = vmatpush1.msra.mxu0 0.0
  %4735 = vmatprep.subr.mxu0 0.0
  %4736 = vmatpush1.msra.mxu0 0.0
  %4737 = vmatprep.subr.mxu0 0.0
  %4738 = vmatpush1.msra.mxu0 0.0
  %4739 = vmatprep.subr.mxu0 0.0
  %4740 = vmatpush1.msra.mxu0 0.0
  %4741 = vmatprep.subr.mxu0 0.0
  %4742 = vmatpush1.msra.mxu0 0.0
  %4743 = vmatprep.subr.mxu0 0.0
  %4744 = vmatpush1.msra.mxu0 0.0
  %4745 = vmatprep.subr.mxu0 0.0
  %4746 = vmatpush1.msra.mxu0 0.0
  %4747 = vmatprep.subr.mxu0 0.0
  %4748 = vmatpush1.msra.mxu0 0.0
  %4749 = vmatprep.subr.mxu0 0.0
  %4750 = vmatpush1.msra.mxu0 0.0
  %4751 = vmatprep.subr.mxu0 0.0
  %4752 = vmatpush1.msra.mxu0 0.0
  %4753 = vmatprep.subr.mxu0 0.0
  %4754 = vmatpush1.msra.mxu0 0.0
  %4755 = vmatprep.subr.mxu0 0.0
  %4756 = vmatpush1.msra.mxu0 0.0
  %4757 = vmatprep.subr.mxu0 0.0
  %4758 = vmatpush1.msra.mxu0 0.0
  %4759 = vmatprep.subr.mxu0 0.0
  %4760 = vmatpush1.msra.mxu0 0.0
  %4761 = vmatprep.subr.mxu0 0.0
  %4762 = vmatpush1.msra.mxu0 0.0
  %4763 = vmatprep.subr.mxu0 0.0
  %4764 = vmatpush1.msra.mxu0 0.0
  %4765 = vmatprep.subr.mxu0 0.0
  %4766 = vmatpush1.msra.mxu0 0.0
  %4767 = vmatprep.subr.mxu0 0.0
  %4768 = vmatpush1.msra.mxu0 0.0
  %4769 = vmatprep.subr.mxu0 0.0
  %4770 = vmatpush1.msra.mxu0 0.0
  %4771 = vmatprep.subr.mxu0 0.0
  %4772 = vmatpush1.msra.mxu0 0.0
  %4773 = vmatprep.subr.mxu0 0.0
  %4774 = vmatpush1.msra.mxu0 0.0
  %4775 = vmatprep.subr.mxu0 0.0
  %4776 = vmatpush1.msra.mxu0 0.0
  %4777 = vmatprep.subr.mxu0 0.0
  %4778 = vmatpush1.msra.mxu0 0.0
  %4779 = vmatprep.subr.mxu0 0.0
  %4780 = vmatpush1.msra.mxu0 0.0
  %4781 = vmatprep.subr.mxu0 0.0
  %4782 = vmatpush1.msra.mxu0 0.0
  %4783 = vmatprep.subr.mxu0 0.0
  %4784 = vmatpush1.msra.mxu0 0.0
  %4785 = vmatprep.subr.mxu0 0.0
  %4786 = vmatpush1.msra.mxu0 0.0
  %4787 = vmatprep.subr.mxu0 0.0
  %4788 = vmatpush1.msra.mxu0 0.0
  %4789 = vmatprep.subr.mxu0 0.0
  %4790 = vmatpush1.msra.mxu0 0.0
  %4791 = vmatprep.mubr.f32.mxu0 0.0
  %4792 = vmatmul.mubr.f32.gmra.mrb[0].mxu0 %v4725
  %v4793 = vpop.f32.mrb[0].mxu0
  %v4794 = vadd.f32 0.0, %v4793
  %v4795 = vpop.f32.mrb[0].mxu0
  %v4796 = vadd.f32 0.0, %v4795
  %4797 = vdwg.mxu0
  %4798 = vmatprep.subr.mxu0 0.0
  %4799 = vmatpush1.msra.mxu0 %v4719
  %4800 = vmatprep.subr.mxu0 0.0
  %4801 = vmatpush1.msra.mxu0 %v4722
  %4802 = vmatprep.subr.mxu0 0.0
  %4803 = vmatpush1.msra.mxu0 0.0
  %4804 = vmatprep.subr.mxu0 0.0
  %4805 = vmatpush1.msra.mxu0 0.0
  %4806 = vmatprep.subr.mxu0 0.0
  %4807 = vmatpush1.msra.mxu0 0.0
  %4808 = vmatprep.subr.mxu0 0.0
  %4809 = vmatpush1.msra.mxu0 0.0
  %4810 = vmatprep.subr.mxu0 0.0
  %4811 = vmatpush1.msra.mxu0 0.0
  %4812 = vmatprep.subr.mxu0 0.0
  %4813 = vmatpush1.msra.mxu0 0.0
  %4814 = vmatprep.subr.mxu0 0.0
  %4815 = vmatpush1.msra.mxu0 0.0
  %4816 = vmatprep.subr.mxu0 0.0
  %4817 = vmatpush1.msra.mxu0 0.0
  %4818 = vmatprep.subr.mxu0 0.0
  %4819 = vmatpush1.msra.mxu0 0.0
  %4820 = vmatprep.subr.mxu0 0.0
  %4821 = vmatpush1.msra.mxu0 0.0
  %4822 = vmatprep.subr.mxu0 0.0
  %4823 = vmatpush1.msra.mxu0 0.0
  %4824 = vmatprep.subr.mxu0 0.0
  %4825 = vmatpush1.msra.mxu0 0.0
  %4826 = vmatprep.subr.mxu0 0.0
  %4827 = vmatpush1.msra.mxu0 0.0
  %4828 = vmatprep.subr.mxu0 0.0
  %4829 = vmatpush1.msra.mxu0 0.0
  %4830 = vmatprep.subr.mxu0 0.0
  %4831 = vmatpush1.msra.mxu0 0.0
  %4832 = vmatprep.subr.mxu0 0.0
  %4833 = vmatpush1.msra.mxu0 0.0
  %4834 = vmatprep.subr.mxu0 0.0
  %4835 = vmatpush1.msra.mxu0 0.0
  %4836 = vmatprep.subr.mxu0 0.0
  %4837 = vmatpush1.msra.mxu0 0.0
  %4838 = vmatprep.subr.mxu0 0.0
  %4839 = vmatpush1.msra.mxu0 0.0
  %4840 = vmatprep.subr.mxu0 0.0
  %4841 = vmatpush1.msra.mxu0 0.0
  %4842 = vmatprep.subr.mxu0 0.0
  %4843 = vmatpush1.msra.mxu0 0.0
  %4844 = vmatprep.subr.mxu0 0.0
  %4845 = vmatpush1.msra.mxu0 0.0
  %4846 = vmatprep.subr.mxu0 0.0
  %4847 = vmatpush1.msra.mxu0 0.0
  %4848 = vmatprep.subr.mxu0 0.0
  %4849 = vmatpush1.msra.mxu0 0.0
  %4850 = vmatprep.subr.mxu0 0.0
  %4851 = vmatpush1.msra.mxu0 0.0
  %4852 = vmatprep.subr.mxu0 0.0
  %4853 = vmatpush1.msra.mxu0 0.0
  %4854 = vmatprep.subr.mxu0 0.0
  %4855 = vmatpush1.msra.mxu0 0.0
  %4856 = vmatprep.subr.mxu0 0.0
  %4857 = vmatpush1.msra.mxu0 0.0
  %4858 = vmatprep.subr.mxu0 0.0
  %4859 = vmatpush1.msra.mxu0 0.0
  %4860 = vmatprep.subr.mxu0 0.0
  %4861 = vmatpush1.msra.mxu0 0.0
  %4862 = vmatprep.mubr.f32.mxu0 0.0
  %4863 = vmatmul.mubr.f32.gmra.mrb[0].mxu0 %v4725
  %v4864 = vpop.f32.mrb[0].mxu0
  %v4865 = vadd.f32 0.0, %v4864
  %v4866 = vpop.f32.mrb[0].mxu0
  %4867 = vdwg.mxu0
  %v4869 = vsel %vm4723, %v4716, 0
  %4871 = vmatprep.subr.mxu0 %v4718
  %4872 = vmatpush1.msra.mxu0 %v4717
  %4873 = vmatprep.subr.mxu0 %v4721
  %4874 = vmatpush1.msra.mxu0 %v4720
  %4875 = vmatprep.subr.mxu0 0.0
  %4876 = vmatpush1.msra.mxu0 0.0
  %4877 = vmatprep.subr.mxu0 0.0
  %4878 = vmatpush1.msra.mxu0 0.0
  %4879 = vmatprep.subr.mxu0 0.0
  %4880 = vmatpush1.msra.mxu0 0.0
  %4881 = vmatprep.subr.mxu0 0.0
  %4882 = vmatpush1.msra.mxu0 0.0
  %4883 = vmatprep.subr.mxu0 0.0
  %4884 = vmatpush1.msra.mxu0 0.0
  %4885 = vmatprep.subr.mxu0 0.0
  %4886 = vmatpush1.msra.mxu0 0.0
  %4887 = vmatprep.subr.mxu0 0.0
  %4888 = vmatpush1.msra.mxu0 0.0
  %4889 = vmatprep.subr.mxu0 0.0
  %4890 = vmatpush1.msra.mxu0 0.0
  %4891 = vmatprep.subr.mxu0 0.0
  %4892 = vmatpush1.msra.mxu0 0.0
  %4893 = vmatprep.subr.mxu0 0.0
  %4894 = vmatpush1.msra.mxu0 0.0
  %4895 = vmatprep.subr.mxu0 0.0
  %4896 = vmatpush1.msra.mxu0 0.0
  %4897 = vmatprep.subr.mxu0 0.0
  %4898 = vmatpush1.msra.mxu0 0.0
  %4899 = vmatprep.subr.mxu0 0.0
  %4900 = vmatpush1.msra.mxu0 0.0
  %4901 = vmatprep.subr.mxu0 0.0
  %4902 = vmatpush1.msra.mxu0 0.0
  %4903 = vmatprep.subr.mxu0 0.0
  %4904 = vmatpush1.msra.mxu0 0.0
  %4905 = vmatprep.subr.mxu0 0.0
  %4906 = vmatpush1.msra.mxu0 0.0
  %4907 = vmatprep.subr.mxu0 0.0
  %4908 = vmatpush1.msra.mxu0 0.0
  %4909 = vmatprep.subr.mxu0 0.0
  %4910 = vmatpush1.msra.mxu0 0.0
  %4911 = vmatprep.subr.mxu0 0.0
  %4912 = vmatpush1.msra.mxu0 0.0
  %4913 = vmatprep.subr.mxu0 0.0
  %4914 = vmatpush1.msra.mxu0 0.0
  %4915 = vmatprep.subr.mxu0 0.0
  %4916 = vmatpush1.msra.mxu0 0.0
  %4917 = vmatprep.subr.mxu0 0.0
  %4918 = vmatpush1.msra.mxu0 0.0
  %4919 = vmatprep.subr.mxu0 0.0
  %4920 = vmatpush1.msra.mxu0 0.0
  %4921 = vmatprep.subr.mxu0 0.0
  %4922 = vmatpush1.msra.mxu0 0.0
  %4923 = vmatprep.subr.mxu0 0.0
  %4924 = vmatpush1.msra.mxu0 0.0
  %4925 = vmatprep.subr.mxu0 0.0
  %4926 = vmatpush1.msra.mxu0 0.0
  %4927 = vmatprep.subr.mxu0 0.0
  %4928 = vmatpush1.msra.mxu0 0.0
  %4929 = vmatprep.subr.mxu0 0.0
  %4930 = vmatpush1.msra.mxu0 0.0
  %4931 = vmatprep.subr.mxu0 0.0
  %4932 = vmatpush1.msra.mxu0 0.0
  %4933 = vmatprep.subr.mxu0 0.0
  %4934 = vmatpush1.msra.mxu0 0.0
  %4935 = vmatprep.mubr.f32.mxu0 0.0
  %4936 = vmatmul.mubr.f32.gmra.mrb[0].mxu0 %v4869
  %v4937 = vpop.f32.mrb[0].mxu0
  %v4938 = vadd.f32 0.0, %v4937
  %v4939 = vpop.f32.mrb[0].mxu0
  %v4940 = vadd.f32 0.0, %v4939
  %4941 = vdwg.mxu0
  %4942 = vmatprep.subr.mxu0 0.0
  %4943 = vmatpush1.msra.mxu0 %v4719
  %4944 = vmatprep.subr.mxu0 0.0
  %4945 = vmatpush1.msra.mxu0 %v4722
  %4946 = vmatprep.subr.mxu0 0.0
  %4947 = vmatpush1.msra.mxu0 0.0
  %4948 = vmatprep.subr.mxu0 0.0
  %4949 = vmatpush1.msra.mxu0 0.0
  %4950 = vmatprep.subr.mxu0 0.0
  %4951 = vmatpush1.msra.mxu0 0.0
  %4952 = vmatprep.subr.mxu0 0.0
  %4953 = vmatpush1.msra.mxu0 0.0
  %4954 = vmatprep.subr.mxu0 0.0
  %4955 = vmatpush1.msra.mxu0 0.0
  %4956 = vmatprep.subr.mxu0 0.0
  %4957 = vmatpush1.msra.mxu0 0.0
  %4958 = vmatprep.subr.mxu0 0.0
  %4959 = vmatpush1.msra.mxu0 0.0
  %4960 = vmatprep.subr.mxu0 0.0
  %4961 = vmatpush1.msra.mxu0 0.0
  %4962 = vmatprep.subr.mxu0 0.0
  %4963 = vmatpush1.msra.mxu0 0.0
  %4964 = vmatprep.subr.mxu0 0.0
  %4965 = vmatpush1.msra.mxu0 0.0
  %4966 = vmatprep.subr.mxu0 0.0
  %4967 = vmatpush1.msra.mxu0 0.0
  %4968 = vmatprep.subr.mxu0 0.0
  %4969 = vmatpush1.msra.mxu0 0.0
  %4970 = vmatprep.subr.mxu0 0.0
  %4971 = vmatpush1.msra.mxu0 0.0
  %4972 = vmatprep.subr.mxu0 0.0
  %4973 = vmatpush1.msra.mxu0 0.0
  %4974 = vmatprep.subr.mxu0 0.0
  %4975 = vmatpush1.msra.mxu0 0.0
  %4976 = vmatprep.subr.mxu0 0.0
  %4977 = vmatpush1.msra.mxu0 0.0
  %4978 = vmatprep.subr.mxu0 0.0
  %4979 = vmatpush1.msra.mxu0 0.0
  %4980 = vmatprep.subr.mxu0 0.0
  %4981 = vmatpush1.msra.mxu0 0.0
  %4982 = vmatprep.subr.mxu0 0.0
  %4983 = vmatpush1.msra.mxu0 0.0
  %4984 = vmatprep.subr.mxu0 0.0
  %4985 = vmatpush1.msra.mxu0 0.0
  %4986 = vmatprep.subr.mxu0 0.0
  %4987 = vmatpush1.msra.mxu0 0.0
  %4988 = vmatprep.subr.mxu0 0.0
  %4989 = vmatpush1.msra.mxu0 0.0
  %4990 = vmatprep.subr.mxu0 0.0
  %4991 = vmatpush1.msra.mxu0 0.0
  %4992 = vmatprep.subr.mxu0 0.0
  %4993 = vmatpush1.msra.mxu0 0.0
  %4994 = vmatprep.subr.mxu0 0.0
  %4995 = vmatpush1.msra.mxu0 0.0
  %4996 = vmatprep.subr.mxu0 0.0
  %4997 = vmatpush1.msra.mxu0 0.0
  %4998 = vmatprep.subr.mxu0 0.0
  %4999 = vmatpush1.msra.mxu0 0.0
  %5000 = vmatprep.subr.mxu0 0.0
  %5001 = vmatpush1.msra.mxu0 0.0
  %5002 = vmatprep.subr.mxu0 0.0
  %5003 = vmatpush1.msra.mxu0 0.0
  %5004 = vmatprep.subr.mxu0 0.0
  %5005 = vmatpush1.msra.mxu0 0.0
  %5006 = vmatprep.mubr.f32.mxu0 0.0
  %5007 = vmatmul.mubr.f32.gmra.mrb[0].mxu0 %v4869
  %v5008 = vpop.f32.mrb[0].mxu0
  %v5009 = vadd.f32 0.0, %v5008
  %v5010 = vpop.f32.mrb[0].mxu0
  %5011 = vdwg.mxu0
  %v5012 = vlaneseq
  %v5013 = vshrl.u32 %v5012, 7
  %v5014 = vsub.s32 0, %v5013
  %v5015 = vrot.slane %v4794, %v5014
  %v5016 = vlaneseq
  %v5017 = vshrl.u32 %v5016, 7
  %v5018 = vsub.s32 0, %v5017
  %v5019 = vrot.slane %v4796, %v5018
  %v5020 = vlaneseq
  %v5021 = vshrl.u32 %v5020, 7
  %v5022 = vsub.s32 0, %v5021
  %v5023 = vrot.slane %v4865, %v5022
  %v5024 = vmul.f32 %v4099, %v5015
  %v5025 = vmul.f32 %v4100, %v5019
  %v5026 = vmul.f32 %v4101, %v5023
  %v5027 = vmul.f32 %v4102, %v5015
  %v5028 = vmul.f32 %v4103, %v5019
  %v5029 = vmul.f32 %v4104, %v5023
  %v5030 = vmul.f32 %v4105, %v5015
  %v5031 = vmul.f32 %v4106, %v5019
  %v5032 = vmul.f32 %v4107, %v5023
  %v5033 = vmul.f32 %v4108, %v5015
  %v5034 = vmul.f32 %v4109, %v5019
  %v5035 = vmul.f32 %v4110, %v5023
  %v5036 = vmul.f32 %v4111, %v5015
  %v5037 = vmul.f32 %v4112, %v5019
  %v5038 = vmul.f32 %v4113, %v5023
  %v5039 = vmul.f32 %v4114, %v5015
  %v5040 = vmul.f32 %v4115, %v5019
  %v5041 = vmul.f32 %v4116, %v5023
  %v5042 = vmul.f32 %v4117, %v5015
  %v5043 = vmul.f32 %v4118, %v5019
  %v5044 = vmul.f32 %v4119, %v5023
  %v5045 = vmul.f32 %v4120, %v5015
  %v5046 = vmul.f32 %v4121, %v5019
  %v5047 = vmul.f32 %v4122, %v5023
  %v5048 = vmul.f32 %v4123, %v5015
  %v5049 = vmul.f32 %v4124, %v5019
  %v5050 = vmul.f32 %v4125, %v5023
  %v5051 = vmul.f32 %v4126, %v5015
  %v5052 = vmul.f32 %v4127, %v5019
  %v5053 = vmul.f32 %v4128, %v5023
  %v5054 = vmul.f32 %v4129, %v5015
  %v5055 = vmul.f32 %v4130, %v5019
  %v5056 = vmul.f32 %v4131, %v5023
  %v5057 = vmul.f32 %v4132, %v5015
  %v5058 = vmul.f32 %v4133, %v5019
  %v5059 = vmul.f32 %v4134, %v5023
  %v5060 = vmul.f32 %v4135, %v5015
  %v5061 = vmul.f32 %v4136, %v5019
  %v5062 = vmul.f32 %v4137, %v5023
  %v5063 = vmul.f32 %v4138, %v5015
  %v5064 = vmul.f32 %v4139, %v5019
  %v5065 = vmul.f32 %v4140, %v5023
  %v5066 = vmul.f32 %v4141, %v5015
  %v5067 = vmul.f32 %v4142, %v5019
  %v5068 = vmul.f32 %v4143, %v5023
  %v5069 = vmul.f32 %v4144, %v5015
  %v5070 = vmul.f32 %v4145, %v5019
  %v5071 = vmul.f32 %v4146, %v5023
  %v5072 = vmul.f32 %v4147, %v5015
  %v5073 = vmul.f32 %v4148, %v5019
  %v5074 = vmul.f32 %v4149, %v5023
  %v5075 = vmul.f32 %v4150, %v5015
  %v5076 = vmul.f32 %v4151, %v5019
  %v5077 = vmul.f32 %v4152, %v5023
  %v5078 = vlaneseq
  %v5079 = vshrl.u32 %v5078, 7
  %v5080 = vsub.s32 0, %v5079
  %v5081 = vrot.slane %v4938, %v5080
  %v5082 = vlaneseq
  %v5083 = vshrl.u32 %v5082, 7
  %v5084 = vsub.s32 0, %v5083
  %v5085 = vrot.slane %v4940, %v5084
  %v5086 = vlaneseq
  %v5087 = vshrl.u32 %v5086, 7
  %v5088 = vsub.s32 0, %v5087
  %v5089 = vrot.slane %v5009, %v5088
  %v5090 = vadd.f32 %v5024, %v5081
  %v5091 = vadd.f32 %v5025, %v5085
  %v5092 = vadd.f32 %v5026, %v5089
  %v5093 = vadd.f32 %v5027, %v5081
  %v5094 = vadd.f32 %v5028, %v5085
  %v5095 = vadd.f32 %v5029, %v5089
  %v5096 = vadd.f32 %v5030, %v5081
  %v5097 = vadd.f32 %v5031, %v5085
  %v5098 = vadd.f32 %v5032, %v5089
  %v5099 = vadd.f32 %v5033, %v5081
  %v5100 = vadd.f32 %v5034, %v5085
  %v5101 = vadd.f32 %v5035, %v5089
  %v5102 = vadd.f32 %v5036, %v5081
  %v5103 = vadd.f32 %v5037, %v5085
  %v5104 = vadd.f32 %v5038, %v5089
  %v5105 = vadd.f32 %v5039, %v5081
  %v5106 = vadd.f32 %v5040, %v5085
  %v5107 = vadd.f32 %v5041, %v5089
  %v5108 = vadd.f32 %v5042, %v5081
  %v5109 = vadd.f32 %v5043, %v5085
  %v5110 = vadd.f32 %v5044, %v5089
  %v5111 = vadd.f32 %v5045, %v5081
  %v5112 = vadd.f32 %v5046, %v5085
  %v5113 = vadd.f32 %v5047, %v5089
  %v5114 = vadd.f32 %v5048, %v5081
  %v5115 = vadd.f32 %v5049, %v5085
  %v5116 = vadd.f32 %v5050, %v5089
  %v5117 = vadd.f32 %v5051, %v5081
  %v5118 = vadd.f32 %v5052, %v5085
  %v5119 = vadd.f32 %v5053, %v5089
  %v5120 = vadd.f32 %v5054, %v5081
  %v5121 = vadd.f32 %v5055, %v5085
  %v5122 = vadd.f32 %v5056, %v5089
  %v5123 = vadd.f32 %v5057, %v5081
  %v5124 = vadd.f32 %v5058, %v5085
  %v5125 = vadd.f32 %v5059, %v5089
  %v5126 = vadd.f32 %v5060, %v5081
  %v5127 = vadd.f32 %v5061, %v5085
  %v5128 = vadd.f32 %v5062, %v5089
  %v5129 = vadd.f32 %v5063, %v5081
  %v5130 = vadd.f32 %v5064, %v5085
  %v5131 = vadd.f32 %v5065, %v5089
  %v5132 = vadd.f32 %v5066, %v5081
  %v5133 = vadd.f32 %v5067, %v5085
  %v5134 = vadd.f32 %v5068, %v5089
  %v5135 = vadd.f32 %v5069, %v5081
  %v5136 = vadd.f32 %v5070, %v5085
  %v5137 = vadd.f32 %v5071, %v5089
  %v5138 = vadd.f32 %v5072, %v5081
  %v5139 = vadd.f32 %v5073, %v5085
  %v5140 = vadd.f32 %v5074, %v5089
  %v5141 = vadd.f32 %v5075, %v5081
  %v5142 = vadd.f32 %v5076, %v5085
  %v5143 = vadd.f32 %v5077, %v5089
  %v5144 = vmax.f32 %v5090, 0.0
  %v5145 = vmax.f32 %v5091, 0.0
  %v5146 = vmax.f32 %v5092, 0.0
  %v5147 = vmax.f32 %v5093, 0.0
  %v5148 = vmax.f32 %v5094, 0.0
  %v5149 = vmax.f32 %v5095, 0.0
  %v5150 = vmax.f32 %v5096, 0.0
  %v5151 = vmax.f32 %v5097, 0.0
  %v5152 = vmax.f32 %v5098, 0.0
  %v5153 = vmax.f32 %v5099, 0.0
  %v5154 = vmax.f32 %v5100, 0.0
  %v5155 = vmax.f32 %v5101, 0.0
  %v5156 = vmax.f32 %v5102, 0.0
  %v5157 = vmax.f32 %v5103, 0.0
  %v5158 = vmax.f32 %v5104, 0.0
  %v5159 = vmax.f32 %v5105, 0.0
  %v5160 = vmax.f32 %v5106, 0.0
  %v5161 = vmax.f32 %v5107, 0.0
  %v5162 = vmax.f32 %v5108, 0.0
  %v5163 = vmax.f32 %v5109, 0.0
  %v5164 = vmax.f32 %v5110, 0.0
  %v5165 = vmax.f32 %v5111, 0.0
  %v5166 = vmax.f32 %v5112, 0.0
  %v5167 = vmax.f32 %v5113, 0.0
  %v5168 = vmax.f32 %v5114, 0.0
  %v5169 = vmax.f32 %v5115, 0.0
  %v5170 = vmax.f32 %v5116, 0.0
  %v5171 = vmax.f32 %v5117, 0.0
  %v5172 = vmax.f32 %v5118, 0.0
  %v5173 = vmax.f32 %v5119, 0.0
  %v5174 = vmax.f32 %v5120, 0.0
  %v5175 = vmax.f32 %v5121, 0.0
  %v5176 = vmax.f32 %v5122, 0.0
  %v5177 = vmax.f32 %v5123, 0.0
  %v5178 = vmax.f32 %v5124, 0.0
  %v5179 = vmax.f32 %v5125, 0.0
  %v5180 = vmax.f32 %v5126, 0.0
  %v5181 = vmax.f32 %v5127, 0.0
  %v5182 = vmax.f32 %v5128, 0.0
  %v5183 = vmax.f32 %v5129, 0.0
  %v5184 = vmax.f32 %v5130, 0.0
  %v5185 = vmax.f32 %v5131, 0.0
  %v5186 = vmax.f32 %v5132, 0.0
  %v5187 = vmax.f32 %v5133, 0.0
  %v5188 = vmax.f32 %v5134, 0.0
  %v5189 = vmax.f32 %v5135, 0.0
  %v5190 = vmax.f32 %v5136, 0.0
  %v5191 = vmax.f32 %v5137, 0.0
  %v5192 = vmax.f32 %v5138, 0.0
  %v5193 = vmax.f32 %v5139, 0.0
  %v5194 = vmax.f32 %v5140, 0.0
  %v5195 = vmax.f32 %v5141, 0.0
  %v5196 = vmax.f32 %v5142, 0.0
  %v5197 = vmax.f32 %v5143, 0.0
  %v5198 = vlaneseq
  %v5199 = vshrl.u32 %v5198, 7
  %v5200 = vadd.s32 %v5199, 8
  %v5201 = vadd.s32 %v5199, 16
  %v5202 = vadd.s32 %v5199, 24
  %v5203 = vadd.s32 %v5199, 32
  %v5204 = vadd.s32 %v5199, 40
  %v5205 = vadd.s32 %v5199, 48
  %v5206 = vadd.s32 %v5199, 56
  %v5207 = vadd.s32 %v5199, 64
  %v5208 = vadd.s32 %v5199, 72
  %v5209 = vadd.s32 %v5199, 80
  %v5210 = vadd.s32 %v5199, 88
  %v5211 = vadd.s32 %v5199, 96
  %v5212 = vadd.s32 %v5199, 104
  %v5213 = vadd.s32 %v5199, 112
  %v5214 = vadd.s32 %v5199, 120
  %v5215 = vadd.s32 %v5199, 128
  %v5216 = vadd.s32 %v5199, 136
  %vm5217 = vcmp.lt.s32.totalorder %v5199, 0
  %v5218 = vsub.s32 0, %v5199
  %v5219 = vsel %vm5217, %v5218, %v5199
  %v5220 = vshrl.u32 %v5219, 3
  %v5221 = vand.u32 %v5219, 7
  %v5222 = vsub.s32 0, %v5221
  %v5223 = vsel %vm5217, %v5222, %v5221
  %vm5224 = vcmp.lt.s32.totalorder %v5200, 0
  %v5225 = vsub.s32 0, %v5200
  %v5226 = vsel %vm5224, %v5225, %v5200
  %v5227 = vshrl.u32 %v5226, 3
  %v5228 = vand.u32 %v5226, 7
  %v5229 = vsub.s32 0, %v5228
  %v5230 = vsel %vm5224, %v5229, %v5228
  %vm5231 = vcmp.lt.s32.totalorder %v5201, 0
  %v5232 = vsub.s32 0, %v5201
  %v5233 = vsel %vm5231, %v5232, %v5201
  %v5234 = vshrl.u32 %v5233, 3
  %v5235 = vand.u32 %v5233, 7
  %v5236 = vsub.s32 0, %v5235
  %v5237 = vsel %vm5231, %v5236, %v5235
  %vm5238 = vcmp.lt.s32.totalorder %v5202, 0
  %v5239 = vsub.s32 0, %v5202
  %v5240 = vsel %vm5238, %v5239, %v5202
  %v5241 = vshrl.u32 %v5240, 3
  %v5242 = vand.u32 %v5240, 7
  %v5243 = vsub.s32 0, %v5242
  %v5244 = vsel %vm5238, %v5243, %v5242
  %vm5245 = vcmp.lt.s32.totalorder %v5203, 0
  %v5246 = vsub.s32 0, %v5203
  %v5247 = vsel %vm5245, %v5246, %v5203
  %v5248 = vshrl.u32 %v5247, 3
  %v5249 = vand.u32 %v5247, 7
  %v5250 = vsub.s32 0, %v5249
  %v5251 = vsel %vm5245, %v5250, %v5249
  %vm5252 = vcmp.lt.s32.totalorder %v5204, 0
  %v5253 = vsub.s32 0, %v5204
  %v5254 = vsel %vm5252, %v5253, %v5204
  %v5255 = vshrl.u32 %v5254, 3
  %v5256 = vand.u32 %v5254, 7
  %v5257 = vsub.s32 0, %v5256
  %v5258 = vsel %vm5252, %v5257, %v5256
  %vm5259 = vcmp.lt.s32.totalorder %v5205, 0
  %v5260 = vsub.s32 0, %v5205
  %v5261 = vsel %vm5259, %v5260, %v5205
  %v5262 = vshrl.u32 %v5261, 3
  %v5263 = vand.u32 %v5261, 7
  %v5264 = vsub.s32 0, %v5263
  %v5265 = vsel %vm5259, %v5264, %v5263
  %vm5266 = vcmp.lt.s32.totalorder %v5206, 0
  %v5267 = vsub.s32 0, %v5206
  %v5268 = vsel %vm5266, %v5267, %v5206
  %v5269 = vshrl.u32 %v5268, 3
  %v5270 = vand.u32 %v5268, 7
  %v5271 = vsub.s32 0, %v5270
  %v5272 = vsel %vm5266, %v5271, %v5270
  %vm5273 = vcmp.lt.s32.totalorder %v5207, 0
  %v5274 = vsub.s32 0, %v5207
  %v5275 = vsel %vm5273, %v5274, %v5207
  %v5276 = vshrl.u32 %v5275, 3
  %v5277 = vand.u32 %v5275, 7
  %v5278 = vsub.s32 0, %v5277
  %v5279 = vsel %vm5273, %v5278, %v5277
  %vm5280 = vcmp.lt.s32.totalorder %v5208, 0
  %v5281 = vsub.s32 0, %v5208
  %v5282 = vsel %vm5280, %v5281, %v5208
  %v5283 = vshrl.u32 %v5282, 3
  %v5284 = vand.u32 %v5282, 7
  %v5285 = vsub.s32 0, %v5284
  %v5286 = vsel %vm5280, %v5285, %v5284
  %vm5287 = vcmp.lt.s32.totalorder %v5209, 0
  %v5288 = vsub.s32 0, %v5209
  %v5289 = vsel %vm5287, %v5288, %v5209
  %v5290 = vshrl.u32 %v5289, 3
  %v5291 = vand.u32 %v5289, 7
  %v5292 = vsub.s32 0, %v5291
  %v5293 = vsel %vm5287, %v5292, %v5291
  %vm5294 = vcmp.lt.s32.totalorder %v5210, 0
  %v5295 = vsub.s32 0, %v5210
  %v5296 = vsel %vm5294, %v5295, %v5210
  %v5297 = vshrl.u32 %v5296, 3
  %v5298 = vand.u32 %v5296, 7
  %v5299 = vsub.s32 0, %v5298
  %v5300 = vsel %vm5294, %v5299, %v5298
  %vm5301 = vcmp.lt.s32.totalorder %v5211, 0
  %v5302 = vsub.s32 0, %v5211
  %v5303 = vsel %vm5301, %v5302, %v5211
  %v5304 = vshrl.u32 %v5303, 3
  %v5305 = vand.u32 %v5303, 7
  %v5306 = vsub.s32 0, %v5305
  %v5307 = vsel %vm5301, %v5306, %v5305
  %vm5308 = vcmp.lt.s32.totalorder %v5212, 0
  %v5309 = vsub.s32 0, %v5212
  %v5310 = vsel %vm5308, %v5309, %v5212
  %v5311 = vshrl.u32 %v5310, 3
  %v5312 = vand.u32 %v5310, 7
  %v5313 = vsub.s32 0, %v5312
  %v5314 = vsel %vm5308, %v5313, %v5312
  %vm5315 = vcmp.lt.s32.totalorder %v5213, 0
  %v5316 = vsub.s32 0, %v5213
  %v5317 = vsel %vm5315, %v5316, %v5213
  %v5318 = vshrl.u32 %v5317, 3
  %v5319 = vand.u32 %v5317, 7
  %v5320 = vsub.s32 0, %v5319
  %v5321 = vsel %vm5315, %v5320, %v5319
  %vm5322 = vcmp.lt.s32.totalorder %v5214, 0
  %v5323 = vsub.s32 0, %v5214
  %v5324 = vsel %vm5322, %v5323, %v5214
  %v5325 = vshrl.u32 %v5324, 3
  %v5326 = vand.u32 %v5324, 7
  %v5327 = vsub.s32 0, %v5326
  %v5328 = vsel %vm5322, %v5327, %v5326
  %vm5329 = vcmp.lt.s32.totalorder %v5215, 0
  %v5330 = vsub.s32 0, %v5215
  %v5331 = vsel %vm5329, %v5330, %v5215
  %v5332 = vshrl.u32 %v5331, 3
  %v5333 = vand.u32 %v5331, 7
  %v5334 = vsub.s32 0, %v5333
  %v5335 = vsel %vm5329, %v5334, %v5333
  %vm5336 = vcmp.lt.s32.totalorder %v5216, 0
  %v5337 = vsub.s32 0, %v5216
  %v5338 = vsel %vm5336, %v5337, %v5216
  %v5339 = vshrl.u32 %v5338, 3
  %v5340 = vand.u32 %v5338, 7
  %v5341 = vsub.s32 0, %v5340
  %v5342 = vsel %vm5336, %v5341, %v5340
  %vm5343 = vcmp.ne.s32.totalorder %v5223, 0
  %vm5344 = vcmp.ne.s32.totalorder %v5230, 0
  %vm5345 = vcmp.ne.s32.totalorder %v5237, 0
  %vm5346 = vcmp.ne.s32.totalorder %v5244, 0
  %vm5347 = vcmp.ne.s32.totalorder %v5251, 0
  %vm5348 = vcmp.ne.s32.totalorder %v5258, 0
  %vm5349 = vcmp.ne.s32.totalorder %v5265, 0
  %vm5350 = vcmp.ne.s32.totalorder %v5272, 0
  %vm5351 = vcmp.ne.s32.totalorder %v5279, 0
  %vm5352 = vcmp.ne.s32.totalorder %v5286, 0
  %vm5353 = vcmp.ne.s32.totalorder %v5293, 0
  %vm5354 = vcmp.ne.s32.totalorder %v5300, 0
  %vm5355 = vcmp.ne.s32.totalorder %v5307, 0
  %vm5356 = vcmp.ne.s32.totalorder %v5314, 0
  %vm5357 = vcmp.ne.s32.totalorder %v5321, 0
  %vm5358 = vcmp.ne.s32.totalorder %v5328, 0
  %vm5359 = vcmp.ne.s32.totalorder %v5335, 0
  %vm5360 = vcmp.ne.s32.totalorder %v5342, 0
  %vm5361 = vcmp.lt.s32.totalorder %v5223, 0
  %vm5362 = vcmp.lt.s32.totalorder %v5230, 0
  %vm5363 = vcmp.lt.s32.totalorder %v5237, 0
  %vm5364 = vcmp.lt.s32.totalorder %v5244, 0
  %vm5365 = vcmp.lt.s32.totalorder %v5251, 0
  %vm5366 = vcmp.lt.s32.totalorder %v5258, 0
  %vm5367 = vcmp.lt.s32.totalorder %v5265, 0
  %vm5368 = vcmp.lt.s32.totalorder %v5272, 0
  %vm5369 = vcmp.lt.s32.totalorder %v5279, 0
  %vm5370 = vcmp.lt.s32.totalorder %v5286, 0
  %vm5371 = vcmp.lt.s32.totalorder %v5293, 0
  %vm5372 = vcmp.lt.s32.totalorder %v5300, 0
  %vm5373 = vcmp.lt.s32.totalorder %v5307, 0
  %vm5374 = vcmp.lt.s32.totalorder %v5314, 0
  %vm5375 = vcmp.lt.s32.totalorder %v5321, 0
  %vm5376 = vcmp.lt.s32.totalorder %v5328, 0
  %vm5377 = vcmp.lt.s32.totalorder %v5335, 0
  %vm5378 = vcmp.lt.s32.totalorder %v5342, 0
  %vm5379 = vmand %vm5361, %vm5343
  %vm5380 = vmand %vm5362, %vm5344
  %vm5381 = vmand %vm5363, %vm5345
  %vm5382 = vmand %vm5364, %vm5346
  %vm5383 = vmand %vm5365, %vm5347
  %vm5384 = vmand %vm5366, %vm5348
  %vm5385 = vmand %vm5367, %vm5349
  %vm5386 = vmand %vm5368, %vm5350
  %vm5387 = vmand %vm5369, %vm5351
  %vm5388 = vmand %vm5370, %vm5352
  %vm5389 = vmand %vm5371, %vm5353
  %vm5390 = vmand %vm5372, %vm5354
  %vm5391 = vmand %vm5373, %vm5355
  %vm5392 = vmand %vm5374, %vm5356
  %vm5393 = vmand %vm5375, %vm5357
  %vm5394 = vmand %vm5376, %vm5358
  %vm5395 = vmand %vm5377, %vm5359
  %vm5396 = vmand %vm5378, %vm5360
  %v5397 = vadd.s32 %v5223, 8
  %v5398 = vadd.s32 %v5230, 8
  %v5399 = vadd.s32 %v5237, 8
  %v5400 = vadd.s32 %v5244, 8
  %v5401 = vadd.s32 %v5251, 8
  %v5402 = vadd.s32 %v5258, 8
  %v5403 = vadd.s32 %v5265, 8
  %v5404 = vadd.s32 %v5272, 8
  %v5405 = vadd.s32 %v5279, 8
  %v5406 = vadd.s32 %v5286, 8
  %v5407 = vadd.s32 %v5293, 8
  %v5408 = vadd.s32 %v5300, 8
  %v5409 = vadd.s32 %v5307, 8
  %v5410 = vadd.s32 %v5314, 8
  %v5411 = vadd.s32 %v5321, 8
  %v5412 = vadd.s32 %v5328, 8
  %v5413 = vadd.s32 %v5335, 8
  %v5414 = vadd.s32 %v5342, 8
  %v5415 = vsel %vm5379, %v5397, %v5223
  %v5416 = vsel %vm5380, %v5398, %v5230
  %v5417 = vsel %vm5381, %v5399, %v5237
  %v5418 = vsel %vm5382, %v5400, %v5244
  %v5419 = vsel %vm5383, %v5401, %v5251
  %v5420 = vsel %vm5384, %v5402, %v5258
  %v5421 = vsel %vm5385, %v5403, %v5265
  %v5422 = vsel %vm5386, %v5404, %v5272
  %v5423 = vsel %vm5387, %v5405, %v5279
  %v5424 = vsel %vm5388, %v5406, %v5286
  %v5425 = vsel %vm5389, %v5407, %v5293
  %v5426 = vsel %vm5390, %v5408, %v5300
  %v5427 = vsel %vm5391, %v5409, %v5307
  %v5428 = vsel %vm5392, %v5410, %v5314
  %v5429 = vsel %vm5393, %v5411, %v5321
  %v5430 = vsel %vm5394, %v5412, %v5328
  %v5431 = vsel %vm5395, %v5413, %v5335
  %v5432 = vsel %vm5396, %v5414, %v5342
  %vm5433 = vcmp.lt.s32.totalorder %v5415, 2
  %vm5434 = vcmp.lt.s32.totalorder %v5416, 2
  %vm5435 = vcmp.lt.s32.totalorder %v5417, 2
  %vm5436 = vcmp.lt.s32.totalorder %v5418, 2
  %vm5437 = vcmp.lt.s32.totalorder %v5419, 2
  %vm5438 = vcmp.lt.s32.totalorder %v5420, 2
  %vm5439 = vcmp.lt.s32.totalorder %v5421, 2
  %vm5440 = vcmp.lt.s32.totalorder %v5422, 2
  %vm5441 = vcmp.lt.s32.totalorder %v5423, 2
  %vm5442 = vcmp.lt.s32.totalorder %v5424, 2
  %vm5443 = vcmp.lt.s32.totalorder %v5425, 2
  %vm5444 = vcmp.lt.s32.totalorder %v5426, 2
  %vm5445 = vcmp.lt.s32.totalorder %v5427, 2
  %vm5446 = vcmp.lt.s32.totalorder %v5428, 2
  %vm5447 = vcmp.lt.s32.totalorder %v5429, 2
  %vm5448 = vcmp.lt.s32.totalorder %v5430, 2
  %vm5449 = vcmp.lt.s32.totalorder %v5431, 2
  %vm5450 = vcmp.lt.s32.totalorder %v5432, 2
  %v5451 = vsel %vm5433, 1, 0
  %v5452 = vsel %vm5434, 1, 0
  %v5453 = vsel %vm5435, 1, 0
  %v5454 = vsel %vm5436, 1, 0
  %v5455 = vsel %vm5437, 1, 0
  %v5456 = vsel %vm5438, 1, 0
  %v5457 = vsel %vm5439, 1, 0
  %v5458 = vsel %vm5440, 1, 0
  %v5459 = vsel %vm5441, 1, 0
  %v5460 = vsel %vm5442, 1, 0
  %v5461 = vsel %vm5443, 1, 0
  %v5462 = vsel %vm5444, 1, 0
  %v5463 = vsel %vm5445, 1, 0
  %v5464 = vsel %vm5446, 1, 0
  %v5465 = vsel %vm5447, 1, 0
  %v5466 = vsel %vm5448, 1, 0
  %v5467 = vsel %vm5449, 1, 0
  %v5468 = vsel %vm5450, 1, 0
  %v5469 = vcvt.s32.f32 %v5451
  %v5470 = vcvt.s32.f32 %v5452
  %v5471 = vcvt.s32.f32 %v5453
  %v5472 = vcvt.s32.f32 %v5454
  %v5473 = vcvt.s32.f32 %v5455
  %v5474 = vcvt.s32.f32 %v5456
  %v5475 = vcvt.s32.f32 %v5457
  %v5476 = vcvt.s32.f32 %v5458
  %v5477 = vcvt.s32.f32 %v5459
  %v5478 = vcvt.s32.f32 %v5460
  %v5479 = vcvt.s32.f32 %v5461
  %v5480 = vcvt.s32.f32 %v5462
  %v5481 = vcvt.s32.f32 %v5463
  %v5482 = vcvt.s32.f32 %v5464
  %v5483 = vcvt.s32.f32 %v5465
  %v5484 = vcvt.s32.f32 %v5466
  %v5485 = vcvt.s32.f32 %v5467
  %v5486 = vcvt.s32.f32 %v5468
  %v5487 = vmul.f32 %v5144, %v5469
  %v5488 = vmul.f32 %v5145, %v5469
  %v5489 = vmul.f32 %v5146, %v5469
  %v5490 = vmul.f32 %v5147, %v5470
  %v5491 = vmul.f32 %v5148, %v5470
  %v5492 = vmul.f32 %v5149, %v5470
  %v5493 = vmul.f32 %v5150, %v5471
  %v5494 = vmul.f32 %v5151, %v5471
  %v5495 = vmul.f32 %v5152, %v5471
  %v5496 = vmul.f32 %v5153, %v5472
  %v5497 = vmul.f32 %v5154, %v5472
  %v5498 = vmul.f32 %v5155, %v5472
  %v5499 = vmul.f32 %v5156, %v5473
  %v5500 = vmul.f32 %v5157, %v5473
  %v5501 = vmul.f32 %v5158, %v5473
  %v5502 = vmul.f32 %v5159, %v5474
  %v5503 = vmul.f32 %v5160, %v5474
  %v5504 = vmul.f32 %v5161, %v5474
  %v5505 = vmul.f32 %v5162, %v5475
  %v5506 = vmul.f32 %v5163, %v5475
  %v5507 = vmul.f32 %v5164, %v5475
  %v5508 = vmul.f32 %v5165, %v5476
  %v5509 = vmul.f32 %v5166, %v5476
  %v5510 = vmul.f32 %v5167, %v5476
  %v5511 = vmul.f32 %v5168, %v5477
  %v5512 = vmul.f32 %v5169, %v5477
  %v5513 = vmul.f32 %v5170, %v5477
  %v5514 = vmul.f32 %v5171, %v5478
  %v5515 = vmul.f32 %v5172, %v5478
  %v5516 = vmul.f32 %v5173, %v5478
  %v5517 = vmul.f32 %v5174, %v5479
  %v5518 = vmul.f32 %v5175, %v5479
  %v5519 = vmul.f32 %v5176, %v5479
  %v5520 = vmul.f32 %v5177, %v5480
  %v5521 = vmul.f32 %v5178, %v5480
  %v5522 = vmul.f32 %v5179, %v5480
  %v5523 = vmul.f32 %v5180, %v5481
  %v5524 = vmul.f32 %v5181, %v5481
  %v5525 = vmul.f32 %v5182, %v5481
  %v5526 = vmul.f32 %v5183, %v5482
  %v5527 = vmul.f32 %v5184, %v5482
  %v5528 = vmul.f32 %v5185, %v5482
  %v5529 = vmul.f32 %v5186, %v5483
  %v5530 = vmul.f32 %v5187, %v5483
  %v5531 = vmul.f32 %v5188, %v5483
  %v5532 = vmul.f32 %v5189, %v5484
  %v5533 = vmul.f32 %v5190, %v5484
  %v5534 = vmul.f32 %v5191, %v5484
  %v5535 = vmul.f32 %v5192, %v5485
  %v5536 = vmul.f32 %v5193, %v5485
  %v5537 = vmul.f32 %v5194, %v5485
  %v5538 = vmul.f32 %v5195, %v5486
  %v5539 = vmul.f32 %v5196, %v5486
  %v5540 = vmul.f32 %v5197, %v5486
  %5541 = vst [vmem:[#allocation2] sm:$0xff] %v5487
  %5542 = vst [vmem:[#allocation2 + $0x8] sm:$0xff] %v5488
  %5543 = vst.msk [vmem:[#allocation2 + $0x10] sm:$0xff] %vm4199, %v5489
  %5544 = vst [vmem:[#allocation2 + $0xd8] sm:$0xff] %v5490
  %5545 = vst [vmem:[#allocation2 + $0xe0] sm:$0xff] %v5491
  %5546 = vst.msk [vmem:[#allocation2 + $0xe8] sm:$0xff] %vm4199, %v5492
  %5547 = vst [vmem:[#allocation2 + $0x18] sm:$0xff] %v5493
  %5548 = vst [vmem:[#allocation2 + $0x20] sm:$0xff] %v5494
  %5549 = vst.msk [vmem:[#allocation2 + $0x28] sm:$0xff] %vm4199, %v5495
  %5550 = vst [vmem:[#allocation2 + $0xf0] sm:$0xff] %v5496
  %5551 = vst [vmem:[#allocation2 + $0xf8] sm:$0xff] %v5497
  %5552 = vst.msk [vmem:[#allocation2 + $0x100] sm:$0xff] %vm4199, %v5498
  %5553 = vst [vmem:[#allocation2 + $0x30] sm:$0xff] %v5499
  %5554 = vst [vmem:[#allocation2 + $0x38] sm:$0xff] %v5500
  %5555 = vst.msk [vmem:[#allocation2 + $0x40] sm:$0xff] %vm4199, %v5501
  %5556 = vst [vmem:[#allocation2 + $0x108] sm:$0xff] %v5502
  %5557 = vst [vmem:[#allocation2 + $0x110] sm:$0xff] %v5503
  %5558 = vst.msk [vmem:[#allocation2 + $0x118] sm:$0xff] %vm4199, %v5504
  %5559 = vst [vmem:[#allocation2 + $0x48] sm:$0xff] %v5505
  %5560 = vst [vmem:[#allocation2 + $0x50] sm:$0xff] %v5506
  %5561 = vst.msk [vmem:[#allocation2 + $0x58] sm:$0xff] %vm4199, %v5507
  %5562 = vst [vmem:[#allocation2 + $0x120] sm:$0xff] %v5508
  %5563 = vst [vmem:[#allocation2 + $0x128] sm:$0xff] %v5509
  %5564 = vst.msk [vmem:[#allocation2 + $0x130] sm:$0xff] %vm4199, %v5510
  %5565 = vst [vmem:[#allocation2 + $0x60] sm:$0xff] %v5511
  %5566 = vst [vmem:[#allocation2 + $0x68] sm:$0xff] %v5512
  %5567 = vst.msk [vmem:[#allocation2 + $0x70] sm:$0xff] %vm4199, %v5513
  %5568 = vst [vmem:[#allocation2 + $0x138] sm:$0xff] %v5514
  %5569 = vst [vmem:[#allocation2 + $0x140] sm:$0xff] %v5515
  %5570 = vst.msk [vmem:[#allocation2 + $0x148] sm:$0xff] %vm4199, %v5516
  %5571 = vst [vmem:[#allocation2 + $0x78] sm:$0xff] %v5517
  %5572 = vst [vmem:[#allocation2 + $0x80] sm:$0xff] %v5518
  %5573 = vst.msk [vmem:[#allocation2 + $0x88] sm:$0xff] %vm4199, %v5519
  %5574 = vst [vmem:[#allocation2 + $0x150] sm:$0xff] %v5520
  %5575 = vst [vmem:[#allocation2 + $0x158] sm:$0xff] %v5521
  %5576 = vst.msk [vmem:[#allocation2 + $0x160] sm:$0xff] %vm4199, %v5522
  %5577 = vst [vmem:[#allocation2 + $0x90] sm:$0xff] %v5523
  %5578 = vst [vmem:[#allocation2 + $0x98] sm:$0xff] %v5524
  %5579 = vst.msk [vmem:[#allocation2 + $0xa0] sm:$0xff] %vm4199, %v5525
  %5580 = vst [vmem:[#allocation2 + $0x168] sm:$0xff] %v5526
  %5581 = vst [vmem:[#allocation2 + $0x170] sm:$0xff] %v5527
  %5582 = vst.msk [vmem:[#allocation2 + $0x178] sm:$0xff] %vm4199, %v5528
  %5583 = vst [vmem:[#allocation2 + $0xa8] sm:$0xff] %v5529
  %5584 = vst [vmem:[#allocation2 + $0xb0] sm:$0xff] %v5530
  %5585 = vst.msk [vmem:[#allocation2 + $0xb8] sm:$0xff] %vm4199, %v5531
  %5586 = vst [vmem:[#allocation2 + $0x180] sm:$0xff] %v5532
  %5587 = vst [vmem:[#allocation2 + $0x188] sm:$0xff] %v5533
  %5588 = vst.msk [vmem:[#allocation2 + $0x190] sm:$0xff] %vm4199, %v5534
  %5589 = vst [vmem:[#allocation2 + $0xc0] sm:$0xff] %v5535
  %5590 = vst [vmem:[#allocation2 + $0xc8] sm:$0xff] %v5536
  %5591 = vst.msk [vmem:[#allocation2 + $0xd0] sm:$0xff] %vm4199, %v5537
  %5592 = vst [vmem:[#allocation2 + $0x198] sm:$0xff] %v5538
  %5593 = vst [vmem:[#allocation2 + $0x1a0] sm:$0xff] %v5539
  %5594 = vst.msk [vmem:[#allocation2 + $0x1a8] sm:$0xff] %vm4199, %v5540
  %s5595 = smul.u32 4, 5
  %s5596 = smul.u32 %s5595, 36
  %s5597 = smul.u32 %s5596, 2
  %s5598 = sshll.u32 %s5597, 4
  %5599 = dma.done [#allocation7], %s5598
  %v5600 = vld [vmem:[#allocation2] sm:$0xff]
  %v5601 = vld [vmem:[#allocation2 + $0x8] sm:$0xff]
  %v5602 = vld [vmem:[#allocation2 + $0x10] sm:$0xff]
  %v5603 = vld [vmem:[#allocation2 + $0x18] sm:$0xff]
  %v5604 = vld [vmem:[#allocation2 + $0x20] sm:$0xff]
  %v5605 = vld [vmem:[#allocation2 + $0x28] sm:$0xff]
  %v5606 = vld [vmem:[#allocation2 + $0x30] sm:$0xff]
  %v5607 = vld [vmem:[#allocation2 + $0x38] sm:$0xff]
  %v5608 = vld [vmem:[#allocation2 + $0x40] sm:$0xff]
  %v5609 = vld [vmem:[#allocation2 + $0x48] sm:$0xff]
  %v5610 = vld [vmem:[#allocation2 + $0x50] sm:$0xff]
  %v5611 = vld [vmem:[#allocation2 + $0x58] sm:$0xff]
  %v5612 = vld [vmem:[#allocation2 + $0x60] sm:$0xff]
  %v5613 = vld [vmem:[#allocation2 + $0x68] sm:$0xff]
  %v5614 = vld [vmem:[#allocation2 + $0x70] sm:$0xff]
  %v5615 = vld [vmem:[#allocation2 + $0x78] sm:$0xff]
  %v5616 = vld [vmem:[#allocation2 + $0x80] sm:$0xff]
  %v5617 = vld [vmem:[#allocation2 + $0x88] sm:$0xff]
  %v5618 = vld [vmem:[#allocation2 + $0x90] sm:$0xff]
  %v5619 = vld [vmem:[#allocation2 + $0x98] sm:$0xff]
  %v5620 = vld [vmem:[#allocation2 + $0xa0] sm:$0xff]
  %v5621 = vpack.c.bf16 %v5603, %v5600
  %v5622 = vpack.c.bf16 %v5604, %v5601
  %v5623 = vpack.c.bf16 %v5605, %v5602
  %v5624 = vpack.c.bf16 %v5609, %v5606
  %v5625 = vpack.c.bf16 %v5610, %v5607
  %v5626 = vpack.c.bf16 %v5611, %v5608
  %v5627 = vpack.c.bf16 %v5615, %v5612
  %v5628 = vpack.c.bf16 %v5616, %v5613
  %v5629 = vpack.c.bf16 %v5617, %v5614
  %v5630 = vpack.c.bf16 %v5618, %v5618
  %v5631 = vpack.c.bf16 %v5619, %v5619
  %v5632 = vpack.c.bf16 %v5620, %v5620
  %v5633 = vld [vmem:[#allocation4] sm:$0xff]
  %v5634 = vld [vmem:[#allocation4 + $0x8] sm:$0xff]
  %v5635 = vld [vmem:[#allocation4 + $0x10] sm:$0xff]
  %v5636 = vld [vmem:[#allocation4 + $0x18] sm:$0xff]
  %v5637 = vld [vmem:[#allocation4 + $0x20] sm:$0xff]
  %v5638 = vld [vmem:[#allocation4 + $0x28] sm:$0xff]
  %v5639 = vld [vmem:[#allocation4 + $0x30] sm:$0xff]
  %v5640 = vld [vmem:[#allocation4 + $0x38] sm:$0xff]
  %v5641 = vld [vmem:[#allocation4 + $0x40] sm:$0xff]
  %v5642 = vld [vmem:[#allocation4 + $0x48] sm:$0xff]
  %v5643 = vld [vmem:[#allocation4 + $0x50] sm:$0xff]
  %v5644 = vld [vmem:[#allocation4 + $0x58] sm:$0xff]
  %v5645 = vld [vmem:[#allocation4 + $0x60] sm:$0xff]
  %v5646 = vld [vmem:[#allocation4 + $0x68] sm:$0xff]
  %v5647 = vld [vmem:[#allocation4 + $0x70] sm:$0xff]
  %v5648 = vld [vmem:[#allocation4 + $0x78] sm:$0xff]
  %v5649 = vld [vmem:[#allocation4 + $0x80] sm:$0xff]
  %v5650 = vld [vmem:[#allocation4 + $0x88] sm:$0xff]
  %v5651 = vld [vmem:[#allocation4 + $0x90] sm:$0xff]
  %v5652 = vld [vmem:[#allocation4 + $0x98] sm:$0xff]
  %v5653 = vld [vmem:[#allocation4 + $0xa0] sm:$0xff]
  %v5654 = vld [vmem:[#allocation4 + $0xa8] sm:$0xff]
  %v5655 = vld [vmem:[#allocation4 + $0xb0] sm:$0xff]
  %v5656 = vld [vmem:[#allocation4 + $0xb8] sm:$0xff]
  %v5657 = vld [vmem:[#allocation4 + $0xc0] sm:$0xff]
  %v5658 = vld [vmem:[#allocation4 + $0xc8] sm:$0xff]
  %v5659 = vld [vmem:[#allocation4 + $0xd0] sm:$0xff]
  %v5660 = vld [vmem:[#allocation4 + $0xd8] sm:$0xff]
  %v5661 = vld [vmem:[#allocation4 + $0xe0] sm:$0xff]
  %v5662 = vld [vmem:[#allocation4 + $0xe8] sm:$0xff]
  %v5663 = vld [vmem:[#allocation4 + $0xf0] sm:$0xff]
  %v5664 = vld [vmem:[#allocation4 + $0xf8] sm:$0xff]
  %v5665 = vld [vmem:[#allocation4 + $0x100] sm:$0xff]
  %v5666 = vld [vmem:[#allocation4 + $0x108] sm:$0xff]
  %v5667 = vld [vmem:[#allocation4 + $0x110] sm:$0xff]
  %v5668 = vld [vmem:[#allocation4 + $0x118] sm:$0xff]
  %v5669 = vld [vmem:[#allocation2 + $0xd8] sm:$0xff]
  %v5670 = vld [vmem:[#allocation2 + $0xe0] sm:$0xff]
  %v5671 = vld [vmem:[#allocation2 + $0xe8] sm:$0xff]
  %v5672 = vld [vmem:[#allocation2 + $0xf0] sm:$0xff]
  %v5673 = vld [vmem:[#allocation2 + $0xf8] sm:$0xff]
  %v5674 = vld [vmem:[#allocation2 + $0x100] sm:$0xff]
  %v5675 = vld [vmem:[#allocation2 + $0x108] sm:$0xff]
  %v5676 = vld [vmem:[#allocation2 + $0x110] sm:$0xff]
  %v5677 = vld [vmem:[#allocation2 + $0x118] sm:$0xff]
  %v5678 = vld [vmem:[#allocation2 + $0x120] sm:$0xff]
  %v5679 = vld [vmem:[#allocation2 + $0x128] sm:$0xff]
  %v5680 = vld [vmem:[#allocation2 + $0x130] sm:$0xff]
  %v5681 = vld [vmem:[#allocation2 + $0x138] sm:$0xff]
  %v5682 = vld [vmem:[#allocation2 + $0x140] sm:$0xff]
  %v5683 = vld [vmem:[#allocation2 + $0x148] sm:$0xff]
  %v5684 = vld [vmem:[#allocation2 + $0x150] sm:$0xff]
  %v5685 = vld [vmem:[#allocation2 + $0x158] sm:$0xff]
  %v5686 = vld [vmem:[#allocation2 + $0x160] sm:$0xff]
  %v5687 = vld [vmem:[#allocation2 + $0x168] sm:$0xff]
  %v5688 = vld [vmem:[#allocation2 + $0x170] sm:$0xff]
  %v5689 = vld [vmem:[#allocation2 + $0x178] sm:$0xff]
  %v5690 = vpack.c.bf16 %v5672, %v5669
  %v5691 = vpack.c.bf16 %v5673, %v5670
  %v5692 = vpack.c.bf16 %v5674, %v5671
  %v5693 = vpack.c.bf16 %v5678, %v5675
  %v5694 = vpack.c.bf16 %v5679, %v5676
  %v5695 = vpack.c.bf16 %v5680, %v5677
  %v5696 = vpack.c.bf16 %v5684, %v5681
  %v5697 = vpack.c.bf16 %v5685, %v5682
  %v5698 = vpack.c.bf16 %v5686, %v5683
  %v5699 = vpack.c.bf16 %v5687, %v5687
  %v5700 = vpack.c.bf16 %v5688, %v5688
  %v5701 = vpack.c.bf16 %v5689, %v5689
  %s5702 = scalar_lea.vmem [#allocation4], 288
  %v5703 = vld [vmem:[%s5702] sm:$0xff]
  %v5704 = vld [vmem:[%s5702 + $0x8] sm:$0xff]
  %v5705 = vld [vmem:[%s5702 + $0x10] sm:$0xff]
  %v5706 = vld [vmem:[%s5702 + $0x18] sm:$0xff]
  %v5707 = vld [vmem:[%s5702 + $0x20] sm:$0xff]
  %v5708 = vld [vmem:[%s5702 + $0x28] sm:$0xff]
  %v5709 = vld [vmem:[%s5702 + $0x30] sm:$0xff]
  %v5710 = vld [vmem:[%s5702 + $0x38] sm:$0xff]
  %v5711 = vld [vmem:[%s5702 + $0x40] sm:$0xff]
  %v5712 = vld [vmem:[%s5702 + $0x48] sm:$0xff]
  %v5713 = vld [vmem:[%s5702 + $0x50] sm:$0xff]
  %v5714 = vld [vmem:[%s5702 + $0x58] sm:$0xff]
  %v5715 = vld [vmem:[%s5702 + $0x60] sm:$0xff]
  %v5716 = vld [vmem:[%s5702 + $0x68] sm:$0xff]
  %v5717 = vld [vmem:[%s5702 + $0x70] sm:$0xff]
  %v5718 = vld [vmem:[%s5702 + $0x78] sm:$0xff]
  %v5719 = vld [vmem:[%s5702 + $0x80] sm:$0xff]
  %v5720 = vld [vmem:[%s5702 + $0x88] sm:$0xff]
  %v5721 = vld [vmem:[%s5702 + $0x90] sm:$0xff]
  %v5722 = vld [vmem:[%s5702 + $0x98] sm:$0xff]
  %v5723 = vld [vmem:[%s5702 + $0xa0] sm:$0xff]
  %v5724 = vld [vmem:[%s5702 + $0xa8] sm:$0xff]
  %v5725 = vld [vmem:[%s5702 + $0xb0] sm:$0xff]
  %v5726 = vld [vmem:[%s5702 + $0xb8] sm:$0xff]
  %v5727 = vld [vmem:[%s5702 + $0xc0] sm:$0xff]
  %v5728 = vld [vmem:[%s5702 + $0xc8] sm:$0xff]
  %v5729 = vld [vmem:[%s5702 + $0xd0] sm:$0xff]
  %v5730 = vld [vmem:[%s5702 + $0xd8] sm:$0xff]
  %v5731 = vld [vmem:[%s5702 + $0xe0] sm:$0xff]
  %v5732 = vld [vmem:[%s5702 + $0xe8] sm:$0xff]
  %v5733 = vld [vmem:[%s5702 + $0xf0] sm:$0xff]
  %v5734 = vld [vmem:[%s5702 + $0xf8] sm:$0xff]
  %v5735 = vld [vmem:[%s5702 + $0x100] sm:$0xff]
  %v5736 = vld [vmem:[%s5702 + $0x108] sm:$0xff]
  %v5737 = vld [vmem:[%s5702 + $0x110] sm:$0xff]
  %v5738 = vld [vmem:[%s5702 + $0x118] sm:$0xff]
  %v5740 = vsel %vm4199, %v5692, 0
  %v5743 = vsel %vm4199, %v5695, 0
  %v5746 = vsel %vm4199, %v5698, 0
  %v5749 = vsel %vm4199, %v5701, 0
  %5751 = vmatprep.subr.bf16.mxu0 %v5704
  %5752 = vmatpush1.bf16.msra.mxu0 %v5703
  %5753 = vmatprep.subr.bf16.mxu0 %v5706
  %5754 = vmatpush1.bf16.msra.mxu0 %v5705
  %5755 = vmatprep.subr.bf16.mxu0 %v5708
  %5756 = vmatpush1.bf16.msra.mxu0 %v5707
  %5757 = vmatprep.subr.bf16.mxu0 %v5710
  %5758 = vmatpush1.bf16.msra.mxu0 %v5709
  %5759 = vmatprep.subr.bf16.mxu0 %v5712
  %5760 = vmatpush1.bf16.msra.mxu0 %v5711
  %5761 = vmatprep.subr.bf16.mxu0 %v5714
  %5762 = vmatpush1.bf16.msra.mxu0 %v5713
  %5763 = vmatprep.subr.bf16.mxu0 %v5716
  %5764 = vmatpush1.bf16.msra.mxu0 %v5715
  %5765 = vmatprep.subr.bf16.mxu0 %v5718
  %5766 = vmatpush1.bf16.msra.mxu0 %v5717
  %5767 = vmatprep.subr.bf16.mxu0 %v5720
  %5768 = vmatpush1.bf16.msra.mxu0 %v5719
  %5769 = vmatprep.subr.bf16.mxu0 %v5722
  %5770 = vmatpush1.bf16.msra.mxu0 %v5721
  %5771 = vmatprep.subr.bf16.mxu0 %v5724
  %5772 = vmatpush1.bf16.msra.mxu0 %v5723
  %5773 = vmatprep.subr.bf16.mxu0 %v5726
  %5774 = vmatpush1.bf16.msra.mxu0 %v5725
  %5775 = vmatprep.subr.bf16.mxu0 %v5728
  %5776 = vmatpush1.bf16.msra.mxu0 %v5727
  %5777 = vmatprep.subr.bf16.mxu0 %v5730
  %5778 = vmatpush1.bf16.msra.mxu0 %v5729
  %5779 = vmatprep.subr.bf16.mxu0 %v5732
  %5780 = vmatpush1.bf16.msra.mxu0 %v5731
  %5781 = vmatprep.subr.bf16.mxu0 %v5734
  %5782 = vmatpush1.bf16.msra.mxu0 %v5733
  %5783 = vmatprep.mubr.bf16.mxu0 %v5691
  %5784 = vmatmul.mubr.bf16.gmra.mrb[0].mxu0 %v5690
  %v5785 = vpop.f32.mrb[0].mxu0
  %v5786 = vadd.f32 0.0, %v5785
  %v5787 = vpop.f32.mrb[0].mxu0
  %v5788 = vadd.f32 0.0, %v5787
  %v5789 = vpop.f32.mrb[0].mxu0
  %v5790 = vadd.f32 0.0, %v5789
  %v5791 = vpop.f32.mrb[0].mxu0
  %v5792 = vadd.f32 0.0, %v5791
  %5793 = vmatprep.mubr.bf16.mxu0 %v5694
  %5794 = vmatmul.mubr.bf16.gmra.mrb[0].mxu0 %v5693
  %v5795 = vpop.f32.mrb[0].mxu0
  %v5796 = vadd.f32 0.0, %v5795
  %v5797 = vpop.f32.mrb[0].mxu0
  %v5798 = vadd.f32 0.0, %v5797
  %v5799 = vpop.f32.mrb[0].mxu0
  %v5800 = vadd.f32 0.0, %v5799
  %v5801 = vpop.f32.mrb[0].mxu0
  %v5802 = vadd.f32 0.0, %v5801
  %5803 = vmatprep.mubr.bf16.mxu0 %v5697
  %5804 = vmatmul.mubr.bf16.gmra.mrb[0].mxu0 %v5696
  %v5805 = vpop.f32.mrb[0].mxu0
  %v5806 = vadd.f32 0.0, %v5805
  %v5807 = vpop.f32.mrb[0].mxu0
  %v5808 = vadd.f32 0.0, %v5807
  %v5809 = vpop.f32.mrb[0].mxu0
  %v5810 = vadd.f32 0.0, %v5809
  %v5811 = vpop.f32.mrb[0].mxu0
  %v5812 = vadd.f32 0.0, %v5811
  %5813 = vmatprep.mubr.bf16.mxu0 %v5700
  %5814 = vmatmul.mubr.bf16.gmra.mrb[0].mxu0 %v5699
  %v5815 = vpop.f32.mrb[0].mxu0
  %v5816 = vadd.f32 0.0, %v5815
  %v5817 = vpop.f32.mrb[0].mxu0
  %v5818 = vadd.f32 0.0, %v5817
  %v5819 = vpop.f32.mrb[0].mxu0
  %v5820 = vpop.f32.mrb[0].mxu0
  %5821 = vdwg.mxu0
  %5822 = vmatprep.subr.bf16.mxu0 %v5736
  %5823 = vmatpush1.bf16.msra.mxu0 %v5735
  %5824 = vmatprep.subr.bf16.mxu0 %v5738
  %5825 = vmatpush1.bf16.msra.mxu0 %v5737
  %5826 = vmatprep.subr.bf16.mxu0 0
  %5827 = vmatpush1.bf16.msra.mxu0 0
  %5828 = vmatprep.subr.bf16.mxu0 0
  %5829 = vmatpush1.bf16.msra.mxu0 0
  %5830 = vmatprep.subr.bf16.mxu0 0
  %5831 = vmatpush1.bf16.msra.mxu0 0
  %5832 = vmatprep.subr.bf16.mxu0 0
  %5833 = vmatpush1.bf16.msra.mxu0 0
  %5834 = vmatprep.subr.bf16.mxu0 0
  %5835 = vmatpush1.bf16.msra.mxu0 0
  %5836 = vmatprep.subr.bf16.mxu0 0
  %5837 = vmatpush1.bf16.msra.mxu0 0
  %5838 = vmatprep.subr.bf16.mxu0 0
  %5839 = vmatpush1.bf16.msra.mxu0 0
  %5840 = vmatprep.subr.bf16.mxu0 0
  %5841 = vmatpush1.bf16.msra.mxu0 0
  %5842 = vmatprep.subr.bf16.mxu0 0
  %5843 = vmatpush1.bf16.msra.mxu0 0
  %5844 = vmatprep.subr.bf16.mxu0 0
  %5845 = vmatpush1.bf16.msra.mxu0 0
  %5846 = vmatprep.subr.bf16.mxu0 0
  %5847 = vmatpush1.bf16.msra.mxu0 0
  %5848 = vmatprep.subr.bf16.mxu0 0
  %5849 = vmatpush1.bf16.msra.mxu0 0
  %5850 = vmatprep.subr.bf16.mxu0 0
  %5851 = vmatpush1.bf16.msra.mxu0 0
  %5852 = vmatprep.subr.bf16.mxu0 0
  %5853 = vmatpush1.bf16.msra.mxu0 0
  %5854 = vmatprep.mubr.bf16.mxu0 0
  %5855 = vmatmul.mubr.bf16.gmra.mrb[0].mxu0 %v5740
  %v5856 = vpop.f32.mrb[0].mxu0
  %v5857 = vadd.f32 %v5786, %v5856
  %v5858 = vpop.f32.mrb[0].mxu0
  %v5859 = vadd.f32 %v5788, %v5858
  %v5860 = vpop.f32.mrb[0].mxu0
  %v5861 = vadd.f32 %v5790, %v5860
  %v5862 = vpop.f32.mrb[0].mxu0
  %v5863 = vadd.f32 %v5792, %v5862
  %5864 = vmatprep.mubr.bf16.mxu0 0
  %5865 = vmatmul.mubr.bf16.gmra.mrb[0].mxu0 %v5743
  %v5866 = vpop.f32.mrb[0].mxu0
  %v5867 = vadd.f32 %v5796, %v5866
  %v5868 = vpop.f32.mrb[0].mxu0
  %v5869 = vadd.f32 %v5798, %v5868
  %v5870 = vpop.f32.mrb[0].mxu0
  %v5871 = vadd.f32 %v5800, %v5870
  %v5872 = vpop.f32.mrb[0].mxu0
  %v5873 = vadd.f32 %v5802, %v5872
  %5874 = vmatprep.mubr.bf16.mxu0 0
  %5875 = vmatmul.mubr.bf16.gmra.mrb[0].mxu0 %v5746
  %v5876 = vpop.f32.mrb[0].mxu0
  %v5877 = vadd.f32 %v5806, %v5876
  %v5878 = vpop.f32.mrb[0].mxu0
  %v5879 = vadd.f32 %v5808, %v5878
  %v5880 = vpop.f32.mrb[0].mxu0
  %v5881 = vadd.f32 %v5810, %v5880
  %v5882 = vpop.f32.mrb[0].mxu0
  %v5883 = vadd.f32 %v5812, %v5882
  %5884 = vmatprep.mubr.bf16.mxu0 0
  %5885 = vmatmul.mubr.bf16.gmra.mrb[0].mxu0 %v5749
  %v5886 = vpop.f32.mrb[0].mxu0
  %v5887 = vadd.f32 %v5816, %v5886
  %v5888 = vpop.f32.mrb[0].mxu0
  %v5889 = vadd.f32 %v5818, %v5888
  %v5890 = vpop.f32.mrb[0].mxu0
  %v5891 = vpop.f32.mrb[0].mxu0
  %5892 = vdwg.mxu0
  %v5894 = vsel %vm4199, %v5623, 0
  %v5897 = vsel %vm4199, %v5626, 0
  %v5900 = vsel %vm4199, %v5629, 0
  %v5903 = vsel %vm4199, %v5632, 0
  %5905 = vmatprep.subr.bf16.mxu0 %v5634
  %5906 = vmatpush1.bf16.msra.mxu0 %v5633
  %5907 = vmatprep.subr.bf16.mxu0 %v5636
  %5908 = vmatpush1.bf16.msra.mxu0 %v5635
  %5909 = vmatprep.subr.bf16.mxu0 %v5638
  %5910 = vmatpush1.bf16.msra.mxu0 %v5637
  %5911 = vmatprep.subr.bf16.mxu0 %v5640
  %5912 = vmatpush1.bf16.msra.mxu0 %v5639
  %5913 = vmatprep.subr.bf16.mxu0 %v5642
  %5914 = vmatpush1.bf16.msra.mxu0 %v5641
  %5915 = vmatprep.subr.bf16.mxu0 %v5644
  %5916 = vmatpush1.bf16.msra.mxu0 %v5643
  %5917 = vmatprep.subr.bf16.mxu0 %v5646
  %5918 = vmatpush1.bf16.msra.mxu0 %v5645
  %5919 = vmatprep.subr.bf16.mxu0 %v5648
  %5920 = vmatpush1.bf16.msra.mxu0 %v5647
  %5921 = vmatprep.subr.bf16.mxu0 %v5650
  %5922 = vmatpush1.bf16.msra.mxu0 %v5649
  %5923 = vmatprep.subr.bf16.mxu0 %v5652
  %5924 = vmatpush1.bf16.msra.mxu0 %v5651
  %5925 = vmatprep.subr.bf16.mxu0 %v5654
  %5926 = vmatpush1.bf16.msra.mxu0 %v5653
  %5927 = vmatprep.subr.bf16.mxu0 %v5656
  %5928 = vmatpush1.bf16.msra.mxu0 %v5655
  %5929 = vmatprep.subr.bf16.mxu0 %v5658
  %5930 = vmatpush1.bf16.msra.mxu0 %v5657
  %5931 = vmatprep.subr.bf16.mxu0 %v5660
  %5932 = vmatpush1.bf16.msra.mxu0 %v5659
  %5933 = vmatprep.subr.bf16.mxu0 %v5662
  %5934 = vmatpush1.bf16.msra.mxu0 %v5661
  %5935 = vmatprep.subr.bf16.mxu0 %v5664
  %5936 = vmatpush1.bf16.msra.mxu0 %v5663
  %5937 = vmatprep.mubr.bf16.mxu0 %v5622
  %5938 = vmatmul.mubr.bf16.gmra.mrb[0].mxu0 %v5621
  %v5939 = vpop.f32.mrb[0].mxu0
  %v5940 = vadd.f32 %v5857, %v5939
  %v5941 = vpop.f32.mrb[0].mxu0
  %v5942 = vadd.f32 %v5859, %v5941
  %v5943 = vpop.f32.mrb[0].mxu0
  %v5944 = vadd.f32 %v5861, %v5943
  %v5945 = vpop.f32.mrb[0].mxu0
  %v5946 = vadd.f32 %v5863, %v5945
  %5947 = vmatprep.mubr.bf16.mxu0 %v5625
  %5948 = vmatmul.mubr.bf16.gmra.mrb[0].mxu0 %v5624
  %v5949 = vpop.f32.mrb[0].mxu0
  %v5950 = vadd.f32 %v5867, %v5949
  %v5951 = vpop.f32.mrb[0].mxu0
  %v5952 = vadd.f32 %v5869, %v5951
  %v5953 = vpop.f32.mrb[0].mxu0
  %v5954 = vadd.f32 %v5871, %v5953
  %v5955 = vpop.f32.mrb[0].mxu0
  %v5956 = vadd.f32 %v5873, %v5955
  %5957 = vmatprep.mubr.bf16.mxu0 %v5628
  %5958 = vmatmul.mubr.bf16.gmra.mrb[0].mxu0 %v5627
  %v5959 = vpop.f32.mrb[0].mxu0
  %v5960 = vadd.f32 %v5877, %v5959
  %v5961 = vpop.f32.mrb[0].mxu0
  %v5962 = vadd.f32 %v5879, %v5961
  %v5963 = vpop.f32.mrb[0].mxu0
  %v5964 = vadd.f32 %v5881, %v5963
  %v5965 = vpop.f32.mrb[0].mxu0
  %v5966 = vadd.f32 %v5883, %v5965
  %5967 = vmatprep.mubr.bf16.mxu0 %v5631
  %5968 = vmatmul.mubr.bf16.gmra.mrb[0].mxu0 %v5630
  %v5969 = vpop.f32.mrb[0].mxu0
  %v5970 = vadd.f32 %v5887, %v5969
  %v5971 = vpop.f32.mrb[0].mxu0
  %v5972 = vadd.f32 %v5889, %v5971
  %v5973 = vpop.f32.mrb[0].mxu0
  %v5974 = vpop.f32.mrb[0].mxu0
  %5975 = vdwg.mxu0
  %5976 = vmatprep.subr.bf16.mxu0 %v5666
  %5977 = vmatpush1.bf16.msra.mxu0 %v5665
  %5978 = vmatprep.subr.bf16.mxu0 %v5668
  %5979 = vmatpush1.bf16.msra.mxu0 %v5667
  %5980 = vmatprep.subr.bf16.mxu0 0
  %5981 = vmatpush1.bf16.msra.mxu0 0
  %5982 = vmatprep.subr.bf16.mxu0 0
  %5983 = vmatpush1.bf16.msra.mxu0 0
  %5984 = vmatprep.subr.bf16.mxu0 0
  %5985 = vmatpush1.bf16.msra.mxu0 0
  %5986 = vmatprep.subr.bf16.mxu0 0
  %5987 = vmatpush1.bf16.msra.mxu0 0
  %5988 = vmatprep.subr.bf16.mxu0 0
  %5989 = vmatpush1.bf16.msra.mxu0 0
  %5990 = vmatprep.subr.bf16.mxu0 0
  %5991 = vmatpush1.bf16.msra.mxu0 0
  %5992 = vmatprep.subr.bf16.mxu0 0
  %5993 = vmatpush1.bf16.msra.mxu0 0
  %5994 = vmatprep.subr.bf16.mxu0 0
  %5995 = vmatpush1.bf16.msra.mxu0 0
  %5996 = vmatprep.subr.bf16.mxu0 0
  %5997 = vmatpush1.bf16.msra.mxu0 0
  %5998 = vmatprep.subr.bf16.mxu0 0
  %5999 = vmatpush1.bf16.msra.mxu0 0
  %6000 = vmatprep.subr.bf16.mxu0 0
  %6001 = vmatpush1.bf16.msra.mxu0 0
  %6002 = vmatprep.subr.bf16.mxu0 0
  %6003 = vmatpush1.bf16.msra.mxu0 0
  %6004 = vmatprep.subr.bf16.mxu0 0
  %6005 = vmatpush1.bf16.msra.mxu0 0
  %6006 = vmatprep.subr.bf16.mxu0 0
  %6007 = vmatpush1.bf16.msra.mxu0 0
  %6008 = vmatprep.mubr.bf16.mxu0 0
  %6009 = vmatmul.mubr.bf16.gmra.mrb[0].mxu0 %v5894
  %v6010 = vpop.f32.mrb[0].mxu0
  %v6011 = vadd.f32 %v5940, %v6010
  %v6012 = vpop.f32.mrb[0].mxu0
  %v6013 = vadd.f32 %v5942, %v6012
  %v6014 = vpop.f32.mrb[0].mxu0
  %v6015 = vadd.f32 %v5944, %v6014
  %v6016 = vpop.f32.mrb[0].mxu0
  %v6017 = vadd.f32 %v5946, %v6016
  %6018 = vmatprep.mubr.bf16.mxu0 0
  %6019 = vmatmul.mubr.bf16.gmra.mrb[0].mxu0 %v5897
  %v6020 = vpop.f32.mrb[0].mxu0
  %v6021 = vadd.f32 %v5950, %v6020
  %v6022 = vpop.f32.mrb[0].mxu0
  %v6023 = vadd.f32 %v5952, %v6022
  %v6024 = vpop.f32.mrb[0].mxu0
  %v6025 = vadd.f32 %v5954, %v6024
  %v6026 = vpop.f32.mrb[0].mxu0
  %v6027 = vadd.f32 %v5956, %v6026
  %6028 = vmatprep.mubr.bf16.mxu0 0
  %6029 = vmatmul.mubr.bf16.gmra.mrb[0].mxu0 %v5900
  %v6030 = vpop.f32.mrb[0].mxu0
  %v6031 = vadd.f32 %v5960, %v6030
  %v6032 = vpop.f32.mrb[0].mxu0
  %v6033 = vadd.f32 %v5962, %v6032
  %v6034 = vpop.f32.mrb[0].mxu0
  %v6035 = vadd.f32 %v5964, %v6034
  %v6036 = vpop.f32.mrb[0].mxu0
  %v6037 = vadd.f32 %v5966, %v6036
  %6038 = vmatprep.mubr.bf16.mxu0 0
  %6039 = vmatmul.mubr.bf16.gmra.mrb[0].mxu0 %v5903
  %v6040 = vpop.f32.mrb[0].mxu0
  %v6041 = vadd.f32 %v5970, %v6040
  %v6042 = vpop.f32.mrb[0].mxu0
  %v6043 = vadd.f32 %v5972, %v6042
  %v6044 = vpop.f32.mrb[0].mxu0
  %v6045 = vpop.f32.mrb[0].mxu0
  %6046 = vdwg.mxu0
  %v6047 = vld [vmem:[#allocation2 + $0x18] sm:$0xff]
  %v6048 = vld [vmem:[#allocation2 + $0x20] sm:$0xff]
  %v6049 = vld [vmem:[#allocation2 + $0x28] sm:$0xff]
  %v6050 = vld [vmem:[#allocation2 + $0x30] sm:$0xff]
  %v6051 = vld [vmem:[#allocation2 + $0x38] sm:$0xff]
  %v6052 = vld [vmem:[#allocation2 + $0x40] sm:$0xff]
  %v6053 = vld [vmem:[#allocation2 + $0x48] sm:$0xff]
  %v6054 = vld [vmem:[#allocation2 + $0x50] sm:$0xff]
  %v6055 = vld [vmem:[#allocation2 + $0x58] sm:$0xff]
  %v6056 = vld [vmem:[#allocation2 + $0x60] sm:$0xff]
  %v6057 = vld [vmem:[#allocation2 + $0x68] sm:$0xff]
  %v6058 = vld [vmem:[#allocation2 + $0x70] sm:$0xff]
  %v6059 = vld [vmem:[#allocation2 + $0x78] sm:$0xff]
  %v6060 = vld [vmem:[#allocation2 + $0x80] sm:$0xff]
  %v6061 = vld [vmem:[#allocation2 + $0x88] sm:$0xff]
  %v6062 = vld [vmem:[#allocation2 + $0x90] sm:$0xff]
  %v6063 = vld [vmem:[#allocation2 + $0x98] sm:$0xff]
  %v6064 = vld [vmem:[#allocation2 + $0xa0] sm:$0xff]
  %v6065 = vld [vmem:[#allocation2 + $0xa8] sm:$0xff]
  %v6066 = vld [vmem:[#allocation2 + $0xb0] sm:$0xff]
  %v6067 = vld [vmem:[#allocation2 + $0xb8] sm:$0xff]
  %v6068 = vpack.c.bf16 %v6050, %v6047
  %v6069 = vpack.c.bf16 %v6051, %v6048
  %v6070 = vpack.c.bf16 %v6052, %v6049
  %v6071 = vpack.c.bf16 %v6056, %v6053
  %v6072 = vpack.c.bf16 %v6057, %v6054
  %v6073 = vpack.c.bf16 %v6058, %v6055
  %v6074 = vpack.c.bf16 %v6062, %v6059
  %v6075 = vpack.c.bf16 %v6063, %v6060
  %v6076 = vpack.c.bf16 %v6064, %v6061
  %v6077 = vpack.c.bf16 %v6065, %v6065
  %v6078 = vpack.c.bf16 %v6066, %v6066
  %v6079 = vpack.c.bf16 %v6067, %v6067
  %s6080 = scalar_lea.vmem [#allocation4], 576
  %v6081 = vld [vmem:[%s6080] sm:$0xff]
  %v6082 = vld [vmem:[%s6080 + $0x8] sm:$0xff]
  %v6083 = vld [vmem:[%s6080 + $0x10] sm:$0xff]
  %v6084 = vld [vmem:[%s6080 + $0x18] sm:$0xff]
  %v6085 = vld [vmem:[%s6080 + $0x20] sm:$0xff]
  %v6086 = vld [vmem:[%s6080 + $0x28] sm:$0xff]
  %v6087 = vld [vmem:[%s6080 + $0x30] sm:$0xff]
  %v6088 = vld [vmem:[%s6080 + $0x38] sm:$0xff]
  %v6089 = vld [vmem:[%s6080 + $0x40] sm:$0xff]
  %v6090 = vld [vmem:[%s6080 + $0x48] sm:$0xff]
  %v6091 = vld [vmem:[%s6080 + $0x50] sm:$0xff]
  %v6092 = vld [vmem:[%s6080 + $0x58] sm:$0xff]
  %v6093 = vld [vmem:[%s6080 + $0x60] sm:$0xff]
  %v6094 = vld [vmem:[%s6080 + $0x68] sm:$0xff]
  %v6095 = vld [vmem:[%s6080 + $0x70] sm:$0xff]
  %v6096 = vld [vmem:[%s6080 + $0x78] sm:$0xff]
  %v6097 = vld [vmem:[%s6080 + $0x80] sm:$0xff]
  %v6098 = vld [vmem:[%s6080 + $0x88] sm:$0xff]
  %v6099 = vld [vmem:[%s6080 + $0x90] sm:$0xff]
  %v6100 = vld [vmem:[%s6080 + $0x98] sm:$0xff]
  %v6101 = vld [vmem:[%s6080 + $0xa0] sm:$0xff]
  %v6102 = vld [vmem:[%s6080 + $0xa8] sm:$0xff]
  %v6103 = vld [vmem:[%s6080 + $0xb0] sm:$0xff]
  %v6104 = vld [vmem:[%s6080 + $0xb8] sm:$0xff]
  %v6105 = vld [vmem:[%s6080 + $0xc0] sm:$0xff]
  %v6106 = vld [vmem:[%s6080 + $0xc8] sm:$0xff]
  %v6107 = vld [vmem:[%s6080 + $0xd0] sm:$0xff]
  %v6108 = vld [vmem:[%s6080 + $0xd8] sm:$0xff]
  %v6109 = vld [vmem:[%s6080 + $0xe0] sm:$0xff]
  %v6110 = vld [vmem:[%s6080 + $0xe8] sm:$0xff]
  %v6111 = vld [vmem:[%s6080 + $0xf0] sm:$0xff]
  %v6112 = vld [vmem:[%s6080 + $0xf8] sm:$0xff]
  %v6113 = vld [vmem:[%s6080 + $0x100] sm:$0xff]
  %v6114 = vld [vmem:[%s6080 + $0x108] sm:$0xff]
  %v6115 = vld [vmem:[%s6080 + $0x110] sm:$0xff]
  %v6116 = vld [vmem:[%s6080 + $0x118] sm:$0xff]
  %v6118 = vsel %vm4199, %v6070, 0
  %v6121 = vsel %vm4199, %v6073, 0
  %v6124 = vsel %vm4199, %v6076, 0
  %v6127 = vsel %vm4199, %v6079, 0
  %6129 = vmatprep.subr.bf16.mxu0 %v6082
  %6130 = vmatpush1.bf16.msra.mxu0 %v6081
  %6131 = vmatprep.subr.bf16.mxu0 %v6084
  %6132 = vmatpush1.bf16.msra.mxu0 %v6083
  %6133 = vmatprep.subr.bf16.mxu0 %v6086
  %6134 = vmatpush1.bf16.msra.mxu0 %v6085
  %6135 = vmatprep.subr.bf16.mxu0 %v6088
  %6136 = vmatpush1.bf16.msra.mxu0 %v6087
  %6137 = vmatprep.subr.bf16.mxu0 %v6090
  %6138 = vmatpush1.bf16.msra.mxu0 %v6089
  %6139 = vmatprep.subr.bf16.mxu0 %v6092
  %6140 = vmatpush1.bf16.msra.mxu0 %v6091
  %6141 = vmatprep.subr.bf16.mxu0 %v6094
  %6142 = vmatpush1.bf16.msra.mxu0 %v6093
  %6143 = vmatprep.subr.bf16.mxu0 %v6096
  %6144 = vmatpush1.bf16.msra.mxu0 %v6095
  %6145 = vmatprep.subr.bf16.mxu0 %v6098
  %6146 = vmatpush1.bf16.msra.mxu0 %v6097
  %6147 = vmatprep.subr.bf16.mxu0 %v6100
  %6148 = vmatpush1.bf16.msra.mxu0 %v6099
  %6149 = vmatprep.subr.bf16.mxu0 %v6102
  %6150 = vmatpush1.bf16.msra.mxu0 %v6101
  %6151 = vmatprep.subr.bf16.mxu0 %v6104
  %6152 = vmatpush1.bf16.msra.mxu0 %v6103
  %6153 = vmatprep.subr.bf16.mxu0 %v6106
  %6154 = vmatpush1.bf16.msra.mxu0 %v6105
  %6155 = vmatprep.subr.bf16.mxu0 %v6108
  %6156 = vmatpush1.bf16.msra.mxu0 %v6107
  %6157 = vmatprep.subr.bf16.mxu0 %v6110
  %6158 = vmatpush1.bf16.msra.mxu0 %v6109
  %6159 = vmatprep.subr.bf16.mxu0 %v6112
  %6160 = vmatpush1.bf16.msra.mxu0 %v6111
  %6161 = vmatprep.mubr.bf16.mxu0 %v6069
  %6162 = vmatmul.mubr.bf16.gmra.mrb[0].mxu0 %v6068
  %v6163 = vpop.f32.mrb[0].mxu0
  %v6164 = vadd.f32 0.0, %v6163
  %v6165 = vpop.f32.mrb[0].mxu0
  %v6166 = vadd.f32 0.0, %v6165
  %v6167 = vpop.f32.mrb[0].mxu0
  %v6168 = vadd.f32 0.0, %v6167
  %v6169 = vpop.f32.mrb[0].mxu0
  %v6170 = vadd.f32 0.0, %v6169
  %6171 = vmatprep.mubr.bf16.mxu0 %v6072
  %6172 = vmatmul.mubr.bf16.gmra.mrb[0].mxu0 %v6071
  %v6173 = vpop.f32.mrb[0].mxu0
  %v6174 = vadd.f32 0.0, %v6173
  %v6175 = vpop.f32.mrb[0].mxu0
  %v6176 = vadd.f32 0.0, %v6175
  %v6177 = vpop.f32.mrb[0].mxu0
  %v6178 = vadd.f32 0.0, %v6177
  %v6179 = vpop.f32.mrb[0].mxu0
  %v6180 = vadd.f32 0.0, %v6179
  %6181 = vmatprep.mubr.bf16.mxu0 %v6075
  %6182 = vmatmul.mubr.bf16.gmra.mrb[0].mxu0 %v6074
  %v6183 = vpop.f32.mrb[0].mxu0
  %v6184 = vadd.f32 0.0, %v6183
  %v6185 = vpop.f32.mrb[0].mxu0
  %v6186 = vadd.f32 0.0, %v6185
  %v6187 = vpop.f32.mrb[0].mxu0
  %v6188 = vadd.f32 0.0, %v6187
  %v6189 = vpop.f32.mrb[0].mxu0
  %v6190 = vadd.f32 0.0, %v6189
  %6191 = vmatprep.mubr.bf16.mxu0 %v6078
  %6192 = vmatmul.mubr.bf16.gmra.mrb[0].mxu0 %v6077
  %v6193 = vpop.f32.mrb[0].mxu0
  %v6194 = vadd.f32 0.0, %v6193
  %v6195 = vpop.f32.mrb[0].mxu0
  %v6196 = vadd.f32 0.0, %v6195
  %v6197 = vpop.f32.mrb[0].mxu0
  %v6198 = vpop.f32.mrb[0].mxu0
  %6199 = vdwg.mxu0
  %6200 = vmatprep.subr.bf16.mxu0 %v6114
  %6201 = vmatpush1.bf16.msra.mxu0 %v6113
  %6202 = vmatprep.subr.bf16.mxu0 %v6116
  %6203 = vmatpush1.bf16.msra.mxu0 %v6115
  %6204 = vmatprep.subr.bf16.mxu0 0
  %6205 = vmatpush1.bf16.msra.mxu0 0
  %6206 = vmatprep.subr.bf16.mxu0 0
  %6207 = vmatpush1.bf16.msra.mxu0 0
  %6208 = vmatprep.subr.bf16.mxu0 0
  %6209 = vmatpush1.bf16.msra.mxu0 0
  %6210 = vmatprep.subr.bf16.mxu0 0
  %6211 = vmatpush1.bf16.msra.mxu0 0
  %6212 = vmatprep.subr.bf16.mxu0 0
  %6213 = vmatpush1.bf16.msra.mxu0 0
  %6214 = vmatprep.subr.bf16.mxu0 0
  %6215 = vmatpush1.bf16.msra.mxu0 0
  %6216 = vmatprep.subr.bf16.mxu0 0
  %6217 = vmatpush1.bf16.msra.mxu0 0
  %6218 = vmatprep.subr.bf16.mxu0 0
  %6219 = vmatpush1.bf16.msra.mxu0 0
  %6220 = vmatprep.subr.bf16.mxu0 0
  %6221 = vmatpush1.bf16.msra.mxu0 0
  %6222 = vmatprep.subr.bf16.mxu0 0
  %6223 = vmatpush1.bf16.msra.mxu0 0
  %6224 = vmatprep.subr.bf16.mxu0 0
  %6225 = vmatpush1.bf16.msra.mxu0 0
  %6226 = vmatprep.subr.bf16.mxu0 0
  %6227 = vmatpush1.bf16.msra.mxu0 0
  %6228 = vmatprep.subr.bf16.mxu0 0
  %6229 = vmatpush1.bf16.msra.mxu0 0
  %6230 = vmatprep.subr.bf16.mxu0 0
  %6231 = vmatpush1.bf16.msra.mxu0 0
  %6232 = vmatprep.mubr.bf16.mxu0 0
  %6233 = vmatmul.mubr.bf16.gmra.mrb[0].mxu0 %v6118
  %v6234 = vpop.f32.mrb[0].mxu0
  %v6235 = vadd.f32 %v6164, %v6234
  %v6236 = vpop.f32.mrb[0].mxu0
  %v6237 = vadd.f32 %v6166, %v6236
  %v6238 = vpop.f32.mrb[0].mxu0
  %v6239 = vadd.f32 %v6168, %v6238
  %v6240 = vpop.f32.mrb[0].mxu0
  %v6241 = vadd.f32 %v6170, %v6240
  %6242 = vmatprep.mubr.bf16.mxu0 0
  %6243 = vmatmul.mubr.bf16.gmra.mrb[0].mxu0 %v6121
  %v6244 = vpop.f32.mrb[0].mxu0
  %v6245 = vadd.f32 %v6174, %v6244
  %v6246 = vpop.f32.mrb[0].mxu0
  %v6247 = vadd.f32 %v6176, %v6246
  %v6248 = vpop.f32.mrb[0].mxu0
  %v6249 = vadd.f32 %v6178, %v6248
  %v6250 = vpop.f32.mrb[0].mxu0
  %v6251 = vadd.f32 %v6180, %v6250
  %6252 = vmatprep.mubr.bf16.mxu0 0
  %6253 = vmatmul.mubr.bf16.gmra.mrb[0].mxu0 %v6124
  %v6254 = vpop.f32.mrb[0].mxu0
  %v6255 = vadd.f32 %v6184, %v6254
  %v6256 = vpop.f32.mrb[0].mxu0
  %v6257 = vadd.f32 %v6186, %v6256
  %v6258 = vpop.f32.mrb[0].mxu0
  %v6259 = vadd.f32 %v6188, %v6258
  %v6260 = vpop.f32.mrb[0].mxu0
  %v6261 = vadd.f32 %v6190, %v6260
  %6262 = vmatprep.mubr.bf16.mxu0 0
  %6263 = vmatmul.mubr.bf16.gmra.mrb[0].mxu0 %v6127
  %v6264 = vpop.f32.mrb[0].mxu0
  %v6265 = vadd.f32 %v6194, %v6264
  %v6266 = vpop.f32.mrb[0].mxu0
  %v6267 = vadd.f32 %v6196, %v6266
  %v6268 = vpop.f32.mrb[0].mxu0
  %v6269 = vpop.f32.mrb[0].mxu0
  %6270 = vdwg.mxu0
  %v6271 = vadd.f32 %v6011, %v6235
  %v6272 = vadd.f32 %v6013, %v6237
  %v6273 = vadd.f32 %v6015, %v6239
  %v6274 = vadd.f32 %v6017, %v6241
  %v6275 = vadd.f32 %v6021, %v6245
  %v6276 = vadd.f32 %v6023, %v6247
  %v6277 = vadd.f32 %v6025, %v6249
  %v6278 = vadd.f32 %v6027, %v6251
  %v6279 = vadd.f32 %v6031, %v6255
  %v6280 = vadd.f32 %v6033, %v6257
  %v6281 = vadd.f32 %v6035, %v6259
  %v6282 = vadd.f32 %v6037, %v6261
  %v6283 = vadd.f32 %v6041, %v6265
  %v6284 = vadd.f32 %v6043, %v6267
  %v6285 = vld [vmem:[#allocation2 + $0xf0] sm:$0xff]
  %v6286 = vld [vmem:[#allocation2 + $0xf8] sm:$0xff]
  %v6287 = vld [vmem:[#allocation2 + $0x100] sm:$0xff]
  %v6288 = vld [vmem:[#allocation2 + $0x108] sm:$0xff]
  %v6289 = vld [vmem:[#allocation2 + $0x110] sm:$0xff]
  %v6290 = vld [vmem:[#allocation2 + $0x118] sm:$0xff]
  %v6291 = vld [vmem:[#allocation2 + $0x120] sm:$0xff]
  %v6292 = vld [vmem:[#allocation2 + $0x128] sm:$0xff]
  %v6293 = vld [vmem:[#allocation2 + $0x130] sm:$0xff]
  %v6294 = vld [vmem:[#allocation2 + $0x138] sm:$0xff]
  %v6295 = vld [vmem:[#allocation2 + $0x140] sm:$0xff]
  %v6296 = vld [vmem:[#allocation2 + $0x148] sm:$0xff]
  %v6297 = vld [vmem:[#allocation2 + $0x150] sm:$0xff]
  %v6298 = vld [vmem:[#allocation2 + $0x158] sm:$0xff]
  %v6299 = vld [vmem:[#allocation2 + $0x160] sm:$0xff]
  %v6300 = vld [vmem:[#allocation2 + $0x168] sm:$0xff]
  %v6301 = vld [vmem:[#allocation2 + $0x170] sm:$0xff]
  %v6302 = vld [vmem:[#allocation2 + $0x178] sm:$0xff]
  %v6303 = vld [vmem:[#allocation2 + $0x180] sm:$0xff]
  %v6304 = vld [vmem:[#allocation2 + $0x188] sm:$0xff]
  %v6305 = vld [vmem:[#allocation2 + $0x190] sm:$0xff]
  %v6306 = vpack.c.bf16 %v6288, %v6285
  %v6307 = vpack.c.bf16 %v6289, %v6286
  %v6308 = vpack.c.bf16 %v6290, %v6287
  %v6309 = vpack.c.bf16 %v6294, %v6291
  %v6310 = vpack.c.bf16 %v6295, %v6292
  %v6311 = vpack.c.bf16 %v6296, %v6293
  %v6312 = vpack.c.bf16 %v6300, %v6297
  %v6313 = vpack.c.bf16 %v6301, %v6298
  %v6314 = vpack.c.bf16 %v6302, %v6299
  %v6315 = vpack.c.bf16 %v6303, %v6303
  %v6316 = vpack.c.bf16 %v6304, %v6304
  %v6317 = vpack.c.bf16 %v6305, %v6305
  %s6318 = scalar_lea.vmem [#allocation4], 864
  %v6319 = vld [vmem:[%s6318] sm:$0xff]
  %v6320 = vld [vmem:[%s6318 + $0x8] sm:$0xff]
  %v6321 = vld [vmem:[%s6318 + $0x10] sm:$0xff]
  %v6322 = vld [vmem:[%s6318 + $0x18] sm:$0xff]
  %v6323 = vld [vmem:[%s6318 + $0x20] sm:$0xff]
  %v6324 = vld [vmem:[%s6318 + $0x28] sm:$0xff]
  %v6325 = vld [vmem:[%s6318 + $0x30] sm:$0xff]
  %v6326 = vld [vmem:[%s6318 + $0x38] sm:$0xff]
  %v6327 = vld [vmem:[%s6318 + $0x40] sm:$0xff]
  %v6328 = vld [vmem:[%s6318 + $0x48] sm:$0xff]
  %v6329 = vld [vmem:[%s6318 + $0x50] sm:$0xff]
  %v6330 = vld [vmem:[%s6318 + $0x58] sm:$0xff]
  %v6331 = vld [vmem:[%s6318 + $0x60] sm:$0xff]
  %v6332 = vld [vmem:[%s6318 + $0x68] sm:$0xff]
  %v6333 = vld [vmem:[%s6318 + $0x70] sm:$0xff]
  %v6334 = vld [vmem:[%s6318 + $0x78] sm:$0xff]
  %v6335 = vld [vmem:[%s6318 + $0x80] sm:$0xff]
  %v6336 = vld [vmem:[%s6318 + $0x88] sm:$0xff]
  %v6337 = vld [vmem:[%s6318 + $0x90] sm:$0xff]
  %v6338 = vld [vmem:[%s6318 + $0x98] sm:$0xff]
  %v6339 = vld [vmem:[%s6318 + $0xa0] sm:$0xff]
  %v6340 = vld [vmem:[%s6318 + $0xa8] sm:$0xff]
  %v6341 = vld [vmem:[%s6318 + $0xb0] sm:$0xff]
  %v6342 = vld [vmem:[%s6318 + $0xb8] sm:$0xff]
  %v6343 = vld [vmem:[%s6318 + $0xc0] sm:$0xff]
  %v6344 = vld [vmem:[%s6318 + $0xc8] sm:$0xff]
  %v6345 = vld [vmem:[%s6318 + $0xd0] sm:$0xff]
  %v6346 = vld [vmem:[%s6318 + $0xd8] sm:$0xff]
  %v6347 = vld [vmem:[%s6318 + $0xe0] sm:$0xff]
  %v6348 = vld [vmem:[%s6318 + $0xe8] sm:$0xff]
  %v6349 = vld [vmem:[%s6318 + $0xf0] sm:$0xff]
  %v6350 = vld [vmem:[%s6318 + $0xf8] sm:$0xff]
  %v6351 = vld [vmem:[%s6318 + $0x100] sm:$0xff]
  %v6352 = vld [vmem:[%s6318 + $0x108] sm:$0xff]
  %v6353 = vld [vmem:[%s6318 + $0x110] sm:$0xff]
  %v6354 = vld [vmem:[%s6318 + $0x118] sm:$0xff]
  %v6356 = vsel %vm4199, %v6308, 0
  %v6359 = vsel %vm4199, %v6311, 0
  %v6362 = vsel %vm4199, %v6314, 0
  %v6365 = vsel %vm4199, %v6317, 0
  %6367 = vmatprep.subr.bf16.mxu0 %v6320
  %6368 = vmatpush1.bf16.msra.mxu0 %v6319
  %6369 = vmatprep.subr.bf16.mxu0 %v6322
  %6370 = vmatpush1.bf16.msra.mxu0 %v6321
  %6371 = vmatprep.subr.bf16.mxu0 %v6324
  %6372 = vmatpush1.bf16.msra.mxu0 %v6323
  %6373 = vmatprep.subr.bf16.mxu0 %v6326
  %6374 = vmatpush1.bf16.msra.mxu0 %v6325
  %6375 = vmatprep.subr.bf16.mxu0 %v6328
  %6376 = vmatpush1.bf16.msra.mxu0 %v6327
  %6377 = vmatprep.subr.bf16.mxu0 %v6330
  %6378 = vmatpush1.bf16.msra.mxu0 %v6329
  %6379 = vmatprep.subr.bf16.mxu0 %v6332
  %6380 = vmatpush1.bf16.msra.mxu0 %v6331
  %6381 = vmatprep.subr.bf16.mxu0 %v6334
  %6382 = vmatpush1.bf16.msra.mxu0 %v6333
  %6383 = vmatprep.subr.bf16.mxu0 %v6336
  %6384 = vmatpush1.bf16.msra.mxu0 %v6335
  %6385 = vmatprep.subr.bf16.mxu0 %v6338
  %6386 = vmatpush1.bf16.msra.mxu0 %v6337
  %6387 = vmatprep.subr.bf16.mxu0 %v6340
  %6388 = vmatpush1.bf16.msra.mxu0 %v6339
  %6389 = vmatprep.subr.bf16.mxu0 %v6342
  %6390 = vmatpush1.bf16.msra.mxu0 %v6341
  %6391 = vmatprep.subr.bf16.mxu0 %v6344
  %6392 = vmatpush1.bf16.msra.mxu0 %v6343
  %6393 = vmatprep.subr.bf16.mxu0 %v6346
  %6394 = vmatpush1.bf16.msra.mxu0 %v6345
  %6395 = vmatprep.subr.bf16.mxu0 %v6348
  %6396 = vmatpush1.bf16.msra.mxu0 %v6347
  %6397 = vmatprep.subr.bf16.mxu0 %v6350
  %6398 = vmatpush1.bf16.msra.mxu0 %v6349
  %6399 = vmatprep.mubr.bf16.mxu0 %v6307
  %6400 = vmatmul.mubr.bf16.gmra.mrb[0].mxu0 %v6306
  %v6401 = vpop.f32.mrb[0].mxu0
  %v6402 = vadd.f32 0.0, %v6401
  %v6403 = vpop.f32.mrb[0].mxu0
  %v6404 = vadd.f32 0.0, %v6403
  %v6405 = vpop.f32.mrb[0].mxu0
  %v6406 = vadd.f32 0.0, %v6405
  %v6407 = vpop.f32.mrb[0].mxu0
  %v6408 = vadd.f32 0.0, %v6407
  %6409 = vmatprep.mubr.bf16.mxu0 %v6310
  %6410 = vmatmul.mubr.bf16.gmra.mrb[0].mxu0 %v6309
  %v6411 = vpop.f32.mrb[0].mxu0
  %v6412 = vadd.f32 0.0, %v6411
  %v6413 = vpop.f32.mrb[0].mxu0
  %v6414 = vadd.f32 0.0, %v6413
  %v6415 = vpop.f32.mrb[0].mxu0
  %v6416 = vadd.f32 0.0, %v6415
  %v6417 = vpop.f32.mrb[0].mxu0
  %v6418 = vadd.f32 0.0, %v6417
  %6419 = vmatprep.mubr.bf16.mxu0 %v6313
  %6420 = vmatmul.mubr.bf16.gmra.mrb[0].mxu0 %v6312
  %v6421 = vpop.f32.mrb[0].mxu0
  %v6422 = vadd.f32 0.0, %v6421
  %v6423 = vpop.f32.mrb[0].mxu0
  %v6424 = vadd.f32 0.0, %v6423
  %v6425 = vpop.f32.mrb[0].mxu0
  %v6426 = vadd.f32 0.0, %v6425
  %v6427 = vpop.f32.mrb[0].mxu0
  %v6428 = vadd.f32 0.0, %v6427
  %6429 = vmatprep.mubr.bf16.mxu0 %v6316
  %6430 = vmatmul.mubr.bf16.gmra.mrb[0].mxu0 %v6315
  %v6431 = vpop.f32.mrb[0].mxu0
  %v6432 = vadd.f32 0.0, %v6431
  %v6433 = vpop.f32.mrb[0].mxu0
  %v6434 = vadd.f32 0.0, %v6433
  %v6435 = vpop.f32.mrb[0].mxu0
  %v6436 = vpop.f32.mrb[0].mxu0
  %6437 = vdwg.mxu0
  %6438 = vmatprep.subr.bf16.mxu0 %v6352
  %6439 = vmatpush1.bf16.msra.mxu0 %v6351
  %6440 = vmatprep.subr.bf16.mxu0 %v6354
  %6441 = vmatpush1.bf16.msra.mxu0 %v6353
  %6442 = vmatprep.subr.bf16.mxu0 0
  %6443 = vmatpush1.bf16.msra.mxu0 0
  %6444 = vmatprep.subr.bf16.mxu0 0
  %6445 = vmatpush1.bf16.msra.mxu0 0
  %6446 = vmatprep.subr.bf16.mxu0 0
  %6447 = vmatpush1.bf16.msra.mxu0 0
  %6448 = vmatprep.subr.bf16.mxu0 0
  %6449 = vmatpush1.bf16.msra.mxu0 0
  %6450 = vmatprep.subr.bf16.mxu0 0
  %6451 = vmatpush1.bf16.msra.mxu0 0
  %6452 = vmatprep.subr.bf16.mxu0 0
  %6453 = vmatpush1.bf16.msra.mxu0 0
  %6454 = vmatprep.subr.bf16.mxu0 0
  %6455 = vmatpush1.bf16.msra.mxu0 0
  %6456 = vmatprep.subr.bf16.mxu0 0
  %6457 = vmatpush1.bf16.msra.mxu0 0
  %6458 = vmatprep.subr.bf16.mxu0 0
  %6459 = vmatpush1.bf16.msra.mxu0 0
  %6460 = vmatprep.subr.bf16.mxu0 0
  %6461 = vmatpush1.bf16.msra.mxu0 0
  %6462 = vmatprep.subr.bf16.mxu0 0
  %6463 = vmatpush1.bf16.msra.mxu0 0
  %6464 = vmatprep.subr.bf16.mxu0 0
  %6465 = vmatpush1.bf16.msra.mxu0 0
  %6466 = vmatprep.subr.bf16.mxu0 0
  %6467 = vmatpush1.bf16.msra.mxu0 0
  %6468 = vmatprep.subr.bf16.mxu0 0
  %6469 = vmatpush1.bf16.msra.mxu0 0
  %6470 = vmatprep.mubr.bf16.mxu0 0
  %6471 = vmatmul.mubr.bf16.gmra.mrb[0].mxu0 %v6356
  %v6472 = vpop.f32.mrb[0].mxu0
  %v6473 = vadd.f32 %v6402, %v6472
  %v6474 = vpop.f32.mrb[0].mxu0
  %v6475 = vadd.f32 %v6404, %v6474
  %v6476 = vpop.f32.mrb[0].mxu0
  %v6477 = vadd.f32 %v6406, %v6476
  %v6478 = vpop.f32.mrb[0].mxu0
  %v6479 = vadd.f32 %v6408, %v6478
  %6480 = vmatprep.mubr.bf16.mxu0 0
  %6481 = vmatmul.mubr.bf16.gmra.mrb[0].mxu0 %v6359
  %v6482 = vpop.f32.mrb[0].mxu0
  %v6483 = vadd.f32 %v6412, %v6482
  %v6484 = vpop.f32.mrb[0].mxu0
  %v6485 = vadd.f32 %v6414, %v6484
  %v6486 = vpop.f32.mrb[0].mxu0
  %v6487 = vadd.f32 %v6416, %v6486
  %v6488 = vpop.f32.mrb[0].mxu0
  %v6489 = vadd.f32 %v6418, %v6488
  %6490 = vmatprep.mubr.bf16.mxu0 0
  %6491 = vmatmul.mubr.bf16.gmra.mrb[0].mxu0 %v6362
  %v6492 = vpop.f32.mrb[0].mxu0
  %v6493 = vadd.f32 %v6422, %v6492
  %v6494 = vpop.f32.mrb[0].mxu0
  %v6495 = vadd.f32 %v6424, %v6494
  %v6496 = vpop.f32.mrb[0].mxu0
  %v6497 = vadd.f32 %v6426, %v6496
  %v6498 = vpop.f32.mrb[0].mxu0
  %v6499 = vadd.f32 %v6428, %v6498
  %6500 = vmatprep.mubr.bf16.mxu0 0
  %6501 = vmatmul.mubr.bf16.gmra.mrb[0].mxu0 %v6365
  %v6502 = vpop.f32.mrb[0].mxu0
  %v6503 = vadd.f32 %v6432, %v6502
  %v6504 = vpop.f32.mrb[0].mxu0
  %v6505 = vadd.f32 %v6434, %v6504
  %v6506 = vpop.f32.mrb[0].mxu0
  %v6507 = vpop.f32.mrb[0].mxu0
  %6508 = vdwg.mxu0
  %v6509 = vadd.f32 %v6271, %v6473
  %v6510 = vadd.f32 %v6272, %v6475
  %v6511 = vadd.f32 %v6273, %v6477
  %v6512 = vadd.f32 %v6274, %v6479
  %v6513 = vadd.f32 %v6275, %v6483
  %v6514 = vadd.f32 %v6276, %v6485
  %v6515 = vadd.f32 %v6277, %v6487
  %v6516 = vadd.f32 %v6278, %v6489
  %v6517 = vadd.f32 %v6279, %v6493
  %v6518 = vadd.f32 %v6280, %v6495
  %v6519 = vadd.f32 %v6281, %v6497
  %v6520 = vadd.f32 %v6282, %v6499
  %v6521 = vadd.f32 %v6283, %v6503
  %v6522 = vadd.f32 %v6284, %v6505
  %v6523 = vld [vmem:[#allocation2 + $0x30] sm:$0xff]
  %v6524 = vld [vmem:[#allocation2 + $0x38] sm:$0xff]
  %v6525 = vld [vmem:[#allocation2 + $0x40] sm:$0xff]
  %v6526 = vld [vmem:[#allocation2 + $0x48] sm:$0xff]
  %v6527 = vld [vmem:[#allocation2 + $0x50] sm:$0xff]
  %v6528 = vld [vmem:[#allocation2 + $0x58] sm:$0xff]
  %v6529 = vld [vmem:[#allocation2 + $0x60] sm:$0xff]
  %v6530 = vld [vmem:[#allocation2 + $0x68] sm:$0xff]
  %v6531 = vld [vmem:[#allocation2 + $0x70] sm:$0xff]
  %v6532 = vld [vmem:[#allocation2 + $0x78] sm:$0xff]
  %v6533 = vld [vmem:[#allocation2 + $0x80] sm:$0xff]
  %v6534 = vld [vmem:[#allocation2 + $0x88] sm:$0xff]
  %v6535 = vld [vmem:[#allocation2 + $0x90] sm:$0xff]
  %v6536 = vld [vmem:[#allocation2 + $0x98] sm:$0xff]
  %v6537 = vld [vmem:[#allocation2 + $0xa0] sm:$0xff]
  %v6538 = vld [vmem:[#allocation2 + $0xa8] sm:$0xff]
  %v6539 = vld [vmem:[#allocation2 + $0xb0] sm:$0xff]
  %v6540 = vld [vmem:[#allocation2 + $0xb8] sm:$0xff]
  %v6541 = vld [vmem:[#allocation2 + $0xc0] sm:$0xff]
  %v6542 = vld [vmem:[#allocation2 + $0xc8] sm:$0xff]
  %v6543 = vld [vmem:[#allocation2 + $0xd0] sm:$0xff]
  %v6544 = vpack.c.bf16 %v6526, %v6523
  %v6545 = vpack.c.bf16 %v6527, %v6524
  %v6546 = vpack.c.bf16 %v6528, %v6525
  %v6547 = vpack.c.bf16 %v6532, %v6529
  %v6548 = vpack.c.bf16 %v6533, %v6530
  %v6549 = vpack.c.bf16 %v6534, %v6531
  %v6550 = vpack.c.bf16 %v6538, %v6535
  %v6551 = vpack.c.bf16 %v6539, %v6536
  %v6552 = vpack.c.bf16 %v6540, %v6537
  %v6553 = vpack.c.bf16 %v6541, %v6541
  %v6554 = vpack.c.bf16 %v6542, %v6542
  %v6555 = vpack.c.bf16 %v6543, %v6543
  %s6556 = scalar_lea.vmem [#allocation4], 1152
  %v6557 = vld [vmem:[%s6556] sm:$0xff]
  %v6558 = vld [vmem:[%s6556 + $0x8] sm:$0xff]
  %v6559 = vld [vmem:[%s6556 + $0x10] sm:$0xff]
  %v6560 = vld [vmem:[%s6556 + $0x18] sm:$0xff]
  %v6561 = vld [vmem:[%s6556 + $0x20] sm:$0xff]
  %v6562 = vld [vmem:[%s6556 + $0x28] sm:$0xff]
  %v6563 = vld [vmem:[%s6556 + $0x30] sm:$0xff]
  %v6564 = vld [vmem:[%s6556 + $0x38] sm:$0xff]
  %v6565 = vld [vmem:[%s6556 + $0x40] sm:$0xff]
  %v6566 = vld [vmem:[%s6556 + $0x48] sm:$0xff]
  %v6567 = vld [vmem:[%s6556 + $0x50] sm:$0xff]
  %v6568 = vld [vmem:[%s6556 + $0x58] sm:$0xff]
  %v6569 = vld [vmem:[%s6556 + $0x60] sm:$0xff]
  %v6570 = vld [vmem:[%s6556 + $0x68] sm:$0xff]
  %v6571 = vld [vmem:[%s6556 + $0x70] sm:$0xff]
  %v6572 = vld [vmem:[%s6556 + $0x78] sm:$0xff]
  %v6573 = vld [vmem:[%s6556 + $0x80] sm:$0xff]
  %v6574 = vld [vmem:[%s6556 + $0x88] sm:$0xff]
  %v6575 = vld [vmem:[%s6556 + $0x90] sm:$0xff]
  %v6576 = vld [vmem:[%s6556 + $0x98] sm:$0xff]
  %v6577 = vld [vmem:[%s6556 + $0xa0] sm:$0xff]
  %v6578 = vld [vmem:[%s6556 + $0xa8] sm:$0xff]
  %v6579 = vld [vmem:[%s6556 + $0xb0] sm:$0xff]
  %v6580 = vld [vmem:[%s6556 + $0xb8] sm:$0xff]
  %v6581 = vld [vmem:[%s6556 + $0xc0] sm:$0xff]
  %v6582 = vld [vmem:[%s6556 + $0xc8] sm:$0xff]
  %v6583 = vld [vmem:[%s6556 + $0xd0] sm:$0xff]
  %v6584 = vld [vmem:[%s6556 + $0xd8] sm:$0xff]
  %v6585 = vld [vmem:[%s6556 + $0xe0] sm:$0xff]
  %v6586 = vld [vmem:[%s6556 + $0xe8] sm:$0xff]
  %v6587 = vld [vmem:[%s6556 + $0xf0] sm:$0xff]
  %v6588 = vld [vmem:[%s6556 + $0xf8] sm:$0xff]
  %v6589 = vld [vmem:[%s6556 + $0x100] sm:$0xff]
  %v6590 = vld [vmem:[%s6556 + $0x108] sm:$0xff]
  %v6591 = vld [vmem:[%s6556 + $0x110] sm:$0xff]
  %v6592 = vld [vmem:[%s6556 + $0x118] sm:$0xff]
  %v6594 = vsel %vm4199, %v6546, 0
  %v6597 = vsel %vm4199, %v6549, 0
  %v6600 = vsel %vm4199, %v6552, 0
  %v6603 = vsel %vm4199, %v6555, 0
  %6605 = vmatprep.subr.bf16.mxu0 %v6558
  %6606 = vmatpush1.bf16.msra.mxu0 %v6557
  %6607 = vmatprep.subr.bf16.mxu0 %v6560
  %6608 = vmatpush1.bf16.msra.mxu0 %v6559
  %6609 = vmatprep.subr.bf16.mxu0 %v6562
  %6610 = vmatpush1.bf16.msra.mxu0 %v6561
  %6611 = vmatprep.subr.bf16.mxu0 %v6564
  %6612 = vmatpush1.bf16.msra.mxu0 %v6563
  %6613 = vmatprep.subr.bf16.mxu0 %v6566
  %6614 = vmatpush1.bf16.msra.mxu0 %v6565
  %6615 = vmatprep.subr.bf16.mxu0 %v6568
  %6616 = vmatpush1.bf16.msra.mxu0 %v6567
  %6617 = vmatprep.subr.bf16.mxu0 %v6570
  %6618 = vmatpush1.bf16.msra.mxu0 %v6569
  %6619 = vmatprep.subr.bf16.mxu0 %v6572
  %6620 = vmatpush1.bf16.msra.mxu0 %v6571
  %6621 = vmatprep.subr.bf16.mxu0 %v6574
  %6622 = vmatpush1.bf16.msra.mxu0 %v6573
  %6623 = vmatprep.subr.bf16.mxu0 %v6576
  %6624 = vmatpush1.bf16.msra.mxu0 %v6575
  %6625 = vmatprep.subr.bf16.mxu0 %v6578
  %6626 = vmatpush1.bf16.msra.mxu0 %v6577
  %6627 = vmatprep.subr.bf16.mxu0 %v6580
  %6628 = vmatpush1.bf16.msra.mxu0 %v6579
  %6629 = vmatprep.subr.bf16.mxu0 %v6582
  %6630 = vmatpush1.bf16.msra.mxu0 %v6581
  %6631 = vmatprep.subr.bf16.mxu0 %v6584
  %6632 = vmatpush1.bf16.msra.mxu0 %v6583
  %6633 = vmatprep.subr.bf16.mxu0 %v6586
  %6634 = vmatpush1.bf16.msra.mxu0 %v6585
  %6635 = vmatprep.subr.bf16.mxu0 %v6588
  %6636 = vmatpush1.bf16.msra.mxu0 %v6587
  %6637 = vmatprep.mubr.bf16.mxu0 %v6545
  %6638 = vmatmul.mubr.bf16.gmra.mrb[0].mxu0 %v6544
  %v6639 = vpop.f32.mrb[0].mxu0
  %v6640 = vadd.f32 0.0, %v6639
  %v6641 = vpop.f32.mrb[0].mxu0
  %v6642 = vadd.f32 0.0, %v6641
  %v6643 = vpop.f32.mrb[0].mxu0
  %v6644 = vadd.f32 0.0, %v6643
  %v6645 = vpop.f32.mrb[0].mxu0
  %v6646 = vadd.f32 0.0, %v6645
  %6647 = vmatprep.mubr.bf16.mxu0 %v6548
  %6648 = vmatmul.mubr.bf16.gmra.mrb[0].mxu0 %v6547
  %v6649 = vpop.f32.mrb[0].mxu0
  %v6650 = vadd.f32 0.0, %v6649
  %v6651 = vpop.f32.mrb[0].mxu0
  %v6652 = vadd.f32 0.0, %v6651
  %v6653 = vpop.f32.mrb[0].mxu0
  %v6654 = vadd.f32 0.0, %v6653
  %v6655 = vpop.f32.mrb[0].mxu0
  %v6656 = vadd.f32 0.0, %v6655
  %6657 = vmatprep.mubr.bf16.mxu0 %v6551
  %6658 = vmatmul.mubr.bf16.gmra.mrb[0].mxu0 %v6550
  %v6659 = vpop.f32.mrb[0].mxu0
  %v6660 = vadd.f32 0.0, %v6659
  %v6661 = vpop.f32.mrb[0].mxu0
  %v6662 = vadd.f32 0.0, %v6661
  %v6663 = vpop.f32.mrb[0].mxu0
  %v6664 = vadd.f32 0.0, %v6663
  %v6665 = vpop.f32.mrb[0].mxu0
  %v6666 = vadd.f32 0.0, %v6665
  %6667 = vmatprep.mubr.bf16.mxu0 %v6554
  %6668 = vmatmul.mubr.bf16.gmra.mrb[0].mxu0 %v6553
  %v6669 = vpop.f32.mrb[0].mxu0
  %v6670 = vadd.f32 0.0, %v6669
  %v6671 = vpop.f32.mrb[0].mxu0
  %v6672 = vadd.f32 0.0, %v6671
  %v6673 = vpop.f32.mrb[0].mxu0
  %v6674 = vpop.f32.mrb[0].mxu0
  %6675 = vdwg.mxu0
  %6676 = vmatprep.subr.bf16.mxu0 %v6590
  %6677 = vmatpush1.bf16.msra.mxu0 %v6589
  %6678 = vmatprep.subr.bf16.mxu0 %v6592
  %6679 = vmatpush1.bf16.msra.mxu0 %v6591
  %6680 = vmatprep.subr.bf16.mxu0 0
  %6681 = vmatpush1.bf16.msra.mxu0 0
  %6682 = vmatprep.subr.bf16.mxu0 0
  %6683 = vmatpush1.bf16.msra.mxu0 0
  %6684 = vmatprep.subr.bf16.mxu0 0
  %6685 = vmatpush1.bf16.msra.mxu0 0
  %6686 = vmatprep.subr.bf16.mxu0 0
  %6687 = vmatpush1.bf16.msra.mxu0 0
  %6688 = vmatprep.subr.bf16.mxu0 0
  %6689 = vmatpush1.bf16.msra.mxu0 0
  %6690 = vmatprep.subr.bf16.mxu0 0
  %6691 = vmatpush1.bf16.msra.mxu0 0
  %6692 = vmatprep.subr.bf16.mxu0 0
  %6693 = vmatpush1.bf16.msra.mxu0 0
  %6694 = vmatprep.subr.bf16.mxu0 0
  %6695 = vmatpush1.bf16.msra.mxu0 0
  %6696 = vmatprep.subr.bf16.mxu0 0
  %6697 = vmatpush1.bf16.msra.mxu0 0
  %6698 = vmatprep.subr.bf16.mxu0 0
  %6699 = vmatpush1.bf16.msra.mxu0 0
  %6700 = vmatprep.subr.bf16.mxu0 0
  %6701 = vmatpush1.bf16.msra.mxu0 0
  %6702 = vmatprep.subr.bf16.mxu0 0
  %6703 = vmatpush1.bf16.msra.mxu0 0
  %6704 = vmatprep.subr.bf16.mxu0 0
  %6705 = vmatpush1.bf16.msra.mxu0 0
  %6706 = vmatprep.subr.bf16.mxu0 0
  %6707 = vmatpush1.bf16.msra.mxu0 0
  %6708 = vmatprep.mubr.bf16.mxu0 0
  %6709 = vmatmul.mubr.bf16.gmra.mrb[0].mxu0 %v6594
  %v6710 = vpop.f32.mrb[0].mxu0
  %v6711 = vadd.f32 %v6640, %v6710
  %v6712 = vpop.f32.mrb[0].mxu0
  %v6713 = vadd.f32 %v6642, %v6712
  %v6714 = vpop.f32.mrb[0].mxu0
  %v6715 = vadd.f32 %v6644, %v6714
  %v6716 = vpop.f32.mrb[0].mxu0
  %v6717 = vadd.f32 %v6646, %v6716
  %6718 = vmatprep.mubr.bf16.mxu0 0
  %6719 = vmatmul.mubr.bf16.gmra.mrb[0].mxu0 %v6597
  %v6720 = vpop.f32.mrb[0].mxu0
  %v6721 = vadd.f32 %v6650, %v6720
  %v6722 = vpop.f32.mrb[0].mxu0
  %v6723 = vadd.f32 %v6652, %v6722
  %v6724 = vpop.f32.mrb[0].mxu0
  %v6725 = vadd.f32 %v6654, %v6724
  %v6726 = vpop.f32.mrb[0].mxu0
  %v6727 = vadd.f32 %v6656, %v6726
  %6728 = vmatprep.mubr.bf16.mxu0 0
  %6729 = vmatmul.mubr.bf16.gmra.mrb[0].mxu0 %v6600
  %v6730 = vpop.f32.mrb[0].mxu0
  %v6731 = vadd.f32 %v6660, %v6730
  %v6732 = vpop.f32.mrb[0].mxu0
  %v6733 = vadd.f32 %v6662, %v6732
  %v6734 = vpop.f32.mrb[0].mxu0
  %v6735 = vadd.f32 %v6664, %v6734
  %v6736 = vpop.f32.mrb[0].mxu0
  %v6737 = vadd.f32 %v6666, %v6736
  %6738 = vmatprep.mubr.bf16.mxu0 0
  %6739 = vmatmul.mubr.bf16.gmra.mrb[0].mxu0 %v6603
  %v6740 = vpop.f32.mrb[0].mxu0
  %v6741 = vadd.f32 %v6670, %v6740
  %v6742 = vpop.f32.mrb[0].mxu0
  %v6743 = vadd.f32 %v6672, %v6742
  %v6744 = vpop.f32.mrb[0].mxu0
  %v6745 = vpop.f32.mrb[0].mxu0
  %6746 = vdwg.mxu0
  %v6747 = vadd.f32 %v6509, %v6711
  %v6748 = vadd.f32 %v6510, %v6713
  %v6749 = vadd.f32 %v6511, %v6715
  %v6750 = vadd.f32 %v6512, %v6717
  %v6751 = vadd.f32 %v6513, %v6721
  %v6752 = vadd.f32 %v6514, %v6723
  %v6753 = vadd.f32 %v6515, %v6725
  %v6754 = vadd.f32 %v6516, %v6727
  %v6755 = vadd.f32 %v6517, %v6731
  %v6756 = vadd.f32 %v6518, %v6733
  %v6757 = vadd.f32 %v6519, %v6735
  %v6758 = vadd.f32 %v6520, %v6737
  %v6759 = vadd.f32 %v6521, %v6741
  %v6760 = vadd.f32 %v6522, %v6743
  %v6761 = vadd.f32 %v6747, %v6749
  %v6762 = vadd.f32 %v6761, %v6751
  %v6763 = vadd.f32 %v6762, %v6753
  %v6764 = vadd.f32 %v6763, %v6755
  %v6765 = vadd.f32 %v6764, %v6757
  %v6766 = vadd.f32 %v6765, %v6759
  %v6767 = vrot.slane %v6766, 4
  %v6768 = vadd.f32 %v6766, %v6767
  %v6769 = vrot.slane %v6768, 2
  %v6770 = vadd.f32 %v6768, %v6769
  %v6771 = vrot.slane %v6770, 1
  %v6772 = vadd.f32 %v6770, %v6771
  %vm6773 = vcmask 785408
  %v6774 = vsel %vm6773, %v6748, 0.0
  %v6775 = vsel %vm6773, %v6750, 0.0
  %v6776 = vadd.f32 %v6774, %v6775
  %v6777 = vsel %vm6773, %v6752, 0.0
  %v6778 = vadd.f32 %v6776, %v6777
  %v6779 = vsel %vm6773, %v6754, 0.0
  %v6780 = vadd.f32 %v6778, %v6779
  %v6781 = vsel %vm6773, %v6756, 0.0
  %v6782 = vadd.f32 %v6780, %v6781
  %v6783 = vsel %vm6773, %v6758, 0.0
  %v6784 = vadd.f32 %v6782, %v6783
  %v6785 = vsel %vm6773, %v6760, 0.0
  %v6786 = vadd.f32 %v6784, %v6785
  %v6787 = vrot.slane %v6786, 4
  %v6788 = vadd.f32 %v6786, %v6787
  %v6789 = vrot.slane %v6788, 2
  %v6790 = vadd.f32 %v6788, %v6789
  %v6791 = vrot.slane %v6790, 1
  %v6792 = vadd.f32 %v6790, %v6791
  %v6793 = vmul.f32 %v6747, %v6747
  %v6794 = vmul.f32 %v6748, %v6748
  %v6795 = vmul.f32 %v6749, %v6749
  %v6796 = vmul.f32 %v6750, %v6750
  %v6797 = vmul.f32 %v6751, %v6751
  %v6798 = vmul.f32 %v6752, %v6752
  %v6799 = vmul.f32 %v6753, %v6753
  %v6800 = vmul.f32 %v6754, %v6754
  %v6801 = vmul.f32 %v6755, %v6755
  %v6802 = vmul.f32 %v6756, %v6756
  %v6803 = vmul.f32 %v6757, %v6757
  %v6804 = vmul.f32 %v6758, %v6758
  %v6805 = vmul.f32 %v6759, %v6759
  %v6806 = vmul.f32 %v6760, %v6760
  %v6807 = vadd.f32 %v6793, %v6795
  %v6808 = vadd.f32 %v6807, %v6797
  %v6809 = vadd.f32 %v6808, %v6799
  %v6810 = vadd.f32 %v6809, %v6801
  %v6811 = vadd.f32 %v6810, %v6803
  %v6812 = vadd.f32 %v6811, %v6805
  %v6813 = vrot.slane %v6812, 4
  %v6814 = vadd.f32 %v6812, %v6813
  %v6815 = vrot.slane %v6814, 2
  %v6816 = vadd.f32 %v6814, %v6815
  %v6817 = vrot.slane %v6816, 1
  %v6818 = vadd.f32 %v6816, %v6817
  %v6819 = vsel %vm6773, %v6794, 0.0
  %v6820 = vsel %vm6773, %v6796, 0.0
  %v6821 = vadd.f32 %v6819, %v6820
  %v6822 = vsel %vm6773, %v6798, 0.0
  %v6823 = vadd.f32 %v6821, %v6822
  %v6824 = vsel %vm6773, %v6800, 0.0
  %v6825 = vadd.f32 %v6823, %v6824
  %v6826 = vsel %vm6773, %v6802, 0.0
  %v6827 = vadd.f32 %v6825, %v6826
  %v6828 = vsel %vm6773, %v6804, 0.0
  %v6829 = vadd.f32 %v6827, %v6828
  %v6830 = vsel %vm6773, %v6806, 0.0
  %v6831 = vadd.f32 %v6829, %v6830
  %v6832 = vrot.slane %v6831, 4
  %v6833 = vadd.f32 %v6831, %v6832
  %v6834 = vrot.slane %v6833, 2
  %v6835 = vadd.f32 %v6833, %v6834
  %v6836 = vrot.slane %v6835, 1
  %v6837 = vadd.f32 %v6835, %v6836
  %v6838 = vld [vmem:[%s9] sm:$0xff]
  %v6839 = vld [vmem:[%s9 + $0x8] sm:$0xff]
  %v6840 = vld [vmem:[%s9 + $0x10] sm:$0xff]
  %v6841 = vld [vmem:[%s9 + $0x18] sm:$0xff]
  %v6842 = vld [vmem:[%s9 + $0x20] sm:$0xff]
  %v6843 = vld [vmem:[%s9 + $0x28] sm:$0xff]
  %v6844 = vld [vmem:[%s9 + $0x30] sm:$0xff]
  %v6845 = vld [vmem:[%s9 + $0x38] sm:$0xff]
  %v6846 = vld [vmem:[%s9 + $0x40] sm:$0xff]
  %v6847 = vld [vmem:[%s9 + $0x48] sm:$0xff]
  %v6848 = vld [vmem:[%s9 + $0x50] sm:$0xff]
  %v6849 = vld [vmem:[%s9 + $0x58] sm:$0xff]
  %v6850 = vld [vmem:[%s9 + $0x60] sm:$0xff]
  %v6851 = vld [vmem:[%s9 + $0x68] sm:$0xff]
  %v6852 = vld [vmem:[%s9 + $0x70] sm:$0xff]
  %v6853 = vld [vmem:[%s9 + $0x78] sm:$0xff]
  %v6854 = vld [vmem:[%s9 + $0x80] sm:$0xff]
  %v6855 = vld [vmem:[%s9 + $0x88] sm:$0xff]
  %v6856 = vld [vmem:[%s9 + $0x90] sm:$0xff]
  %v6857 = vld [vmem:[%s9 + $0x98] sm:$0xff]
  %v6858 = vld [vmem:[%s9 + $0xa0] sm:$0xff]
  %v6859 = vld [vmem:[%s9 + $0xa8] sm:$0xff]
  %v6860 = vld [vmem:[%s9 + $0xb0] sm:$0xff]
  %v6861 = vld [vmem:[%s9 + $0xb8] sm:$0xff]
  %v6862 = vld [vmem:[%s9 + $0xc0] sm:$0xff]
  %v6863 = vld [vmem:[%s9 + $0xc8] sm:$0xff]
  %v6864 = vld [vmem:[%s9 + $0xd0] sm:$0xff]
  %v6865 = vld [vmem:[%s9 + $0xd8] sm:$0xff]
  %v6867 = vsel %vm6773, %v6792, 0
  %6869 = vmatprep.subr.mxu0 0.0
  %6870 = vmatpush1.msra.mxu0 %v6838
  %6871 = vmatprep.subr.mxu0 0.0
  %6872 = vmatpush1.msra.mxu0 %v6839
  %6873 = vmatprep.subr.mxu0 0.0
  %6874 = vmatpush1.msra.mxu0 %v6840
  %6875 = vmatprep.subr.mxu0 0.0
  %6876 = vmatpush1.msra.mxu0 %v6841
  %6877 = vmatprep.subr.mxu0 0.0
  %6878 = vmatpush1.msra.mxu0 %v6842
  %6879 = vmatprep.subr.mxu0 0.0
  %6880 = vmatpush1.msra.mxu0 %v6843
  %6881 = vmatprep.subr.mxu0 0.0
  %6882 = vmatpush1.msra.mxu0 %v6844
  %6883 = vmatprep.subr.mxu0 0.0
  %6884 = vmatpush1.msra.mxu0 %v6845
  %6885 = vmatprep.subr.mxu0 0.0
  %6886 = vmatpush1.msra.mxu0 %v6846
  %6887 = vmatprep.subr.mxu0 0.0
  %6888 = vmatpush1.msra.mxu0 %v6847
  %6889 = vmatprep.subr.mxu0 0.0
  %6890 = vmatpush1.msra.mxu0 %v6848
  %6891 = vmatprep.subr.mxu0 0.0
  %6892 = vmatpush1.msra.mxu0 %v6849
  %6893 = vmatprep.subr.mxu0 0.0
  %6894 = vmatpush1.msra.mxu0 %v6850
  %6895 = vmatprep.subr.mxu0 0.0
  %6896 = vmatpush1.msra.mxu0 %v6851
  %6897 = vmatprep.subr.mxu0 0.0
  %6898 = vmatpush1.msra.mxu0 %v6852
  %6899 = vmatprep.subr.mxu0 0.0
  %6900 = vmatpush1.msra.mxu0 %v6853
  %6901 = vmatprep.subr.mxu0 0.0
  %6902 = vmatpush1.msra.mxu0 %v6854
  %6903 = vmatprep.subr.mxu0 0.0
  %6904 = vmatpush1.msra.mxu0 %v6855
  %6905 = vmatprep.subr.mxu0 0.0
  %6906 = vmatpush1.msra.mxu0 %v6856
  %6907 = vmatprep.subr.mxu0 0.0
  %6908 = vmatpush1.msra.mxu0 %v6857
  %6909 = vmatprep.subr.mxu0 0.0
  %6910 = vmatpush1.msra.mxu0 %v6858
  %6911 = vmatprep.subr.mxu0 0.0
  %6912 = vmatpush1.msra.mxu0 %v6859
  %6913 = vmatprep.subr.mxu0 0.0
  %6914 = vmatpush1.msra.mxu0 %v6860
  %6915 = vmatprep.subr.mxu0 0.0
  %6916 = vmatpush1.msra.mxu0 %v6861
  %6917 = vmatprep.subr.mxu0 0.0
  %6918 = vmatpush1.msra.mxu0 %v6862
  %6919 = vmatprep.subr.mxu0 0.0
  %6920 = vmatpush1.msra.mxu0 %v6863
  %6921 = vmatprep.subr.mxu0 0.0
  %6922 = vmatpush1.msra.mxu0 %v6864
  %6923 = vmatprep.subr.mxu0 0.0
  %6924 = vmatpush1.msra.mxu0 %v6865
  %6925 = vmatprep.subr.mxu0 0.0
  %6926 = vmatpush1.msra.mxu0 0.0
  %6927 = vmatprep.subr.mxu0 0.0
  %6928 = vmatpush1.msra.mxu0 0.0
  %6929 = vmatprep.subr.mxu0 0.0
  %6930 = vmatpush1.msra.mxu0 0.0
  %6931 = vmatprep.subr.mxu0 0.0
  %6932 = vmatpush1.msra.mxu0 0.0
  %6933 = vmatprep.mubr.f32.mxu0 %v6867
  %6934 = vmatmul.mubr.f32.gmra.mrb[0].mxu0 %v6772
  %v6935 = vpop.f32.mrb[0].mxu0
  %v6936 = vadd.f32 0.0, %v6935
  %v6937 = vpop.f32.mrb[0].mxu0
  %6938 = vdwg.mxu0
  %v6939 = vrcp.pop 98.0
  %v6940 = vmul.f32 %v6936, %v6939
  %v6942 = vsel %vm6773, %v6837, 0
  %6944 = vmatprep.subr.mxu0 0.0
  %6945 = vmatpush1.msra.mxu0 %v6838
  %6946 = vmatprep.subr.mxu0 0.0
  %6947 = vmatpush1.msra.mxu0 %v6839
  %6948 = vmatprep.subr.mxu0 0.0
  %6949 = vmatpush1.msra.mxu0 %v6840
  %6950 = vmatprep.subr.mxu0 0.0
  %6951 = vmatpush1.msra.mxu0 %v6841
  %6952 = vmatprep.subr.mxu0 0.0
  %6953 = vmatpush1.msra.mxu0 %v6842
  %6954 = vmatprep.subr.mxu0 0.0
  %6955 = vmatpush1.msra.mxu0 %v6843
  %6956 = vmatprep.subr.mxu0 0.0
  %6957 = vmatpush1.msra.mxu0 %v6844
  %6958 = vmatprep.subr.mxu0 0.0
  %6959 = vmatpush1.msra.mxu0 %v6845
  %6960 = vmatprep.subr.mxu0 0.0
  %6961 = vmatpush1.msra.mxu0 %v6846
  %6962 = vmatprep.subr.mxu0 0.0
  %6963 = vmatpush1.msra.mxu0 %v6847
  %6964 = vmatprep.subr.mxu0 0.0
  %6965 = vmatpush1.msra.mxu0 %v6848
  %6966 = vmatprep.subr.mxu0 0.0
  %6967 = vmatpush1.msra.mxu0 %v6849
  %6968 = vmatprep.subr.mxu0 0.0
  %6969 = vmatpush1.msra.mxu0 %v6850
  %6970 = vmatprep.subr.mxu0 0.0
  %6971 = vmatpush1.msra.mxu0 %v6851
  %6972 = vmatprep.subr.mxu0 0.0
  %6973 = vmatpush1.msra.mxu0 %v6852
  %6974 = vmatprep.subr.mxu0 0.0
  %6975 = vmatpush1.msra.mxu0 %v6853
  %6976 = vmatprep.subr.mxu0 0.0
  %6977 = vmatpush1.msra.mxu0 %v6854
  %6978 = vmatprep.subr.mxu0 0.0
  %6979 = vmatpush1.msra.mxu0 %v6855
  %6980 = vmatprep.subr.mxu0 0.0
  %6981 = vmatpush1.msra.mxu0 %v6856
  %6982 = vmatprep.subr.mxu0 0.0
  %6983 = vmatpush1.msra.mxu0 %v6857
  %6984 = vmatprep.subr.mxu0 0.0
  %6985 = vmatpush1.msra.mxu0 %v6858
  %6986 = vmatprep.subr.mxu0 0.0
  %6987 = vmatpush1.msra.mxu0 %v6859
  %6988 = vmatprep.subr.mxu0 0.0
  %6989 = vmatpush1.msra.mxu0 %v6860
  %6990 = vmatprep.subr.mxu0 0.0
  %6991 = vmatpush1.msra.mxu0 %v6861
  %6992 = vmatprep.subr.mxu0 0.0
  %6993 = vmatpush1.msra.mxu0 %v6862
  %6994 = vmatprep.subr.mxu0 0.0
  %6995 = vmatpush1.msra.mxu0 %v6863
  %6996 = vmatprep.subr.mxu0 0.0
  %6997 = vmatpush1.msra.mxu0 %v6864
  %6998 = vmatprep.subr.mxu0 0.0
  %6999 = vmatpush1.msra.mxu0 %v6865
  %7000 = vmatprep.subr.mxu0 0.0
  %7001 = vmatpush1.msra.mxu0 0.0
  %7002 = vmatprep.subr.mxu0 0.0
  %7003 = vmatpush1.msra.mxu0 0.0
  %7004 = vmatprep.subr.mxu0 0.0
  %7005 = vmatpush1.msra.mxu0 0.0
  %7006 = vmatprep.subr.mxu0 0.0
  %7007 = vmatpush1.msra.mxu0 0.0
  %7008 = vmatprep.mubr.f32.mxu0 %v6942
  %7009 = vmatmul.mubr.f32.gmra.mrb[0].mxu0 %v6818
  %v7010 = vpop.f32.mrb[0].mxu0
  %v7011 = vadd.f32 0.0, %v7010
  %v7012 = vpop.f32.mrb[0].mxu0
  %7013 = vdwg.mxu0
  %v7014 = vmul.f32 %v7011, %v6939
  %v7015 = vmul.f32 %v6940, %v6940
  %v7016 = vsub.f32 %v7014, %v7015
  %v7017 = vmax.f32 %v7016, 0.0
  %v7018 = vld [vmem:[%s7] sm:$0x1]
  %v7019 = vadd.f32 %v7017, 1e-05
  %v7020 = vrsqrt.pop %v7019
  %v7021 = vmul.f32 %v7018, %v7020
  %v7022 = vld [vmem:[%s8] sm:$0x1]
  %v7023 = vmul.f32 %v6940, %v7021
  %v7024 = vsub.f32 %v7022, %v7023
  %v7025 = vld [vmem:[%s10] sm:$0xff]
  %v7026 = vld [vmem:[%s10 + $0x8] sm:$0xff]
  %v7027 = vld [vmem:[%s10 + $0x10] sm:$0xff]
  %v7028 = vld [vmem:[%s10 + $0x18] sm:$0xff]
  %v7029 = vld [vmem:[%s10 + $0x20] sm:$0xff]
  %v7030 = vld [vmem:[%s10 + $0x28] sm:$0xff]
  %v7031 = vld [vmem:[%s10 + $0x30] sm:$0xff]
  %v7032 = vld [vmem:[%s10 + $0x38] sm:$0xff]
  %v7034 = vsel %vm4199, %v7021, 0
  %7036 = vmatprep.subr.mxu0 %v7026
  %7037 = vmatpush1.msra.mxu0 %v7025
  %7038 = vmatprep.subr.mxu0 %v7028
  %7039 = vmatpush1.msra.mxu0 %v7027
  %7040 = vmatprep.subr.mxu0 %v7030
  %7041 = vmatpush1.msra.mxu0 %v7029
  %7042 = vmatprep.subr.mxu0 %v7032
  %7043 = vmatpush1.msra.mxu0 %v7031
  %7044 = vmatprep.subr.mxu0 0.0
  %7045 = vmatpush1.msra.mxu0 0.0
  %7046 = vmatprep.subr.mxu0 0.0
  %7047 = vmatpush1.msra.mxu0 0.0
  %7048 = vmatprep.subr.mxu0 0.0
  %7049 = vmatpush1.msra.mxu0 0.0
  %7050 = vmatprep.subr.mxu0 0.0
  %7051 = vmatpush1.msra.mxu0 0.0
  %7052 = vmatprep.subr.mxu0 0.0
  %7053 = vmatpush1.msra.mxu0 0.0
  %7054 = vmatprep.subr.mxu0 0.0
  %7055 = vmatpush1.msra.mxu0 0.0
  %7056 = vmatprep.subr.mxu0 0.0
  %7057 = vmatpush1.msra.mxu0 0.0
  %7058 = vmatprep.subr.mxu0 0.0
  %7059 = vmatpush1.msra.mxu0 0.0
  %7060 = vmatprep.subr.mxu0 0.0
  %7061 = vmatpush1.msra.mxu0 0.0
  %7062 = vmatprep.subr.mxu0 0.0
  %7063 = vmatpush1.msra.mxu0 0.0
  %7064 = vmatprep.subr.mxu0 0.0
  %7065 = vmatpush1.msra.mxu0 0.0
  %7066 = vmatprep.subr.mxu0 0.0
  %7067 = vmatpush1.msra.mxu0 0.0
  %7068 = vmatprep.subr.mxu0 0.0
  %7069 = vmatpush1.msra.mxu0 0.0
  %7070 = vmatprep.subr.mxu0 0.0
  %7071 = vmatpush1.msra.mxu0 0.0
  %7072 = vmatprep.subr.mxu0 0.0
  %7073 = vmatpush1.msra.mxu0 0.0
  %7074 = vmatprep.subr.mxu0 0.0
  %7075 = vmatpush1.msra.mxu0 0.0
  %7076 = vmatprep.subr.mxu0 0.0
  %7077 = vmatpush1.msra.mxu0 0.0
  %7078 = vmatprep.subr.mxu0 0.0
  %7079 = vmatpush1.msra.mxu0 0.0
  %7080 = vmatprep.subr.mxu0 0.0
  %7081 = vmatpush1.msra.mxu0 0.0
  %7082 = vmatprep.subr.mxu0 0.0
  %7083 = vmatpush1.msra.mxu0 0.0
  %7084 = vmatprep.subr.mxu0 0.0
  %7085 = vmatpush1.msra.mxu0 0.0
  %7086 = vmatprep.subr.mxu0 0.0
  %7087 = vmatpush1.msra.mxu0 0.0
  %7088 = vmatprep.subr.mxu0 0.0
  %7089 = vmatpush1.msra.mxu0 0.0
  %7090 = vmatprep.subr.mxu0 0.0
  %7091 = vmatpush1.msra.mxu0 0.0
  %7092 = vmatprep.subr.mxu0 0.0
  %7093 = vmatpush1.msra.mxu0 0.0
  %7094 = vmatprep.subr.mxu0 0.0
  %7095 = vmatpush1.msra.mxu0 0.0
  %7096 = vmatprep.subr.mxu0 0.0
  %7097 = vmatpush1.msra.mxu0 0.0
  %7098 = vmatprep.subr.mxu0 0.0
  %7099 = vmatpush1.msra.mxu0 0.0
  %7100 = vmatprep.mubr.f32.mxu0 0.0
  %7101 = vmatmul.mubr.f32.gmra.mrb[0].mxu0 %v7034
  %v7102 = vpop.f32.mrb[0].mxu0
  %v7103 = vadd.f32 0.0, %v7102
  %v7104 = vpop.f32.mrb[0].mxu0
  %v7105 = vadd.f32 0.0, %v7104
  %7106 = vdwg.mxu0
  %v7108 = vsel %vm4199, %v7024, 0
  %7110 = vmatprep.subr.mxu0 %v7026
  %7111 = vmatpush1.msra.mxu0 %v7025
  %7112 = vmatprep.subr.mxu0 %v7028
  %7113 = vmatpush1.msra.mxu0 %v7027
  %7114 = vmatprep.subr.mxu0 %v7030
  %7115 = vmatpush1.msra.mxu0 %v7029
  %7116 = vmatprep.subr.mxu0 %v7032
  %7117 = vmatpush1.msra.mxu0 %v7031
  %7118 = vmatprep.subr.mxu0 0.0
  %7119 = vmatpush1.msra.mxu0 0.0
  %7120 = vmatprep.subr.mxu0 0.0
  %7121 = vmatpush1.msra.mxu0 0.0
  %7122 = vmatprep.subr.mxu0 0.0
  %7123 = vmatpush1.msra.mxu0 0.0
  %7124 = vmatprep.subr.mxu0 0.0
  %7125 = vmatpush1.msra.mxu0 0.0
  %7126 = vmatprep.subr.mxu0 0.0
  %7127 = vmatpush1.msra.mxu0 0.0
  %7128 = vmatprep.subr.mxu0 0.0
  %7129 = vmatpush1.msra.mxu0 0.0
  %7130 = vmatprep.subr.mxu0 0.0
  %7131 = vmatpush1.msra.mxu0 0.0
  %7132 = vmatprep.subr.mxu0 0.0
  %7133 = vmatpush1.msra.mxu0 0.0
  %7134 = vmatprep.subr.mxu0 0.0
  %7135 = vmatpush1.msra.mxu0 0.0
  %7136 = vmatprep.subr.mxu0 0.0
  %7137 = vmatpush1.msra.mxu0 0.0
  %7138 = vmatprep.subr.mxu0 0.0
  %7139 = vmatpush1.msra.mxu0 0.0
  %7140 = vmatprep.subr.mxu0 0.0
  %7141 = vmatpush1.msra.mxu0 0.0
  %7142 = vmatprep.subr.mxu0 0.0
  %7143 = vmatpush1.msra.mxu0 0.0
  %7144 = vmatprep.subr.mxu0 0.0
  %7145 = vmatpush1.msra.mxu0 0.0
  %7146 = vmatprep.subr.mxu0 0.0
  %7147 = vmatpush1.msra.mxu0 0.0
  %7148 = vmatprep.subr.mxu0 0.0
  %7149 = vmatpush1.msra.mxu0 0.0
  %7150 = vmatprep.subr.mxu0 0.0
  %7151 = vmatpush1.msra.mxu0 0.0
  %7152 = vmatprep.subr.mxu0 0.0
  %7153 = vmatpush1.msra.mxu0 0.0
  %7154 = vmatprep.subr.mxu0 0.0
  %7155 = vmatpush1.msra.mxu0 0.0
  %7156 = vmatprep.subr.mxu0 0.0
  %7157 = vmatpush1.msra.mxu0 0.0
  %7158 = vmatprep.subr.mxu0 0.0
  %7159 = vmatpush1.msra.mxu0 0.0
  %7160 = vmatprep.subr.mxu0 0.0
  %7161 = vmatpush1.msra.mxu0 0.0
  %7162 = vmatprep.subr.mxu0 0.0
  %7163 = vmatpush1.msra.mxu0 0.0
  %7164 = vmatprep.subr.mxu0 0.0
  %7165 = vmatpush1.msra.mxu0 0.0
  %7166 = vmatprep.subr.mxu0 0.0
  %7167 = vmatpush1.msra.mxu0 0.0
  %7168 = vmatprep.subr.mxu0 0.0
  %7169 = vmatpush1.msra.mxu0 0.0
  %7170 = vmatprep.subr.mxu0 0.0
  %7171 = vmatpush1.msra.mxu0 0.0
  %7172 = vmatprep.subr.mxu0 0.0
  %7173 = vmatpush1.msra.mxu0 0.0
  %7174 = vmatprep.mubr.f32.mxu0 0.0
  %7175 = vmatmul.mubr.f32.gmra.mrb[0].mxu0 %v7108
  %v7176 = vpop.f32.mrb[0].mxu0
  %v7177 = vadd.f32 0.0, %v7176
  %v7178 = vpop.f32.mrb[0].mxu0
  %v7179 = vadd.f32 0.0, %v7178
  %7180 = vdwg.mxu0
  %v7181 = vlaneseq
  %v7182 = vshrl.u32 %v7181, 7
  %v7183 = vsub.s32 0, %v7182
  %v7184 = vrot.slane %v7103, %v7183
  %v7185 = vlaneseq
  %v7186 = vshrl.u32 %v7185, 7
  %v7187 = vsub.s32 0, %v7186
  %v7188 = vrot.slane %v7105, %v7187
  %v7189 = vmul.f32 %v6747, %v7184
  %v7190 = vmul.f32 %v6748, %v7188
  %v7191 = vmul.f32 %v6749, %v7184
  %v7192 = vmul.f32 %v6750, %v7188
  %v7193 = vmul.f32 %v6751, %v7184
  %v7194 = vmul.f32 %v6752, %v7188
  %v7195 = vmul.f32 %v6753, %v7184
  %v7196 = vmul.f32 %v6754, %v7188
  %v7197 = vmul.f32 %v6755, %v7184
  %v7198 = vmul.f32 %v6756, %v7188
  %v7199 = vmul.f32 %v6757, %v7184
  %v7200 = vmul.f32 %v6758, %v7188
  %v7201 = vmul.f32 %v6759, %v7184
  %v7202 = vmul.f32 %v6760, %v7188
  %v7203 = vlaneseq
  %v7204 = vshrl.u32 %v7203, 7
  %v7205 = vsub.s32 0, %v7204
  %v7206 = vrot.slane %v7177, %v7205
  %v7207 = vlaneseq
  %v7208 = vshrl.u32 %v7207, 7
  %v7209 = vsub.s32 0, %v7208
  %v7210 = vrot.slane %v7179, %v7209
  %v7211 = vadd.f32 %v7189, %v7206
  %v7212 = vadd.f32 %v7190, %v7210
  %v7213 = vadd.f32 %v7191, %v7206
  %v7214 = vadd.f32 %v7192, %v7210
  %v7215 = vadd.f32 %v7193, %v7206
  %v7216 = vadd.f32 %v7194, %v7210
  %v7217 = vadd.f32 %v7195, %v7206
  %v7218 = vadd.f32 %v7196, %v7210
  %v7219 = vadd.f32 %v7197, %v7206
  %v7220 = vadd.f32 %v7198, %v7210
  %v7221 = vadd.f32 %v7199, %v7206
  %v7222 = vadd.f32 %v7200, %v7210
  %v7223 = vadd.f32 %v7201, %v7206
  %v7224 = vadd.f32 %v7202, %v7210
  %v7225 = vmax.f32 %v7211, 0.0
  %v7226 = vmax.f32 %v7212, 0.0
  %v7227 = vmax.f32 %v7213, 0.0
  %v7228 = vmax.f32 %v7214, 0.0
  %v7229 = vmax.f32 %v7215, 0.0
  %v7230 = vmax.f32 %v7216, 0.0
  %v7231 = vmax.f32 %v7217, 0.0
  %v7232 = vmax.f32 %v7218, 0.0
  %v7233 = vmax.f32 %v7219, 0.0
  %v7234 = vmax.f32 %v7220, 0.0
  %v7235 = vmax.f32 %v7221, 0.0
  %v7236 = vmax.f32 %v7222, 0.0
  %v7237 = vmax.f32 %v7223, 0.0
  %v7238 = vmax.f32 %v7224, 0.0
  %v7239 = vmul.f32 %v7225, %v5469
  %v7240 = vmul.f32 %v7226, %v5469
  %v7241 = vmul.f32 %v7227, %v5470
  %v7242 = vmul.f32 %v7228, %v5470
  %v7243 = vmul.f32 %v7229, %v5471
  %v7244 = vmul.f32 %v7230, %v5471
  %v7245 = vmul.f32 %v7231, %v5472
  %v7246 = vmul.f32 %v7232, %v5472
  %v7247 = vmul.f32 %v7233, %v5473
  %v7248 = vmul.f32 %v7234, %v5473
  %v7249 = vmul.f32 %v7235, %v5474
  %v7250 = vmul.f32 %v7236, %v5474
  %v7251 = vmul.f32 %v7237, %v5475
  %v7252 = vmul.f32 %v7238, %v5475
  %7253 = vst [vmem:[#allocation3] sm:$0xff] %v7239
  %7254 = vst.msk [vmem:[#allocation3 + $0x8] sm:$0xff] %vm6773, %v7240
  %7255 = vst [vmem:[#allocation3 + $0x40] sm:$0xff] %v7241
  %7256 = vst.msk [vmem:[#allocation3 + $0x48] sm:$0xff] %vm6773, %v7242
  %7257 = vst [vmem:[#allocation3 + $0x10] sm:$0xff] %v7243
  %7258 = vst.msk [vmem:[#allocation3 + $0x18] sm:$0xff] %vm6773, %v7244
  %7259 = vst [vmem:[#allocation3 + $0x50] sm:$0xff] %v7245
  %7260 = vst.msk [vmem:[#allocation3 + $0x58] sm:$0xff] %vm6773, %v7246
  %7261 = vst [vmem:[#allocation3 + $0x20] sm:$0xff] %v7247
  %7262 = vst.msk [vmem:[#allocation3 + $0x28] sm:$0xff] %vm6773, %v7248
  %7263 = vst [vmem:[#allocation3 + $0x60] sm:$0xff] %v7249
  %7264 = vst.msk [vmem:[#allocation3 + $0x68] sm:$0xff] %vm6773, %v7250
  %7265 = vst [vmem:[#allocation3 + $0x30] sm:$0xff] %v7251
  %7266 = vst.msk [vmem:[#allocation3 + $0x38] sm:$0xff] %vm6773, %v7252
  %s7267 = smul.u32 %s5595, 28
  %s7268 = smul.u32 %s7267, 1
  %s7269 = sshll.u32 %s7268, 4
  %7270 = dma.done %s1542, %s7269
  %v7271 = vld [vmem:[#allocation3] sm:$0xff]
  %v7272 = vld [vmem:[#allocation3 + $0x8] sm:$0xff]
  %v7273 = vld [vmem:[#allocation3 + $0x10] sm:$0xff]
  %v7274 = vld [vmem:[#allocation3 + $0x18] sm:$0xff]
  %v7275 = vpack.c.bf16 %v7273, %v7271
  %v7276 = vpack.c.bf16 %v7274, %v7272
  %v7277 = vld [vmem:[#allocation5] sm:$0xff]
  %v7278 = vld [vmem:[#allocation5 + $0x8] sm:$0xff]
  %v7279 = vld [vmem:[#allocation5 + $0x10] sm:$0xff]
  %v7280 = vld [vmem:[#allocation5 + $0x18] sm:$0xff]
  %v7281 = vld [vmem:[#allocation5 + $0x20] sm:$0xff]
  %v7282 = vld [vmem:[#allocation5 + $0x28] sm:$0xff]
  %v7283 = vld [vmem:[#allocation5 + $0x30] sm:$0xff]
  %v7284 = vld [vmem:[#allocation5 + $0x38] sm:$0xff]
  %v7285 = vld [vmem:[#allocation5 + $0x40] sm:$0xff]
  %v7286 = vld [vmem:[#allocation5 + $0x48] sm:$0xff]
  %v7287 = vld [vmem:[#allocation5 + $0x50] sm:$0xff]
  %v7288 = vld [vmem:[#allocation5 + $0x58] sm:$0xff]
  %v7289 = vld [vmem:[#allocation5 + $0x60] sm:$0xff]
  %v7290 = vld [vmem:[#allocation5 + $0x68] sm:$0xff]
  %v7291 = vld [vmem:[#allocation3 + $0x40] sm:$0xff]
  %v7292 = vld [vmem:[#allocation3 + $0x48] sm:$0xff]
  %v7293 = vld [vmem:[#allocation3 + $0x50] sm:$0xff]
  %v7294 = vld [vmem:[#allocation3 + $0x58] sm:$0xff]
  %v7295 = vpack.c.bf16 %v7293, %v7291
  %v7296 = vpack.c.bf16 %v7294, %v7292
  %s7297 = scalar_lea.vmem [#allocation5], 112
  %v7298 = vld [vmem:[%s7297] sm:$0xff]
  %v7299 = vld [vmem:[%s7297 + $0x8] sm:$0xff]
  %v7300 = vld [vmem:[%s7297 + $0x10] sm:$0xff]
  %v7301 = vld [vmem:[%s7297 + $0x18] sm:$0xff]
  %v7302 = vld [vmem:[%s7297 + $0x20] sm:$0xff]
  %v7303 = vld [vmem:[%s7297 + $0x28] sm:$0xff]
  %v7304 = vld [vmem:[%s7297 + $0x30] sm:$0xff]
  %v7305 = vld [vmem:[%s7297 + $0x38] sm:$0xff]
  %v7306 = vld [vmem:[%s7297 + $0x40] sm:$0xff]
  %v7307 = vld [vmem:[%s7297 + $0x48] sm:$0xff]
  %v7308 = vld [vmem:[%s7297 + $0x50] sm:$0xff]
  %v7309 = vld [vmem:[%s7297 + $0x58] sm:$0xff]
  %v7310 = vld [vmem:[%s7297 + $0x60] sm:$0xff]
  %v7311 = vld [vmem:[%s7297 + $0x68] sm:$0xff]
  %v7313 = vsel %vm6773, %v7296, 0
  %7315 = vmatprep.subr.bf16.mxu0 0
  %7316 = vmatpush1.bf16.msra.mxu0 %v7298
  %7317 = vmatprep.subr.bf16.mxu0 0
  %7318 = vmatpush1.bf16.msra.mxu0 %v7299
  %7319 = vmatprep.subr.bf16.mxu0 0
  %7320 = vmatpush1.bf16.msra.mxu0 %v7300
  %7321 = vmatprep.subr.bf16.mxu0 0
  %7322 = vmatpush1.bf16.msra.mxu0 %v7301
  %7323 = vmatprep.subr.bf16.mxu0 0
  %7324 = vmatpush1.bf16.msra.mxu0 %v7302
  %7325 = vmatprep.subr.bf16.mxu0 0
  %7326 = vmatpush1.bf16.msra.mxu0 %v7303
  %7327 = vmatprep.subr.bf16.mxu0 0
  %7328 = vmatpush1.bf16.msra.mxu0 %v7304
  %7329 = vmatprep.subr.bf16.mxu0 0
  %7330 = vmatpush1.bf16.msra.mxu0 %v7305
  %7331 = vmatprep.subr.bf16.mxu0 0
  %7332 = vmatpush1.bf16.msra.mxu0 %v7306
  %7333 = vmatprep.subr.bf16.mxu0 0
  %7334 = vmatpush1.bf16.msra.mxu0 %v7307
  %7335 = vmatprep.subr.bf16.mxu0 0
  %7336 = vmatpush1.bf16.msra.mxu0 %v7308
  %7337 = vmatprep.subr.bf16.mxu0 0
  %7338 = vmatpush1.bf16.msra.mxu0 %v7309
  %7339 = vmatprep.subr.bf16.mxu0 0
  %7340 = vmatpush1.bf16.msra.mxu0 %v7310
  %7341 = vmatprep.subr.bf16.mxu0 0
  %7342 = vmatpush1.bf16.msra.mxu0 %v7311
  %7343 = vmatprep.subr.bf16.mxu0 0
  %7344 = vmatpush1.bf16.msra.mxu0 0
  %7345 = vmatprep.subr.bf16.mxu0 0
  %7346 = vmatpush1.bf16.msra.mxu0 0
  %7347 = vmatprep.mubr.bf16.mxu0 %v7313
  %7348 = vmatmul.mubr.bf16.gmra.mrb[0].mxu0 %v7295
  %v7349 = vpop.f32.mrb[0].mxu0
  %v7350 = vadd.f32 0.0, %v7349
  %v7351 = vpop.f32.mrb[0].mxu0
  %v7352 = vpop.f32.mrb[0].mxu0
  %v7353 = vadd.f32 0.0, %v7352
  %v7354 = vpop.f32.mrb[0].mxu0
  %7355 = vdwg.mxu0
  %v7357 = vsel %vm6773, %v7276, 0
  %7359 = vmatprep.subr.bf16.mxu0 0
  %7360 = vmatpush1.bf16.msra.mxu0 %v7277
  %7361 = vmatprep.subr.bf16.mxu0 0
  %7362 = vmatpush1.bf16.msra.mxu0 %v7278
  %7363 = vmatprep.subr.bf16.mxu0 0
  %7364 = vmatpush1.bf16.msra.mxu0 %v7279
  %7365 = vmatprep.subr.bf16.mxu0 0
  %7366 = vmatpush1.bf16.msra.mxu0 %v7280
  %7367 = vmatprep.subr.bf16.mxu0 0
  %7368 = vmatpush1.bf16.msra.mxu0 %v7281
  %7369 = vmatprep.subr.bf16.mxu0 0
  %7370 = vmatpush1.bf16.msra.mxu0 %v7282
  %7371 = vmatprep.subr.bf16.mxu0 0
  %7372 = vmatpush1.bf16.msra.mxu0 %v7283
  %7373 = vmatprep.subr.bf16.mxu0 0
  %7374 = vmatpush1.bf16.msra.mxu0 %v7284
  %7375 = vmatprep.subr.bf16.mxu0 0
  %7376 = vmatpush1.bf16.msra.mxu0 %v7285
  %7377 = vmatprep.subr.bf16.mxu0 0
  %7378 = vmatpush1.bf16.msra.mxu0 %v7286
  %7379 = vmatprep.subr.bf16.mxu0 0
  %7380 = vmatpush1.bf16.msra.mxu0 %v7287
  %7381 = vmatprep.subr.bf16.mxu0 0
  %7382 = vmatpush1.bf16.msra.mxu0 %v7288
  %7383 = vmatprep.subr.bf16.mxu0 0
  %7384 = vmatpush1.bf16.msra.mxu0 %v7289
  %7385 = vmatprep.subr.bf16.mxu0 0
  %7386 = vmatpush1.bf16.msra.mxu0 %v7290
  %7387 = vmatprep.subr.bf16.mxu0 0
  %7388 = vmatpush1.bf16.msra.mxu0 0
  %7389 = vmatprep.subr.bf16.mxu0 0
  %7390 = vmatpush1.bf16.msra.mxu0 0
  %7391 = vmatprep.mubr.bf16.mxu0 %v7357
  %7392 = vmatmul.mubr.bf16.gmra.mrb[0].mxu0 %v7275
  %v7393 = vpop.f32.mrb[0].mxu0
  %v7394 = vadd.f32 %v7350, %v7393
  %v7395 = vpop.f32.mrb[0].mxu0
  %v7396 = vpop.f32.mrb[0].mxu0
  %v7397 = vadd.f32 %v7353, %v7396
  %v7398 = vpop.f32.mrb[0].mxu0
  %7399 = vdwg.mxu0
  %v7400 = vld [vmem:[#allocation3 + $0x10] sm:$0xff]
  %v7401 = vld [vmem:[#allocation3 + $0x18] sm:$0xff]
  %v7402 = vld [vmem:[#allocation3 + $0x20] sm:$0xff]
  %v7403 = vld [vmem:[#allocation3 + $0x28] sm:$0xff]
  %v7404 = vpack.c.bf16 %v7402, %v7400
  %v7405 = vpack.c.bf16 %v7403, %v7401
  %s7406 = scalar_lea.vmem [#allocation5], 224
  %v7407 = vld [vmem:[%s7406] sm:$0xff]
  %v7408 = vld [vmem:[%s7406 + $0x8] sm:$0xff]
  %v7409 = vld [vmem:[%s7406 + $0x10] sm:$0xff]
  %v7410 = vld [vmem:[%s7406 + $0x18] sm:$0xff]
  %v7411 = vld [vmem:[%s7406 + $0x20] sm:$0xff]
  %v7412 = vld [vmem:[%s7406 + $0x28] sm:$0xff]
  %v7413 = vld [vmem:[%s7406 + $0x30] sm:$0xff]
  %v7414 = vld [vmem:[%s7406 + $0x38] sm:$0xff]
  %v7415 = vld [vmem:[%s7406 + $0x40] sm:$0xff]
  %v7416 = vld [vmem:[%s7406 + $0x48] sm:$0xff]
  %v7417 = vld [vmem:[%s7406 + $0x50] sm:$0xff]
  %v7418 = vld [vmem:[%s7406 + $0x58] sm:$0xff]
  %v7419 = vld [vmem:[%s7406 + $0x60] sm:$0xff]
  %v7420 = vld [vmem:[%s7406 + $0x68] sm:$0xff]
  %v7422 = vsel %vm6773, %v7405, 0
  %7424 = vmatprep.subr.bf16.mxu0 0
  %7425 = vmatpush1.bf16.msra.mxu0 %v7407
  %7426 = vmatprep.subr.bf16.mxu0 0
  %7427 = vmatpush1.bf16.msra.mxu0 %v7408
  %7428 = vmatprep.subr.bf16.mxu0 0
  %7429 = vmatpush1.bf16.msra.mxu0 %v7409
  %7430 = vmatprep.subr.bf16.mxu0 0
  %7431 = vmatpush1.bf16.msra.mxu0 %v7410
  %7432 = vmatprep.subr.bf16.mxu0 0
  %7433 = vmatpush1.bf16.msra.mxu0 %v7411
  %7434 = vmatprep.subr.bf16.mxu0 0
  %7435 = vmatpush1.bf16.msra.mxu0 %v7412
  %7436 = vmatprep.subr.bf16.mxu0 0
  %7437 = vmatpush1.bf16.msra.mxu0 %v7413
  %7438 = vmatprep.subr.bf16.mxu0 0
  %7439 = vmatpush1.bf16.msra.mxu0 %v7414
  %7440 = vmatprep.subr.bf16.mxu0 0
  %7441 = vmatpush1.bf16.msra.mxu0 %v7415
  %7442 = vmatprep.subr.bf16.mxu0 0
  %7443 = vmatpush1.bf16.msra.mxu0 %v7416
  %7444 = vmatprep.subr.bf16.mxu0 0
  %7445 = vmatpush1.bf16.msra.mxu0 %v7417
  %7446 = vmatprep.subr.bf16.mxu0 0
  %7447 = vmatpush1.bf16.msra.mxu0 %v7418
  %7448 = vmatprep.subr.bf16.mxu0 0
  %7449 = vmatpush1.bf16.msra.mxu0 %v7419
  %7450 = vmatprep.subr.bf16.mxu0 0
  %7451 = vmatpush1.bf16.msra.mxu0 %v7420
  %7452 = vmatprep.subr.bf16.mxu0 0
  %7453 = vmatpush1.bf16.msra.mxu0 0
  %7454 = vmatprep.subr.bf16.mxu0 0
  %7455 = vmatpush1.bf16.msra.mxu0 0
  %7456 = vmatprep.mubr.bf16.mxu0 %v7422
  %7457 = vmatmul.mubr.bf16.gmra.mrb[0].mxu0 %v7404
  %v7458 = vpop.f32.mrb[0].mxu0
  %v7459 = vadd.f32 0.0, %v7458
  %v7460 = vpop.f32.mrb[0].mxu0
  %v7461 = vpop.f32.mrb[0].mxu0
  %v7462 = vadd.f32 0.0, %v7461
  %v7463 = vpop.f32.mrb[0].mxu0
  %7464 = vdwg.mxu0
  %v7465 = vadd.f32 %v7394, %v7459
  %v7466 = vadd.f32 %v7397, %v7462
  %v7467 = vld [vmem:[#allocation3 + $0x50] sm:$0xff]
  %v7468 = vld [vmem:[#allocation3 + $0x58] sm:$0xff]
  %v7469 = vld [vmem:[#allocation3 + $0x60] sm:$0xff]
  %v7470 = vld [vmem:[#allocation3 + $0x68] sm:$0xff]
  %v7471 = vpack.c.bf16 %v7469, %v7467
  %v7472 = vpack.c.bf16 %v7470, %v7468
  %s7473 = scalar_lea.vmem [#allocation5], 336
  %v7474 = vld [vmem:[%s7473] sm:$0xff]
  %v7475 = vld [vmem:[%s7473 + $0x8] sm:$0xff]
  %v7476 = vld [vmem:[%s7473 + $0x10] sm:$0xff]
  %v7477 = vld [vmem:[%s7473 + $0x18] sm:$0xff]
  %v7478 = vld [vmem:[%s7473 + $0x20] sm:$0xff]
  %v7479 = vld [vmem:[%s7473 + $0x28] sm:$0xff]
  %v7480 = vld [vmem:[%s7473 + $0x30] sm:$0xff]
  %v7481 = vld [vmem:[%s7473 + $0x38] sm:$0xff]
  %v7482 = vld [vmem:[%s7473 + $0x40] sm:$0xff]
  %v7483 = vld [vmem:[%s7473 + $0x48] sm:$0xff]
  %v7484 = vld [vmem:[%s7473 + $0x50] sm:$0xff]
  %v7485 = vld [vmem:[%s7473 + $0x58] sm:$0xff]
  %v7486 = vld [vmem:[%s7473 + $0x60] sm:$0xff]
  %v7487 = vld [vmem:[%s7473 + $0x68] sm:$0xff]
  %v7489 = vsel %vm6773, %v7472, 0
  %7491 = vmatprep.subr.bf16.mxu0 0
  %7492 = vmatpush1.bf16.msra.mxu0 %v7474
  %7493 = vmatprep.subr.bf16.mxu0 0
  %7494 = vmatpush1.bf16.msra.mxu0 %v7475
  %7495 = vmatprep.subr.bf16.mxu0 0
  %7496 = vmatpush1.bf16.msra.mxu0 %v7476
  %7497 = vmatprep.subr.bf16.mxu0 0
  %7498 = vmatpush1.bf16.msra.mxu0 %v7477
  %7499 = vmatprep.subr.bf16.mxu0 0
  %7500 = vmatpush1.bf16.msra.mxu0 %v7478
  %7501 = vmatprep.subr.bf16.mxu0 0
  %7502 = vmatpush1.bf16.msra.mxu0 %v7479
  %7503 = vmatprep.subr.bf16.mxu0 0
  %7504 = vmatpush1.bf16.msra.mxu0 %v7480
  %7505 = vmatprep.subr.bf16.mxu0 0
  %7506 = vmatpush1.bf16.msra.mxu0 %v7481
  %7507 = vmatprep.subr.bf16.mxu0 0
  %7508 = vmatpush1.bf16.msra.mxu0 %v7482
  %7509 = vmatprep.subr.bf16.mxu0 0
  %7510 = vmatpush1.bf16.msra.mxu0 %v7483
  %7511 = vmatprep.subr.bf16.mxu0 0
  %7512 = vmatpush1.bf16.msra.mxu0 %v7484
  %7513 = vmatprep.subr.bf16.mxu0 0
  %7514 = vmatpush1.bf16.msra.mxu0 %v7485
  %7515 = vmatprep.subr.bf16.mxu0 0
  %7516 = vmatpush1.bf16.msra.mxu0 %v7486
  %7517 = vmatprep.subr.bf16.mxu0 0
  %7518 = vmatpush1.bf16.msra.mxu0 %v7487
  %7519 = vmatprep.subr.bf16.mxu0 0
  %7520 = vmatpush1.bf16.msra.mxu0 0
  %7521 = vmatprep.subr.bf16.mxu0 0
  %7522 = vmatpush1.bf16.msra.mxu0 0
  %7523 = vmatprep.mubr.bf16.mxu0 %v7489
  %7524 = vmatmul.mubr.bf16.gmra.mrb[0].mxu0 %v7471
  %v7525 = vpop.f32.mrb[0].mxu0
  %v7526 = vadd.f32 0.0, %v7525
  %v7527 = vpop.f32.mrb[0].mxu0
  %v7528 = vpop.f32.mrb[0].mxu0
  %v7529 = vadd.f32 0.0, %v7528
  %v7530 = vpop.f32.mrb[0].mxu0
  %7531 = vdwg.mxu0
  %v7532 = vadd.f32 %v7465, %v7526
  %v7533 = vadd.f32 %v7466, %v7529
  %v7534 = vld [vmem:[#allocation3 + $0x20] sm:$0xff]
  %v7535 = vld [vmem:[#allocation3 + $0x28] sm:$0xff]
  %v7536 = vld [vmem:[#allocation3 + $0x30] sm:$0xff]
  %v7537 = vld [vmem:[#allocation3 + $0x38] sm:$0xff]
  %v7538 = vpack.c.bf16 %v7536, %v7534
  %v7539 = vpack.c.bf16 %v7537, %v7535
  %s7540 = scalar_lea.vmem [#allocation5], 448
  %v7541 = vld [vmem:[%s7540] sm:$0xff]
  %v7542 = vld [vmem:[%s7540 + $0x8] sm:$0xff]
  %v7543 = vld [vmem:[%s7540 + $0x10] sm:$0xff]
  %v7544 = vld [vmem:[%s7540 + $0x18] sm:$0xff]
  %v7545 = vld [vmem:[%s7540 + $0x20] sm:$0xff]
  %v7546 = vld [vmem:[%s7540 + $0x28] sm:$0xff]
  %v7547 = vld [vmem:[%s7540 + $0x30] sm:$0xff]
  %v7548 = vld [vmem:[%s7540 + $0x38] sm:$0xff]
  %v7549 = vld [vmem:[%s7540 + $0x40] sm:$0xff]
  %v7550 = vld [vmem:[%s7540 + $0x48] sm:$0xff]
  %v7551 = vld [vmem:[%s7540 + $0x50] sm:$0xff]
  %v7552 = vld [vmem:[%s7540 + $0x58] sm:$0xff]
  %v7553 = vld [vmem:[%s7540 + $0x60] sm:$0xff]
  %v7554 = vld [vmem:[%s7540 + $0x68] sm:$0xff]
  %v7556 = vsel %vm6773, %v7539, 0
  %7558 = vmatprep.subr.bf16.mxu0 0
  %7559 = vmatpush1.bf16.msra.mxu0 %v7541
  %7560 = vmatprep.subr.bf16.mxu0 0
  %7561 = vmatpush1.bf16.msra.mxu0 %v7542
  %7562 = vmatprep.subr.bf16.mxu0 0
  %7563 = vmatpush1.bf16.msra.mxu0 %v7543
  %7564 = vmatprep.subr.bf16.mxu0 0
  %7565 = vmatpush1.bf16.msra.mxu0 %v7544
  %7566 = vmatprep.subr.bf16.mxu0 0
  %7567 = vmatpush1.bf16.msra.mxu0 %v7545
  %7568 = vmatprep.subr.bf16.mxu0 0
  %7569 = vmatpush1.bf16.msra.mxu0 %v7546
  %7570 = vmatprep.subr.bf16.mxu0 0
  %7571 = vmatpush1.bf16.msra.mxu0 %v7547
  %7572 = vmatprep.subr.bf16.mxu0 0
  %7573 = vmatpush1.bf16.msra.mxu0 %v7548
  %7574 = vmatprep.subr.bf16.mxu0 0
  %7575 = vmatpush1.bf16.msra.mxu0 %v7549
  %7576 = vmatprep.subr.bf16.mxu0 0
  %7577 = vmatpush1.bf16.msra.mxu0 %v7550
  %7578 = vmatprep.subr.bf16.mxu0 0
  %7579 = vmatpush1.bf16.msra.mxu0 %v7551
  %7580 = vmatprep.subr.bf16.mxu0 0
  %7581 = vmatpush1.bf16.msra.mxu0 %v7552
  %7582 = vmatprep.subr.bf16.mxu0 0
  %7583 = vmatpush1.bf16.msra.mxu0 %v7553
  %7584 = vmatprep.subr.bf16.mxu0 0
  %7585 = vmatpush1.bf16.msra.mxu0 %v7554
  %7586 = vmatprep.subr.bf16.mxu0 0
  %7587 = vmatpush1.bf16.msra.mxu0 0
  %7588 = vmatprep.subr.bf16.mxu0 0
  %7589 = vmatpush1.bf16.msra.mxu0 0
  %7590 = vmatprep.mubr.bf16.mxu0 %v7556
  %7591 = vmatmul.mubr.bf16.gmra.mrb[0].mxu0 %v7538
  %v7592 = vpop.f32.mrb[0].mxu0
  %v7593 = vadd.f32 0.0, %v7592
  %v7594 = vpop.f32.mrb[0].mxu0
  %v7595 = vpop.f32.mrb[0].mxu0
  %v7596 = vadd.f32 0.0, %v7595
  %v7597 = vpop.f32.mrb[0].mxu0
  %7598 = vdwg.mxu0
  %v7599 = vadd.f32 %v7532, %v7593
  %v7600 = vadd.f32 %v7533, %v7596
  %vm7601 = vcmask 523264
  %v7602 = vsel %vm7601, %v7599, 0.0
  %v7603 = vsel %vm7601, %v7600, 0.0
  %v7604 = vadd.f32 %v7602, %v7603
  %v7605 = vrot.slane %v7604, 4
  %v7606 = vadd.f32 %v7604, %v7605
  %v7607 = vrot.slane %v7606, 2
  %v7608 = vadd.f32 %v7606, %v7607
  %v7609 = vrot.slane %v7608, 1
  %v7610 = vadd.f32 %v7608, %v7609
  %v7611 = vmul.f32 %v7599, %v7599
  %v7612 = vmul.f32 %v7600, %v7600
  %v7613 = vsel %vm7601, %v7611, 0.0
  %v7614 = vsel %vm7601, %v7612, 0.0
  %v7615 = vadd.f32 %v7613, %v7614
  %v7616 = vrot.slane %v7615, 4
  %v7617 = vadd.f32 %v7615, %v7616
  %v7618 = vrot.slane %v7617, 2
  %v7619 = vadd.f32 %v7617, %v7618
  %v7620 = vrot.slane %v7619, 1
  %v7621 = vadd.f32 %v7619, %v7620
  %v7622 = vld [vmem:[%s14] sm:$0xff]
  %v7623 = vld [vmem:[%s14 + $0x8] sm:$0xff]
  %v7624 = vld [vmem:[%s14 + $0x10] sm:$0xff]
  %v7625 = vld [vmem:[%s14 + $0x18] sm:$0xff]
  %v7626 = vld [vmem:[%s14 + $0x20] sm:$0xff]
  %v7627 = vld [vmem:[%s14 + $0x28] sm:$0xff]
  %v7628 = vld [vmem:[%s14 + $0x30] sm:$0xff]
  %v7629 = vld [vmem:[%s14 + $0x38] sm:$0xff]
  %v7631 = vsel %vm7601, %v7610, 0
  %7633 = vmatprep.subr.mxu0 0.0
  %7634 = vmatpush1.msra.mxu0 %v7622
  %7635 = vmatprep.subr.mxu0 0.0
  %7636 = vmatpush1.msra.mxu0 %v7623
  %7637 = vmatprep.subr.mxu0 0.0
  %7638 = vmatpush1.msra.mxu0 %v7624
  %7639 = vmatprep.subr.mxu0 0.0
  %7640 = vmatpush1.msra.mxu0 %v7625
  %7641 = vmatprep.subr.mxu0 0.0
  %7642 = vmatpush1.msra.mxu0 %v7626
  %7643 = vmatprep.subr.mxu0 0.0
  %7644 = vmatpush1.msra.mxu0 %v7627
  %7645 = vmatprep.subr.mxu0 0.0
  %7646 = vmatpush1.msra.mxu0 %v7628
  %7647 = vmatprep.subr.mxu0 0.0
  %7648 = vmatpush1.msra.mxu0 %v7629
  %7649 = vmatprep.subr.mxu0 0.0
  %7650 = vmatpush1.msra.mxu0 0.0
  %7651 = vmatprep.subr.mxu0 0.0
  %7652 = vmatpush1.msra.mxu0 0.0
  %7653 = vmatprep.subr.mxu0 0.0
  %7654 = vmatpush1.msra.mxu0 0.0
  %7655 = vmatprep.subr.mxu0 0.0
  %7656 = vmatpush1.msra.mxu0 0.0
  %7657 = vmatprep.subr.mxu0 0.0
  %7658 = vmatpush1.msra.mxu0 0.0
  %7659 = vmatprep.subr.mxu0 0.0
  %7660 = vmatpush1.msra.mxu0 0.0
  %7661 = vmatprep.subr.mxu0 0.0
  %7662 = vmatpush1.msra.mxu0 0.0
  %7663 = vmatprep.subr.mxu0 0.0
  %7664 = vmatpush1.msra.mxu0 0.0
  %7665 = vmatprep.subr.mxu0 0.0
  %7666 = vmatpush1.msra.mxu0 0.0
  %7667 = vmatprep.subr.mxu0 0.0
  %7668 = vmatpush1.msra.mxu0 0.0
  %7669 = vmatprep.subr.mxu0 0.0
  %7670 = vmatpush1.msra.mxu0 0.0
  %7671 = vmatprep.subr.mxu0 0.0
  %7672 = vmatpush1.msra.mxu0 0.0
  %7673 = vmatprep.subr.mxu0 0.0
  %7674 = vmatpush1.msra.mxu0 0.0
  %7675 = vmatprep.subr.mxu0 0.0
  %7676 = vmatpush1.msra.mxu0 0.0
  %7677 = vmatprep.subr.mxu0 0.0
  %7678 = vmatpush1.msra.mxu0 0.0
  %7679 = vmatprep.subr.mxu0 0.0
  %7680 = vmatpush1.msra.mxu0 0.0
  %7681 = vmatprep.subr.mxu0 0.0
  %7682 = vmatpush1.msra.mxu0 0.0
  %7683 = vmatprep.subr.mxu0 0.0
  %7684 = vmatpush1.msra.mxu0 0.0
  %7685 = vmatprep.subr.mxu0 0.0
  %7686 = vmatpush1.msra.mxu0 0.0
  %7687 = vmatprep.subr.mxu0 0.0
  %7688 = vmatpush1.msra.mxu0 0.0
  %7689 = vmatprep.subr.mxu0 0.0
  %7690 = vmatpush1.msra.mxu0 0.0
  %7691 = vmatprep.subr.mxu0 0.0
  %7692 = vmatpush1.msra.mxu0 0.0
  %7693 = vmatprep.subr.mxu0 0.0
  %7694 = vmatpush1.msra.mxu0 0.0
  %7695 = vmatprep.subr.mxu0 0.0
  %7696 = vmatpush1.msra.mxu0 0.0
  %7697 = vmatprep.mubr.f32.mxu0 0.0
  %7698 = vmatmul.mubr.f32.gmra.mrb[0].mxu0 %v7631
  %v7699 = vpop.f32.mrb[0].mxu0
  %v7700 = vadd.f32 0.0, %v7699
  %v7701 = vpop.f32.mrb[0].mxu0
  %7702 = vdwg.mxu0
  %v7703 = vrcp.pop 8.0
  %v7704 = vmul.f32 %v7700, %v7703
  %v7706 = vsel %vm7601, %v7621, 0
  %7708 = vmatprep.subr.mxu0 0.0
  %7709 = vmatpush1.msra.mxu0 %v7622
  %7710 = vmatprep.subr.mxu0 0.0
  %7711 = vmatpush1.msra.mxu0 %v7623
  %7712 = vmatprep.subr.mxu0 0.0
  %7713 = vmatpush1.msra.mxu0 %v7624
  %7714 = vmatprep.subr.mxu0 0.0
  %7715 = vmatpush1.msra.mxu0 %v7625
  %7716 = vmatprep.subr.mxu0 0.0
  %7717 = vmatpush1.msra.mxu0 %v7626
  %7718 = vmatprep.subr.mxu0 0.0
  %7719 = vmatpush1.msra.mxu0 %v7627
  %7720 = vmatprep.subr.mxu0 0.0
  %7721 = vmatpush1.msra.mxu0 %v7628
  %7722 = vmatprep.subr.mxu0 0.0
  %7723 = vmatpush1.msra.mxu0 %v7629
  %7724 = vmatprep.subr.mxu0 0.0
  %7725 = vmatpush1.msra.mxu0 0.0
  %7726 = vmatprep.subr.mxu0 0.0
  %7727 = vmatpush1.msra.mxu0 0.0
  %7728 = vmatprep.subr.mxu0 0.0
  %7729 = vmatpush1.msra.mxu0 0.0
  %7730 = vmatprep.subr.mxu0 0.0
  %7731 = vmatpush1.msra.mxu0 0.0
  %7732 = vmatprep.subr.mxu0 0.0
  %7733 = vmatpush1.msra.mxu0 0.0
  %7734 = vmatprep.subr.mxu0 0.0
  %7735 = vmatpush1.msra.mxu0 0.0
  %7736 = vmatprep.subr.mxu0 0.0
  %7737 = vmatpush1.msra.mxu0 0.0
  %7738 = vmatprep.subr.mxu0 0.0
  %7739 = vmatpush1.msra.mxu0 0.0
  %7740 = vmatprep.subr.mxu0 0.0
  %7741 = vmatpush1.msra.mxu0 0.0
  %7742 = vmatprep.subr.mxu0 0.0
  %7743 = vmatpush1.msra.mxu0 0.0
  %7744 = vmatprep.subr.mxu0 0.0
  %7745 = vmatpush1.msra.mxu0 0.0
  %7746 = vmatprep.subr.mxu0 0.0
  %7747 = vmatpush1.msra.mxu0 0.0
  %7748 = vmatprep.subr.mxu0 0.0
  %7749 = vmatpush1.msra.mxu0 0.0
  %7750 = vmatprep.subr.mxu0 0.0
  %7751 = vmatpush1.msra.mxu0 0.0
  %7752 = vmatprep.subr.mxu0 0.0
  %7753 = vmatpush1.msra.mxu0 0.0
  %7754 = vmatprep.subr.mxu0 0.0
  %7755 = vmatpush1.msra.mxu0 0.0
  %7756 = vmatprep.subr.mxu0 0.0
  %7757 = vmatpush1.msra.mxu0 0.0
  %7758 = vmatprep.subr.mxu0 0.0
  %7759 = vmatpush1.msra.mxu0 0.0
  %7760 = vmatprep.subr.mxu0 0.0
  %7761 = vmatpush1.msra.mxu0 0.0
  %7762 = vmatprep.subr.mxu0 0.0
  %7763 = vmatpush1.msra.mxu0 0.0
  %7764 = vmatprep.subr.mxu0 0.0
  %7765 = vmatpush1.msra.mxu0 0.0
  %7766 = vmatprep.subr.mxu0 0.0
  %7767 = vmatpush1.msra.mxu0 0.0
  %7768 = vmatprep.subr.mxu0 0.0
  %7769 = vmatpush1.msra.mxu0 0.0
  %7770 = vmatprep.subr.mxu0 0.0
  %7771 = vmatpush1.msra.mxu0 0.0
  %7772 = vmatprep.mubr.f32.mxu0 0.0
  %7773 = vmatmul.mubr.f32.gmra.mrb[0].mxu0 %v7706
  %v7774 = vpop.f32.mrb[0].mxu0
  %v7775 = vadd.f32 0.0, %v7774
  %v7776 = vpop.f32.mrb[0].mxu0
  %7777 = vdwg.mxu0
  %v7778 = vmul.f32 %v7775, %v7703
  %v7779 = vmul.f32 %v7704, %v7704
  %v7780 = vsub.f32 %v7778, %v7779
  %v7781 = vmax.f32 %v7780, 0.0
  %v7782 = vld [vmem:[%s12] sm:$0x1]
  %v7783 = vadd.f32 %v7781, 1e-05
  %v7784 = vrsqrt.pop %v7783
  %v7785 = vmul.f32 %v7782, %v7784
  %v7786 = vld [vmem:[%s13] sm:$0x1]
  %v7787 = vmul.f32 %v7704, %v7785
  %v7788 = vsub.f32 %v7786, %v7787
  %v7789 = vld [vmem:[%s15] sm:$0xff]
  %v7790 = vld [vmem:[%s15 + $0x8] sm:$0xff]
  %v7791 = vld [vmem:[%s15 + $0x10] sm:$0xff]
  %v7792 = vld [vmem:[%s15 + $0x18] sm:$0xff]
  %v7794 = vsel %vm4199, %v7785, 0
  %7796 = vmatprep.subr.mxu0 0.0
  %7797 = vmatpush1.msra.mxu0 %v7789
  %7798 = vmatprep.subr.mxu0 0.0
  %7799 = vmatpush1.msra.mxu0 %v7790
  %7800 = vmatprep.subr.mxu0 0.0
  %7801 = vmatpush1.msra.mxu0 %v7791
  %7802 = vmatprep.subr.mxu0 0.0
  %7803 = vmatpush1.msra.mxu0 %v7792
  %7804 = vmatprep.subr.mxu0 0.0
  %7805 = vmatpush1.msra.mxu0 0.0
  %7806 = vmatprep.subr.mxu0 0.0
  %7807 = vmatpush1.msra.mxu0 0.0
  %7808 = vmatprep.subr.mxu0 0.0
  %7809 = vmatpush1.msra.mxu0 0.0
  %7810 = vmatprep.subr.mxu0 0.0
  %7811 = vmatpush1.msra.mxu0 0.0
  %7812 = vmatprep.subr.mxu0 0.0
  %7813 = vmatpush1.msra.mxu0 0.0
  %7814 = vmatprep.subr.mxu0 0.0
  %7815 = vmatpush1.msra.mxu0 0.0
  %7816 = vmatprep.subr.mxu0 0.0
  %7817 = vmatpush1.msra.mxu0 0.0
  %7818 = vmatprep.subr.mxu0 0.0
  %7819 = vmatpush1.msra.mxu0 0.0
  %7820 = vmatprep.subr.mxu0 0.0
  %7821 = vmatpush1.msra.mxu0 0.0
  %7822 = vmatprep.subr.mxu0 0.0
  %7823 = vmatpush1.msra.mxu0 0.0
  %7824 = vmatprep.subr.mxu0 0.0
  %7825 = vmatpush1.msra.mxu0 0.0
  %7826 = vmatprep.subr.mxu0 0.0
  %7827 = vmatpush1.msra.mxu0 0.0
  %7828 = vmatprep.subr.mxu0 0.0
  %7829 = vmatpush1.msra.mxu0 0.0
  %7830 = vmatprep.subr.mxu0 0.0
  %7831 = vmatpush1.msra.mxu0 0.0
  %7832 = vmatprep.subr.mxu0 0.0
  %7833 = vmatpush1.msra.mxu0 0.0
  %7834 = vmatprep.subr.mxu0 0.0
  %7835 = vmatpush1.msra.mxu0 0.0
  %7836 = vmatprep.subr.mxu0 0.0
  %7837 = vmatpush1.msra.mxu0 0.0
  %7838 = vmatprep.subr.mxu0 0.0
  %7839 = vmatpush1.msra.mxu0 0.0
  %7840 = vmatprep.subr.mxu0 0.0
  %7841 = vmatpush1.msra.mxu0 0.0
  %7842 = vmatprep.subr.mxu0 0.0
  %7843 = vmatpush1.msra.mxu0 0.0
  %7844 = vmatprep.subr.mxu0 0.0
  %7845 = vmatpush1.msra.mxu0 0.0
  %7846 = vmatprep.subr.mxu0 0.0
  %7847 = vmatpush1.msra.mxu0 0.0
  %7848 = vmatprep.subr.mxu0 0.0
  %7849 = vmatpush1.msra.mxu0 0.0
  %7850 = vmatprep.subr.mxu0 0.0
  %7851 = vmatpush1.msra.mxu0 0.0
  %7852 = vmatprep.subr.mxu0 0.0
  %7853 = vmatpush1.msra.mxu0 0.0
  %7854 = vmatprep.subr.mxu0 0.0
  %7855 = vmatpush1.msra.mxu0 0.0
  %7856 = vmatprep.subr.mxu0 0.0
  %7857 = vmatpush1.msra.mxu0 0.0
  %7858 = vmatprep.subr.mxu0 0.0
  %7859 = vmatpush1.msra.mxu0 0.0
  %7860 = vmatprep.mubr.f32.mxu0 0.0
  %7861 = vmatmul.mubr.f32.gmra.mrb[0].mxu0 %v7794
  %v7862 = vpop.f32.mrb[0].mxu0
  %v7863 = vadd.f32 0.0, %v7862
  %v7864 = vpop.f32.mrb[0].mxu0
  %7865 = vdwg.mxu0
  %v7867 = vsel %vm4199, %v7788, 0
  %7869 = vmatprep.subr.mxu0 0.0
  %7870 = vmatpush1.msra.mxu0 %v7789
  %7871 = vmatprep.subr.mxu0 0.0
  %7872 = vmatpush1.msra.mxu0 %v7790
  %7873 = vmatprep.subr.mxu0 0.0
  %7874 = vmatpush1.msra.mxu0 %v7791
  %7875 = vmatprep.subr.mxu0 0.0
  %7876 = vmatpush1.msra.mxu0 %v7792
  %7877 = vmatprep.subr.mxu0 0.0
  %7878 = vmatpush1.msra.mxu0 0.0
  %7879 = vmatprep.subr.mxu0 0.0
  %7880 = vmatpush1.msra.mxu0 0.0
  %7881 = vmatprep.subr.mxu0 0.0
  %7882 = vmatpush1.msra.mxu0 0.0
  %7883 = vmatprep.subr.mxu0 0.0
  %7884 = vmatpush1.msra.mxu0 0.0
  %7885 = vmatprep.subr.mxu0 0.0
  %7886 = vmatpush1.msra.mxu0 0.0
  %7887 = vmatprep.subr.mxu0 0.0
  %7888 = vmatpush1.msra.mxu0 0.0
  %7889 = vmatprep.subr.mxu0 0.0
  %7890 = vmatpush1.msra.mxu0 0.0
  %7891 = vmatprep.subr.mxu0 0.0
  %7892 = vmatpush1.msra.mxu0 0.0
  %7893 = vmatprep.subr.mxu0 0.0
  %7894 = vmatpush1.msra.mxu0 0.0
  %7895 = vmatprep.subr.mxu0 0.0
  %7896 = vmatpush1.msra.mxu0 0.0
  %7897 = vmatprep.subr.mxu0 0.0
  %7898 = vmatpush1.msra.mxu0 0.0
  %7899 = vmatprep.subr.mxu0 0.0
  %7900 = vmatpush1.msra.mxu0 0.0
  %7901 = vmatprep.subr.mxu0 0.0
  %7902 = vmatpush1.msra.mxu0 0.0
  %7903 = vmatprep.subr.mxu0 0.0
  %7904 = vmatpush1.msra.mxu0 0.0
  %7905 = vmatprep.subr.mxu0 0.0
  %7906 = vmatpush1.msra.mxu0 0.0
  %7907 = vmatprep.subr.mxu0 0.0
  %7908 = vmatpush1.msra.mxu0 0.0
  %7909 = vmatprep.subr.mxu0 0.0
  %7910 = vmatpush1.msra.mxu0 0.0
  %7911 = vmatprep.subr.mxu0 0.0
  %7912 = vmatpush1.msra.mxu0 0.0
  %7913 = vmatprep.subr.mxu0 0.0
  %7914 = vmatpush1.msra.mxu0 0.0
  %7915 = vmatprep.subr.mxu0 0.0
  %7916 = vmatpush1.msra.mxu0 0.0
  %7917 = vmatprep.subr.mxu0 0.0
  %7918 = vmatpush1.msra.mxu0 0.0
  %7919 = vmatprep.subr.mxu0 0.0
  %7920 = vmatpush1.msra.mxu0 0.0
  %7921 = vmatprep.subr.mxu0 0.0
  %7922 = vmatpush1.msra.mxu0 0.0
  %7923 = vmatprep.subr.mxu0 0.0
  %7924 = vmatpush1.msra.mxu0 0.0
  %7925 = vmatprep.subr.mxu0 0.0
  %7926 = vmatpush1.msra.mxu0 0.0
  %7927 = vmatprep.subr.mxu0 0.0
  %7928 = vmatpush1.msra.mxu0 0.0
  %7929 = vmatprep.subr.mxu0 0.0
  %7930 = vmatpush1.msra.mxu0 0.0
  %7931 = vmatprep.subr.mxu0 0.0
  %7932 = vmatpush1.msra.mxu0 0.0
  %7933 = vmatprep.mubr.f32.mxu0 0.0
  %7934 = vmatmul.mubr.f32.gmra.mrb[0].mxu0 %v7867
  %v7935 = vpop.f32.mrb[0].mxu0
  %v7936 = vadd.f32 0.0, %v7935
  %v7937 = vpop.f32.mrb[0].mxu0
  %7938 = vdwg.mxu0
  %v7939 = vlaneseq
  %v7940 = vshrl.u32 %v7939, 7
  %v7941 = vsub.s32 0, %v7940
  %v7942 = vrot.slane %v7863, %v7941
  %v7943 = vmul.f32 %v7599, %v7942
  %v7944 = vmul.f32 %v7600, %v7942
  %v7945 = vlaneseq
  %v7946 = vshrl.u32 %v7945, 7
  %v7947 = vsub.s32 0, %v7946
  %v7948 = vrot.slane %v7936, %v7947
  %v7949 = vadd.f32 %v7943, %v7948
  %v7950 = vadd.f32 %v7944, %v7948
  %v7951 = vmax.f32 %v7949, 0.0
  %v7952 = vmax.f32 %v7950, 0.0
  %v7953 = vmul.f32 %v7951, %v5469
  %v7954 = vmul.f32 %v7952, %v5470
  %s7955 = smul.u32 4, 2
  %s7956 = smul.u32 %s7955, 8
  %s7957 = smul.u32 %s7956, 1
  %s7958 = sshll.u32 %s7957, 4
  %7959 = dma.done %s1723, %s7958
  %v7960 = vpack.c.bf16 %v7953, %v7953
  %v7961 = vld [vmem:[#allocation6] sm:$0xff]
  %v7962 = vld [vmem:[#allocation6 + $0x8] sm:$0xff]
  %v7963 = vld [vmem:[#allocation6 + $0x10] sm:$0xff]
  %v7964 = vld [vmem:[#allocation6 + $0x18] sm:$0xff]
  %v7965 = vpack.c.bf16 %v7954, %v7954
  %s7966 = scalar_lea.vmem [#allocation6], 32
  %v7967 = vld [vmem:[%s7966] sm:$0xff]
  %v7968 = vld [vmem:[%s7966 + $0x8] sm:$0xff]
  %v7969 = vld [vmem:[%s7966 + $0x10] sm:$0xff]
  %v7970 = vld [vmem:[%s7966 + $0x18] sm:$0xff]
  %v7972 = vsel %vm7601, %v7965, 0
  %7974 = vmatprep.subr.bf16.mxu0 0
  %7975 = vmatpush1.bf16.msra.mxu0 %v7967
  %7976 = vmatprep.subr.bf16.mxu0 0
  %7977 = vmatpush1.bf16.msra.mxu0 %v7968
  %7978 = vmatprep.subr.bf16.mxu0 0
  %7979 = vmatpush1.bf16.msra.mxu0 %v7969
  %7980 = vmatprep.subr.bf16.mxu0 0
  %7981 = vmatpush1.bf16.msra.mxu0 %v7970
  %7982 = vmatprep.subr.bf16.mxu0 0
  %7983 = vmatpush1.bf16.msra.mxu0 0
  %7984 = vmatprep.subr.bf16.mxu0 0
  %7985 = vmatpush1.bf16.msra.mxu0 0
  %7986 = vmatprep.subr.bf16.mxu0 0
  %7987 = vmatpush1.bf16.msra.mxu0 0
  %7988 = vmatprep.subr.bf16.mxu0 0
  %7989 = vmatpush1.bf16.msra.mxu0 0
  %7990 = vmatprep.subr.bf16.mxu0 0
  %7991 = vmatpush1.bf16.msra.mxu0 0
  %7992 = vmatprep.subr.bf16.mxu0 0
  %7993 = vmatpush1.bf16.msra.mxu0 0
  %7994 = vmatprep.subr.bf16.mxu0 0
  %7995 = vmatpush1.bf16.msra.mxu0 0
  %7996 = vmatprep.subr.bf16.mxu0 0
  %7997 = vmatpush1.bf16.msra.mxu0 0
  %7998 = vmatprep.subr.bf16.mxu0 0
  %7999 = vmatpush1.bf16.msra.mxu0 0
  %8000 = vmatprep.subr.bf16.mxu0 0
  %8001 = vmatpush1.bf16.msra.mxu0 0
  %8002 = vmatprep.subr.bf16.mxu0 0
  %8003 = vmatpush1.bf16.msra.mxu0 0
  %8004 = vmatprep.subr.bf16.mxu0 0
  %8005 = vmatpush1.bf16.msra.mxu0 0
  %8006 = vmatprep.mubr.bf16.mxu0 0
  %8007 = vmatmul.mubr.bf16.gmra.mrb[0].mxu0 %v7972
  %v8008 = vpop.f32.mrb[0].mxu0
  %v8009 = vadd.f32 0.0, %v8008
  %v8010 = vpop.f32.mrb[0].mxu0
  %v8011 = vpop.f32.mrb[0].mxu0
  %v8012 = vpop.f32.mrb[0].mxu0
  %8013 = vdwg.mxu0
  %v8015 = vsel %vm7601, %v7960, 0
  %8017 = vmatprep.subr.bf16.mxu0 0
  %8018 = vmatpush1.bf16.msra.mxu0 %v7961
  %8019 = vmatprep.subr.bf16.mxu0 0
  %8020 = vmatpush1.bf16.msra.mxu0 %v7962
  %8021 = vmatprep.subr.bf16.mxu0 0
  %8022 = vmatpush1.bf16.msra.mxu0 %v7963
  %8023 = vmatprep.subr.bf16.mxu0 0
  %8024 = vmatpush1.bf16.msra.mxu0 %v7964
  %8025 = vmatprep.subr.bf16.mxu0 0
  %8026 = vmatpush1.bf16.msra.mxu0 0
  %8027 = vmatprep.subr.bf16.mxu0 0
  %8028 = vmatpush1.bf16.msra.mxu0 0
  %8029 = vmatprep.subr.bf16.mxu0 0
  %8030 = vmatpush1.bf16.msra.mxu0 0
  %8031 = vmatprep.subr.bf16.mxu0 0
  %8032 = vmatpush1.bf16.msra.mxu0 0
  %8033 = vmatprep.subr.bf16.mxu0 0
  %8034 = vmatpush1.bf16.msra.mxu0 0
  %8035 = vmatprep.subr.bf16.mxu0 0
  %8036 = vmatpush1.bf16.msra.mxu0 0
  %8037 = vmatprep.subr.bf16.mxu0 0
  %8038 = vmatpush1.bf16.msra.mxu0 0
  %8039 = vmatprep.subr.bf16.mxu0 0
  %8040 = vmatpush1.bf16.msra.mxu0 0
  %8041 = vmatprep.subr.bf16.mxu0 0
  %8042 = vmatpush1.bf16.msra.mxu0 0
  %8043 = vmatprep.subr.bf16.mxu0 0
  %8044 = vmatpush1.bf16.msra.mxu0 0
  %8045 = vmatprep.subr.bf16.mxu0 0
  %8046 = vmatpush1.bf16.msra.mxu0 0
  %8047 = vmatprep.subr.bf16.mxu0 0
  %8048 = vmatpush1.bf16.msra.mxu0 0
  %8049 = vmatprep.mubr.bf16.mxu0 0
  %8050 = vmatmul.mubr.bf16.gmra.mrb[0].mxu0 %v8015
  %v8051 = vpop.f32.mrb[0].mxu0
  %v8052 = vadd.f32 %v8009, %v8051
  %v8053 = vpop.f32.mrb[0].mxu0
  %v8054 = vpop.f32.mrb[0].mxu0
  %v8055 = vpop.f32.mrb[0].mxu0
  %8056 = vdwg.mxu0
  %v8057 = vld [vmem:[%s17] sm:$0x1]
  %v8059 = vlaneseq
  %v8060 = vshrl.u32 %v8059, 7
  %v8061 = vsub.s32 0, %v8060
  %v8062 = vrot.slane %v8057, %v8061
  %v8064 = vadd.f32 %v8052, %v8062
  %vm8065 = vcmask 15360
  %8066 = vst.msk [vmem:[%s18] sm:$0xff] %vm8065, %v8064
  // Predicated region
  $region167: #{dqn_forward.1} parent=0 // pred_check
    _
  $region168: #{dqn_forward.1} parent=0 // pred_check_branch
    %8068 = sbr.rel (0) target = $region170
  $region169: #{dqn_forward.1} parent=0 // pred_region
    _
  $region170: #{dqn_forward.1} parent=0 // pred_fallthru
    _
  // Predicated region
  $region171: #{dqn_forward.1} parent=0 // pred_check
    _
  $region172: #{dqn_forward.1} parent=0 // pred_check_branch
    %8070 = sbr.rel (0) target = $region174
  $region173: #{dqn_forward.1} parent=0 // pred_region
    _
  $region174: #{dqn_forward.1} parent=0 // pred_fallthru
    _
  %8071 = vsyncmov [#allocation7]
  %s8072 = vpop.sfrf %8071
  %p8073 = scmp.eq.s32.totalorder %s8072, 0
  %p8074 = pneg %p8073
  %8076 = shalt.err (%p8074)
  %s8077 = scalar_lea.sflag [#allocation7], 1
  %8078 = vsyncmov %s8077
  %s8079 = vpop.sfrf %8078
  %p8080 = scmp.eq.s32.totalorder %s8079, 0
  %p8081 = pneg %p8080
  %8083 = shalt.err (%p8081)
  %s8084 = scalar_lea.sflag [#allocation7], 2
  %8085 = vsyncmov %s8084
  %s8086 = vpop.sfrf %8085
  %p8087 = scmp.eq.s32.totalorder %s8086, 0
  %p8088 = pneg %p8087
  %8090 = shalt.err (%p8088)

</llo_original>
